<compile_context>
chip_gen: v6e
topology: v6e:2x2x1
jax: 0.10.0
libtpu: 0.0.40
codegen_flags: <defaults>
</compile_context>

<pallas_src>
import math
from functools import partial

import numpy as np
import jax
import jax.numpy as jnp
from jax.experimental import pallas as pl
from jax.experimental.pallas import tpu as pltpu


CFG = dict(
    batch=2, seq_len=16,
    dim_out=14, dim_in_proj=8, dim_cond_emb=16,
    dim=64, depth=2, dim_head=16, heads=4,
    ff_mult=4, time_hidden_dim=64,
    conv_kernel_size=7, num_register_tokens=4,
    qk_norm_scale=10.0, rotary_theta=50000.0,
)


# ----------------------------------------------------------------------------
# In-kernel math helpers
# ----------------------------------------------------------------------------

def _erf(z):
    # Abramowitz & Stegun 7.1.26 (|err| < 1.5e-7): keeps exact-(erf)-GELU
    # semantics to float32 accuracy without relying on a Mosaic erf lowering.
    az = jnp.abs(z)
    t = 1.0 / (1.0 + 0.3275911 * az)
    poly = ((((1.061405429 * t - 1.453152027) * t + 1.421413741) * t
             - 0.284496736) * t + 0.254829592) * t
    e = 1.0 - poly * jnp.exp(-az * az)
    return jnp.where(z >= 0.0, e, -e)


def _gelu(x):  # exact GELU, as nn.GELU()/F.gelu default
    return 0.5 * x * (1.0 + _erf(x * 0.7071067811865476))


def _l2norm(x):  # F.normalize(x, dim=-1) (eps ~ 1e-12), via EUP rsqrt
    ss = jnp.sum(x * x, axis=-1, keepdims=True)
    return x * jax.lax.rsqrt(jnp.maximum(ss, 1e-24))


# ----------------------------------------------------------------------------
# Single fused kernel: entire Regressor forward for one batch element
# ----------------------------------------------------------------------------

def _regressor_kernel(
    xc_ref, gb_ref,
    emb_w, misc, conv_w, rope_tab, qkn,
    wqkv, wo, ff1_w, ff1_b, ff2_w, pred_w,
    o_ref,
    xcat,                                 # VMEM scratch (ntot, dim)
    *, nseq, ntot, nreg, dim, heads, dh, depth, ksize, qk_scale,
):
    f32 = jnp.float32
    mm = lambda a, b: jnp.dot(a, b, preferred_element_type=f32)

    m = misc[...]                          # (2+depth+nreg, dim): biases + reg tokens
    gb = gb_ref[0]                         # (4*depth, dim); gammas pre-scaled by sqrt(dim)

    # --- prologue: proj_in folded into to_embed; cond branch dead in eval ---
    h = mm(xc_ref[0], emb_w[...]) + m[0:1]                     # (nseq, dim), 1 MXU push

    # --- ConvPositionEmbed: depthwise 'same' conv via sublane rolls with
    #     edge masks pre-baked into per-tap weights; exact GELU; residual ---
    pad = ksize // 2
    conv = jnp.zeros((nseq, dim), f32)
    for j in range(ksize):
        shift = (pad - j) % nseq
        hj = pltpu.roll(h, shift, axis=0) if shift else h
        conv = conv + hj * conv_w[j]                           # conv_w[j] = mask * weight
    h = _gelu(conv + m[1:2]) + h

    # --- token layout [main | register] (order-equivariant rewrite of the
    #     reference's register-token prepend; rotary positions match) ---
    xcat[pl.ds(0, nseq), :] = h
    xcat[pl.ds(nseq, nreg), :] = m[2 + depth:2 + depth + nreg]
    x = xcat[...]                                              # (ntot, dim)

    cos = rope_tab[0]                                          # (ntot, dh)
    sinm = rope_tab[1]                                         # rotate_half sign baked in

    def rope(t):
        tsw = jnp.concatenate([t[:, dh // 2:], t[:, :dh // 2]], axis=-1)
        return t * cos + tsw * sinm

    # --- transformer layers (depth=2, fully unrolled, x stays in vregs/VMEM) ---
    for l in range(depth):
        # AdaptiveRMSNorm (attention branch): gamma/beta computed in the wrapper
        attn_in = _l2norm(x) * gb[4 * l + 0:4 * l + 1] + gb[4 * l + 1:4 * l + 2]

        qkv = mm(attn_in, wqkv[l])                             # (ntot, 3*H*dh), ONE push
        outs = []
        for hh in range(heads):
            q = qkv[:, hh * dh:(hh + 1) * dh]
            k = qkv[:, (heads + hh) * dh:(heads + hh + 1) * dh]
            v = qkv[:, (2 * heads + hh) * dh:(2 * heads + hh + 1) * dh]
            q = rope(_l2norm(q) * qkn[(2 * l + 0) * heads + hh])   # gamma*sqrt(dh) baked
            k = rope(_l2norm(k) * qkn[(2 * l + 1) * heads + hh])
            sim = mm(q, k.T) * qk_scale
            sim = sim - jnp.max(sim, axis=-1, keepdims=True)
            p = jnp.exp(sim)
            p = p * pl.reciprocal(jnp.sum(p, axis=-1, keepdims=True), approx=True)
            outs.append(mm(p, v))                              # (ntot, dh)
        # single fused output projection over all heads
        x = mm(jnp.concatenate(outs, axis=-1), wo[l]) + x

        # AdaptiveRMSNorm (ff branch) + GEGLU feed-forward (inner dim 128-padded)
        ff_in = _l2norm(x) * gb[4 * l + 2:4 * l + 3] + gb[4 * l + 3:4 * l + 4]
        hid = mm(ff_in, ff1_w[l]) + ff1_b[l]                   # (ntot, 2*dim_pad), ONE push
        di = hid.shape[-1] // 2
        x = mm(_gelu(hid[:, di:]) * hid[:, :di], ff2_w[l]) + m[2 + l:3 + l] + x

    # --- drop register tokens; final RMSNorm gamma*sqrt(dim) folded into the
    #     lane-padded to_pred weight -> lane-dense store ---
    o_ref[0] = mm(_l2norm(x[:nseq]), pred_w[...])


# ----------------------------------------------------------------------------
# Parameter init (same logical parameterization as the PyTorch module)
# ----------------------------------------------------------------------------

def init_params(key, cfg):
    dim, Dh, H = cfg['dim'], cfg['dim_head'], cfg['heads']
    thd = cfg['time_hidden_dim']
    dim_inner_ff = int(dim * cfg['ff_mult'] * 2 / 3)
    cnt = [0]

    def rand(shape, scale=0.05):
        cnt[0] += 1
        return scale * jax.random.normal(
            jax.random.fold_in(key, cnt[0]), shape, jnp.float32)

    p = dict(
        proj_in_w=rand((cfg['dim_out'], cfg['dim_in_proj'])),
        proj_in_b=rand((cfg['dim_in_proj'],)),
        sinu_weights=rand((dim // 2,), 1.0),
        sinu_lin_w=rand((dim, thd)),
        sinu_lin_b=rand((thd,)),
        to_embed_w=rand((2 * cfg['dim_in_proj'] + cfg['dim_cond_emb'], dim)),
        to_embed_b=rand((dim,)),
        conv_w=rand((cfg['conv_kernel_size'], dim)),
        conv_b=rand((dim,)),
        register_tokens=rand((cfg['num_register_tokens'], dim), 1.0),
        final_norm_gamma=jnp.ones((dim,), jnp.float32),
        to_pred_w=rand((dim, cfg['dim_out'])),
        layers=[],
    )
    for _ in range(cfg['depth']):
        layer = dict(
            # AdaptiveRMSNorm init: zero weights, gamma bias = 1, beta bias = 0
            attn_gamma_w=jnp.zeros((thd, dim), jnp.float32),
            attn_gamma_b=jnp.ones((dim,), jnp.float32),
            attn_beta_w=jnp.zeros((thd, dim), jnp.float32),
            attn_beta_b=jnp.zeros((dim,), jnp.float32),
            to_qkv_w=rand((dim, 3 * H * Dh)),
            q_norm_gamma=jnp.ones((H, 1, Dh), jnp.float32),
            k_norm_gamma=jnp.ones((H, 1, Dh), jnp.float32),
            to_out_w=rand((H * Dh, dim)),
            ff_gamma_w=jnp.zeros((thd, dim), jnp.float32),
            ff_gamma_b=jnp.ones((dim,), jnp.float32),
            ff_beta_w=jnp.zeros((thd, dim), jnp.float32),
            ff_beta_b=jnp.zeros((dim,), jnp.float32),
            ff1_w=rand((dim, 2 * dim_inner_ff)),
            ff1_b=rand((2 * dim_inner_ff,)),
            ff2_w=rand((dim_inner_ff, dim)),
            ff2_b=rand((dim,)),
        )
        p['layers'].append(layer)
    return p


def pack_params(params, cfg):
    """One-time host-side packing: fold proj_in into to_embed, bake edge masks
    into conv taps, bake sqrt(dim_head) / sqrt(dim) scales into gammas / to_pred,
    zero-pad the GEGLU inner dim and the output lane dim, and coalesce all
    weights into 11 kernel-friendly arrays."""
    dim, H, Dh = cfg['dim'], cfg['heads'], cfg['dim_head']
    Nseq, R = cfg['seq_len'], cfg['num_register_tokens']
    K = cfg['conv_kernel_size']
    pad = K // 2
    dip, dce = cfg['dim_in_proj'], cfg['dim_cond_emb']
    depth = cfg['depth']
    dim_inner = int(dim * cfg['ff_mult'] * 2 / 3)
    dim_pad = ((dim_inner + 127) // 128) * 128
    out_pad = ((cfg['dim_out'] + 127) // 128) * 128
    f32 = np.float32

    P = {k: np.asarray(v, f32) for k, v in params.items() if k != 'layers'}
    layers = [{k: np.asarray(v, f32) for k, v in lyr.items()} for lyr in params['layers']]

    # fold proj_in into the x-rows of to_embed (cond branch is exactly zero in eval)
    emb = P['to_embed_w']   # rows: [x_proj | cond_emb | cond_proj(dead)]
    w_embed = np.concatenate([P['proj_in_w'] @ emb[:dip], emb[dip:dip + dce]], axis=0)
    b_embed = P['proj_in_b'] @ emb[:dip] + P['to_embed_b']

    # misc rows: [to_embed bias, conv bias, ff2 biases (depth), register tokens]
    misc = np.zeros((2 + depth + R, dim), f32)
    misc[0] = b_embed
    misc[1] = P['conv_b']
    for l, layer in enumerate(layers):
        misc[2 + l] = layer['ff2_b']
    misc[2 + depth:] = P['register_tokens']

    # depthwise conv taps with the 'same'-padding edge mask baked in
    conv_w_eff = np.zeros((K, Nseq, dim), f32)
    for j in range(K):
        for i in range(Nseq):
            if 0 <= i + j - pad < Nseq:
                conv_w_eff[j, i] = P['conv_w'][j]

    # rotary tables for [main | register] token order; rotate_half sign baked in
    positions = np.concatenate([np.arange(Nseq, dtype=f32),
                                np.full((R,), -10000.0, f32)])
    inv_freq = 1.0 / (cfg['rotary_theta'] ** (np.arange(0, Dh, 2, dtype=f32) / Dh))
    half = positions[:, None] * inv_freq[None, :]
    freqs = np.concatenate([half, half], axis=-1)                       # (Ntot, Dh)
    rope_tab = np.stack([np.cos(freqs),
                         np.concatenate([-np.sin(half), np.sin(half)], axis=-1)])

    qkn, wqkv, wo, ff1w, ff1b, ff2w = [], [], [], [], [], []
    ada_w, ada_b = [], []
    for layer in layers:
        wqkv.append(layer['to_qkv_w'])                                  # (dim, 3*H*Dh)
        wo.append(layer['to_out_w'])                                    # (H*Dh, dim)
        for gam in (layer['q_norm_gamma'], layer['k_norm_gamma']):      # (H, 1, Dh)
            for hh in range(H):
                qkn.append(gam[hh] * math.sqrt(Dh))                     # scale baked
        f1, b1 = layer['ff1_w'], layer['ff1_b']
        w1 = np.zeros((dim, 2 * dim_pad), f32)
        w1[:, :dim_inner] = f1[:, :dim_inner]                           # value
        w1[:, dim_pad:dim_pad + dim_inner] = f1[:, dim_inner:]          # gate
        ff1w.append(w1)
        bb = np.zeros((1, 2 * dim_pad), f32)
        bb[0, :dim_inner] = b1[:dim_inner]
        bb[0, dim_pad:dim_pad + dim_inner] = b1[dim_inner:]
        ff1b.append(bb)
        w2 = np.zeros((dim_pad, dim), f32)
        w2[:dim_inner] = layer['ff2_w']
        ff2w.append(w2)
        ada_w += [layer['attn_gamma_w'], layer['attn_beta_w'],
                  layer['ff_gamma_w'], layer['ff_beta_w']]
        ada_b += [layer['attn_gamma_b'], layer['attn_beta_b'],
                  layer['ff_gamma_b'], layer['ff_beta_b']]

    # final RMSNorm gamma * sqrt(dim) folded into a lane-padded to_pred
    pred_w = np.zeros((dim, out_pad), f32)
    pred_w[:, :cfg['dim_out']] = (
        P['to_pred_w'] * (math.sqrt(dim) * P['final_norm_gamma'])[:, None])

    # fold the AdaRMSNorm sqrt(dim) scale into the (wrapper-computed) gammas
    gb_scale = np.ones((4 * depth,), f32)
    gb_scale[0::4] = math.sqrt(dim)
    gb_scale[2::4] = math.sqrt(dim)

    weights = [w_embed, misc, conv_w_eff, rope_tab, np.stack(qkn),
               np.stack(wqkv), np.stack(wo), np.stack(ff1w), np.stack(ff1b),
               np.stack(ff2w), pred_w]
    return dict(
        weights=[jnp.asarray(w, jnp.float32) for w in weights],
        sinu_weights=jnp.asarray(P['sinu_weights'], jnp.float32),
        sinu_lin_w=jnp.asarray(P['sinu_lin_w'], jnp.float32),
        sinu_lin_b=jnp.asarray(P['sinu_lin_b'], jnp.float32),
        ada_w=jnp.asarray(np.stack(ada_w), jnp.float32),
        ada_b=jnp.asarray(np.stack(ada_b), jnp.float32),
        gb_scale=jnp.asarray(gb_scale, jnp.float32),
        out_pad=out_pad,
    )


# ----------------------------------------------------------------------------
# Forward wrapper: one fused pallas_call over grid=(batch,)
# ----------------------------------------------------------------------------

def _zero_idx(*_, nd):
    return (0,) * nd


def regressor_forward(packed, cfg, x, times, cond, cond_emb):
    """Eval-mode Regressor.forward (no target / self_attn_mask / cond_mask).
    With cond_mask=None in eval the projected cond is multiplied by zero, so
    the cond branch is dropped as provably dead work."""
    del cond  # dead in inference mode; kept in the signature for API parity
    B, Nseq, _ = x.shape
    dim, depth, dim_out = cfg['dim'], cfg['depth'], cfg['dim_out']
    Ntot = Nseq + cfg['num_register_tokens']
    out_pad = packed['out_pad']

    # time conditioning hoisted out of the kernel: learned-sinusoid Fourier
    # features, Linear+SiLU, and all per-layer AdaRMSNorm gammas/betas live in
    # one tiny XLA fusion and enter the kernel as a (B, 4*depth, dim) tensor.
    t = times[:, None].astype(jnp.float32) * packed['sinu_weights'][None, :] * (2.0 * math.pi)
    fourier = jnp.concatenate([jnp.sin(t), jnp.cos(t)], axis=-1)        # (B, dim)
    th = fourier @ packed['sinu_lin_w'] + packed['sinu_lin_b']
    time_emb = th * jax.nn.sigmoid(th)                                   # SiLU
    gb = jnp.einsum('bt,ktd->bkd', time_emb, packed['ada_w']) + packed['ada_b'][None]
    gb = (gb * packed['gb_scale'][None, :, None]).astype(jnp.float32)    # (B, 4*depth, dim)

    # x and cond_emb go through to_embed together (proj_in folded host-side)
    xc = jnp.concatenate([x, cond_emb], axis=-1).astype(jnp.float32)     # (B, Nseq, dim_out+dce)

    weights = packed['weights']
    in_specs = [
        pl.BlockSpec((1, Nseq, xc.shape[-1]), lambda b: (b, 0, 0)),
        pl.BlockSpec((1, 4 * depth, dim), lambda b: (b, 0, 0)),
    ] + [pl.BlockSpec(w.shape, partial(_zero_idx, nd=w.ndim)) for w in weights]

    kernel = partial(
        _regressor_kernel,
        nseq=Nseq, ntot=Ntot, nreg=cfg['num_register_tokens'],
        dim=dim, heads=cfg['heads'], dh=cfg['dim_head'],
        depth=depth, ksize=cfg['conv_kernel_size'], qk_scale=cfg['qk_norm_scale'],
    )
    # TODO(synk): on single-TC v5e/v6e, folding both batch elements into one
    # grid step (stacking along sublanes) would avoid a second grid-step
    # prologue; kept grid=(B,) parallel so v7x's two TensorCores both get work.
    out = pl.pallas_call(
        kernel,
        out_shape=jax.ShapeDtypeStruct((B, Nseq, out_pad), jnp.float32),
        grid=(B,),
        in_specs=in_specs,
        out_specs=pl.BlockSpec((1, Nseq, out_pad), lambda b: (b, 0, 0)),
        scratch_shapes=[pltpu.VMEM((Ntot, dim), jnp.float32)],
        compiler_params=pltpu.CompilerParams(
            dimension_semantics=("parallel",)),
    )(xc, gb, *weights)
    return out[..., :dim_out]                      # drop the lane padding


if __name__ == "__main__":
    cfg = CFG
    key = jax.random.PRNGKey(0)
    kx, kc, ke, kt, kp = jax.random.split(key, 5)
    B, N = cfg['batch'], cfg['seq_len']

    x = jax.random.normal(kx, (B, N, cfg['dim_out']), jnp.float32)
    cond = jax.random.normal(kc, (B, N, cfg['dim_out']), jnp.float32)
    cond_emb = jax.random.normal(ke, (B, N, cfg['dim_cond_emb']), jnp.float32)
    times = jax.random.uniform(kt, (B,), jnp.float32)

    params = init_params(kp, cfg)
    packed = pack_params(params, cfg)
    fwd = jax.jit(partial(regressor_forward, packed, cfg))
    out = fwd(x, times, cond, cond_emb)
    jax.block_until_ready(out)
    assert out.shape == (B, N, cfg['dim_out'])
    print("KERNEL_OK")
</pallas_src>

<mosaic_0001>
module attributes {stable_mosaic.version = 11 : i64} {
  func.func @_regressor_kernel(%arg0: i32, %arg1: memref<1x16x30xf32, #tpu.memory_space<vmem>>, %arg2: memref<1x8x64xf32, #tpu.memory_space<vmem>>, %arg3: memref<30x64xf32, #tpu.memory_space<vmem>>, %arg4: memref<8x64xf32, #tpu.memory_space<vmem>>, %arg5: memref<7x16x64xf32, #tpu.memory_space<vmem>>, %arg6: memref<2x20x16xf32, #tpu.memory_space<vmem>>, %arg7: memref<16x1x16xf32, #tpu.memory_space<vmem>>, %arg8: memref<2x64x192xf32, #tpu.memory_space<vmem>>, %arg9: memref<2x64x64xf32, #tpu.memory_space<vmem>>, %arg10: memref<2x64x512xf32, #tpu.memory_space<vmem>>, %arg11: memref<2x1x512xf32, #tpu.memory_space<vmem>>, %arg12: memref<2x256x64xf32, #tpu.memory_space<vmem>>, %arg13: memref<64x128xf32, #tpu.memory_space<vmem>>, %arg14: memref<1x16x128xf32, #tpu.memory_space<vmem>>, %arg15: memref<20x64xf32, #tpu.memory_space<vmem>>) attributes {dimension_semantics = [#tpu.dimension_semantics<parallel>], iteration_bounds = array<i64: 2>, scalar_prefetch = 0 : i64, scratch_operands = 1 : i64, tpu.core_type = #tpu.core_type<tc>, window_params = [{transform_indices = @transform_0, window_bounds = array<i64: 1, 16, 30>}, {transform_indices = @transform_1, window_bounds = array<i64: 1, 8, 64>}, {pipeline_mode = #tpu.pipeline_mode<synchronous>, transform_indices = @transform_2, window_bounds = array<i64: 30, 64>}, {pipeline_mode = #tpu.pipeline_mode<synchronous>, transform_indices = @transform_3, window_bounds = array<i64: 8, 64>}, {pipeline_mode = #tpu.pipeline_mode<synchronous>, transform_indices = @transform_4, window_bounds = array<i64: 7, 16, 64>}, {pipeline_mode = #tpu.pipeline_mode<synchronous>, transform_indices = @transform_5, window_bounds = array<i64: 2, 20, 16>}, {pipeline_mode = #tpu.pipeline_mode<synchronous>, transform_indices = @transform_6, window_bounds = array<i64: 16, 1, 16>}, {pipeline_mode = #tpu.pipeline_mode<synchronous>, transform_indices = @transform_7, window_bounds = array<i64: 2, 64, 192>}, {pipeline_mode = #tpu.pipeline_mode<synchronous>, transform_indices = @transform_8, window_bounds = array<i64: 2, 64, 64>}, {pipeline_mode = #tpu.pipeline_mode<synchronous>, transform_indices = @transform_9, window_bounds = array<i64: 2, 64, 512>}, {pipeline_mode = #tpu.pipeline_mode<synchronous>, transform_indices = @transform_10, window_bounds = array<i64: 2, 1, 512>}, {pipeline_mode = #tpu.pipeline_mode<synchronous>, transform_indices = @transform_11, window_bounds = array<i64: 2, 256, 64>}, {pipeline_mode = #tpu.pipeline_mode<synchronous>, transform_indices = @transform_12, window_bounds = array<i64: 64, 128>}, {transform_indices = @transform_13, window_bounds = array<i64: 1, 16, 128>}]} {
    %c0 = arith.constant 0 : index
    %c0_0 = arith.constant 0 : index
    %0 = vector.load %arg4[%c0, %c0_0] : memref<8x64xf32, #tpu.memory_space<vmem>>, vector<8x64xf32>
    %c0_1 = arith.constant 0 : index
    %c0_2 = arith.constant 0 : index
    %c0_3 = arith.constant 0 : index
    %1 = vector.load %arg2[%c0_1, %c0_2, %c0_3] : memref<1x8x64xf32, #tpu.memory_space<vmem>>, vector<1x8x64xf32>
    %2 = vector.shape_cast %1 : vector<1x8x64xf32> to vector<8x64xf32>
    %c0_4 = arith.constant 0 : index
    %c0_5 = arith.constant 0 : index
    %c0_6 = arith.constant 0 : index
    %3 = vector.load %arg1[%c0_4, %c0_5, %c0_6] : memref<1x16x30xf32, #tpu.memory_space<vmem>>, vector<1x16x30xf32>
    %4 = vector.shape_cast %3 : vector<1x16x30xf32> to vector<16x30xf32>
    %c0_7 = arith.constant 0 : index
    %c0_8 = arith.constant 0 : index
    %5 = vector.load %arg3[%c0_7, %c0_8] : memref<30x64xf32, #tpu.memory_space<vmem>>, vector<30x64xf32>
    %cst = arith.constant dense<0.000000e+00> : vector<16x64xf32>
    %6 = tpu.matmul %4, %5, %cst {dimension_numbers = #tpu.dot_dimension_numbers<[1], [0], [0], [1], [0, 0, 1, 1], [], []>} : vector<16x30xf32>, vector<30x64xf32>, vector<16x64xf32> -> vector<16x64xf32>
    %7 = vector.extract_strided_slice %0 {offsets = [0, 0], sizes = [1, 64], strides = [1, 1]} : vector<8x64xf32> to vector<1x64xf32>
    %8 = vector.broadcast %7 : vector<1x64xf32> to vector<16x64xf32>
    %9 = arith.addf %6, %8 : vector<16x64xf32>
    %cst_9 = arith.constant 0.000000e+00 : f32
    %10 = vector.broadcast %cst_9 : f32 to vector<16x64xf32>
    %c3_i32 = arith.constant 3 : i32
    %11 = tpu.dynamic_rotate %9 by %c3_i32 dim 0 : vector<16x64xf32>, i32 -> vector<16x64xf32>
    %c0_10 = arith.constant 0 : index
    %c0_11 = arith.constant 0 : index
    %c0_12 = arith.constant 0 : index
    %12 = vector.load %arg5[%c0_10, %c0_11, %c0_12] : memref<7x16x64xf32, #tpu.memory_space<vmem>>, vector<1x16x64xf32>
    %13 = vector.shape_cast %12 : vector<1x16x64xf32> to vector<16x64xf32>
    %14 = arith.mulf %11, %13 : vector<16x64xf32>
    %15 = arith.addf %10, %14 : vector<16x64xf32>
    %c2_i32 = arith.constant 2 : i32
    %16 = tpu.dynamic_rotate %9 by %c2_i32 dim 0 : vector<16x64xf32>, i32 -> vector<16x64xf32>
    %c1 = arith.constant 1 : index
    %c0_13 = arith.constant 0 : index
    %c0_14 = arith.constant 0 : index
    %17 = vector.load %arg5[%c1, %c0_13, %c0_14] : memref<7x16x64xf32, #tpu.memory_space<vmem>>, vector<1x16x64xf32>
    %18 = vector.shape_cast %17 : vector<1x16x64xf32> to vector<16x64xf32>
    %19 = arith.mulf %16, %18 : vector<16x64xf32>
    %20 = arith.addf %15, %19 : vector<16x64xf32>
    %c1_i32 = arith.constant 1 : i32
    %21 = tpu.dynamic_rotate %9 by %c1_i32 dim 0 : vector<16x64xf32>, i32 -> vector<16x64xf32>
    %c2 = arith.constant 2 : index
    %c0_15 = arith.constant 0 : index
    %c0_16 = arith.constant 0 : index
    %22 = vector.load %arg5[%c2, %c0_15, %c0_16] : memref<7x16x64xf32, #tpu.memory_space<vmem>>, vector<1x16x64xf32>
    %23 = vector.shape_cast %22 : vector<1x16x64xf32> to vector<16x64xf32>
    %24 = arith.mulf %21, %23 : vector<16x64xf32>
    %25 = arith.addf %20, %24 : vector<16x64xf32>
    %c3 = arith.constant 3 : index
    %c0_17 = arith.constant 0 : index
    %c0_18 = arith.constant 0 : index
    %26 = vector.load %arg5[%c3, %c0_17, %c0_18] : memref<7x16x64xf32, #tpu.memory_space<vmem>>, vector<1x16x64xf32>
    %27 = vector.shape_cast %26 : vector<1x16x64xf32> to vector<16x64xf32>
    %28 = arith.mulf %9, %27 : vector<16x64xf32>
    %29 = arith.addf %25, %28 : vector<16x64xf32>
    %c15_i32 = arith.constant 15 : i32
    %30 = tpu.dynamic_rotate %9 by %c15_i32 dim 0 : vector<16x64xf32>, i32 -> vector<16x64xf32>
    %c4 = arith.constant 4 : index
    %c0_19 = arith.constant 0 : index
    %c0_20 = arith.constant 0 : index
    %31 = vector.load %arg5[%c4, %c0_19, %c0_20] : memref<7x16x64xf32, #tpu.memory_space<vmem>>, vector<1x16x64xf32>
    %32 = vector.shape_cast %31 : vector<1x16x64xf32> to vector<16x64xf32>
    %33 = arith.mulf %30, %32 : vector<16x64xf32>
    %34 = arith.addf %29, %33 : vector<16x64xf32>
    %c14_i32 = arith.constant 14 : i32
    %35 = tpu.dynamic_rotate %9 by %c14_i32 dim 0 : vector<16x64xf32>, i32 -> vector<16x64xf32>
    %c5 = arith.constant 5 : index
    %c0_21 = arith.constant 0 : index
    %c0_22 = arith.constant 0 : index
    %36 = vector.load %arg5[%c5, %c0_21, %c0_22] : memref<7x16x64xf32, #tpu.memory_space<vmem>>, vector<1x16x64xf32>
    %37 = vector.shape_cast %36 : vector<1x16x64xf32> to vector<16x64xf32>
    %38 = arith.mulf %35, %37 : vector<16x64xf32>
    %39 = arith.addf %34, %38 : vector<16x64xf32>
    %c13_i32 = arith.constant 13 : i32
    %40 = tpu.dynamic_rotate %9 by %c13_i32 dim 0 : vector<16x64xf32>, i32 -> vector<16x64xf32>
    %c6 = arith.constant 6 : index
    %c0_23 = arith.constant 0 : index
    %c0_24 = arith.constant 0 : index
    %41 = vector.load %arg5[%c6, %c0_23, %c0_24] : memref<7x16x64xf32, #tpu.memory_space<vmem>>, vector<1x16x64xf32>
    %42 = vector.shape_cast %41 : vector<1x16x64xf32> to vector<16x64xf32>
    %43 = arith.mulf %40, %42 : vector<16x64xf32>
    %44 = arith.addf %39, %43 : vector<16x64xf32>
    %45 = vector.extract_strided_slice %0 {offsets = [1, 0], sizes = [1, 64], strides = [1, 1]} : vector<8x64xf32> to vector<1x64xf32>
    %46 = vector.broadcast %45 : vector<1x64xf32> to vector<16x64xf32>
    %47 = arith.addf %44, %46 : vector<16x64xf32>
    %cst_25 = arith.constant 5.000000e-01 : f32
    %48 = vector.broadcast %cst_25 : f32 to vector<16x64xf32>
    %49 = arith.mulf %48, %47 : vector<16x64xf32>
    %cst_26 = arith.constant 0.707106769 : f32
    %50 = vector.broadcast %cst_26 : f32 to vector<16x64xf32>
    %51 = arith.mulf %47, %50 : vector<16x64xf32>
    %52 = math.absf %51 : vector<16x64xf32>
    %cst_27 = arith.constant 0.327591091 : f32
    %53 = vector.broadcast %cst_27 : f32 to vector<16x64xf32>
    %54 = arith.mulf %53, %52 : vector<16x64xf32>
    %cst_28 = arith.constant 1.000000e+00 : f32
    %55 = vector.broadcast %cst_28 : f32 to vector<16x64xf32>
    %56 = arith.addf %55, %54 : vector<16x64xf32>
    %cst_29 = arith.constant 1.000000e+00 : f32
    %57 = vector.broadcast %cst_29 : f32 to vector<16x64xf32>
    %58 = arith.divf %57, %56 : vector<16x64xf32>
    %cst_30 = arith.constant 1.06140542 : f32
    %59 = vector.broadcast %cst_30 : f32 to vector<16x64xf32>
    %60 = arith.mulf %59, %58 : vector<16x64xf32>
    %cst_31 = arith.constant 1.45315206 : f32
    %61 = vector.broadcast %cst_31 : f32 to vector<16x64xf32>
    %62 = arith.subf %60, %61 : vector<16x64xf32>
    %63 = arith.mulf %62, %58 : vector<16x64xf32>
    %cst_32 = arith.constant 1.42141378 : f32
    %64 = vector.broadcast %cst_32 : f32 to vector<16x64xf32>
    %65 = arith.addf %63, %64 : vector<16x64xf32>
    %66 = arith.mulf %65, %58 : vector<16x64xf32>
    %cst_33 = arith.constant 0.284496725 : f32
    %67 = vector.broadcast %cst_33 : f32 to vector<16x64xf32>
    %68 = arith.subf %66, %67 : vector<16x64xf32>
    %69 = arith.mulf %68, %58 : vector<16x64xf32>
    %cst_34 = arith.constant 0.254829586 : f32
    %70 = vector.broadcast %cst_34 : f32 to vector<16x64xf32>
    %71 = arith.addf %69, %70 : vector<16x64xf32>
    %72 = arith.mulf %71, %58 : vector<16x64xf32>
    %cst_35 = arith.constant 0.000000e+00 : f32
    %73 = vector.broadcast %cst_35 : f32 to vector<16x64xf32>
    %74 = arith.subf %73, %52 : vector<16x64xf32>
    %75 = arith.mulf %74, %52 : vector<16x64xf32>
    %76 = math.exp %75 : vector<16x64xf32>
    %77 = arith.mulf %72, %76 : vector<16x64xf32>
    %cst_36 = arith.constant 1.000000e+00 : f32
    %78 = vector.broadcast %cst_36 : f32 to vector<16x64xf32>
    %79 = arith.subf %78, %77 : vector<16x64xf32>
    %cst_37 = arith.constant 0.000000e+00 : f32
    %80 = vector.broadcast %cst_37 : f32 to vector<16x64xf32>
    %81 = arith.cmpf oge, %51, %80 : vector<16x64xf32>
    %cst_38 = arith.constant 0.000000e+00 : f32
    %82 = vector.broadcast %cst_38 : f32 to vector<16x64xf32>
    %83 = arith.subf %82, %79 : vector<16x64xf32>
    %84 = arith.select %81, %79, %83 : vector<16x64xi1>, vector<16x64xf32>
    %cst_39 = arith.constant 1.000000e+00 : f32
    %85 = vector.broadcast %cst_39 : f32 to vector<16x64xf32>
    %86 = arith.addf %85, %84 : vector<16x64xf32>
    %87 = arith.mulf %49, %86 : vector<16x64xf32>
    %88 = arith.addf %87, %9 : vector<16x64xf32>
    %c0_40 = arith.constant 0 : index
    %c0_41 = arith.constant 0 : index
    %89 = vector.load %arg15[%c0_40, %c0_41] : memref<20x64xf32, #tpu.memory_space<vmem>>, vector<16x64xf32>
    tpu.vector_store %arg15[%c0_40, %c0_41], %88 {strides = array<i32>} : memref<20x64xf32, #tpu.memory_space<vmem>>, vector<16x64xf32>,
    %90 = vector.extract_strided_slice %0 {offsets = [4, 0], sizes = [4, 64], strides = [1, 1]} : vector<8x64xf32> to vector<4x64xf32>
    %c16 = arith.constant 16 : index
    %c0_42 = arith.constant 0 : index
    %91 = vector.load %arg15[%c16, %c0_42] : memref<20x64xf32, #tpu.memory_space<vmem>>, vector<4x64xf32>
    tpu.vector_store %arg15[%c16, %c0_42], %90 {strides = array<i32>} : memref<20x64xf32, #tpu.memory_space<vmem>>, vector<4x64xf32>,
    %c0_43 = arith.constant 0 : index
    %c0_44 = arith.constant 0 : index
    %92 = vector.load %arg15[%c0_43, %c0_44] : memref<20x64xf32, #tpu.memory_space<vmem>>, vector<20x64xf32>
    %c0_45 = arith.constant 0 : index
    %c0_46 = arith.constant 0 : index
    %c0_47 = arith.constant 0 : index
    %93 = vector.load %arg6[%c0_45, %c0_46, %c0_47] : memref<2x20x16xf32, #tpu.memory_space<vmem>>, vector<1x20x16xf32>
    %94 = vector.shape_cast %93 : vector<1x20x16xf32> to vector<20x16xf32>
    %c1_48 = arith.constant 1 : index
    %c0_49 = arith.constant 0 : index
    %c0_50 = arith.constant 0 : index
    %95 = vector.load %arg6[%c1_48, %c0_49, %c0_50] : memref<2x20x16xf32, #tpu.memory_space<vmem>>, vector<1x20x16xf32>
    %96 = vector.shape_cast %95 : vector<1x20x16xf32> to vector<20x16xf32>
    %97 = arith.mulf %92, %92 : vector<20x64xf32>
    %cst_51 = arith.constant dense<0.000000e+00> : vector<20xf32>
    %98 = vector.multi_reduction <add>, %97, %cst_51 [1] : vector<20x64xf32> to vector<20xf32>
    %99 = vector.shape_cast %98 : vector<20xf32> to vector<20x1xf32>
    %cst_52 = arith.constant 1.000000e-24 : f32
    %100 = vector.broadcast %cst_52 : f32 to vector<20x1xf32>
    %101 = arith.maximumf %99, %100 : vector<20x1xf32>
    %102 = math.rsqrt %101 : vector<20x1xf32>
    %103 = vector.broadcast %102 : vector<20x1xf32> to vector<20x64xf32>
    %104 = arith.mulf %92, %103 : vector<20x64xf32>
    %105 = vector.extract_strided_slice %2 {offsets = [0, 0], sizes = [1, 64], strides = [1, 1]} : vector<8x64xf32> to vector<1x64xf32>
    %106 = vector.broadcast %105 : vector<1x64xf32> to vector<20x64xf32>
    %107 = arith.mulf %104, %106 : vector<20x64xf32>
    %108 = vector.extract_strided_slice %2 {offsets = [1, 0], sizes = [1, 64], strides = [1, 1]} : vector<8x64xf32> to vector<1x64xf32>
    %109 = vector.broadcast %108 : vector<1x64xf32> to vector<20x64xf32>
    %110 = arith.addf %107, %109 : vector<20x64xf32>
    %c0_53 = arith.constant 0 : index
    %c0_54 = arith.constant 0 : index
    %c0_55 = arith.constant 0 : index
    %111 = vector.load %arg8[%c0_53, %c0_54, %c0_55] : memref<2x64x192xf32, #tpu.memory_space<vmem>>, vector<1x64x192xf32>
    %112 = vector.shape_cast %111 : vector<1x64x192xf32> to vector<64x192xf32>
    %cst_56 = arith.constant dense<0.000000e+00> : vector<20x192xf32>
    %113 = tpu.matmul %110, %112, %cst_56 {dimension_numbers = #tpu.dot_dimension_numbers<[1], [0], [0], [1], [0, 0, 1, 1], [], []>} : vector<20x64xf32>, vector<64x192xf32>, vector<20x192xf32> -> vector<20x192xf32>
    %114 = vector.extract_strided_slice %113 {offsets = [0, 0], sizes = [20, 16], strides = [1, 1]} : vector<20x192xf32> to vector<20x16xf32>
    %115 = vector.extract_strided_slice %113 {offsets = [0, 64], sizes = [20, 16], strides = [1, 1]} : vector<20x192xf32> to vector<20x16xf32>
    %116 = vector.extract_strided_slice %113 {offsets = [0, 128], sizes = [20, 16], strides = [1, 1]} : vector<20x192xf32> to vector<20x16xf32>
    %117 = arith.mulf %114, %114 : vector<20x16xf32>
    %cst_57 = arith.constant dense<0.000000e+00> : vector<20xf32>
    %118 = vector.multi_reduction <add>, %117, %cst_57 [1] : vector<20x16xf32> to vector<20xf32>
    %119 = vector.shape_cast %118 : vector<20xf32> to vector<20x1xf32>
    %cst_58 = arith.constant 1.000000e-24 : f32
    %120 = vector.broadcast %cst_58 : f32 to vector<20x1xf32>
    %121 = arith.maximumf %119, %120 : vector<20x1xf32>
    %122 = math.rsqrt %121 : vector<20x1xf32>
    %123 = vector.broadcast %122 : vector<20x1xf32> to vector<20x16xf32>
    %124 = arith.mulf %114, %123 : vector<20x16xf32>
    %c0_59 = arith.constant 0 : index
    %c0_60 = arith.constant 0 : index
    %c0_61 = arith.constant 0 : index
    %125 = vector.load %arg7[%c0_59, %c0_60, %c0_61] : memref<16x1x16xf32, #tpu.memory_space<vmem>>, vector<1x1x16xf32>
    %126 = vector.shape_cast %125 : vector<1x1x16xf32> to vector<1x16xf32>
    %127 = vector.broadcast %126 : vector<1x16xf32> to vector<20x16xf32>
    %128 = arith.mulf %124, %127 : vector<20x16xf32>
    %129 = vector.extract_strided_slice %128 {offsets = [0, 8], sizes = [20, 8], strides = [1, 1]} : vector<20x16xf32> to vector<20x8xf32>
    %130 = vector.extract_strided_slice %128 {offsets = [0, 0], sizes = [20, 8], strides = [1, 1]} : vector<20x16xf32> to vector<20x8xf32>
    %131 = tpu.concatenate %129, %130 in 1 : vector<20x8xf32>, vector<20x8xf32> -> vector<20x16xf32>
    %132 = arith.mulf %128, %94 : vector<20x16xf32>
    %133 = arith.mulf %131, %96 : vector<20x16xf32>
    %134 = arith.addf %132, %133 : vector<20x16xf32>
    %135 = arith.mulf %115, %115 : vector<20x16xf32>
    %cst_62 = arith.constant dense<0.000000e+00> : vector<20xf32>
    %136 = vector.multi_reduction <add>, %135, %cst_62 [1] : vector<20x16xf32> to vector<20xf32>
    %137 = vector.shape_cast %136 : vector<20xf32> to vector<20x1xf32>
    %cst_63 = arith.constant 1.000000e-24 : f32
    %138 = vector.broadcast %cst_63 : f32 to vector<20x1xf32>
    %139 = arith.maximumf %137, %138 : vector<20x1xf32>
    %140 = math.rsqrt %139 : vector<20x1xf32>
    %141 = vector.broadcast %140 : vector<20x1xf32> to vector<20x16xf32>
    %142 = arith.mulf %115, %141 : vector<20x16xf32>
    %c4_64 = arith.constant 4 : index
    %c0_65 = arith.constant 0 : index
    %c0_66 = arith.constant 0 : index
    %143 = vector.load %arg7[%c4_64, %c0_65, %c0_66] : memref<16x1x16xf32, #tpu.memory_space<vmem>>, vector<1x1x16xf32>
    %144 = vector.shape_cast %143 : vector<1x1x16xf32> to vector<1x16xf32>
    %145 = vector.broadcast %144 : vector<1x16xf32> to vector<20x16xf32>
    %146 = arith.mulf %142, %145 : vector<20x16xf32>
    %147 = vector.extract_strided_slice %146 {offsets = [0, 8], sizes = [20, 8], strides = [1, 1]} : vector<20x16xf32> to vector<20x8xf32>
    %148 = vector.extract_strided_slice %146 {offsets = [0, 0], sizes = [20, 8], strides = [1, 1]} : vector<20x16xf32> to vector<20x8xf32>
    %149 = tpu.concatenate %147, %148 in 1 : vector<20x8xf32>, vector<20x8xf32> -> vector<20x16xf32>
    %150 = arith.mulf %146, %94 : vector<20x16xf32>
    %151 = arith.mulf %149, %96 : vector<20x16xf32>
    %152 = arith.addf %150, %151 : vector<20x16xf32>
    %153 = tpu.transpose %152, [1, 0] : vector<20x16xf32> -> vector<16x20xf32>
    %cst_67 = arith.constant dense<0.000000e+00> : vector<20x20xf32>
    %154 = tpu.matmul %134, %153, %cst_67 {dimension_numbers = #tpu.dot_dimension_numbers<[1], [0], [0], [1], [0, 0, 1, 1], [], []>} : vector<20x16xf32>, vector<16x20xf32>, vector<20x20xf32> -> vector<20x20xf32>
    %cst_68 = arith.constant 1.000000e+01 : f32
    %155 = vector.broadcast %cst_68 : f32 to vector<20x20xf32>
    %156 = arith.mulf %154, %155 : vector<20x20xf32>
    %cst_69 = arith.constant dense<0xFF800000> : vector<20xf32>
    %157 = vector.multi_reduction <maximumf>, %156, %cst_69 [1] : vector<20x20xf32> to vector<20xf32>
    %158 = vector.shape_cast %157 : vector<20xf32> to vector<20x1xf32>
    %159 = vector.broadcast %158 : vector<20x1xf32> to vector<20x20xf32>
    %160 = arith.subf %156, %159 : vector<20x20xf32>
    %161 = math.exp %160 : vector<20x20xf32>
    %cst_70 = arith.constant dense<0.000000e+00> : vector<20xf32>
    %162 = vector.multi_reduction <add>, %161, %cst_70 [1] : vector<20x20xf32> to vector<20xf32>
    %163 = vector.shape_cast %162 : vector<20xf32> to vector<20x1xf32>
    %164 = tpu.reciprocal %163 {approx = true} : vector<20x1xf32> -> vector<20x1xf32>
    %165 = vector.broadcast %164 : vector<20x1xf32> to vector<20x20xf32>
    %166 = arith.mulf %161, %165 : vector<20x20xf32>
    %cst_71 = arith.constant dense<0.000000e+00> : vector<20x16xf32>
    %167 = tpu.matmul %166, %116, %cst_71 {dimension_numbers = #tpu.dot_dimension_numbers<[1], [0], [0], [1], [0, 0, 1, 1], [], []>} : vector<20x20xf32>, vector<20x16xf32>, vector<20x16xf32> -> vector<20x16xf32>
    %168 = vector.extract_strided_slice %113 {offsets = [0, 16], sizes = [20, 16], strides = [1, 1]} : vector<20x192xf32> to vector<20x16xf32>
    %169 = vector.extract_strided_slice %113 {offsets = [0, 80], sizes = [20, 16], strides = [1, 1]} : vector<20x192xf32> to vector<20x16xf32>
    %170 = vector.extract_strided_slice %113 {offsets = [0, 144], sizes = [20, 16], strides = [1, 1]} : vector<20x192xf32> to vector<20x16xf32>
    %171 = arith.mulf %168, %168 : vector<20x16xf32>
    %cst_72 = arith.constant dense<0.000000e+00> : vector<20xf32>
    %172 = vector.multi_reduction <add>, %171, %cst_72 [1] : vector<20x16xf32> to vector<20xf32>
    %173 = vector.shape_cast %172 : vector<20xf32> to vector<20x1xf32>
    %cst_73 = arith.constant 1.000000e-24 : f32
    %174 = vector.broadcast %cst_73 : f32 to vector<20x1xf32>
    %175 = arith.maximumf %173, %174 : vector<20x1xf32>
    %176 = math.rsqrt %175 : vector<20x1xf32>
    %177 = vector.broadcast %176 : vector<20x1xf32> to vector<20x16xf32>
    %178 = arith.mulf %168, %177 : vector<20x16xf32>
    %c1_74 = arith.constant 1 : index
    %c0_75 = arith.constant 0 : index
    %c0_76 = arith.constant 0 : index
    %179 = vector.load %arg7[%c1_74, %c0_75, %c0_76] : memref<16x1x16xf32, #tpu.memory_space<vmem>>, vector<1x1x16xf32>
    %180 = vector.shape_cast %179 : vector<1x1x16xf32> to vector<1x16xf32>
    %181 = vector.broadcast %180 : vector<1x16xf32> to vector<20x16xf32>
    %182 = arith.mulf %178, %181 : vector<20x16xf32>
    %183 = vector.extract_strided_slice %182 {offsets = [0, 8], sizes = [20, 8], strides = [1, 1]} : vector<20x16xf32> to vector<20x8xf32>
    %184 = vector.extract_strided_slice %182 {offsets = [0, 0], sizes = [20, 8], strides = [1, 1]} : vector<20x16xf32> to vector<20x8xf32>
    %185 = tpu.concatenate %183, %184 in 1 : vector<20x8xf32>, vector<20x8xf32> -> vector<20x16xf32>
    %186 = arith.mulf %182, %94 : vector<20x16xf32>
    %187 = arith.mulf %185, %96 : vector<20x16xf32>
    %188 = arith.addf %186, %187 : vector<20x16xf32>
    %189 = arith.mulf %169, %169 : vector<20x16xf32>
    %cst_77 = arith.constant dense<0.000000e+00> : vector<20xf32>
    %190 = vector.multi_reduction <add>, %189, %cst_77 [1] : vector<20x16xf32> to vector<20xf32>
    %191 = vector.shape_cast %190 : vector<20xf32> to vector<20x1xf32>
    %cst_78 = arith.constant 1.000000e-24 : f32
    %192 = vector.broadcast %cst_78 : f32 to vector<20x1xf32>
    %193 = arith.maximumf %191, %192 : vector<20x1xf32>
    %194 = math.rsqrt %193 : vector<20x1xf32>
    %195 = vector.broadcast %194 : vector<20x1xf32> to vector<20x16xf32>
    %196 = arith.mulf %169, %195 : vector<20x16xf32>
    %c5_79 = arith.constant 5 : index
    %c0_80 = arith.constant 0 : index
    %c0_81 = arith.constant 0 : index
    %197 = vector.load %arg7[%c5_79, %c0_80, %c0_81] : memref<16x1x16xf32, #tpu.memory_space<vmem>>, vector<1x1x16xf32>
    %198 = vector.shape_cast %197 : vector<1x1x16xf32> to vector<1x16xf32>
    %199 = vector.broadcast %198 : vector<1x16xf32> to vector<20x16xf32>
    %200 = arith.mulf %196, %199 : vector<20x16xf32>
    %201 = vector.extract_strided_slice %200 {offsets = [0, 8], sizes = [20, 8], strides = [1, 1]} : vector<20x16xf32> to vector<20x8xf32>
    %202 = vector.extract_strided_slice %200 {offsets = [0, 0], sizes = [20, 8], strides = [1, 1]} : vector<20x16xf32> to vector<20x8xf32>
    %203 = tpu.concatenate %201, %202 in 1 : vector<20x8xf32>, vector<20x8xf32> -> vector<20x16xf32>
    %204 = arith.mulf %200, %94 : vector<20x16xf32>
    %205 = arith.mulf %203, %96 : vector<20x16xf32>
    %206 = arith.addf %204, %205 : vector<20x16xf32>
    %207 = tpu.transpose %206, [1, 0] : vector<20x16xf32> -> vector<16x20xf32>
    %cst_82 = arith.constant dense<0.000000e+00> : vector<20x20xf32>
    %208 = tpu.matmul %188, %207, %cst_82 {dimension_numbers = #tpu.dot_dimension_numbers<[1], [0], [0], [1], [0, 0, 1, 1], [], []>} : vector<20x16xf32>, vector<16x20xf32>, vector<20x20xf32> -> vector<20x20xf32>
    %cst_83 = arith.constant 1.000000e+01 : f32
    %209 = vector.broadcast %cst_83 : f32 to vector<20x20xf32>
    %210 = arith.mulf %208, %209 : vector<20x20xf32>
    %cst_84 = arith.constant dense<0xFF800000> : vector<20xf32>
    %211 = vector.multi_reduction <maximumf>, %210, %cst_84 [1] : vector<20x20xf32> to vector<20xf32>
    %212 = vector.shape_cast %211 : vector<20xf32> to vector<20x1xf32>
    %213 = vector.broadcast %212 : vector<20x1xf32> to vector<20x20xf32>
    %214 = arith.subf %210, %213 : vector<20x20xf32>
    %215 = math.exp %214 : vector<20x20xf32>
    %cst_85 = arith.constant dense<0.000000e+00> : vector<20xf32>
    %216 = vector.multi_reduction <add>, %215, %cst_85 [1] : vector<20x20xf32> to vector<20xf32>
    %217 = vector.shape_cast %216 : vector<20xf32> to vector<20x1xf32>
    %218 = tpu.reciprocal %217 {approx = true} : vector<20x1xf32> -> vector<20x1xf32>
    %219 = vector.broadcast %218 : vector<20x1xf32> to vector<20x20xf32>
    %220 = arith.mulf %215, %219 : vector<20x20xf32>
    %cst_86 = arith.constant dense<0.000000e+00> : vector<20x16xf32>
    %221 = tpu.matmul %220, %170, %cst_86 {dimension_numbers = #tpu.dot_dimension_numbers<[1], [0], [0], [1], [0, 0, 1, 1], [], []>} : vector<20x20xf32>, vector<20x16xf32>, vector<20x16xf32> -> vector<20x16xf32>
    %222 = vector.extract_strided_slice %113 {offsets = [0, 32], sizes = [20, 16], strides = [1, 1]} : vector<20x192xf32> to vector<20x16xf32>
    %223 = vector.extract_strided_slice %113 {offsets = [0, 96], sizes = [20, 16], strides = [1, 1]} : vector<20x192xf32> to vector<20x16xf32>
    %224 = vector.extract_strided_slice %113 {offsets = [0, 160], sizes = [20, 16], strides = [1, 1]} : vector<20x192xf32> to vector<20x16xf32>
    %225 = arith.mulf %222, %222 : vector<20x16xf32>
    %cst_87 = arith.constant dense<0.000000e+00> : vector<20xf32>
    %226 = vector.multi_reduction <add>, %225, %cst_87 [1] : vector<20x16xf32> to vector<20xf32>
    %227 = vector.shape_cast %226 : vector<20xf32> to vector<20x1xf32>
    %cst_88 = arith.constant 1.000000e-24 : f32
    %228 = vector.broadcast %cst_88 : f32 to vector<20x1xf32>
    %229 = arith.maximumf %227, %228 : vector<20x1xf32>
    %230 = math.rsqrt %229 : vector<20x1xf32>
    %231 = vector.broadcast %230 : vector<20x1xf32> to vector<20x16xf32>
    %232 = arith.mulf %222, %231 : vector<20x16xf32>
    %c2_89 = arith.constant 2 : index
    %c0_90 = arith.constant 0 : index
    %c0_91 = arith.constant 0 : index
    %233 = vector.load %arg7[%c2_89, %c0_90, %c0_91] : memref<16x1x16xf32, #tpu.memory_space<vmem>>, vector<1x1x16xf32>
    %234 = vector.shape_cast %233 : vector<1x1x16xf32> to vector<1x16xf32>
    %235 = vector.broadcast %234 : vector<1x16xf32> to vector<20x16xf32>
    %236 = arith.mulf %232, %235 : vector<20x16xf32>
    %237 = vector.extract_strided_slice %236 {offsets = [0, 8], sizes = [20, 8], strides = [1, 1]} : vector<20x16xf32> to vector<20x8xf32>
    %238 = vector.extract_strided_slice %236 {offsets = [0, 0], sizes = [20, 8], strides = [1, 1]} : vector<20x16xf32> to vector<20x8xf32>
    %239 = tpu.concatenate %237, %238 in 1 : vector<20x8xf32>, vector<20x8xf32> -> vector<20x16xf32>
    %240 = arith.mulf %236, %94 : vector<20x16xf32>
    %241 = arith.mulf %239, %96 : vector<20x16xf32>
    %242 = arith.addf %240, %241 : vector<20x16xf32>
    %243 = arith.mulf %223, %223 : vector<20x16xf32>
    %cst_92 = arith.constant dense<0.000000e+00> : vector<20xf32>
    %244 = vector.multi_reduction <add>, %243, %cst_92 [1] : vector<20x16xf32> to vector<20xf32>
    %245 = vector.shape_cast %244 : vector<20xf32> to vector<20x1xf32>
    %cst_93 = arith.constant 1.000000e-24 : f32
    %246 = vector.broadcast %cst_93 : f32 to vector<20x1xf32>
    %247 = arith.maximumf %245, %246 : vector<20x1xf32>
    %248 = math.rsqrt %247 : vector<20x1xf32>
    %249 = vector.broadcast %248 : vector<20x1xf32> to vector<20x16xf32>
    %250 = arith.mulf %223, %249 : vector<20x16xf32>
    %c6_94 = arith.constant 6 : index
    %c0_95 = arith.constant 0 : index
    %c0_96 = arith.constant 0 : index
    %251 = vector.load %arg7[%c6_94, %c0_95, %c0_96] : memref<16x1x16xf32, #tpu.memory_space<vmem>>, vector<1x1x16xf32>
    %252 = vector.shape_cast %251 : vector<1x1x16xf32> to vector<1x16xf32>
    %253 = vector.broadcast %252 : vector<1x16xf32> to vector<20x16xf32>
    %254 = arith.mulf %250, %253 : vector<20x16xf32>
    %255 = vector.extract_strided_slice %254 {offsets = [0, 8], sizes = [20, 8], strides = [1, 1]} : vector<20x16xf32> to vector<20x8xf32>
    %256 = vector.extract_strided_slice %254 {offsets = [0, 0], sizes = [20, 8], strides = [1, 1]} : vector<20x16xf32> to vector<20x8xf32>
    %257 = tpu.concatenate %255, %256 in 1 : vector<20x8xf32>, vector<20x8xf32> -> vector<20x16xf32>
    %258 = arith.mulf %254, %94 : vector<20x16xf32>
    %259 = arith.mulf %257, %96 : vector<20x16xf32>
    %260 = arith.addf %258, %259 : vector<20x16xf32>
    %261 = tpu.transpose %260, [1, 0] : vector<20x16xf32> -> vector<16x20xf32>
    %cst_97 = arith.constant dense<0.000000e+00> : vector<20x20xf32>
    %262 = tpu.matmul %242, %261, %cst_97 {dimension_numbers = #tpu.dot_dimension_numbers<[1], [0], [0], [1], [0, 0, 1, 1], [], []>} : vector<20x16xf32>, vector<16x20xf32>, vector<20x20xf32> -> vector<20x20xf32>
    %cst_98 = arith.constant 1.000000e+01 : f32
    %263 = vector.broadcast %cst_98 : f32 to vector<20x20xf32>
    %264 = arith.mulf %262, %263 : vector<20x20xf32>
    %cst_99 = arith.constant dense<0xFF800000> : vector<20xf32>
    %265 = vector.multi_reduction <maximumf>, %264, %cst_99 [1] : vector<20x20xf32> to vector<20xf32>
    %266 = vector.shape_cast %265 : vector<20xf32> to vector<20x1xf32>
    %267 = vector.broadcast %266 : vector<20x1xf32> to vector<20x20xf32>
    %268 = arith.subf %264, %267 : vector<20x20xf32>
    %269 = math.exp %268 : vector<20x20xf32>
    %cst_100 = arith.constant dense<0.000000e+00> : vector<20xf32>
    %270 = vector.multi_reduction <add>, %269, %cst_100 [1] : vector<20x20xf32> to vector<20xf32>
    %271 = vector.shape_cast %270 : vector<20xf32> to vector<20x1xf32>
    %272 = tpu.reciprocal %271 {approx = true} : vector<20x1xf32> -> vector<20x1xf32>
    %273 = vector.broadcast %272 : vector<20x1xf32> to vector<20x20xf32>
    %274 = arith.mulf %269, %273 : vector<20x20xf32>
    %cst_101 = arith.constant dense<0.000000e+00> : vector<20x16xf32>
    %275 = tpu.matmul %274, %224, %cst_101 {dimension_numbers = #tpu.dot_dimension_numbers<[1], [0], [0], [1], [0, 0, 1, 1], [], []>} : vector<20x20xf32>, vector<20x16xf32>, vector<20x16xf32> -> vector<20x16xf32>
    %276 = vector.extract_strided_slice %113 {offsets = [0, 48], sizes = [20, 16], strides = [1, 1]} : vector<20x192xf32> to vector<20x16xf32>
    %277 = vector.extract_strided_slice %113 {offsets = [0, 112], sizes = [20, 16], strides = [1, 1]} : vector<20x192xf32> to vector<20x16xf32>
    %278 = vector.extract_strided_slice %113 {offsets = [0, 176], sizes = [20, 16], strides = [1, 1]} : vector<20x192xf32> to vector<20x16xf32>
    %279 = arith.mulf %276, %276 : vector<20x16xf32>
    %cst_102 = arith.constant dense<0.000000e+00> : vector<20xf32>
    %280 = vector.multi_reduction <add>, %279, %cst_102 [1] : vector<20x16xf32> to vector<20xf32>
    %281 = vector.shape_cast %280 : vector<20xf32> to vector<20x1xf32>
    %cst_103 = arith.constant 1.000000e-24 : f32
    %282 = vector.broadcast %cst_103 : f32 to vector<20x1xf32>
    %283 = arith.maximumf %281, %282 : vector<20x1xf32>
    %284 = math.rsqrt %283 : vector<20x1xf32>
    %285 = vector.broadcast %284 : vector<20x1xf32> to vector<20x16xf32>
    %286 = arith.mulf %276, %285 : vector<20x16xf32>
    %c3_104 = arith.constant 3 : index
    %c0_105 = arith.constant 0 : index
    %c0_106 = arith.constant 0 : index
    %287 = vector.load %arg7[%c3_104, %c0_105, %c0_106] : memref<16x1x16xf32, #tpu.memory_space<vmem>>, vector<1x1x16xf32>
    %288 = vector.shape_cast %287 : vector<1x1x16xf32> to vector<1x16xf32>
    %289 = vector.broadcast %288 : vector<1x16xf32> to vector<20x16xf32>
    %290 = arith.mulf %286, %289 : vector<20x16xf32>
    %291 = vector.extract_strided_slice %290 {offsets = [0, 8], sizes = [20, 8], strides = [1, 1]} : vector<20x16xf32> to vector<20x8xf32>
    %292 = vector.extract_strided_slice %290 {offsets = [0, 0], sizes = [20, 8], strides = [1, 1]} : vector<20x16xf32> to vector<20x8xf32>
    %293 = tpu.concatenate %291, %292 in 1 : vector<20x8xf32>, vector<20x8xf32> -> vector<20x16xf32>
    %294 = arith.mulf %290, %94 : vector<20x16xf32>
    %295 = arith.mulf %293, %96 : vector<20x16xf32>
    %296 = arith.addf %294, %295 : vector<20x16xf32>
    %297 = arith.mulf %277, %277 : vector<20x16xf32>
    %cst_107 = arith.constant dense<0.000000e+00> : vector<20xf32>
    %298 = vector.multi_reduction <add>, %297, %cst_107 [1] : vector<20x16xf32> to vector<20xf32>
    %299 = vector.shape_cast %298 : vector<20xf32> to vector<20x1xf32>
    %cst_108 = arith.constant 1.000000e-24 : f32
    %300 = vector.broadcast %cst_108 : f32 to vector<20x1xf32>
    %301 = arith.maximumf %299, %300 : vector<20x1xf32>
    %302 = math.rsqrt %301 : vector<20x1xf32>
    %303 = vector.broadcast %302 : vector<20x1xf32> to vector<20x16xf32>
    %304 = arith.mulf %277, %303 : vector<20x16xf32>
    %c7 = arith.constant 7 : index
    %c0_109 = arith.constant 0 : index
    %c0_110 = arith.constant 0 : index
    %305 = vector.load %arg7[%c7, %c0_109, %c0_110] : memref<16x1x16xf32, #tpu.memory_space<vmem>>, vector<1x1x16xf32>
    %306 = vector.shape_cast %305 : vector<1x1x16xf32> to vector<1x16xf32>
    %307 = vector.broadcast %306 : vector<1x16xf32> to vector<20x16xf32>
    %308 = arith.mulf %304, %307 : vector<20x16xf32>
    %309 = vector.extract_strided_slice %308 {offsets = [0, 8], sizes = [20, 8], strides = [1, 1]} : vector<20x16xf32> to vector<20x8xf32>
    %310 = vector.extract_strided_slice %308 {offsets = [0, 0], sizes = [20, 8], strides = [1, 1]} : vector<20x16xf32> to vector<20x8xf32>
    %311 = tpu.concatenate %309, %310 in 1 : vector<20x8xf32>, vector<20x8xf32> -> vector<20x16xf32>
    %312 = arith.mulf %308, %94 : vector<20x16xf32>
    %313 = arith.mulf %311, %96 : vector<20x16xf32>
    %314 = arith.addf %312, %313 : vector<20x16xf32>
    %315 = tpu.transpose %314, [1, 0] : vector<20x16xf32> -> vector<16x20xf32>
    %cst_111 = arith.constant dense<0.000000e+00> : vector<20x20xf32>
    %316 = tpu.matmul %296, %315, %cst_111 {dimension_numbers = #tpu.dot_dimension_numbers<[1], [0], [0], [1], [0, 0, 1, 1], [], []>} : vector<20x16xf32>, vector<16x20xf32>, vector<20x20xf32> -> vector<20x20xf32>
    %cst_112 = arith.constant 1.000000e+01 : f32
    %317 = vector.broadcast %cst_112 : f32 to vector<20x20xf32>
    %318 = arith.mulf %316, %317 : vector<20x20xf32>
    %cst_113 = arith.constant dense<0xFF800000> : vector<20xf32>
    %319 = vector.multi_reduction <maximumf>, %318, %cst_113 [1] : vector<20x20xf32> to vector<20xf32>
    %320 = vector.shape_cast %319 : vector<20xf32> to vector<20x1xf32>
    %321 = vector.broadcast %320 : vector<20x1xf32> to vector<20x20xf32>
    %322 = arith.subf %318, %321 : vector<20x20xf32>
    %323 = math.exp %322 : vector<20x20xf32>
    %cst_114 = arith.constant dense<0.000000e+00> : vector<20xf32>
    %324 = vector.multi_reduction <add>, %323, %cst_114 [1] : vector<20x20xf32> to vector<20xf32>
    %325 = vector.shape_cast %324 : vector<20xf32> to vector<20x1xf32>
    %326 = tpu.reciprocal %325 {approx = true} : vector<20x1xf32> -> vector<20x1xf32>
    %327 = vector.broadcast %326 : vector<20x1xf32> to vector<20x20xf32>
    %328 = arith.mulf %323, %327 : vector<20x20xf32>
    %cst_115 = arith.constant dense<0.000000e+00> : vector<20x16xf32>
    %329 = tpu.matmul %328, %278, %cst_115 {dimension_numbers = #tpu.dot_dimension_numbers<[1], [0], [0], [1], [0, 0, 1, 1], [], []>} : vector<20x20xf32>, vector<20x16xf32>, vector<20x16xf32> -> vector<20x16xf32>
    %330 = tpu.concatenate %167, %221, %275, %329 in 1 : vector<20x16xf32>, vector<20x16xf32>, vector<20x16xf32>, vector<20x16xf32> -> vector<20x64xf32>
    %c0_116 = arith.constant 0 : index
    %c0_117 = arith.constant 0 : index
    %c0_118 = arith.constant 0 : index
    %331 = vector.load %arg9[%c0_116, %c0_117, %c0_118] : memref<2x64x64xf32, #tpu.memory_space<vmem>>, vector<1x64x64xf32>
    %332 = vector.shape_cast %331 : vector<1x64x64xf32> to vector<64x64xf32>
    %cst_119 = arith.constant dense<0.000000e+00> : vector<20x64xf32>
    %333 = tpu.matmul %330, %332, %cst_119 {dimension_numbers = #tpu.dot_dimension_numbers<[1], [0], [0], [1], [0, 0, 1, 1], [], []>} : vector<20x64xf32>, vector<64x64xf32>, vector<20x64xf32> -> vector<20x64xf32>
    %334 = arith.addf %333, %92 : vector<20x64xf32>
    %335 = arith.mulf %334, %334 : vector<20x64xf32>
    %cst_120 = arith.constant dense<0.000000e+00> : vector<20xf32>
    %336 = vector.multi_reduction <add>, %335, %cst_120 [1] : vector<20x64xf32> to vector<20xf32>
    %337 = vector.shape_cast %336 : vector<20xf32> to vector<20x1xf32>
    %cst_121 = arith.constant 1.000000e-24 : f32
    %338 = vector.broadcast %cst_121 : f32 to vector<20x1xf32>
    %339 = arith.maximumf %337, %338 : vector<20x1xf32>
    %340 = math.rsqrt %339 : vector<20x1xf32>
    %341 = vector.broadcast %340 : vector<20x1xf32> to vector<20x64xf32>
    %342 = arith.mulf %334, %341 : vector<20x64xf32>
    %343 = vector.extract_strided_slice %2 {offsets = [2, 0], sizes = [1, 64], strides = [1, 1]} : vector<8x64xf32> to vector<1x64xf32>
    %344 = vector.broadcast %343 : vector<1x64xf32> to vector<20x64xf32>
    %345 = arith.mulf %342, %344 : vector<20x64xf32>
    %346 = vector.extract_strided_slice %2 {offsets = [3, 0], sizes = [1, 64], strides = [1, 1]} : vector<8x64xf32> to vector<1x64xf32>
    %347 = vector.broadcast %346 : vector<1x64xf32> to vector<20x64xf32>
    %348 = arith.addf %345, %347 : vector<20x64xf32>
    %c0_122 = arith.constant 0 : index
    %c0_123 = arith.constant 0 : index
    %c0_124 = arith.constant 0 : index
    %349 = vector.load %arg10[%c0_122, %c0_123, %c0_124] : memref<2x64x512xf32, #tpu.memory_space<vmem>>, vector<1x64x512xf32>
    %350 = vector.shape_cast %349 : vector<1x64x512xf32> to vector<64x512xf32>
    %cst_125 = arith.constant dense<0.000000e+00> : vector<20x512xf32>
    %351 = tpu.matmul %348, %350, %cst_125 {dimension_numbers = #tpu.dot_dimension_numbers<[1], [0], [0], [1], [0, 0, 1, 1], [], []>} : vector<20x64xf32>, vector<64x512xf32>, vector<20x512xf32> -> vector<20x512xf32>
    %c0_126 = arith.constant 0 : index
    %c0_127 = arith.constant 0 : index
    %c0_128 = arith.constant 0 : index
    %352 = vector.load %arg11[%c0_126, %c0_127, %c0_128] : memref<2x1x512xf32, #tpu.memory_space<vmem>>, vector<1x1x512xf32>
    %353 = vector.shape_cast %352 : vector<1x1x512xf32> to vector<1x512xf32>
    %354 = vector.broadcast %353 : vector<1x512xf32> to vector<20x512xf32>
    %355 = arith.addf %351, %354 : vector<20x512xf32>
    %356 = vector.extract_strided_slice %355 {offsets = [0, 256], sizes = [20, 256], strides = [1, 1]} : vector<20x512xf32> to vector<20x256xf32>
    %cst_129 = arith.constant 5.000000e-01 : f32
    %357 = vector.broadcast %cst_129 : f32 to vector<20x256xf32>
    %358 = arith.mulf %357, %356 : vector<20x256xf32>
    %cst_130 = arith.constant 0.707106769 : f32
    %359 = vector.broadcast %cst_130 : f32 to vector<20x256xf32>
    %360 = arith.mulf %356, %359 : vector<20x256xf32>
    %361 = math.absf %360 : vector<20x256xf32>
    %cst_131 = arith.constant 0.327591091 : f32
    %362 = vector.broadcast %cst_131 : f32 to vector<20x256xf32>
    %363 = arith.mulf %362, %361 : vector<20x256xf32>
    %cst_132 = arith.constant 1.000000e+00 : f32
    %364 = vector.broadcast %cst_132 : f32 to vector<20x256xf32>
    %365 = arith.addf %364, %363 : vector<20x256xf32>
    %cst_133 = arith.constant 1.000000e+00 : f32
    %366 = vector.broadcast %cst_133 : f32 to vector<20x256xf32>
    %367 = arith.divf %366, %365 : vector<20x256xf32>
    %cst_134 = arith.constant 1.06140542 : f32
    %368 = vector.broadcast %cst_134 : f32 to vector<20x256xf32>
    %369 = arith.mulf %368, %367 : vector<20x256xf32>
    %cst_135 = arith.constant 1.45315206 : f32
    %370 = vector.broadcast %cst_135 : f32 to vector<20x256xf32>
    %371 = arith.subf %369, %370 : vector<20x256xf32>
    %372 = arith.mulf %371, %367 : vector<20x256xf32>
    %cst_136 = arith.constant 1.42141378 : f32
    %373 = vector.broadcast %cst_136 : f32 to vector<20x256xf32>
    %374 = arith.addf %372, %373 : vector<20x256xf32>
    %375 = arith.mulf %374, %367 : vector<20x256xf32>
    %cst_137 = arith.constant 0.284496725 : f32
    %376 = vector.broadcast %cst_137 : f32 to vector<20x256xf32>
    %377 = arith.subf %375, %376 : vector<20x256xf32>
    %378 = arith.mulf %377, %367 : vector<20x256xf32>
    %cst_138 = arith.constant 0.254829586 : f32
    %379 = vector.broadcast %cst_138 : f32 to vector<20x256xf32>
    %380 = arith.addf %378, %379 : vector<20x256xf32>
    %381 = arith.mulf %380, %367 : vector<20x256xf32>
    %cst_139 = arith.constant 0.000000e+00 : f32
    %382 = vector.broadcast %cst_139 : f32 to vector<20x256xf32>
    %383 = arith.subf %382, %361 : vector<20x256xf32>
    %384 = arith.mulf %383, %361 : vector<20x256xf32>
    %385 = math.exp %384 : vector<20x256xf32>
    %386 = arith.mulf %381, %385 : vector<20x256xf32>
    %cst_140 = arith.constant 1.000000e+00 : f32
    %387 = vector.broadcast %cst_140 : f32 to vector<20x256xf32>
    %388 = arith.subf %387, %386 : vector<20x256xf32>
    %cst_141 = arith.constant 0.000000e+00 : f32
    %389 = vector.broadcast %cst_141 : f32 to vector<20x256xf32>
    %390 = arith.cmpf oge, %360, %389 : vector<20x256xf32>
    %cst_142 = arith.constant 0.000000e+00 : f32
    %391 = vector.broadcast %cst_142 : f32 to vector<20x256xf32>
    %392 = arith.subf %391, %388 : vector<20x256xf32>
    %393 = arith.select %390, %388, %392 : vector<20x256xi1>, vector<20x256xf32>
    %cst_143 = arith.constant 1.000000e+00 : f32
    %394 = vector.broadcast %cst_143 : f32 to vector<20x256xf32>
    %395 = arith.addf %394, %393 : vector<20x256xf32>
    %396 = arith.mulf %358, %395 : vector<20x256xf32>
    %397 = vector.extract_strided_slice %355 {offsets = [0, 0], sizes = [20, 256], strides = [1, 1]} : vector<20x512xf32> to vector<20x256xf32>
    %398 = arith.mulf %396, %397 : vector<20x256xf32>
    %c0_144 = arith.constant 0 : index
    %c0_145 = arith.constant 0 : index
    %c0_146 = arith.constant 0 : index
    %399 = vector.load %arg12[%c0_144, %c0_145, %c0_146] : memref<2x256x64xf32, #tpu.memory_space<vmem>>, vector<1x256x64xf32>
    %400 = vector.shape_cast %399 : vector<1x256x64xf32> to vector<256x64xf32>
    %cst_147 = arith.constant dense<0.000000e+00> : vector<20x64xf32>
    %401 = tpu.matmul %398, %400, %cst_147 {dimension_numbers = #tpu.dot_dimension_numbers<[1], [0], [0], [1], [0, 0, 1, 1], [], []>} : vector<20x256xf32>, vector<256x64xf32>, vector<20x64xf32> -> vector<20x64xf32>
    %402 = vector.extract_strided_slice %0 {offsets = [2, 0], sizes = [1, 64], strides = [1, 1]} : vector<8x64xf32> to vector<1x64xf32>
    %403 = vector.broadcast %402 : vector<1x64xf32> to vector<20x64xf32>
    %404 = arith.addf %401, %403 : vector<20x64xf32>
    %405 = arith.addf %404, %334 : vector<20x64xf32>
    %406 = arith.mulf %405, %405 : vector<20x64xf32>
    %cst_148 = arith.constant dense<0.000000e+00> : vector<20xf32>
    %407 = vector.multi_reduction <add>, %406, %cst_148 [1] : vector<20x64xf32> to vector<20xf32>
    %408 = vector.shape_cast %407 : vector<20xf32> to vector<20x1xf32>
    %cst_149 = arith.constant 1.000000e-24 : f32
    %409 = vector.broadcast %cst_149 : f32 to vector<20x1xf32>
    %410 = arith.maximumf %408, %409 : vector<20x1xf32>
    %411 = math.rsqrt %410 : vector<20x1xf32>
    %412 = vector.broadcast %411 : vector<20x1xf32> to vector<20x64xf32>
    %413 = arith.mulf %405, %412 : vector<20x64xf32>
    %414 = vector.extract_strided_slice %2 {offsets = [4, 0], sizes = [1, 64], strides = [1, 1]} : vector<8x64xf32> to vector<1x64xf32>
    %415 = vector.broadcast %414 : vector<1x64xf32> to vector<20x64xf32>
    %416 = arith.mulf %413, %415 : vector<20x64xf32>
    %417 = vector.extract_strided_slice %2 {offsets = [5, 0], sizes = [1, 64], strides = [1, 1]} : vector<8x64xf32> to vector<1x64xf32>
    %418 = vector.broadcast %417 : vector<1x64xf32> to vector<20x64xf32>
    %419 = arith.addf %416, %418 : vector<20x64xf32>
    %c1_150 = arith.constant 1 : index
    %c0_151 = arith.constant 0 : index
    %c0_152 = arith.constant 0 : index
    %420 = vector.load %arg8[%c1_150, %c0_151, %c0_152] : memref<2x64x192xf32, #tpu.memory_space<vmem>>, vector<1x64x192xf32>
    %421 = vector.shape_cast %420 : vector<1x64x192xf32> to vector<64x192xf32>
    %cst_153 = arith.constant dense<0.000000e+00> : vector<20x192xf32>
    %422 = tpu.matmul %419, %421, %cst_153 {dimension_numbers = #tpu.dot_dimension_numbers<[1], [0], [0], [1], [0, 0, 1, 1], [], []>} : vector<20x64xf32>, vector<64x192xf32>, vector<20x192xf32> -> vector<20x192xf32>
    %423 = vector.extract_strided_slice %422 {offsets = [0, 0], sizes = [20, 16], strides = [1, 1]} : vector<20x192xf32> to vector<20x16xf32>
    %424 = vector.extract_strided_slice %422 {offsets = [0, 64], sizes = [20, 16], strides = [1, 1]} : vector<20x192xf32> to vector<20x16xf32>
    %425 = vector.extract_strided_slice %422 {offsets = [0, 128], sizes = [20, 16], strides = [1, 1]} : vector<20x192xf32> to vector<20x16xf32>
    %426 = arith.mulf %423, %423 : vector<20x16xf32>
    %cst_154 = arith.constant dense<0.000000e+00> : vector<20xf32>
    %427 = vector.multi_reduction <add>, %426, %cst_154 [1] : vector<20x16xf32> to vector<20xf32>
    %428 = vector.shape_cast %427 : vector<20xf32> to vector<20x1xf32>
    %cst_155 = arith.constant 1.000000e-24 : f32
    %429 = vector.broadcast %cst_155 : f32 to vector<20x1xf32>
    %430 = arith.maximumf %428, %429 : vector<20x1xf32>
    %431 = math.rsqrt %430 : vector<20x1xf32>
    %432 = vector.broadcast %431 : vector<20x1xf32> to vector<20x16xf32>
    %433 = arith.mulf %423, %432 : vector<20x16xf32>
    %c8 = arith.constant 8 : index
    %c0_156 = arith.constant 0 : index
    %c0_157 = arith.constant 0 : index
    %434 = vector.load %arg7[%c8, %c0_156, %c0_157] : memref<16x1x16xf32, #tpu.memory_space<vmem>>, vector<1x1x16xf32>
    %435 = vector.shape_cast %434 : vector<1x1x16xf32> to vector<1x16xf32>
    %436 = vector.broadcast %435 : vector<1x16xf32> to vector<20x16xf32>
    %437 = arith.mulf %433, %436 : vector<20x16xf32>
    %438 = vector.extract_strided_slice %437 {offsets = [0, 8], sizes = [20, 8], strides = [1, 1]} : vector<20x16xf32> to vector<20x8xf32>
    %439 = vector.extract_strided_slice %437 {offsets = [0, 0], sizes = [20, 8], strides = [1, 1]} : vector<20x16xf32> to vector<20x8xf32>
    %440 = tpu.concatenate %438, %439 in 1 : vector<20x8xf32>, vector<20x8xf32> -> vector<20x16xf32>
    %441 = arith.mulf %437, %94 : vector<20x16xf32>
    %442 = arith.mulf %440, %96 : vector<20x16xf32>
    %443 = arith.addf %441, %442 : vector<20x16xf32>
    %444 = arith.mulf %424, %424 : vector<20x16xf32>
    %cst_158 = arith.constant dense<0.000000e+00> : vector<20xf32>
    %445 = vector.multi_reduction <add>, %444, %cst_158 [1] : vector<20x16xf32> to vector<20xf32>
    %446 = vector.shape_cast %445 : vector<20xf32> to vector<20x1xf32>
    %cst_159 = arith.constant 1.000000e-24 : f32
    %447 = vector.broadcast %cst_159 : f32 to vector<20x1xf32>
    %448 = arith.maximumf %446, %447 : vector<20x1xf32>
    %449 = math.rsqrt %448 : vector<20x1xf32>
    %450 = vector.broadcast %449 : vector<20x1xf32> to vector<20x16xf32>
    %451 = arith.mulf %424, %450 : vector<20x16xf32>
    %c12 = arith.constant 12 : index
    %c0_160 = arith.constant 0 : index
    %c0_161 = arith.constant 0 : index
    %452 = vector.load %arg7[%c12, %c0_160, %c0_161] : memref<16x1x16xf32, #tpu.memory_space<vmem>>, vector<1x1x16xf32>
    %453 = vector.shape_cast %452 : vector<1x1x16xf32> to vector<1x16xf32>
    %454 = vector.broadcast %453 : vector<1x16xf32> to vector<20x16xf32>
    %455 = arith.mulf %451, %454 : vector<20x16xf32>
    %456 = vector.extract_strided_slice %455 {offsets = [0, 8], sizes = [20, 8], strides = [1, 1]} : vector<20x16xf32> to vector<20x8xf32>
    %457 = vector.extract_strided_slice %455 {offsets = [0, 0], sizes = [20, 8], strides = [1, 1]} : vector<20x16xf32> to vector<20x8xf32>
    %458 = tpu.concatenate %456, %457 in 1 : vector<20x8xf32>, vector<20x8xf32> -> vector<20x16xf32>
    %459 = arith.mulf %455, %94 : vector<20x16xf32>
    %460 = arith.mulf %458, %96 : vector<20x16xf32>
    %461 = arith.addf %459, %460 : vector<20x16xf32>
    %462 = tpu.transpose %461, [1, 0] : vector<20x16xf32> -> vector<16x20xf32>
    %cst_162 = arith.constant dense<0.000000e+00> : vector<20x20xf32>
    %463 = tpu.matmul %443, %462, %cst_162 {dimension_numbers = #tpu.dot_dimension_numbers<[1], [0], [0], [1], [0, 0, 1, 1], [], []>} : vector<20x16xf32>, vector<16x20xf32>, vector<20x20xf32> -> vector<20x20xf32>
    %cst_163 = arith.constant 1.000000e+01 : f32
    %464 = vector.broadcast %cst_163 : f32 to vector<20x20xf32>
    %465 = arith.mulf %463, %464 : vector<20x20xf32>
    %cst_164 = arith.constant dense<0xFF800000> : vector<20xf32>
    %466 = vector.multi_reduction <maximumf>, %465, %cst_164 [1] : vector<20x20xf32> to vector<20xf32>
    %467 = vector.shape_cast %466 : vector<20xf32> to vector<20x1xf32>
    %468 = vector.broadcast %467 : vector<20x1xf32> to vector<20x20xf32>
    %469 = arith.subf %465, %468 : vector<20x20xf32>
    %470 = math.exp %469 : vector<20x20xf32>
    %cst_165 = arith.constant dense<0.000000e+00> : vector<20xf32>
    %471 = vector.multi_reduction <add>, %470, %cst_165 [1] : vector<20x20xf32> to vector<20xf32>
    %472 = vector.shape_cast %471 : vector<20xf32> to vector<20x1xf32>
    %473 = tpu.reciprocal %472 {approx = true} : vector<20x1xf32> -> vector<20x1xf32>
    %474 = vector.broadcast %473 : vector<20x1xf32> to vector<20x20xf32>
    %475 = arith.mulf %470, %474 : vector<20x20xf32>
    %cst_166 = arith.constant dense<0.000000e+00> : vector<20x16xf32>
    %476 = tpu.matmul %475, %425, %cst_166 {dimension_numbers = #tpu.dot_dimension_numbers<[1], [0], [0], [1], [0, 0, 1, 1], [], []>} : vector<20x20xf32>, vector<20x16xf32>, vector<20x16xf32> -> vector<20x16xf32>
    %477 = vector.extract_strided_slice %422 {offsets = [0, 16], sizes = [20, 16], strides = [1, 1]} : vector<20x192xf32> to vector<20x16xf32>
    %478 = vector.extract_strided_slice %422 {offsets = [0, 80], sizes = [20, 16], strides = [1, 1]} : vector<20x192xf32> to vector<20x16xf32>
    %479 = vector.extract_strided_slice %422 {offsets = [0, 144], sizes = [20, 16], strides = [1, 1]} : vector<20x192xf32> to vector<20x16xf32>
    %480 = arith.mulf %477, %477 : vector<20x16xf32>
    %cst_167 = arith.constant dense<0.000000e+00> : vector<20xf32>
    %481 = vector.multi_reduction <add>, %480, %cst_167 [1] : vector<20x16xf32> to vector<20xf32>
    %482 = vector.shape_cast %481 : vector<20xf32> to vector<20x1xf32>
    %cst_168 = arith.constant 1.000000e-24 : f32
    %483 = vector.broadcast %cst_168 : f32 to vector<20x1xf32>
    %484 = arith.maximumf %482, %483 : vector<20x1xf32>
    %485 = math.rsqrt %484 : vector<20x1xf32>
    %486 = vector.broadcast %485 : vector<20x1xf32> to vector<20x16xf32>
    %487 = arith.mulf %477, %486 : vector<20x16xf32>
    %c9 = arith.constant 9 : index
    %c0_169 = arith.constant 0 : index
    %c0_170 = arith.constant 0 : index
    %488 = vector.load %arg7[%c9, %c0_169, %c0_170] : memref<16x1x16xf32, #tpu.memory_space<vmem>>, vector<1x1x16xf32>
    %489 = vector.shape_cast %488 : vector<1x1x16xf32> to vector<1x16xf32>
    %490 = vector.broadcast %489 : vector<1x16xf32> to vector<20x16xf32>
    %491 = arith.mulf %487, %490 : vector<20x16xf32>
    %492 = vector.extract_strided_slice %491 {offsets = [0, 8], sizes = [20, 8], strides = [1, 1]} : vector<20x16xf32> to vector<20x8xf32>
    %493 = vector.extract_strided_slice %491 {offsets = [0, 0], sizes = [20, 8], strides = [1, 1]} : vector<20x16xf32> to vector<20x8xf32>
    %494 = tpu.concatenate %492, %493 in 1 : vector<20x8xf32>, vector<20x8xf32> -> vector<20x16xf32>
    %495 = arith.mulf %491, %94 : vector<20x16xf32>
    %496 = arith.mulf %494, %96 : vector<20x16xf32>
    %497 = arith.addf %495, %496 : vector<20x16xf32>
    %498 = arith.mulf %478, %478 : vector<20x16xf32>
    %cst_171 = arith.constant dense<0.000000e+00> : vector<20xf32>
    %499 = vector.multi_reduction <add>, %498, %cst_171 [1] : vector<20x16xf32> to vector<20xf32>
    %500 = vector.shape_cast %499 : vector<20xf32> to vector<20x1xf32>
    %cst_172 = arith.constant 1.000000e-24 : f32
    %501 = vector.broadcast %cst_172 : f32 to vector<20x1xf32>
    %502 = arith.maximumf %500, %501 : vector<20x1xf32>
    %503 = math.rsqrt %502 : vector<20x1xf32>
    %504 = vector.broadcast %503 : vector<20x1xf32> to vector<20x16xf32>
    %505 = arith.mulf %478, %504 : vector<20x16xf32>
    %c13 = arith.constant 13 : index
    %c0_173 = arith.constant 0 : index
    %c0_174 = arith.constant 0 : index
    %506 = vector.load %arg7[%c13, %c0_173, %c0_174] : memref<16x1x16xf32, #tpu.memory_space<vmem>>, vector<1x1x16xf32>
    %507 = vector.shape_cast %506 : vector<1x1x16xf32> to vector<1x16xf32>
    %508 = vector.broadcast %507 : vector<1x16xf32> to vector<20x16xf32>
    %509 = arith.mulf %505, %508 : vector<20x16xf32>
    %510 = vector.extract_strided_slice %509 {offsets = [0, 8], sizes = [20, 8], strides = [1, 1]} : vector<20x16xf32> to vector<20x8xf32>
    %511 = vector.extract_strided_slice %509 {offsets = [0, 0], sizes = [20, 8], strides = [1, 1]} : vector<20x16xf32> to vector<20x8xf32>
    %512 = tpu.concatenate %510, %511 in 1 : vector<20x8xf32>, vector<20x8xf32> -> vector<20x16xf32>
    %513 = arith.mulf %509, %94 : vector<20x16xf32>
    %514 = arith.mulf %512, %96 : vector<20x16xf32>
    %515 = arith.addf %513, %514 : vector<20x16xf32>
    %516 = tpu.transpose %515, [1, 0] : vector<20x16xf32> -> vector<16x20xf32>
    %cst_175 = arith.constant dense<0.000000e+00> : vector<20x20xf32>
    %517 = tpu.matmul %497, %516, %cst_175 {dimension_numbers = #tpu.dot_dimension_numbers<[1], [0], [0], [1], [0, 0, 1, 1], [], []>} : vector<20x16xf32>, vector<16x20xf32>, vector<20x20xf32> -> vector<20x20xf32>
    %cst_176 = arith.constant 1.000000e+01 : f32
    %518 = vector.broadcast %cst_176 : f32 to vector<20x20xf32>
    %519 = arith.mulf %517, %518 : vector<20x20xf32>
    %cst_177 = arith.constant dense<0xFF800000> : vector<20xf32>
    %520 = vector.multi_reduction <maximumf>, %519, %cst_177 [1] : vector<20x20xf32> to vector<20xf32>
    %521 = vector.shape_cast %520 : vector<20xf32> to vector<20x1xf32>
    %522 = vector.broadcast %521 : vector<20x1xf32> to vector<20x20xf32>
    %523 = arith.subf %519, %522 : vector<20x20xf32>
    %524 = math.exp %523 : vector<20x20xf32>
    %cst_178 = arith.constant dense<0.000000e+00> : vector<20xf32>
    %525 = vector.multi_reduction <add>, %524, %cst_178 [1] : vector<20x20xf32> to vector<20xf32>
    %526 = vector.shape_cast %525 : vector<20xf32> to vector<20x1xf32>
    %527 = tpu.reciprocal %526 {approx = true} : vector<20x1xf32> -> vector<20x1xf32>
    %528 = vector.broadcast %527 : vector<20x1xf32> to vector<20x20xf32>
    %529 = arith.mulf %524, %528 : vector<20x20xf32>
    %cst_179 = arith.constant dense<0.000000e+00> : vector<20x16xf32>
    %530 = tpu.matmul %529, %479, %cst_179 {dimension_numbers = #tpu.dot_dimension_numbers<[1], [0], [0], [1], [0, 0, 1, 1], [], []>} : vector<20x20xf32>, vector<20x16xf32>, vector<20x16xf32> -> vector<20x16xf32>
    %531 = vector.extract_strided_slice %422 {offsets = [0, 32], sizes = [20, 16], strides = [1, 1]} : vector<20x192xf32> to vector<20x16xf32>
    %532 = vector.extract_strided_slice %422 {offsets = [0, 96], sizes = [20, 16], strides = [1, 1]} : vector<20x192xf32> to vector<20x16xf32>
    %533 = vector.extract_strided_slice %422 {offsets = [0, 160], sizes = [20, 16], strides = [1, 1]} : vector<20x192xf32> to vector<20x16xf32>
    %534 = arith.mulf %531, %531 : vector<20x16xf32>
    %cst_180 = arith.constant dense<0.000000e+00> : vector<20xf32>
    %535 = vector.multi_reduction <add>, %534, %cst_180 [1] : vector<20x16xf32> to vector<20xf32>
    %536 = vector.shape_cast %535 : vector<20xf32> to vector<20x1xf32>
    %cst_181 = arith.constant 1.000000e-24 : f32
    %537 = vector.broadcast %cst_181 : f32 to vector<20x1xf32>
    %538 = arith.maximumf %536, %537 : vector<20x1xf32>
    %539 = math.rsqrt %538 : vector<20x1xf32>
    %540 = vector.broadcast %539 : vector<20x1xf32> to vector<20x16xf32>
    %541 = arith.mulf %531, %540 : vector<20x16xf32>
    %c10 = arith.constant 10 : index
    %c0_182 = arith.constant 0 : index
    %c0_183 = arith.constant 0 : index
    %542 = vector.load %arg7[%c10, %c0_182, %c0_183] : memref<16x1x16xf32, #tpu.memory_space<vmem>>, vector<1x1x16xf32>
    %543 = vector.shape_cast %542 : vector<1x1x16xf32> to vector<1x16xf32>
    %544 = vector.broadcast %543 : vector<1x16xf32> to vector<20x16xf32>
    %545 = arith.mulf %541, %544 : vector<20x16xf32>
    %546 = vector.extract_strided_slice %545 {offsets = [0, 8], sizes = [20, 8], strides = [1, 1]} : vector<20x16xf32> to vector<20x8xf32>
    %547 = vector.extract_strided_slice %545 {offsets = [0, 0], sizes = [20, 8], strides = [1, 1]} : vector<20x16xf32> to vector<20x8xf32>
    %548 = tpu.concatenate %546, %547 in 1 : vector<20x8xf32>, vector<20x8xf32> -> vector<20x16xf32>
    %549 = arith.mulf %545, %94 : vector<20x16xf32>
    %550 = arith.mulf %548, %96 : vector<20x16xf32>
    %551 = arith.addf %549, %550 : vector<20x16xf32>
    %552 = arith.mulf %532, %532 : vector<20x16xf32>
    %cst_184 = arith.constant dense<0.000000e+00> : vector<20xf32>
    %553 = vector.multi_reduction <add>, %552, %cst_184 [1] : vector<20x16xf32> to vector<20xf32>
    %554 = vector.shape_cast %553 : vector<20xf32> to vector<20x1xf32>
    %cst_185 = arith.constant 1.000000e-24 : f32
    %555 = vector.broadcast %cst_185 : f32 to vector<20x1xf32>
    %556 = arith.maximumf %554, %555 : vector<20x1xf32>
    %557 = math.rsqrt %556 : vector<20x1xf32>
    %558 = vector.broadcast %557 : vector<20x1xf32> to vector<20x16xf32>
    %559 = arith.mulf %532, %558 : vector<20x16xf32>
    %c14 = arith.constant 14 : index
    %c0_186 = arith.constant 0 : index
    %c0_187 = arith.constant 0 : index
    %560 = vector.load %arg7[%c14, %c0_186, %c0_187] : memref<16x1x16xf32, #tpu.memory_space<vmem>>, vector<1x1x16xf32>
    %561 = vector.shape_cast %560 : vector<1x1x16xf32> to vector<1x16xf32>
    %562 = vector.broadcast %561 : vector<1x16xf32> to vector<20x16xf32>
    %563 = arith.mulf %559, %562 : vector<20x16xf32>
    %564 = vector.extract_strided_slice %563 {offsets = [0, 8], sizes = [20, 8], strides = [1, 1]} : vector<20x16xf32> to vector<20x8xf32>
    %565 = vector.extract_strided_slice %563 {offsets = [0, 0], sizes = [20, 8], strides = [1, 1]} : vector<20x16xf32> to vector<20x8xf32>
    %566 = tpu.concatenate %564, %565 in 1 : vector<20x8xf32>, vector<20x8xf32> -> vector<20x16xf32>
    %567 = arith.mulf %563, %94 : vector<20x16xf32>
    %568 = arith.mulf %566, %96 : vector<20x16xf32>
    %569 = arith.addf %567, %568 : vector<20x16xf32>
    %570 = tpu.transpose %569, [1, 0] : vector<20x16xf32> -> vector<16x20xf32>
    %cst_188 = arith.constant dense<0.000000e+00> : vector<20x20xf32>
    %571 = tpu.matmul %551, %570, %cst_188 {dimension_numbers = #tpu.dot_dimension_numbers<[1], [0], [0], [1], [0, 0, 1, 1], [], []>} : vector<20x16xf32>, vector<16x20xf32>, vector<20x20xf32> -> vector<20x20xf32>
    %cst_189 = arith.constant 1.000000e+01 : f32
    %572 = vector.broadcast %cst_189 : f32 to vector<20x20xf32>
    %573 = arith.mulf %571, %572 : vector<20x20xf32>
    %cst_190 = arith.constant dense<0xFF800000> : vector<20xf32>
    %574 = vector.multi_reduction <maximumf>, %573, %cst_190 [1] : vector<20x20xf32> to vector<20xf32>
    %575 = vector.shape_cast %574 : vector<20xf32> to vector<20x1xf32>
    %576 = vector.broadcast %575 : vector<20x1xf32> to vector<20x20xf32>
    %577 = arith.subf %573, %576 : vector<20x20xf32>
    %578 = math.exp %577 : vector<20x20xf32>
    %cst_191 = arith.constant dense<0.000000e+00> : vector<20xf32>
    %579 = vector.multi_reduction <add>, %578, %cst_191 [1] : vector<20x20xf32> to vector<20xf32>
    %580 = vector.shape_cast %579 : vector<20xf32> to vector<20x1xf32>
    %581 = tpu.reciprocal %580 {approx = true} : vector<20x1xf32> -> vector<20x1xf32>
    %582 = vector.broadcast %581 : vector<20x1xf32> to vector<20x20xf32>
    %583 = arith.mulf %578, %582 : vector<20x20xf32>
    %cst_192 = arith.constant dense<0.000000e+00> : vector<20x16xf32>
    %584 = tpu.matmul %583, %533, %cst_192 {dimension_numbers = #tpu.dot_dimension_numbers<[1], [0], [0], [1], [0, 0, 1, 1], [], []>} : vector<20x20xf32>, vector<20x16xf32>, vector<20x16xf32> -> vector<20x16xf32>
    %585 = vector.extract_strided_slice %422 {offsets = [0, 48], sizes = [20, 16], strides = [1, 1]} : vector<20x192xf32> to vector<20x16xf32>
    %586 = vector.extract_strided_slice %422 {offsets = [0, 112], sizes = [20, 16], strides = [1, 1]} : vector<20x192xf32> to vector<20x16xf32>
    %587 = vector.extract_strided_slice %422 {offsets = [0, 176], sizes = [20, 16], strides = [1, 1]} : vector<20x192xf32> to vector<20x16xf32>
    %588 = arith.mulf %585, %585 : vector<20x16xf32>
    %cst_193 = arith.constant dense<0.000000e+00> : vector<20xf32>
    %589 = vector.multi_reduction <add>, %588, %cst_193 [1] : vector<20x16xf32> to vector<20xf32>
    %590 = vector.shape_cast %589 : vector<20xf32> to vector<20x1xf32>
    %cst_194 = arith.constant 1.000000e-24 : f32
    %591 = vector.broadcast %cst_194 : f32 to vector<20x1xf32>
    %592 = arith.maximumf %590, %591 : vector<20x1xf32>
    %593 = math.rsqrt %592 : vector<20x1xf32>
    %594 = vector.broadcast %593 : vector<20x1xf32> to vector<20x16xf32>
    %595 = arith.mulf %585, %594 : vector<20x16xf32>
    %c11 = arith.constant 11 : index
    %c0_195 = arith.constant 0 : index
    %c0_196 = arith.constant 0 : index
    %596 = vector.load %arg7[%c11, %c0_195, %c0_196] : memref<16x1x16xf32, #tpu.memory_space<vmem>>, vector<1x1x16xf32>
    %597 = vector.shape_cast %596 : vector<1x1x16xf32> to vector<1x16xf32>
    %598 = vector.broadcast %597 : vector<1x16xf32> to vector<20x16xf32>
    %599 = arith.mulf %595, %598 : vector<20x16xf32>
    %600 = vector.extract_strided_slice %599 {offsets = [0, 8], sizes = [20, 8], strides = [1, 1]} : vector<20x16xf32> to vector<20x8xf32>
    %601 = vector.extract_strided_slice %599 {offsets = [0, 0], sizes = [20, 8], strides = [1, 1]} : vector<20x16xf32> to vector<20x8xf32>
    %602 = tpu.concatenate %600, %601 in 1 : vector<20x8xf32>, vector<20x8xf32> -> vector<20x16xf32>
    %603 = arith.mulf %599, %94 : vector<20x16xf32>
    %604 = arith.mulf %602, %96 : vector<20x16xf32>
    %605 = arith.addf %603, %604 : vector<20x16xf32>
    %606 = arith.mulf %586, %586 : vector<20x16xf32>
    %cst_197 = arith.constant dense<0.000000e+00> : vector<20xf32>
    %607 = vector.multi_reduction <add>, %606, %cst_197 [1] : vector<20x16xf32> to vector<20xf32>
    %608 = vector.shape_cast %607 : vector<20xf32> to vector<20x1xf32>
    %cst_198 = arith.constant 1.000000e-24 : f32
    %609 = vector.broadcast %cst_198 : f32 to vector<20x1xf32>
    %610 = arith.maximumf %608, %609 : vector<20x1xf32>
    %611 = math.rsqrt %610 : vector<20x1xf32>
    %612 = vector.broadcast %611 : vector<20x1xf32> to vector<20x16xf32>
    %613 = arith.mulf %586, %612 : vector<20x16xf32>
    %c15 = arith.constant 15 : index
    %c0_199 = arith.constant 0 : index
    %c0_200 = arith.constant 0 : index
    %614 = vector.load %arg7[%c15, %c0_199, %c0_200] : memref<16x1x16xf32, #tpu.memory_space<vmem>>, vector<1x1x16xf32>
    %615 = vector.shape_cast %614 : vector<1x1x16xf32> to vector<1x16xf32>
    %616 = vector.broadcast %615 : vector<1x16xf32> to vector<20x16xf32>
    %617 = arith.mulf %613, %616 : vector<20x16xf32>
    %618 = vector.extract_strided_slice %617 {offsets = [0, 8], sizes = [20, 8], strides = [1, 1]} : vector<20x16xf32> to vector<20x8xf32>
    %619 = vector.extract_strided_slice %617 {offsets = [0, 0], sizes = [20, 8], strides = [1, 1]} : vector<20x16xf32> to vector<20x8xf32>
    %620 = tpu.concatenate %618, %619 in 1 : vector<20x8xf32>, vector<20x8xf32> -> vector<20x16xf32>
    %621 = arith.mulf %617, %94 : vector<20x16xf32>
    %622 = arith.mulf %620, %96 : vector<20x16xf32>
    %623 = arith.addf %621, %622 : vector<20x16xf32>
    %624 = tpu.transpose %623, [1, 0] : vector<20x16xf32> -> vector<16x20xf32>
    %cst_201 = arith.constant dense<0.000000e+00> : vector<20x20xf32>
    %625 = tpu.matmul %605, %624, %cst_201 {dimension_numbers = #tpu.dot_dimension_numbers<[1], [0], [0], [1], [0, 0, 1, 1], [], []>} : vector<20x16xf32>, vector<16x20xf32>, vector<20x20xf32> -> vector<20x20xf32>
    %cst_202 = arith.constant 1.000000e+01 : f32
    %626 = vector.broadcast %cst_202 : f32 to vector<20x20xf32>
    %627 = arith.mulf %625, %626 : vector<20x20xf32>
    %cst_203 = arith.constant dense<0xFF800000> : vector<20xf32>
    %628 = vector.multi_reduction <maximumf>, %627, %cst_203 [1] : vector<20x20xf32> to vector<20xf32>
    %629 = vector.shape_cast %628 : vector<20xf32> to vector<20x1xf32>
    %630 = vector.broadcast %629 : vector<20x1xf32> to vector<20x20xf32>
    %631 = arith.subf %627, %630 : vector<20x20xf32>
    %632 = math.exp %631 : vector<20x20xf32>
    %cst_204 = arith.constant dense<0.000000e+00> : vector<20xf32>
    %633 = vector.multi_reduction <add>, %632, %cst_204 [1] : vector<20x20xf32> to vector<20xf32>
    %634 = vector.shape_cast %633 : vector<20xf32> to vector<20x1xf32>
    %635 = tpu.reciprocal %634 {approx = true} : vector<20x1xf32> -> vector<20x1xf32>
    %636 = vector.broadcast %635 : vector<20x1xf32> to vector<20x20xf32>
    %637 = arith.mulf %632, %636 : vector<20x20xf32>
    %cst_205 = arith.constant dense<0.000000e+00> : vector<20x16xf32>
    %638 = tpu.matmul %637, %587, %cst_205 {dimension_numbers = #tpu.dot_dimension_numbers<[1], [0], [0], [1], [0, 0, 1, 1], [], []>} : vector<20x20xf32>, vector<20x16xf32>, vector<20x16xf32> -> vector<20x16xf32>
    %639 = tpu.concatenate %476, %530, %584, %638 in 1 : vector<20x16xf32>, vector<20x16xf32>, vector<20x16xf32>, vector<20x16xf32> -> vector<20x64xf32>
    %c1_206 = arith.constant 1 : index
    %c0_207 = arith.constant 0 : index
    %c0_208 = arith.constant 0 : index
    %640 = vector.load %arg9[%c1_206, %c0_207, %c0_208] : memref<2x64x64xf32, #tpu.memory_space<vmem>>, vector<1x64x64xf32>
    %641 = vector.shape_cast %640 : vector<1x64x64xf32> to vector<64x64xf32>
    %cst_209 = arith.constant dense<0.000000e+00> : vector<20x64xf32>
    %642 = tpu.matmul %639, %641, %cst_209 {dimension_numbers = #tpu.dot_dimension_numbers<[1], [0], [0], [1], [0, 0, 1, 1], [], []>} : vector<20x64xf32>, vector<64x64xf32>, vector<20x64xf32> -> vector<20x64xf32>
    %643 = arith.addf %642, %405 : vector<20x64xf32>
    %644 = arith.mulf %643, %643 : vector<20x64xf32>
    %cst_210 = arith.constant dense<0.000000e+00> : vector<20xf32>
    %645 = vector.multi_reduction <add>, %644, %cst_210 [1] : vector<20x64xf32> to vector<20xf32>
    %646 = vector.shape_cast %645 : vector<20xf32> to vector<20x1xf32>
    %cst_211 = arith.constant 1.000000e-24 : f32
    %647 = vector.broadcast %cst_211 : f32 to vector<20x1xf32>
    %648 = arith.maximumf %646, %647 : vector<20x1xf32>
    %649 = math.rsqrt %648 : vector<20x1xf32>
    %650 = vector.broadcast %649 : vector<20x1xf32> to vector<20x64xf32>
    %651 = arith.mulf %643, %650 : vector<20x64xf32>
    %652 = vector.extract_strided_slice %2 {offsets = [6, 0], sizes = [1, 64], strides = [1, 1]} : vector<8x64xf32> to vector<1x64xf32>
    %653 = vector.broadcast %652 : vector<1x64xf32> to vector<20x64xf32>
    %654 = arith.mulf %651, %653 : vector<20x64xf32>
    %655 = vector.extract_strided_slice %2 {offsets = [7, 0], sizes = [1, 64], strides = [1, 1]} : vector<8x64xf32> to vector<1x64xf32>
    %656 = vector.broadcast %655 : vector<1x64xf32> to vector<20x64xf32>
    %657 = arith.addf %654, %656 : vector<20x64xf32>
    %c1_212 = arith.constant 1 : index
    %c0_213 = arith.constant 0 : index
    %c0_214 = arith.constant 0 : index
    %658 = vector.load %arg10[%c1_212, %c0_213, %c0_214] : memref<2x64x512xf32, #tpu.memory_space<vmem>>, vector<1x64x512xf32>
    %659 = vector.shape_cast %658 : vector<1x64x512xf32> to vector<64x512xf32>
    %cst_215 = arith.constant dense<0.000000e+00> : vector<20x512xf32>
    %660 = tpu.matmul %657, %659, %cst_215 {dimension_numbers = #tpu.dot_dimension_numbers<[1], [0], [0], [1], [0, 0, 1, 1], [], []>} : vector<20x64xf32>, vector<64x512xf32>, vector<20x512xf32> -> vector<20x512xf32>
    %c1_216 = arith.constant 1 : index
    %c0_217 = arith.constant 0 : index
    %c0_218 = arith.constant 0 : index
    %661 = vector.load %arg11[%c1_216, %c0_217, %c0_218] : memref<2x1x512xf32, #tpu.memory_space<vmem>>, vector<1x1x512xf32>
    %662 = vector.shape_cast %661 : vector<1x1x512xf32> to vector<1x512xf32>
    %663 = vector.broadcast %662 : vector<1x512xf32> to vector<20x512xf32>
    %664 = arith.addf %660, %663 : vector<20x512xf32>
    %665 = vector.extract_strided_slice %664 {offsets = [0, 256], sizes = [20, 256], strides = [1, 1]} : vector<20x512xf32> to vector<20x256xf32>
    %cst_219 = arith.constant 5.000000e-01 : f32
    %666 = vector.broadcast %cst_219 : f32 to vector<20x256xf32>
    %667 = arith.mulf %666, %665 : vector<20x256xf32>
    %cst_220 = arith.constant 0.707106769 : f32
    %668 = vector.broadcast %cst_220 : f32 to vector<20x256xf32>
    %669 = arith.mulf %665, %668 : vector<20x256xf32>
    %670 = math.absf %669 : vector<20x256xf32>
    %cst_221 = arith.constant 0.327591091 : f32
    %671 = vector.broadcast %cst_221 : f32 to vector<20x256xf32>
    %672 = arith.mulf %671, %670 : vector<20x256xf32>
    %cst_222 = arith.constant 1.000000e+00 : f32
    %673 = vector.broadcast %cst_222 : f32 to vector<20x256xf32>
    %674 = arith.addf %673, %672 : vector<20x256xf32>
    %cst_223 = arith.constant 1.000000e+00 : f32
    %675 = vector.broadcast %cst_223 : f32 to vector<20x256xf32>
    %676 = arith.divf %675, %674 : vector<20x256xf32>
    %cst_224 = arith.constant 1.06140542 : f32
    %677 = vector.broadcast %cst_224 : f32 to vector<20x256xf32>
    %678 = arith.mulf %677, %676 : vector<20x256xf32>
    %cst_225 = arith.constant 1.45315206 : f32
    %679 = vector.broadcast %cst_225 : f32 to vector<20x256xf32>
    %680 = arith.subf %678, %679 : vector<20x256xf32>
    %681 = arith.mulf %680, %676 : vector<20x256xf32>
    %cst_226 = arith.constant 1.42141378 : f32
    %682 = vector.broadcast %cst_226 : f32 to vector<20x256xf32>
    %683 = arith.addf %681, %682 : vector<20x256xf32>
    %684 = arith.mulf %683, %676 : vector<20x256xf32>
    %cst_227 = arith.constant 0.284496725 : f32
    %685 = vector.broadcast %cst_227 : f32 to vector<20x256xf32>
    %686 = arith.subf %684, %685 : vector<20x256xf32>
    %687 = arith.mulf %686, %676 : vector<20x256xf32>
    %cst_228 = arith.constant 0.254829586 : f32
    %688 = vector.broadcast %cst_228 : f32 to vector<20x256xf32>
    %689 = arith.addf %687, %688 : vector<20x256xf32>
    %690 = arith.mulf %689, %676 : vector<20x256xf32>
    %cst_229 = arith.constant 0.000000e+00 : f32
    %691 = vector.broadcast %cst_229 : f32 to vector<20x256xf32>
    %692 = arith.subf %691, %670 : vector<20x256xf32>
    %693 = arith.mulf %692, %670 : vector<20x256xf32>
    %694 = math.exp %693 : vector<20x256xf32>
    %695 = arith.mulf %690, %694 : vector<20x256xf32>
    %cst_230 = arith.constant 1.000000e+00 : f32
    %696 = vector.broadcast %cst_230 : f32 to vector<20x256xf32>
    %697 = arith.subf %696, %695 : vector<20x256xf32>
    %cst_231 = arith.constant 0.000000e+00 : f32
    %698 = vector.broadcast %cst_231 : f32 to vector<20x256xf32>
    %699 = arith.cmpf oge, %669, %698 : vector<20x256xf32>
    %cst_232 = arith.constant 0.000000e+00 : f32
    %700 = vector.broadcast %cst_232 : f32 to vector<20x256xf32>
    %701 = arith.subf %700, %697 : vector<20x256xf32>
    %702 = arith.select %699, %697, %701 : vector<20x256xi1>, vector<20x256xf32>
    %cst_233 = arith.constant 1.000000e+00 : f32
    %703 = vector.broadcast %cst_233 : f32 to vector<20x256xf32>
    %704 = arith.addf %703, %702 : vector<20x256xf32>
    %705 = arith.mulf %667, %704 : vector<20x256xf32>
    %706 = vector.extract_strided_slice %664 {offsets = [0, 0], sizes = [20, 256], strides = [1, 1]} : vector<20x512xf32> to vector<20x256xf32>
    %707 = arith.mulf %705, %706 : vector<20x256xf32>
    %c1_234 = arith.constant 1 : index
    %c0_235 = arith.constant 0 : index
    %c0_236 = arith.constant 0 : index
    %708 = vector.load %arg12[%c1_234, %c0_235, %c0_236] : memref<2x256x64xf32, #tpu.memory_space<vmem>>, vector<1x256x64xf32>
    %709 = vector.shape_cast %708 : vector<1x256x64xf32> to vector<256x64xf32>
    %cst_237 = arith.constant dense<0.000000e+00> : vector<20x64xf32>
    %710 = tpu.matmul %707, %709, %cst_237 {dimension_numbers = #tpu.dot_dimension_numbers<[1], [0], [0], [1], [0, 0, 1, 1], [], []>} : vector<20x256xf32>, vector<256x64xf32>, vector<20x64xf32> -> vector<20x64xf32>
    %711 = vector.extract_strided_slice %0 {offsets = [3, 0], sizes = [1, 64], strides = [1, 1]} : vector<8x64xf32> to vector<1x64xf32>
    %712 = vector.broadcast %711 : vector<1x64xf32> to vector<20x64xf32>
    %713 = arith.addf %710, %712 : vector<20x64xf32>
    %714 = arith.addf %713, %643 : vector<20x64xf32>
    %715 = vector.extract_strided_slice %714 {offsets = [0, 0], sizes = [16, 64], strides = [1, 1]} : vector<20x64xf32> to vector<16x64xf32>
    %716 = arith.mulf %715, %715 : vector<16x64xf32>
    %cst_238 = arith.constant dense<0.000000e+00> : vector<16xf32>
    %717 = vector.multi_reduction <add>, %716, %cst_238 [1] : vector<16x64xf32> to vector<16xf32>
    %718 = vector.shape_cast %717 : vector<16xf32> to vector<16x1xf32>
    %cst_239 = arith.constant 1.000000e-24 : f32
    %719 = vector.broadcast %cst_239 : f32 to vector<16x1xf32>
    %720 = arith.maximumf %718, %719 : vector<16x1xf32>
    %721 = math.rsqrt %720 : vector<16x1xf32>
    %722 = vector.broadcast %721 : vector<16x1xf32> to vector<16x64xf32>
    %723 = arith.mulf %715, %722 : vector<16x64xf32>
    %c0_240 = arith.constant 0 : index
    %c0_241 = arith.constant 0 : index
    %724 = vector.load %arg13[%c0_240, %c0_241] : memref<64x128xf32, #tpu.memory_space<vmem>>, vector<64x128xf32>
    %cst_242 = arith.constant dense<0.000000e+00> : vector<16x128xf32>
    %725 = tpu.matmul %723, %724, %cst_242 {dimension_numbers = #tpu.dot_dimension_numbers<[1], [0], [0], [1], [0, 0, 1, 1], [], []>} : vector<16x64xf32>, vector<64x128xf32>, vector<16x128xf32> -> vector<16x128xf32>
    %c0_243 = arith.constant 0 : index
    %c0_244 = arith.constant 0 : index
    %c0_245 = arith.constant 0 : index
    %726 = vector.load %arg14[%c0_243, %c0_244, %c0_245] : memref<1x16x128xf32, #tpu.memory_space<vmem>>, vector<1x16x128xf32>
    %727 = vector.shape_cast %726 : vector<1x16x128xf32> to vector<16x128xf32>
    %728 = vector.shape_cast %725 : vector<16x128xf32> to vector<1x16x128xf32>
    tpu.vector_store %arg14[%c0_243, %c0_244, %c0_245], %728 {strides = array<i32>} : memref<1x16x128xf32, #tpu.memory_space<vmem>>, vector<1x16x128xf32>,
    return
  }
  func.func @transform_0(%arg0: i32) -> (i32, i32, i32) {
    %c0_i32 = arith.constant 0 : i32
    %c0_i32_0 = arith.constant 0 : i32
    %c0_i32_1 = arith.constant 0 : i32
    return %arg0, %c0_i32, %c0_i32_0 : i32, i32, i32
  }
  func.func @transform_1(%arg0: i32) -> (i32, i32, i32) {
    %c0_i32 = arith.constant 0 : i32
    %c0_i32_0 = arith.constant 0 : i32
    %c0_i32_1 = arith.constant 0 : i32
    return %arg0, %c0_i32, %c0_i32_0 : i32, i32, i32
  }
  func.func @transform_2(%arg0: i32) -> (i32, i32) {
    %c0_i32 = arith.constant 0 : i32
    %c0_i32_0 = arith.constant 0 : i32
    %c0_i32_1 = arith.constant 0 : i32
    return %c0_i32, %c0_i32_0 : i32, i32
  }
  func.func @transform_3(%arg0: i32) -> (i32, i32) {
    %c0_i32 = arith.constant 0 : i32
    %c0_i32_0 = arith.constant 0 : i32
    %c0_i32_1 = arith.constant 0 : i32
    return %c0_i32, %c0_i32_0 : i32, i32
  }
  func.func @transform_4(%arg0: i32) -> (i32, i32, i32) {
    %c0_i32 = arith.constant 0 : i32
    %c0_i32_0 = arith.constant 0 : i32
    %c0_i32_1 = arith.constant 0 : i32
    %c0_i32_2 = arith.constant 0 : i32
    return %c0_i32, %c0_i32_0, %c0_i32_1 : i32, i32, i32
  }
  func.func @transform_5(%arg0: i32) -> (i32, i32, i32) {
    %c0_i32 = arith.constant 0 : i32
    %c0_i32_0 = arith.constant 0 : i32
    %c0_i32_1 = arith.constant 0 : i32
    %c0_i32_2 = arith.constant 0 : i32
    return %c0_i32, %c0_i32_0, %c0_i32_1 : i32, i32, i32
  }
  func.func @transform_6(%arg0: i32) -> (i32, i32, i32) {
    %c0_i32 = arith.constant 0 : i32
    %c0_i32_0 = arith.constant 0 : i32
    %c0_i32_1 = arith.constant 0 : i32
    %c0_i32_2 = arith.constant 0 : i32
    return %c0_i32, %c0_i32_0, %c0_i32_1 : i32, i32, i32
  }
  func.func @transform_7(%arg0: i32) -> (i32, i32, i32) {
    %c0_i32 = arith.constant 0 : i32
    %c0_i32_0 = arith.constant 0 : i32
    %c0_i32_1 = arith.constant 0 : i32
    %c0_i32_2 = arith.constant 0 : i32
    return %c0_i32, %c0_i32_0, %c0_i32_1 : i32, i32, i32
  }
  func.func @transform_8(%arg0: i32) -> (i32, i32, i32) {
    %c0_i32 = arith.constant 0 : i32
    %c0_i32_0 = arith.constant 0 : i32
    %c0_i32_1 = arith.constant 0 : i32
    %c0_i32_2 = arith.constant 0 : i32
    return %c0_i32, %c0_i32_0, %c0_i32_1 : i32, i32, i32
  }
  func.func @transform_9(%arg0: i32) -> (i32, i32, i32) {
    %c0_i32 = arith.constant 0 : i32
    %c0_i32_0 = arith.constant 0 : i32
    %c0_i32_1 = arith.constant 0 : i32
    %c0_i32_2 = arith.constant 0 : i32
    return %c0_i32, %c0_i32_0, %c0_i32_1 : i32, i32, i32
  }
  func.func @transform_10(%arg0: i32) -> (i32, i32, i32) {
    %c0_i32 = arith.constant 0 : i32
    %c0_i32_0 = arith.constant 0 : i32
    %c0_i32_1 = arith.constant 0 : i32
    %c0_i32_2 = arith.constant 0 : i32
    return %c0_i32, %c0_i32_0, %c0_i32_1 : i32, i32, i32
  }
  func.func @transform_11(%arg0: i32) -> (i32, i32, i32) {
    %c0_i32 = arith.constant 0 : i32
    %c0_i32_0 = arith.constant 0 : i32
    %c0_i32_1 = arith.constant 0 : i32
    %c0_i32_2 = arith.constant 0 : i32
    return %c0_i32, %c0_i32_0, %c0_i32_1 : i32, i32, i32
  }
  func.func @transform_12(%arg0: i32) -> (i32, i32) {
    %c0_i32 = arith.constant 0 : i32
    %c0_i32_0 = arith.constant 0 : i32
    %c0_i32_1 = arith.constant 0 : i32
    return %c0_i32, %c0_i32_0 : i32, i32
  }
  func.func @transform_13(%arg0: i32) -> (i32, i32, i32) {
    %c0_i32 = arith.constant 0 : i32
    %c0_i32_0 = arith.constant 0 : i32
    %c0_i32_1 = arith.constant 0 : i32
    return %arg0, %c0_i32, %c0_i32_0 : i32, i32, i32
  }
}

</mosaic_0001>

<llo_original>
// kernel: regressor_forward.1
$region0: #{regressor_forward.1}
  #allocation0 [shape = 'u32[]', space=smem, size = 0x4, offset = 0x4, fixed_abs, tag = 'smem constant byte address 0x4 - core index']
  #allocation1 [shape = 'u32[144,128]{1,0:T(1,128)}', space=vmem, size = 0x12000, scoped, tag = 'internal scratch']
  #allocation2 [shape = 'f32[20,64]{1,0:T(8,128)}', space=vmem, size = 0x3000, scoped, tag = 'scratch operand']
  %s0 = inlined_call_operand.vmem [shape: f32[2,16,30], index: 0, kind: input, shape index: {}]
  %s1 = inlined_call_operand.vmem [shape: f32[2,8,64], index: 1, kind: input, shape index: {}]
  %s2 = inlined_call_operand.hbm [shape: f32[30,64], index: 2, kind: input, shape index: {}]
  %s3 = inlined_call_operand.vmem [shape: f32[8,64], index: 3, kind: input, shape index: {}]
  %s4 = inlined_call_operand.hbm [shape: f32[7,16,64], index: 4, kind: input, shape index: {}]
  %s5 = inlined_call_operand.hbm [shape: f32[2,20,16], index: 5, kind: input, shape index: {}]
  %s6 = inlined_call_operand.vmem [shape: f32[16,1,16], index: 6, kind: input, shape index: {}]
  %s7 = inlined_call_operand.vmem [shape: f32[2,64,192], index: 7, kind: input, shape index: {}]
  %s8 = inlined_call_operand.hbm [shape: f32[2,64,64], index: 8, kind: input, shape index: {}]
  %s9 = inlined_call_operand.hbm [shape: f32[2,64,512], index: 9, kind: input, shape index: {}]
  %s10 = inlined_call_operand.vmem [shape: f32[2,1,512], index: 10, kind: input, shape index: {}]
  %s11 = inlined_call_operand.hbm [shape: f32[2,256,64], index: 11, kind: input, shape index: {}]
  %s12 = inlined_call_operand.vmem [shape: f32[64,128], index: 12, kind: input, shape index: {}]
  %s13 = inlined_call_operand.vmem [shape: f32[2,16,128], index: 13, kind: output, shape index: {}]
  %s14 = sld [smem:[#allocation0]]
  $region109: #{regressor_forward.1} parent=0
    _
  %s16 = ssub.s32 1, %s14
  %s17 = scalar_select 0, %s16, %s14
  $region1: #{regressor_forward.1} parent=0
    #allocation3 [shape = 'u8[16384]{0}', space=vmem, size = 0x4000, scoped, tag = 'input window, operand 2, single buffered']
    #allocation4 [shape = 's32[2]{0}', space=sflag, size = 0x8, scoped, tag = 'scoped memory for regressor_forward.1']
    #allocation5 [shape = 'u8[57344]{0}', space=vmem, size = 0xe000, scoped, tag = 'input window, operand 4, single buffered']
    #allocation6 [shape = 's32[1]{0}', space=sflag, size = 0x4, scoped, tag = 'scoped memory for regressor_forward.1']
    #allocation7 [shape = 'u8[24576]{0}', space=vmem, size = 0x6000, scoped, tag = 'input window, operand 5, single buffered']
    #allocation8 [shape = 'u8[65536]{0}', space=vmem, size = 0x10000, scoped, tag = 'input window, operand 8, single buffered']
    #allocation9 [shape = 's32[1]{0}', space=sflag, size = 0x4, scoped, tag = 'scoped memory for regressor_forward.1']
    #allocation10 [shape = 'u8[262144]{0}', space=vmem, size = 0x40000, scoped, tag = 'input window, operand 9, single buffered']
    #allocation11 [shape = 'u8[262144]{0}', space=vmem, size = 0x40000, scoped, tag = 'input window, operand 11, single buffered']
    #allocation12 [shape = 's32[1]{0}', space=sflag, size = 0x4, scoped, tag = 'scoped memory for regressor_forward.1']
    %18 = vsyncpa [#allocation4], 0
    %19 = vsyncpa [#allocation6], 0
    %20 = vsyncpa [#allocation9], 0
    %21 = vsyncpa [#allocation12], 0
    loop: start=0, step=1, limit=4
    $region2: #{regressor_forward.1} parent=1 // loop_pre_header
      _
    $region3: #{regressor_forward.1} parent=1 // loop_header
      %s23 = sphi 0, %s27
      %p24 = scmp.ge.s32.totalorder %s23, 4
      %s33 = sphi 0, %s35
      %s36 = sphi 0, %s33
      %s37 = sphi 0, %s36
      %s53 = sphi 0, %s37
      %s59 = sphi 0, %s61
      %s62 = sphi 0, %s59
      %s63 = sphi 0, %s62
      %s79 = sphi 0, %s63
      %s83 = sphi 0, %s83
      %s85 = sphi 0, %s83
      %s86 = sphi 0, %s85
      %s100 = sphi 0, %s86
      %s104 = sphi 0, %s104
      %s106 = sphi 0, %s104
      %s107 = sphi 0, %s106
      %s121 = sphi 0, %s107
      %s125 = sphi 0, %s125
      %s127 = sphi 0, %s125
      %s128 = sphi 0, %s127
      %s142 = sphi 0, %s128
      %s146 = sphi 0, %s146
      %s148 = sphi 0, %s146
      %s149 = sphi 0, %s148
      %s163 = sphi 0, %s149
      %s167 = sphi 0, %s167
      %s169 = sphi 0, %s167
      %s170 = sphi 0, %s169
      %s184 = sphi 0, %s170
      %s188 = sphi 0, %s188
      %s190 = sphi 0, %s188
      %s191 = sphi 0, %s190
      %s205 = sphi 0, %s191
      %s209 = sphi 0, %s209
      %s211 = sphi 0, %s209
      %s212 = sphi 0, %s211
      %s226 = sphi 0, %s212
      %s230 = sphi 0, %s230
      %s232 = sphi 0, %s230
      %s233 = sphi 0, %s232
      %s247 = sphi 0, %s233
      %s251 = sphi 0, %s251
      %s253 = sphi 0, %s251
      %s254 = sphi 0, %s253
      %s268 = sphi 0, %s254
      %s272 = sphi 0, %s272
      %s274 = sphi 0, %s272
      %s275 = sphi 0, %s274
      %s289 = sphi 0, %s275
      %s293 = sphi 0, %s293
      %s295 = sphi 0, %s293
      %s296 = sphi 0, %s295
      %s310 = sphi 0, %s296
      %s316 = sphi 0, %s318
      %s319 = sphi 0, %s316
      %s320 = sphi 0, %s319
      %s336 = sphi 0, %s320
    $region4: #{regressor_forward.1} parent=1 // loop_header_branch
      %26 = sbr.rel (%p24) target = $region8
    $region5: #{regressor_forward.1} parent=1 // loop_body
      %s28 = ssub.s32 %s23, 1
      %s29 = ssub.s32 %s23, 2
      %s30 = sadd.s32 %s23, 1
      %s31 = ssub.s32 %s23, %s30
      %p32 = scmp.eq.s32.totalorder %s31, 0
      %s34 = sadd.s32 %s33, 1
      %s35 = scalar_select %p32, %s33, %s34
      %p38 = pneg %p32
      %p39 = scmp.eq.s32.totalorder %s23, 1
      %p40 = por %p38, %p39
      %p41 = scmp.ne.s32.totalorder %s33, %s36
      %p42 = scmp.eq.s32.totalorder %s23, 0
      %p43 = por %p41, %p42
      %p44 = scmp.ne.s32.totalorder %s33, %s36
      %p45 = scmp.eq.s32.totalorder %s28, 1
      %p46 = por %p44, %p45
      %p47 = scmp.ne.s32.totalorder %s36, %s37
      %p48 = scmp.eq.s32.totalorder %s28, 0
      %p49 = por %p47, %p48
      %p50 = scmp.ne.s32.totalorder %s36, %s37
      %p51 = scmp.eq.s32.totalorder %s29, 1
      %p52 = por %p50, %p51
      %p54 = scmp.ne.s32.totalorder %s37, %s53
      %p55 = scmp.eq.s32.totalorder %s29, 0
      %p56 = por %p54, %p55
      %s57 = ssub.s32 %s23, %s30
      %p58 = scmp.eq.s32.totalorder %s57, 0
      %s60 = sadd.s32 %s59, 1
      %s61 = scalar_select %p58, %s59, %s60
      %p64 = pneg %p58
      %p65 = scmp.eq.s32.totalorder %s23, 1
      %p66 = por %p64, %p65
      %p67 = scmp.ne.s32.totalorder %s59, %s62
      %p68 = scmp.eq.s32.totalorder %s23, 0
      %p69 = por %p67, %p68
      %p70 = scmp.ne.s32.totalorder %s59, %s62
      %p71 = scmp.eq.s32.totalorder %s28, 1
      %p72 = por %p70, %p71
      %p73 = scmp.ne.s32.totalorder %s62, %s63
      %p74 = scmp.eq.s32.totalorder %s28, 0
      %p75 = por %p73, %p74
      %p76 = scmp.ne.s32.totalorder %s62, %s63
      %p77 = scmp.eq.s32.totalorder %s29, 1
      %p78 = por %p76, %p77
      %p80 = scmp.ne.s32.totalorder %s63, %s79
      %p81 = scmp.eq.s32.totalorder %s29, 0
      %p82 = por %p80, %p81
      %s84 = sadd.s32 %s83, 1
      %p87 = scmp.eq.s32.totalorder %s23, 1
      %p88 = scmp.ne.s32.totalorder %s83, %s85
      %p89 = scmp.eq.s32.totalorder %s23, 0
      %p90 = por %p88, %p89
      %p91 = scmp.ne.s32.totalorder %s83, %s85
      %p92 = scmp.eq.s32.totalorder %s28, 1
      %p93 = por %p91, %p92
      %p94 = scmp.ne.s32.totalorder %s85, %s86
      %p95 = scmp.eq.s32.totalorder %s28, 0
      %p96 = por %p94, %p95
      %p97 = scmp.ne.s32.totalorder %s85, %s86
      %p98 = scmp.eq.s32.totalorder %s29, 1
      %p99 = por %p97, %p98
      %p101 = scmp.ne.s32.totalorder %s86, %s100
      %p102 = scmp.eq.s32.totalorder %s29, 0
      %p103 = por %p101, %p102
      %s105 = sadd.s32 %s104, 1
      %p108 = scmp.eq.s32.totalorder %s23, 1
      %p109 = scmp.ne.s32.totalorder %s104, %s106
      %p110 = scmp.eq.s32.totalorder %s23, 0
      %p111 = por %p109, %p110
      %p112 = scmp.ne.s32.totalorder %s104, %s106
      %p113 = scmp.eq.s32.totalorder %s28, 1
      %p114 = por %p112, %p113
      %p115 = scmp.ne.s32.totalorder %s106, %s107
      %p116 = scmp.eq.s32.totalorder %s28, 0
      %p117 = por %p115, %p116
      %p118 = scmp.ne.s32.totalorder %s106, %s107
      %p119 = scmp.eq.s32.totalorder %s29, 1
      %p120 = por %p118, %p119
      %p122 = scmp.ne.s32.totalorder %s107, %s121
      %p123 = scmp.eq.s32.totalorder %s29, 0
      %p124 = por %p122, %p123
      %s126 = sadd.s32 %s125, 1
      %p129 = scmp.eq.s32.totalorder %s23, 1
      %p130 = scmp.ne.s32.totalorder %s125, %s127
      %p131 = scmp.eq.s32.totalorder %s23, 0
      %p132 = por %p130, %p131
      %p133 = scmp.ne.s32.totalorder %s125, %s127
      %p134 = scmp.eq.s32.totalorder %s28, 1
      %p135 = por %p133, %p134
      %p136 = scmp.ne.s32.totalorder %s127, %s128
      %p137 = scmp.eq.s32.totalorder %s28, 0
      %p138 = por %p136, %p137
      %p139 = scmp.ne.s32.totalorder %s127, %s128
      %p140 = scmp.eq.s32.totalorder %s29, 1
      %p141 = por %p139, %p140
      %p143 = scmp.ne.s32.totalorder %s128, %s142
      %p144 = scmp.eq.s32.totalorder %s29, 0
      %p145 = por %p143, %p144
      %s147 = sadd.s32 %s146, 1
      %p150 = scmp.eq.s32.totalorder %s23, 1
      %p151 = scmp.ne.s32.totalorder %s146, %s148
      %p152 = scmp.eq.s32.totalorder %s23, 0
      %p153 = por %p151, %p152
      %p154 = scmp.ne.s32.totalorder %s146, %s148
      %p155 = scmp.eq.s32.totalorder %s28, 1
      %p156 = por %p154, %p155
      %p157 = scmp.ne.s32.totalorder %s148, %s149
      %p158 = scmp.eq.s32.totalorder %s28, 0
      %p159 = por %p157, %p158
      %p160 = scmp.ne.s32.totalorder %s148, %s149
      %p161 = scmp.eq.s32.totalorder %s29, 1
      %p162 = por %p160, %p161
      %p164 = scmp.ne.s32.totalorder %s149, %s163
      %p165 = scmp.eq.s32.totalorder %s29, 0
      %p166 = por %p164, %p165
      %s168 = sadd.s32 %s167, 1
      %p171 = scmp.eq.s32.totalorder %s23, 1
      %p172 = scmp.ne.s32.totalorder %s167, %s169
      %p173 = scmp.eq.s32.totalorder %s23, 0
      %p174 = por %p172, %p173
      %p175 = scmp.ne.s32.totalorder %s167, %s169
      %p176 = scmp.eq.s32.totalorder %s28, 1
      %p177 = por %p175, %p176
      %p178 = scmp.ne.s32.totalorder %s169, %s170
      %p179 = scmp.eq.s32.totalorder %s28, 0
      %p180 = por %p178, %p179
      %p181 = scmp.ne.s32.totalorder %s169, %s170
      %p182 = scmp.eq.s32.totalorder %s29, 1
      %p183 = por %p181, %p182
      %p185 = scmp.ne.s32.totalorder %s170, %s184
      %p186 = scmp.eq.s32.totalorder %s29, 0
      %p187 = por %p185, %p186
      %s189 = sadd.s32 %s188, 1
      %p192 = scmp.eq.s32.totalorder %s23, 1
      %p193 = scmp.ne.s32.totalorder %s188, %s190
      %p194 = scmp.eq.s32.totalorder %s23, 0
      %p195 = por %p193, %p194
      %p196 = scmp.ne.s32.totalorder %s188, %s190
      %p197 = scmp.eq.s32.totalorder %s28, 1
      %p198 = por %p196, %p197
      %p199 = scmp.ne.s32.totalorder %s190, %s191
      %p200 = scmp.eq.s32.totalorder %s28, 0
      %p201 = por %p199, %p200
      %p202 = scmp.ne.s32.totalorder %s190, %s191
      %p203 = scmp.eq.s32.totalorder %s29, 1
      %p204 = por %p202, %p203
      %p206 = scmp.ne.s32.totalorder %s191, %s205
      %p207 = scmp.eq.s32.totalorder %s29, 0
      %p208 = por %p206, %p207
      %s210 = sadd.s32 %s209, 1
      %p213 = scmp.eq.s32.totalorder %s23, 1
      %p214 = scmp.ne.s32.totalorder %s209, %s211
      %p215 = scmp.eq.s32.totalorder %s23, 0
      %p216 = por %p214, %p215
      %p217 = scmp.ne.s32.totalorder %s209, %s211
      %p218 = scmp.eq.s32.totalorder %s28, 1
      %p219 = por %p217, %p218
      %p220 = scmp.ne.s32.totalorder %s211, %s212
      %p221 = scmp.eq.s32.totalorder %s28, 0
      %p222 = por %p220, %p221
      %p223 = scmp.ne.s32.totalorder %s211, %s212
      %p224 = scmp.eq.s32.totalorder %s29, 1
      %p225 = por %p223, %p224
      %p227 = scmp.ne.s32.totalorder %s212, %s226
      %p228 = scmp.eq.s32.totalorder %s29, 0
      %p229 = por %p227, %p228
      %s231 = sadd.s32 %s230, 1
      %p234 = scmp.eq.s32.totalorder %s23, 1
      %p235 = scmp.ne.s32.totalorder %s230, %s232
      %p236 = scmp.eq.s32.totalorder %s23, 0
      %p237 = por %p235, %p236
      %p238 = scmp.ne.s32.totalorder %s230, %s232
      %p239 = scmp.eq.s32.totalorder %s28, 1
      %p240 = por %p238, %p239
      %p241 = scmp.ne.s32.totalorder %s232, %s233
      %p242 = scmp.eq.s32.totalorder %s28, 0
      %p243 = por %p241, %p242
      %p244 = scmp.ne.s32.totalorder %s232, %s233
      %p245 = scmp.eq.s32.totalorder %s29, 1
      %p246 = por %p244, %p245
      %p248 = scmp.ne.s32.totalorder %s233, %s247
      %p249 = scmp.eq.s32.totalorder %s29, 0
      %p250 = por %p248, %p249
      %s252 = sadd.s32 %s251, 1
      %p255 = scmp.eq.s32.totalorder %s23, 1
      %p256 = scmp.ne.s32.totalorder %s251, %s253
      %p257 = scmp.eq.s32.totalorder %s23, 0
      %p258 = por %p256, %p257
      %p259 = scmp.ne.s32.totalorder %s251, %s253
      %p260 = scmp.eq.s32.totalorder %s28, 1
      %p261 = por %p259, %p260
      %p262 = scmp.ne.s32.totalorder %s253, %s254
      %p263 = scmp.eq.s32.totalorder %s28, 0
      %p264 = por %p262, %p263
      %p265 = scmp.ne.s32.totalorder %s253, %s254
      %p266 = scmp.eq.s32.totalorder %s29, 1
      %p267 = por %p265, %p266
      %p269 = scmp.ne.s32.totalorder %s254, %s268
      %p270 = scmp.eq.s32.totalorder %s29, 0
      %p271 = por %p269, %p270
      %s273 = sadd.s32 %s272, 1
      %p276 = scmp.eq.s32.totalorder %s23, 1
      %p277 = scmp.ne.s32.totalorder %s272, %s274
      %p278 = scmp.eq.s32.totalorder %s23, 0
      %p279 = por %p277, %p278
      %p280 = scmp.ne.s32.totalorder %s272, %s274
      %p281 = scmp.eq.s32.totalorder %s28, 1
      %p282 = por %p280, %p281
      %p283 = scmp.ne.s32.totalorder %s274, %s275
      %p284 = scmp.eq.s32.totalorder %s28, 0
      %p285 = por %p283, %p284
      %p286 = scmp.ne.s32.totalorder %s274, %s275
      %p287 = scmp.eq.s32.totalorder %s29, 1
      %p288 = por %p286, %p287
      %p290 = scmp.ne.s32.totalorder %s275, %s289
      %p291 = scmp.eq.s32.totalorder %s29, 0
      %p292 = por %p290, %p291
      %s294 = sadd.s32 %s293, 1
      %p297 = scmp.eq.s32.totalorder %s23, 1
      %p298 = scmp.ne.s32.totalorder %s293, %s295
      %p299 = scmp.eq.s32.totalorder %s23, 0
      %p300 = por %p298, %p299
      %p301 = scmp.ne.s32.totalorder %s293, %s295
      %p302 = scmp.eq.s32.totalorder %s28, 1
      %p303 = por %p301, %p302
      %p304 = scmp.ne.s32.totalorder %s295, %s296
      %p305 = scmp.eq.s32.totalorder %s28, 0
      %p306 = por %p304, %p305
      %p307 = scmp.ne.s32.totalorder %s295, %s296
      %p308 = scmp.eq.s32.totalorder %s29, 1
      %p309 = por %p307, %p308
      %p311 = scmp.ne.s32.totalorder %s296, %s310
      %p312 = scmp.eq.s32.totalorder %s29, 0
      %p313 = por %p311, %p312
      %s314 = ssub.s32 %s23, %s30
      %p315 = scmp.eq.s32.totalorder %s314, 0
      %s317 = sadd.s32 %s316, 1
      %s318 = scalar_select %p315, %s316, %s317
      %p321 = pneg %p315
      %p322 = scmp.eq.s32.totalorder %s23, 1
      %p323 = por %p321, %p322
      %p324 = scmp.ne.s32.totalorder %s316, %s319
      %p325 = scmp.eq.s32.totalorder %s23, 0
      %p326 = por %p324, %p325
      %p327 = scmp.ne.s32.totalorder %s316, %s319
      %p328 = scmp.eq.s32.totalorder %s28, 1
      %p329 = por %p327, %p328
      %p330 = scmp.ne.s32.totalorder %s319, %s320
      %p331 = scmp.eq.s32.totalorder %s28, 0
      %p332 = por %p330, %p331
      %p333 = scmp.ne.s32.totalorder %s319, %s320
      %p334 = scmp.eq.s32.totalorder %s29, 1
      %p335 = por %p333, %p334
      %p337 = scmp.ne.s32.totalorder %s320, %s336
      %p338 = scmp.eq.s32.totalorder %s29, 0
      %p339 = por %p337, %p338
      %p340 = scmp.le.s32.totalorder 1, %s23
      %p341 = scmp.lt.s32.totalorder %s23, 3
      %p342 = pnand %p340, %p341
      %p343 = pneg %p342
      // Predicated region
      $region9: #{regressor_forward.1} parent=5 // pred_check
        _
      $region10: #{regressor_forward.1} parent=5 // pred_check_branch
        %345 = sbr.rel (%p342) target = $region12
      $region11: #{regressor_forward.1} parent=5 // pred_region
        %s346 = ssub.s32 %s23, 1
        // Predicated region
        $region13: #{regressor_forward.1} parent=11 // pred_check
          %p347 = pneg %p96
        $region14: #{regressor_forward.1} parent=11 // pred_check_branch
          %349 = sbr.rel (%p347) target = $region16
        $region15: #{regressor_forward.1} parent=11 // pred_region
          %s351 = ssub.s32 512, 512
          %352 = vsyncadd [#allocation4], %s351
          %s353 = sshll.u32 [#allocation3], 4
          %s354 = int_to_ptr.vmem [resolvable:$true] %s353
          %359 = dma.hbm_to_vmem [thread:$0]  %s2, 512, %s354, [#allocation4], 128, 128, 8
        $region16: #{regressor_forward.1} parent=11 // pred_fallthru
          _
        // Predicated region
        $region17: #{regressor_forward.1} parent=11 // pred_check
          %p360 = pneg %p117
        $region18: #{regressor_forward.1} parent=11 // pred_check_branch
          %362 = sbr.rel (%p360) target = $region20
        $region19: #{regressor_forward.1} parent=11 // pred_region
          _
        $region20: #{regressor_forward.1} parent=11 // pred_fallthru
          _
        // Predicated region
        $region21: #{regressor_forward.1} parent=11 // pred_check
          %p363 = pneg %p138
        $region22: #{regressor_forward.1} parent=11 // pred_check_branch
          %365 = sbr.rel (%p363) target = $region24
        $region23: #{regressor_forward.1} parent=11 // pred_region
          %s367 = ssub.s32 1792, 1792
          %368 = vsyncadd [#allocation6], %s367
          %s369 = sshll.u32 [#allocation5], 4
          %s370 = int_to_ptr.vmem [resolvable:$true] %s369
          %375 = dma.hbm_to_vmem [thread:$0]  %s4, 1792, %s370, [#allocation6], 128, 128, 8
        $region24: #{regressor_forward.1} parent=11 // pred_fallthru
          _
        // Predicated region
        $region25: #{regressor_forward.1} parent=11 // pred_check
          %p376 = pneg %p159
        $region26: #{regressor_forward.1} parent=11 // pred_check_branch
          %378 = sbr.rel (%p376) target = $region28
        $region27: #{regressor_forward.1} parent=11 // pred_region
          %s380 = ssub.s32 768, 768
          %381 = vsyncadd [#allocation6], %s380
          %s382 = sshll.u32 [#allocation7], 4
          %s383 = int_to_ptr.vmem [resolvable:$true] %s382
          %388 = dma.hbm_to_vmem [thread:$0]  %s5, 768, %s383, [#allocation6], 128, 128, 8
        $region28: #{regressor_forward.1} parent=11 // pred_fallthru
          _
        // Predicated region
        $region29: #{regressor_forward.1} parent=11 // pred_check
          %p389 = pneg %p180
        $region30: #{regressor_forward.1} parent=11 // pred_check_branch
          %391 = sbr.rel (%p389) target = $region32
        $region31: #{regressor_forward.1} parent=11 // pred_region
          _
        $region32: #{regressor_forward.1} parent=11 // pred_fallthru
          _
        // Predicated region
        $region33: #{regressor_forward.1} parent=11 // pred_check
          %p392 = pneg %p201
        $region34: #{regressor_forward.1} parent=11 // pred_check_branch
          %394 = sbr.rel (%p392) target = $region36
        $region35: #{regressor_forward.1} parent=11 // pred_region
          _
        $region36: #{regressor_forward.1} parent=11 // pred_fallthru
          _
        // Predicated region
        $region37: #{regressor_forward.1} parent=11 // pred_check
          %p395 = pneg %p222
        $region38: #{regressor_forward.1} parent=11 // pred_check_branch
          %397 = sbr.rel (%p395) target = $region40
        $region39: #{regressor_forward.1} parent=11 // pred_region
          %s399 = ssub.s32 2048, 2048
          %400 = vsyncadd [#allocation9], %s399
          %s401 = sshll.u32 [#allocation8], 4
          %s402 = int_to_ptr.vmem [resolvable:$true] %s401
          %407 = dma.hbm_to_vmem [thread:$0]  %s8, 2048, %s402, [#allocation9], 128, 128, 8
        $region40: #{regressor_forward.1} parent=11 // pred_fallthru
          _
        // Predicated region
        $region41: #{regressor_forward.1} parent=11 // pred_check
          %p408 = pneg %p243
        $region42: #{regressor_forward.1} parent=11 // pred_check_branch
          %410 = sbr.rel (%p408) target = $region44
        $region43: #{regressor_forward.1} parent=11 // pred_region
          %s412 = ssub.s32 8192, 8192
          %413 = vsyncadd [#allocation9], %s412
          %s414 = sshll.u32 [#allocation10], 4
          %s415 = int_to_ptr.vmem [resolvable:$true] %s414
          %420 = dma.hbm_to_vmem [thread:$0]  %s9, 8192, %s415, [#allocation9], 512, 512, 32
        $region44: #{regressor_forward.1} parent=11 // pred_fallthru
          _
        // Predicated region
        $region45: #{regressor_forward.1} parent=11 // pred_check
          %p421 = pneg %p264
        $region46: #{regressor_forward.1} parent=11 // pred_check_branch
          %423 = sbr.rel (%p421) target = $region48
        $region47: #{regressor_forward.1} parent=11 // pred_region
          _
        $region48: #{regressor_forward.1} parent=11 // pred_fallthru
          _
        // Predicated region
        $region49: #{regressor_forward.1} parent=11 // pred_check
          %p424 = pneg %p285
        $region50: #{regressor_forward.1} parent=11 // pred_check_branch
          %426 = sbr.rel (%p424) target = $region52
        $region51: #{regressor_forward.1} parent=11 // pred_region
          %s428 = ssub.s32 8192, 8192
          %429 = vsyncadd [#allocation12], %s428
          %s430 = sshll.u32 [#allocation11], 4
          %s431 = int_to_ptr.vmem [resolvable:$true] %s430
          %436 = dma.hbm_to_vmem [thread:$0]  %s11, 8192, %s431, [#allocation12], 128, 128, 8
        $region52: #{regressor_forward.1} parent=11 // pred_fallthru
          _
        // Predicated region
        $region53: #{regressor_forward.1} parent=11 // pred_check
          %p437 = pneg %p306
        $region54: #{regressor_forward.1} parent=11 // pred_check_branch
          %439 = sbr.rel (%p437) target = $region56
        $region55: #{regressor_forward.1} parent=11 // pred_region
          _
        $region56: #{regressor_forward.1} parent=11 // pred_fallthru
          _
      $region12: #{regressor_forward.1} parent=5 // pred_fallthru
        _
      %p440 = scmp.lt.s32.totalorder %s23, 2
      // Predicated region
      $region57: #{regressor_forward.1} parent=5 // pred_check
        %p441 = pneg %p440
      $region58: #{regressor_forward.1} parent=5 // pred_check_branch
        %443 = sbr.rel (%p441) target = $region60
      $region59: #{regressor_forward.1} parent=5 // pred_region
        // Predicated region
        $region61: #{regressor_forward.1} parent=59 // pred_check
          %p444 = pneg %p43
        $region62: #{regressor_forward.1} parent=59 // pred_check_branch
          %446 = sbr.rel (%p444) target = $region64
        $region63: #{regressor_forward.1} parent=59 // pred_region
          %p447 = scmp.lt.s32.totalorder %s23, 1
          %s448 = scalar_select %p447, %s23, 1
          %s449 = smul.addr %s448, 2
          %s450 = smul.addr %s449, 8
          %s451 = scalar_lea.vmem %s0, %s450
        $region64: #{regressor_forward.1} parent=59 // pred_fallthru
          _
        // Predicated region
        $region65: #{regressor_forward.1} parent=59 // pred_check
          %p452 = pneg %p69
        $region66: #{regressor_forward.1} parent=59 // pred_check_branch
          %454 = sbr.rel (%p452) target = $region68
        $region67: #{regressor_forward.1} parent=59 // pred_region
          %p455 = scmp.lt.s32.totalorder %s23, 1
          %s456 = scalar_select %p455, %s23, 1
          %s457 = smul.addr %s456, 8
          %s458 = scalar_lea.vmem %s1, %s457
        $region68: #{regressor_forward.1} parent=59 // pred_fallthru
          _
      $region60: #{regressor_forward.1} parent=5 // pred_fallthru
        _
      %p459 = scmp.le.s32.totalorder 1, %s23
      %p460 = scmp.lt.s32.totalorder %s23, 3
      %p461 = pnand %p459, %p460
      %p462 = pneg %p461
      // Predicated region
      $region69: #{regressor_forward.1} parent=5 // pred_check
        _
      $region70: #{regressor_forward.1} parent=5 // pred_check_branch
        %464 = sbr.rel (%p461) target = $region72
      $region71: #{regressor_forward.1} parent=5 // pred_region
        %s465 = ssub.s32 %s23, 1
        // Predicated region
        $region73: #{regressor_forward.1} parent=71 // pred_check
          %p466 = pneg %p96
        $region74: #{regressor_forward.1} parent=71 // pred_check_branch
          %468 = sbr.rel (%p466) target = $region76
        $region75: #{regressor_forward.1} parent=71 // pred_region
          %469 = dma.done [#allocation4], 512
        $region76: #{regressor_forward.1} parent=71 // pred_fallthru
          _
        // Predicated region
        $region77: #{regressor_forward.1} parent=71 // pred_check
          %p470 = pneg %p138
        $region78: #{regressor_forward.1} parent=71 // pred_check_branch
          %472 = sbr.rel (%p470) target = $region80
        $region79: #{regressor_forward.1} parent=71 // pred_region
          %473 = dma.done [#allocation6], 1792
        $region80: #{regressor_forward.1} parent=71 // pred_fallthru
          _
        // Predicated region
        $region81: #{regressor_forward.1} parent=71 // pred_check
          %p474 = pneg %p159
        $region82: #{regressor_forward.1} parent=71 // pred_check_branch
          %476 = sbr.rel (%p474) target = $region84
        $region83: #{regressor_forward.1} parent=71 // pred_region
          %477 = dma.done [#allocation6], 768
        $region84: #{regressor_forward.1} parent=71 // pred_fallthru
          _
        // Predicated region
        $region85: #{regressor_forward.1} parent=71 // pred_check
          %p478 = pneg %p222
        $region86: #{regressor_forward.1} parent=71 // pred_check_branch
          %480 = sbr.rel (%p478) target = $region88
        $region87: #{regressor_forward.1} parent=71 // pred_region
          %481 = dma.done [#allocation9], 2048
        $region88: #{regressor_forward.1} parent=71 // pred_fallthru
          _
        // Predicated region
        $region89: #{regressor_forward.1} parent=71 // pred_check
          %p482 = pneg %p243
        $region90: #{regressor_forward.1} parent=71 // pred_check_branch
          %484 = sbr.rel (%p482) target = $region92
        $region91: #{regressor_forward.1} parent=71 // pred_region
          %485 = dma.done [#allocation9], 8192
        $region92: #{regressor_forward.1} parent=71 // pred_fallthru
          _
        // Predicated region
        $region93: #{regressor_forward.1} parent=71 // pred_check
          %p486 = pneg %p285
        $region94: #{regressor_forward.1} parent=71 // pred_check_branch
          %488 = sbr.rel (%p486) target = $region96
        $region95: #{regressor_forward.1} parent=71 // pred_region
          %489 = dma.done [#allocation12], 8192
        $region96: #{regressor_forward.1} parent=71 // pred_fallthru
          _
        %p490 = scmp.lt.s32.totalorder %s28, 1
        %s491 = scalar_select %p490, %s28, 1
        %s492 = smul.addr %s491, 2
        %s493 = smul.addr %s492, 8
        %s494 = scalar_lea.vmem %s0, %s493
        %p495 = pneg %p49
        %p496 = pneg %p46
        %p497 = scmp.lt.s32.totalorder %s28, 1
        %s498 = scalar_select %p497, %s28, 1
        %s499 = smul.addr %s498, 8
        %s500 = scalar_lea.vmem %s1, %s499
        %p501 = pneg %p75
        %p502 = pneg %p72
        %p503 = pneg %p96
        %p504 = pneg %p93
        %p505 = pneg %p117
        %p506 = pneg %p114
        %p507 = pneg %p138
        %p508 = pneg %p135
        %p509 = pneg %p159
        %p510 = pneg %p156
        %p511 = pneg %p180
        %p512 = pneg %p177
        %p513 = pneg %p201
        %p514 = pneg %p198
        %p515 = pneg %p222
        %p516 = pneg %p219
        %p517 = pneg %p243
        %p518 = pneg %p240
        %p519 = pneg %p264
        %p520 = pneg %p261
        %p521 = pneg %p285
        %p522 = pneg %p282
        %p523 = pneg %p306
        %p524 = pneg %p303
        %p525 = pneg %p332
        %p526 = pneg %p329
        %p527 = scmp.lt.s32.totalorder %s28, 1
        %s528 = scalar_select %p527, %s28, 1
        %s529 = smul.addr %s528, 2
        %s530 = smul.addr %s529, 8
        %s531 = scalar_lea.vmem %s13, %s530
        %p532 = scmp.lt.s32.totalorder %s28, 1
        %s533 = scalar_select %p532, %s28, 1
        %s534 = smul.addr %s533, 2
        %s535 = smul.addr %s534, 8
        %s536 = scalar_lea.vmem %s0, %s535
        %p537 = scmp.lt.s32.totalorder %s28, 1
        %s538 = scalar_select %p537, %s28, 1
        %s539 = smul.addr %s538, 8
        %s540 = scalar_lea.vmem %s1, %s539
        %p541 = scmp.lt.s32.totalorder %s28, 1
        %s542 = scalar_select %p541, %s28, 1
        %s543 = smul.addr %s542, 2
        %s544 = smul.addr %s543, 8
        %s545 = scalar_lea.vmem %s13, %s544
        %v546 = vld [vmem:[%s3] sm:$0xff]
        %v547 = vld [vmem:[%s540] sm:$0xff]
        %v548 = vld [vmem:[%s536] sm:$0xff]
        %v549 = vld [vmem:[%s536 + $0x8] sm:$0xff]
        %v550 = vld [vmem:[#allocation3] sm:$0xff]
        %v551 = vld [vmem:[#allocation3 + $0x8] sm:$0xff]
        %v552 = vld [vmem:[#allocation3 + $0x10] sm:$0xff]
        %v553 = vld [vmem:[#allocation3 + $0x18] sm:$0x3f]
        %v554 = vlaneseq
        %v555 = vshrl.u32 %v554, 7
        %v556 = vsub.s32 0, %v555
        %v557 = vrot.slane %v546, %v556
        %vm558 = vcmask 244736
        %v560 = vsel %vm558, %v548, 0
        %v563 = vsel %vm558, %v549, 0
        %vm565 = vcmask 1045504
        %v567 = vsel %vm565, %v553, 0
        %569 = vmatprep.subr.mxu0 0.0
        %570 = vmatpush1.msra.mxu0 0.0
        %571 = vmatprep.subr.mxu0 0.0
        %572 = vmatpush1.msra.mxu0 0.0
        %573 = vmatprep.subr.mxu0 0.0
        %574 = vmatpush1.msra.mxu0 0.0
        %575 = vmatprep.subr.mxu0 0.0
        %576 = vmatpush1.msra.mxu0 0.0
        %577 = vmatprep.subr.mxu0 0.0
        %578 = vmatpush1.msra.mxu0 0.0
        %579 = vmatprep.subr.mxu0 0.0
        %580 = vmatpush1.msra.mxu0 0.0
        %581 = vmatprep.subr.mxu0 0.0
        %582 = vmatpush1.msra.mxu0 0.0
        %583 = vmatprep.subr.mxu0 0.0
        %584 = vmatpush1.msra.mxu0 0.0
        %585 = vmatprep.subr.mxu0 0.0
        %586 = vmatpush1.msra.mxu0 0.0
        %587 = vmatprep.subr.mxu0 0.0
        %588 = vmatpush1.msra.mxu0 0.0
        %589 = vmatprep.subr.mxu0 0.0
        %590 = vmatpush1.msra.mxu0 0.0
        %591 = vmatprep.subr.mxu0 0.0
        %592 = vmatpush1.msra.mxu0 0.0
        %593 = vmatprep.subr.mxu0 0.0
        %594 = vmatpush1.msra.mxu0 %v567
        %595 = vmatprep.subr.mxu0 0.0
        %596 = vmatpush1.msra.mxu0 %v552
        %597 = vmatprep.subr.mxu0 0.0
        %598 = vmatpush1.msra.mxu0 %v551
        %599 = vmatprep.subr.mxu0 0.0
        %600 = vmatpush1.msra.mxu0 %v550
        %601 = vmatprep.subr.mxu0 0.0
        %602 = vmatpush2.msra.mxu0 0.0
        %603 = vmatprep.subr.mxu0 0.0
        %604 = vmatpush2.msra.mxu0 0.0
        %605 = vmatprep.subr.mxu0 0.0
        %606 = vmatpush2.msra.mxu0 0.0
        %607 = vmatprep.subr.mxu0 0.0
        %608 = vmatpush2.msra.mxu0 0.0
        %609 = vmatprep.subr.mxu0 0.0
        %610 = vmatpush2.msra.mxu0 0.0
        %611 = vmatprep.subr.mxu0 0.0
        %612 = vmatpush2.msra.mxu0 0.0
        %613 = vmatprep.subr.mxu0 0.0
        %614 = vmatpush2.msra.mxu0 0.0
        %615 = vmatprep.subr.mxu0 0.0
        %616 = vmatpush2.msra.mxu0 0.0
        %617 = vmatprep.subr.mxu0 0.0
        %618 = vmatpush2.msra.mxu0 0.0
        %619 = vmatprep.subr.mxu0 0.0
        %620 = vmatpush2.msra.mxu0 0.0
        %621 = vmatprep.subr.mxu0 0.0
        %622 = vmatpush2.msra.mxu0 0.0
        %623 = vmatprep.subr.mxu0 0.0
        %624 = vmatpush2.msra.mxu0 0.0
        %625 = vmatprep.subr.mxu0 0.0
        %626 = vmatpush2.msra.mxu0 0.0
        %627 = vmatprep.subr.mxu0 0.0
        %628 = vmatpush2.msra.mxu0 0.0
        %629 = vmatprep.subr.mxu0 0.0
        %630 = vmatpush2.msra.mxu0 0.0
        %631 = vmatprep.subr.mxu0 0.0
        %632 = vmatpush2.msra.mxu0 0.0
        %633 = vmatprep.mubr.f32.mxu0 0.0
        %634 = vmatmul.mubr.f32.gmra.mxu0 %v560
        %v635 = vpop.f32.mrf.mxu0
        %v636 = vadd.f32 %v557, %v635
        %v637 = vpop.f32.mrf.mxu0
        %638 = vmatprep.mubr.f32.mxu0 0.0
        %639 = vmatmul.mubr.f32.gmra.mxu0 %v563
        %v640 = vpop.f32.mrf.mxu0
        %v641 = vadd.f32 %v557, %v640
        %v642 = vpop.f32.mrf.mxu0
        %643 = vdwg.mxu0
        %v644 = vrot.slane %v636, 5
        %v645 = vrot.slane %v641, 5
        %v646 = vlaneseq
        %v647 = vshrl.u32 %v646, 7
        %vm648 = vcmp.lt.s32.totalorder %v647, 3
        %v649 = vsel %vm648, %v644, %v645
        %v650 = vsel %vm648, %v645, %v644
        %v651 = vld [vmem:[#allocation5] sm:$0xff]
        %v652 = vld [vmem:[#allocation5 + $0x8] sm:$0xff]
        %v653 = vmul.f32 %v650, %v651
        %v654 = vmul.f32 %v649, %v652
        %v655 = vadd.f32 %v653, 0.0
        %v656 = vadd.f32 %v654, 0.0
        %v657 = vrot.slane %v636, 6
        %v658 = vrot.slane %v641, 6
        %vm659 = vcmp.lt.s32.totalorder %v647, 2
        %v660 = vsel %vm659, %v657, %v658
        %v661 = vsel %vm659, %v658, %v657
        %s662 = scalar_lea.vmem [#allocation5], 16
        %v663 = vld [vmem:[%s662] sm:$0xff]
        %v664 = vld [vmem:[%s662 + $0x8] sm:$0xff]
        %v665 = vmul.f32 %v661, %v663
        %v666 = vmul.f32 %v660, %v664
        %v667 = vadd.f32 %v655, %v665
        %v668 = vadd.f32 %v656, %v666
        %v669 = vrot.slane %v636, 7
        %v670 = vrot.slane %v641, 7
        %vm671 = vcmp.lt.s32.totalorder %v647, 1
        %v672 = vsel %vm671, %v669, %v670
        %v673 = vsel %vm671, %v670, %v669
        %s674 = scalar_lea.vmem [#allocation5], 32
        %v675 = vld [vmem:[%s674] sm:$0xff]
        %v676 = vld [vmem:[%s674 + $0x8] sm:$0xff]
        %v677 = vmul.f32 %v673, %v675
        %v678 = vmul.f32 %v672, %v676
        %v679 = vadd.f32 %v667, %v677
        %v680 = vadd.f32 %v668, %v678
        %s681 = scalar_lea.vmem [#allocation5], 48
        %v682 = vld [vmem:[%s681] sm:$0xff]
        %v683 = vld [vmem:[%s681 + $0x8] sm:$0xff]
        %v684 = vmul.f32 %v636, %v682
        %v685 = vmul.f32 %v641, %v683
        %v686 = vadd.f32 %v679, %v684
        %v687 = vadd.f32 %v680, %v685
        %v688 = vrot.slane %v636, 1
        %v689 = vrot.slane %v641, 1
        %vm690 = vcmp.lt.s32.totalorder %v647, 7
        %v691 = vsel %vm690, %v688, %v689
        %v692 = vsel %vm690, %v689, %v688
        %s693 = scalar_lea.vmem [#allocation5], 64
        %v694 = vld [vmem:[%s693] sm:$0xff]
        %v695 = vld [vmem:[%s693 + $0x8] sm:$0xff]
        %v696 = vmul.f32 %v691, %v694
        %v697 = vmul.f32 %v692, %v695
        %v698 = vadd.f32 %v686, %v696
        %v699 = vadd.f32 %v687, %v697
        %v700 = vrot.slane %v636, 2
        %v701 = vrot.slane %v641, 2
        %vm702 = vcmp.lt.s32.totalorder %v647, 6
        %v703 = vsel %vm702, %v700, %v701
        %v704 = vsel %vm702, %v701, %v700
        %s705 = scalar_lea.vmem [#allocation5], 80
        %v706 = vld [vmem:[%s705] sm:$0xff]
        %v707 = vld [vmem:[%s705 + $0x8] sm:$0xff]
        %v708 = vmul.f32 %v703, %v706
        %v709 = vmul.f32 %v704, %v707
        %v710 = vadd.f32 %v698, %v708
        %v711 = vadd.f32 %v699, %v709
        %v712 = vrot.slane %v636, 3
        %v713 = vrot.slane %v641, 3
        %vm714 = vcmp.lt.s32.totalorder %v647, 5
        %v715 = vsel %vm714, %v712, %v713
        %v716 = vsel %vm714, %v713, %v712
        %s717 = scalar_lea.vmem [#allocation5], 96
        %v718 = vld [vmem:[%s717] sm:$0xff]
        %v719 = vld [vmem:[%s717 + $0x8] sm:$0xff]
        %v720 = vmul.f32 %v715, %v718
        %v721 = vmul.f32 %v716, %v719
        %v722 = vadd.f32 %v710, %v720
        %v723 = vadd.f32 %v711, %v721
        %v724 = vlaneseq
        %v725 = vshrl.u32 %v724, 7
        %v726 = vsub.s32 1, %v725
        %v727 = vrot.slane %v546, %v726
        %v728 = vadd.f32 %v722, %v727
        %v729 = vadd.f32 %v723, %v727
        %v730 = vmul.f32 %v728, 0.5
        %v731 = vmul.f32 %v729, 0.5
        %v732 = vmul.f32 %v728, 0.70710677
        %v733 = vmul.f32 %v729, 0.70710677
        %v734 = vand.u32 2147483647, %v732
        %v735 = vand.u32 2147483647, %v733
        %v736 = vmul.f32 %v734, 0.3275911
        %v737 = vmul.f32 %v735, 0.3275911
        %v738 = vadd.f32 %v736, 1.0
        %v739 = vadd.f32 %v737, 1.0
        %v740 = vrcp.pop %v738
        %v741 = vmul.f32 1.0, %v740
        %v742 = vrcp.pop %v739
        %v743 = vmul.f32 1.0, %v742
        %v744 = vmul.f32 %v741, 1.0614054
        %v745 = vmul.f32 %v743, 1.0614054
        %v746 = vsub.f32 %v744, 1.4531521
        %v747 = vsub.f32 %v745, 1.4531521
        %v748 = vmul.f32 %v746, %v741
        %v749 = vmul.f32 %v747, %v743
        %v750 = vadd.f32 %v748, 1.4214138
        %v751 = vadd.f32 %v749, 1.4214138
        %v752 = vmul.f32 %v750, %v741
        %v753 = vmul.f32 %v751, %v743
        %v754 = vsub.f32 %v752, 0.28449672
        %v755 = vsub.f32 %v753, 0.28449672
        %v756 = vmul.f32 %v754, %v741
        %v757 = vmul.f32 %v755, %v743
        %v758 = vadd.f32 %v756, 0.2548296
        %v759 = vadd.f32 %v757, 0.2548296
        %v760 = vmul.f32 %v758, %v741
        %v761 = vmul.f32 %v759, %v743
        %v762 = vsub.f32 0.0, %v734
        %v763 = vsub.f32 0.0, %v735
        %v764 = vmul.f32 %v762, %v734
        %v765 = vmul.f32 %v763, %v735
        %v766 = vmul.f32 %v764, 1.442695
        %v767 = vpow.pop %v766
        %v768 = vmul.f32 %v765, 1.442695
        %v769 = vpow.pop %v768
        %v770 = vmul.f32 %v760, %v767
        %v771 = vmul.f32 %v761, %v769
        %v772 = vsub.f32 1.0, %v770
        %v773 = vsub.f32 1.0, %v771
        %vm774 = vcmp.ge.f32.partialorder %v732, 0.0
        %vm775 = vcmp.ge.f32.partialorder %v733, 0.0
        %v776 = vsub.f32 0.0, %v772
        %v777 = vsub.f32 0.0, %v773
        %v778 = vsel %vm774, %v772, %v776
        %v779 = vsel %vm775, %v773, %v777
        %v780 = vadd.f32 %v778, 1.0
        %v781 = vadd.f32 %v779, 1.0
        %v782 = vmul.f32 %v730, %v780
        %v783 = vmul.f32 %v731, %v781
        %v784 = vadd.f32 %v782, %v636
        %v785 = vadd.f32 %v783, %v641
        %vm786 = vcmask 523264
        %787 = vst.msk [vmem:[#allocation2] sm:$0xff] %vm786, %v784
        %788 = vst.msk [vmem:[#allocation2 + $0x8] sm:$0xff] %vm786, %v785
        %vm789 = vcmask 523268
        %790 = vst.msk [vmem:[#allocation2 + $0xc] sm:$0xf0] %vm789, %v546
        %v791 = vld [vmem:[#allocation2] sm:$0xff]
        %v792 = vld [vmem:[#allocation2 + $0x8] sm:$0xff]
        %v793 = vld [vmem:[#allocation2 + $0x10] sm:$0xf]
        %v794 = vld [vmem:[#allocation7] sm:$0xff]
        %v795 = vld [vmem:[#allocation7 + $0x8] sm:$0xff]
        %v796 = vld [vmem:[#allocation7 + $0x10] sm:$0xf]
        %s797 = scalar_lea.vmem [#allocation7], 24
        %v798 = vld [vmem:[%s797] sm:$0xff]
        %v799 = vld [vmem:[%s797 + $0x8] sm:$0xff]
        %v800 = vld [vmem:[%s797 + $0x10] sm:$0xf]
        %v801 = vmul.f32 %v791, %v791
        %v802 = vmul.f32 %v792, %v792
        %v803 = vmul.f32 %v793, %v793
        %v804 = vsel %vm786, %v801, 0.0
        %805 = vadd.xlane.f32.xlu0 %v804
        %v806 = vpop.xlane.xlu0 %805
        %v807 = vsel %vm786, %v802, 0.0
        %808 = vadd.xlane.f32.xlu0 %v807
        %v809 = vpop.xlane.xlu0 %808
        %vm810 = vcmask 519168
        %v811 = vsel %vm810, %v803, 0.0
        %812 = vadd.xlane.f32.xlu0 %v811
        %v813 = vpop.xlane.xlu0 %812
        %v814 = vmax.f32 %v806, 1e-24
        %v815 = vmax.f32 %v809, 1e-24
        %v816 = vmax.f32 %v813, 1e-24
        %v817 = vrsqrt.pop %v814
        %v818 = vrsqrt.pop %v815
        %v819 = vrsqrt.pop %v816
        %v820 = vmul.f32 %v791, %v817
        %v821 = vmul.f32 %v792, %v818
        %v822 = vmul.f32 %v793, %v819
        %v823 = vlaneseq
        %v824 = vshrl.u32 %v823, 7
        %v825 = vsub.s32 0, %v824
        %v826 = vrot.slane %v547, %v825
        %v827 = vmul.f32 %v820, %v826
        %v828 = vmul.f32 %v821, %v826
        %v829 = vmul.f32 %v822, %v826
        %v830 = vlaneseq
        %v831 = vshrl.u32 %v830, 7
        %v832 = vsub.s32 1, %v831
        %v833 = vrot.slane %v547, %v832
        %v834 = vadd.f32 %v827, %v833
        %v835 = vadd.f32 %v828, %v833
        %v836 = vadd.f32 %v829, %v833
        %v837 = vld [vmem:[%s7] sm:$0xff]
        %v838 = vld [vmem:[%s7 + $0x8] sm:$0xff]
        %v839 = vld [vmem:[%s7 + $0x10] sm:$0xff]
        %v840 = vld [vmem:[%s7 + $0x18] sm:$0xff]
        %v841 = vld [vmem:[%s7 + $0x20] sm:$0xff]
        %v842 = vld [vmem:[%s7 + $0x28] sm:$0xff]
        %v843 = vld [vmem:[%s7 + $0x30] sm:$0xff]
        %v844 = vld [vmem:[%s7 + $0x38] sm:$0xff]
        %v845 = vld [vmem:[%s7 + $0x40] sm:$0xff]
        %v846 = vld [vmem:[%s7 + $0x48] sm:$0xff]
        %v847 = vld [vmem:[%s7 + $0x50] sm:$0xff]
        %v848 = vld [vmem:[%s7 + $0x58] sm:$0xff]
        %v849 = vld [vmem:[%s7 + $0x60] sm:$0xff]
        %v850 = vld [vmem:[%s7 + $0x68] sm:$0xff]
        %v851 = vld [vmem:[%s7 + $0x70] sm:$0xff]
        %v852 = vld [vmem:[%s7 + $0x78] sm:$0xff]
        %v854 = vsel %vm786, %v834, 0
        %v857 = vsel %vm786, %v835, 0
        %v860 = vsel %vm786, %v836, 0
        %862 = vmatprep.subr.mxu0 0.0
        %863 = vmatpush1.msra.mxu0 0.0
        %864 = vmatprep.subr.mxu0 0.0
        %865 = vmatpush1.msra.mxu0 0.0
        %866 = vmatprep.subr.mxu0 0.0
        %867 = vmatpush1.msra.mxu0 0.0
        %868 = vmatprep.subr.mxu0 0.0
        %869 = vmatpush1.msra.mxu0 0.0
        %870 = vmatprep.subr.mxu0 0.0
        %871 = vmatpush1.msra.mxu0 0.0
        %872 = vmatprep.subr.mxu0 0.0
        %873 = vmatpush1.msra.mxu0 0.0
        %874 = vmatprep.subr.mxu0 0.0
        %875 = vmatpush1.msra.mxu0 0.0
        %876 = vmatprep.subr.mxu0 0.0
        %877 = vmatpush1.msra.mxu0 0.0
        %878 = vmatprep.subr.mxu0 %v852
        %879 = vmatpush1.msra.mxu0 %v851
        %880 = vmatprep.subr.mxu0 %v850
        %881 = vmatpush1.msra.mxu0 %v849
        %882 = vmatprep.subr.mxu0 %v848
        %883 = vmatpush1.msra.mxu0 %v847
        %884 = vmatprep.subr.mxu0 %v846
        %885 = vmatpush1.msra.mxu0 %v845
        %886 = vmatprep.subr.mxu0 %v844
        %887 = vmatpush1.msra.mxu0 %v843
        %888 = vmatprep.subr.mxu0 %v842
        %889 = vmatpush1.msra.mxu0 %v841
        %890 = vmatprep.subr.mxu0 %v840
        %891 = vmatpush1.msra.mxu0 %v839
        %892 = vmatprep.subr.mxu0 %v838
        %893 = vmatpush1.msra.mxu0 %v837
        %894 = vmatprep.subr.mxu0 0.0
        %895 = vmatpush2.msra.mxu0 0.0
        %896 = vmatprep.subr.mxu0 0.0
        %897 = vmatpush2.msra.mxu0 0.0
        %898 = vmatprep.subr.mxu0 0.0
        %899 = vmatpush2.msra.mxu0 0.0
        %900 = vmatprep.subr.mxu0 0.0
        %901 = vmatpush2.msra.mxu0 0.0
        %902 = vmatprep.subr.mxu0 0.0
        %903 = vmatpush2.msra.mxu0 0.0
        %904 = vmatprep.subr.mxu0 0.0
        %905 = vmatpush2.msra.mxu0 0.0
        %906 = vmatprep.subr.mxu0 0.0
        %907 = vmatpush2.msra.mxu0 0.0
        %908 = vmatprep.subr.mxu0 0.0
        %909 = vmatpush2.msra.mxu0 0.0
        %910 = vmatprep.subr.mxu0 0.0
        %911 = vmatpush2.msra.mxu0 0.0
        %912 = vmatprep.subr.mxu0 0.0
        %913 = vmatpush2.msra.mxu0 0.0
        %914 = vmatprep.subr.mxu0 0.0
        %915 = vmatpush2.msra.mxu0 0.0
        %916 = vmatprep.subr.mxu0 0.0
        %917 = vmatpush2.msra.mxu0 0.0
        %918 = vmatprep.subr.mxu0 0.0
        %919 = vmatpush2.msra.mxu0 0.0
        %920 = vmatprep.subr.mxu0 0.0
        %921 = vmatpush2.msra.mxu0 0.0
        %922 = vmatprep.subr.mxu0 0.0
        %923 = vmatpush2.msra.mxu0 0.0
        %924 = vmatprep.subr.mxu0 0.0
        %925 = vmatpush2.msra.mxu0 0.0
        %926 = vmatprep.mubr.f32.mxu0 0.0
        %927 = vmatmul.mubr.f32.gmra.mxu0 %v854
        %v928 = vpop.f32.mrf.mxu0
        %v929 = vadd.f32 0.0, %v928
        %v930 = vpop.f32.mrf.mxu0
        %v931 = vadd.f32 0.0, %v930
        %932 = vmatprep.mubr.f32.mxu0 0.0
        %933 = vmatmul.mubr.f32.gmra.mxu0 %v857
        %v934 = vpop.f32.mrf.mxu0
        %v935 = vadd.f32 0.0, %v934
        %v936 = vpop.f32.mrf.mxu0
        %v937 = vadd.f32 0.0, %v936
        %938 = vmatprep.mubr.f32.mxu0 0.0
        %939 = vmatmul.mubr.f32.gmra.mxu0 %v860
        %v940 = vpop.f32.mrf.mxu0
        %v941 = vadd.f32 0.0, %v940
        %v942 = vpop.f32.mrf.mxu0
        %v943 = vadd.f32 0.0, %v942
        %944 = vdwg.mxu0
        %v945 = vmul.f32 %v929, %v929
        %v946 = vmul.f32 %v935, %v935
        %v947 = vmul.f32 %v941, %v941
        %vm948 = vcmask 130048
        %v949 = vsel %vm948, %v945, 0.0
        %950 = vadd.xlane.f32.xlu0 %v949
        %v951 = vpop.xlane.xlu0 %950
        %v952 = vsel %vm948, %v946, 0.0
        %953 = vadd.xlane.f32.xlu0 %v952
        %v954 = vpop.xlane.xlu0 %953
        %vm955 = vcmask 125952
        %v956 = vsel %vm955, %v947, 0.0
        %957 = vadd.xlane.f32.xlu0 %v956
        %v958 = vpop.xlane.xlu0 %957
        %v959 = vmax.f32 %v951, 1e-24
        %v960 = vmax.f32 %v954, 1e-24
        %v961 = vmax.f32 %v958, 1e-24
        %v962 = vrsqrt.pop %v959
        %v963 = vrsqrt.pop %v960
        %v964 = vrsqrt.pop %v961
        %v965 = vmul.f32 %v929, %v962
        %v966 = vmul.f32 %v935, %v963
        %v967 = vmul.f32 %v941, %v964
        %v968 = vld [vmem:[%s6] sm:$0x1]
        %v970 = vlaneseq
        %v971 = vshrl.u32 %v970, 7
        %v972 = vsub.s32 0, %v971
        %v973 = vrot.slane %v968, %v972
        %v975 = vmul.f32 %v965, %v973
        %v976 = vmul.f32 %v966, %v973
        %v977 = vmul.f32 %v967, %v973
        %981 = vrot.lane.b32.xlu0 %v975, 120
        %v982 = vpop.permute.xlu0 %981
        %983 = vrot.lane.b32.xlu0 %v976, 120
        %v984 = vpop.permute.xlu0 %983
        %985 = vrot.lane.b32.xlu0 %v977, 120
        %v986 = vpop.permute.xlu0 %985
        %990 = vrot.lane.b32.xlu0 %v975, 8
        %v991 = vpop.permute.xlu0 %990
        %992 = vrot.lane.b32.xlu0 %v976, 8
        %v993 = vpop.permute.xlu0 %992
        %994 = vrot.lane.b32.xlu0 %v977, 8
        %v995 = vpop.permute.xlu0 %994
        %vm999 = vcmask 64512
        %v1000 = vsel %vm999, %v982, %v991
        %v1001 = vsel %vm999, %v984, %v993
        %v1002 = vsel %vm999, %v986, %v995
        %v1003 = vmul.f32 %v975, %v794
        %v1004 = vmul.f32 %v976, %v795
        %v1005 = vmul.f32 %v977, %v796
        %v1006 = vmul.f32 %v1000, %v798
        %v1007 = vmul.f32 %v1001, %v799
        %v1008 = vmul.f32 %v1002, %v800
        %v1009 = vadd.f32 %v1003, %v1006
        %v1010 = vadd.f32 %v1004, %v1007
        %v1011 = vadd.f32 %v1005, %v1008
        %1015 = vrot.lane.b32.xlu0 %v945, 64
        %v1016 = vpop.permute.xlu0 %1015
        %1017 = vrot.lane.b32.xlu0 %v946, 64
        %v1018 = vpop.permute.xlu0 %1017
        %1019 = vrot.lane.b32.xlu0 %v947, 64
        %v1020 = vpop.permute.xlu0 %1019
        %v1024 = vsel %vm948, %v1016, 0.0
        %1025 = vadd.xlane.f32.xlu0 %v1024
        %v1026 = vpop.xlane.xlu0 %1025
        %v1027 = vsel %vm948, %v1018, 0.0
        %1028 = vadd.xlane.f32.xlu0 %v1027
        %v1029 = vpop.xlane.xlu0 %1028
        %v1030 = vsel %vm955, %v1020, 0.0
        %1031 = vadd.xlane.f32.xlu0 %v1030
        %v1032 = vpop.xlane.xlu0 %1031
        %v1033 = vmax.f32 %v1026, 1e-24
        %v1034 = vmax.f32 %v1029, 1e-24
        %v1035 = vmax.f32 %v1032, 1e-24
        %v1036 = vrsqrt.pop %v1033
        %v1037 = vrsqrt.pop %v1034
        %v1038 = vrsqrt.pop %v1035
        %v1039 = vmul.f32 %v929, %v1036
        %v1040 = vmul.f32 %v935, %v1037
        %v1041 = vmul.f32 %v941, %v1038
        %s1042 = scalar_lea.vmem %s6, 4
        %v1043 = vld [vmem:[%s1042] sm:$0x1]
        %v1045 = vlaneseq
        %v1046 = vshrl.u32 %v1045, 7
        %v1047 = vsub.s32 0, %v1046
        %v1048 = vrot.slane %v1043, %v1047
        %1049 = vrot.lane.b32.xlu0 %v1048, 64
        %v1050 = vpop.permute.xlu0 %1049
        %v1052 = vmul.f32 %v1039, %v1050
        %v1053 = vmul.f32 %v1040, %v1050
        %v1054 = vmul.f32 %v1041, %v1050
        %1058 = vrot.lane.b32.xlu0 %v1052, 56
        %v1059 = vpop.permute.xlu0 %1058
        %1060 = vrot.lane.b32.xlu0 %v1053, 56
        %v1061 = vpop.permute.xlu0 %1060
        %1062 = vrot.lane.b32.xlu0 %v1054, 56
        %v1063 = vpop.permute.xlu0 %1062
        %1067 = vrot.lane.b32.xlu0 %v1052, 72
        %v1068 = vpop.permute.xlu0 %1067
        %1069 = vrot.lane.b32.xlu0 %v1053, 72
        %v1070 = vpop.permute.xlu0 %1069
        %1071 = vrot.lane.b32.xlu0 %v1054, 72
        %v1072 = vpop.permute.xlu0 %1071
        %v1076 = vsel %vm999, %v1059, %v1068
        %v1077 = vsel %vm999, %v1061, %v1070
        %v1078 = vsel %vm999, %v1063, %v1072
        %1082 = vrot.lane.b32.xlu0 %v794, 64
        %v1083 = vpop.permute.xlu0 %1082
        %1084 = vrot.lane.b32.xlu0 %v795, 64
        %v1085 = vpop.permute.xlu0 %1084
        %1086 = vrot.lane.b32.xlu0 %v796, 64
        %v1087 = vpop.permute.xlu0 %1086
        %v1091 = vmul.f32 %v1052, %v1083
        %v1092 = vmul.f32 %v1053, %v1085
        %v1093 = vmul.f32 %v1054, %v1087
        %v1094 = vmul.f32 %v1076, %v798
        %v1095 = vmul.f32 %v1077, %v799
        %v1096 = vmul.f32 %v1078, %v800
        %1100 = vrot.lane.b32.xlu0 %v1094, 64
        %v1101 = vpop.permute.xlu0 %1100
        %1102 = vrot.lane.b32.xlu0 %v1095, 64
        %v1103 = vpop.permute.xlu0 %1102
        %1104 = vrot.lane.b32.xlu0 %v1096, 64
        %v1105 = vpop.permute.xlu0 %1104
        %v1109 = vadd.f32 %v1091, %v1101
        %v1110 = vadd.f32 %v1092, %v1103
        %v1111 = vadd.f32 %v1093, %v1105
        %1115 = vrot.lane.b32.xlu0 %v1109, 64
        %v1116 = vpop.permute.xlu0 %1115
        %1117 = vrot.lane.b32.xlu0 %v1110, 64
        %v1118 = vpop.permute.xlu0 %1117
        %1119 = vrot.lane.b32.xlu0 %v1111, 64
        %v1120 = vpop.permute.xlu0 %1119
        %v1122 = vsel %vm948, %v1009, 0
        %v1125 = vsel %vm948, %v1010, 0
        %v1128 = vsel %vm948, %v1011, 0
        %v1130 = vsel %vm948, %v1116, 0
        %v1132 = vsel %vm948, %v1118, 0
        %v1134 = vsel %vm948, %v1120, 0
        %1136 = vmatprep.subr.mxu0 0.0
        %1137 = vmatpush1.xpose.msra.mxu0 0.0
        %1138 = vmatprep.subr.mxu0 0.0
        %1139 = vmatpush1.xpose.msra.mxu0 0.0
        %1140 = vmatprep.subr.mxu0 0.0
        %1141 = vmatpush1.xpose.msra.mxu0 0.0
        %1142 = vmatprep.subr.mxu0 0.0
        %1143 = vmatpush1.xpose.msra.mxu0 0.0
        %1144 = vmatprep.subr.mxu0 0.0
        %1145 = vmatpush1.xpose.msra.mxu0 0.0
        %1146 = vmatprep.subr.mxu0 0.0
        %1147 = vmatpush1.xpose.msra.mxu0 0.0
        %1148 = vmatprep.subr.mxu0 0.0
        %1149 = vmatpush1.xpose.msra.mxu0 0.0
        %1150 = vmatprep.subr.mxu0 0.0
        %1151 = vmatpush1.xpose.msra.mxu0 0.0
        %1152 = vmatprep.subr.mxu0 0.0
        %1153 = vmatpush1.xpose.msra.mxu0 0.0
        %1154 = vmatprep.subr.mxu0 0.0
        %1155 = vmatpush1.xpose.msra.mxu0 0.0
        %1156 = vmatprep.subr.mxu0 0.0
        %1157 = vmatpush1.xpose.msra.mxu0 0.0
        %1158 = vmatprep.subr.mxu0 0.0
        %1159 = vmatpush1.xpose.msra.mxu0 0.0
        %1160 = vmatprep.subr.mxu0 0.0
        %1161 = vmatpush1.xpose.msra.mxu0 0.0
        %1162 = vmatprep.subr.mxu0 0.0
        %1163 = vmatpush1.xpose.msra.mxu0 %v1134
        %1164 = vmatprep.subr.mxu0 0.0
        %1165 = vmatpush1.xpose.msra.mxu0 %v1132
        %1166 = vmatprep.subr.mxu0 0.0
        %1167 = vmatpush1.xpose.msra.mxu0 %v1130
        %1168 = vmatprep.subr.mxu0 0.0
        %1169 = vmatpush2.xpose.msra.mxu0 0.0
        %1170 = vmatprep.subr.mxu0 0.0
        %1171 = vmatpush2.xpose.msra.mxu0 0.0
        %1172 = vmatprep.subr.mxu0 0.0
        %1173 = vmatpush2.xpose.msra.mxu0 0.0
        %1174 = vmatprep.subr.mxu0 0.0
        %1175 = vmatpush2.xpose.msra.mxu0 0.0
        %1176 = vmatprep.subr.mxu0 0.0
        %1177 = vmatpush2.xpose.msra.mxu0 0.0
        %1178 = vmatprep.subr.mxu0 0.0
        %1179 = vmatpush2.xpose.msra.mxu0 0.0
        %1180 = vmatprep.subr.mxu0 0.0
        %1181 = vmatpush2.xpose.msra.mxu0 0.0
        %1182 = vmatprep.subr.mxu0 0.0
        %1183 = vmatpush2.xpose.msra.mxu0 0.0
        %1184 = vmatprep.subr.mxu0 0.0
        %1185 = vmatpush2.xpose.msra.mxu0 0.0
        %1186 = vmatprep.subr.mxu0 0.0
        %1187 = vmatpush2.xpose.msra.mxu0 0.0
        %1188 = vmatprep.subr.mxu0 0.0
        %1189 = vmatpush2.xpose.msra.mxu0 0.0
        %1190 = vmatprep.subr.mxu0 0.0
        %1191 = vmatpush2.xpose.msra.mxu0 0.0
        %1192 = vmatprep.subr.mxu0 0.0
        %1193 = vmatpush2.xpose.msra.mxu0 0.0
        %1194 = vmatprep.subr.mxu0 0.0
        %1195 = vmatpush2.xpose.msra.mxu0 0.0
        %1196 = vmatprep.subr.mxu0 0.0
        %1197 = vmatpush2.xpose.msra.mxu0 0.0
        %1198 = vmatprep.subr.mxu0 0.0
        %1199 = vmatpush2.xpose.msra.mxu0 0.0
        %1200 = vmatprep.mubr.f32.mxu0 0.0
        %1201 = vmatmul.mubr.f32.gmra.mxu0 %v1122
        %v1202 = vpop.f32.mrf.mxu0
        %v1203 = vadd.f32 0.0, %v1202
        %v1204 = vpop.f32.mrf.mxu0
        %1205 = vmatprep.mubr.f32.mxu0 0.0
        %1206 = vmatmul.mubr.f32.gmra.mxu0 %v1125
        %v1207 = vpop.f32.mrf.mxu0
        %v1208 = vadd.f32 0.0, %v1207
        %v1209 = vpop.f32.mrf.mxu0
        %1210 = vmatprep.mubr.f32.mxu0 0.0
        %1211 = vmatmul.mubr.f32.gmra.mxu0 %v1128
        %v1212 = vpop.f32.mrf.mxu0
        %v1213 = vadd.f32 0.0, %v1212
        %v1214 = vpop.f32.mrf.mxu0
        %1215 = vdwg.mxu0
        %v1216 = vmul.f32 %v1203, 10.0
        %v1217 = vmul.f32 %v1208, 10.0
        %v1218 = vmul.f32 %v1213, 10.0
        %vm1219 = vcmask 162816
        %v1220 = vsel %vm1219, %v1216, -inf
        %1221 = vmax.xlane.f32.xlu0 %v1220
        %v1222 = vpop.xlane.xlu0 %1221
        %v1223 = vsel %vm1219, %v1217, -inf
        %1224 = vmax.xlane.f32.xlu0 %v1223
        %v1225 = vpop.xlane.xlu0 %1224
        %vm1226 = vcmask 158720
        %v1227 = vsel %vm1226, %v1218, -inf
        %1228 = vmax.xlane.f32.xlu0 %v1227
        %v1229 = vpop.xlane.xlu0 %1228
        %v1230 = vsub.f32 %v1216, %v1222
        %v1231 = vsub.f32 %v1217, %v1225
        %v1232 = vsub.f32 %v1218, %v1229
        %v1233 = vmul.f32 %v1230, 1.442695
        %v1234 = vpow.pop %v1233
        %v1235 = vmul.f32 %v1231, 1.442695
        %v1236 = vpow.pop %v1235
        %v1237 = vmul.f32 %v1232, 1.442695
        %v1238 = vpow.pop %v1237
        %v1239 = vsel %vm1219, %v1234, 0.0
        %1240 = vadd.xlane.f32.xlu0 %v1239
        %v1241 = vpop.xlane.xlu0 %1240
        %v1242 = vsel %vm1219, %v1236, 0.0
        %1243 = vadd.xlane.f32.xlu0 %v1242
        %v1244 = vpop.xlane.xlu0 %1243
        %v1245 = vsel %vm1226, %v1238, 0.0
        %1246 = vadd.xlane.f32.xlu0 %v1245
        %v1247 = vpop.xlane.xlu0 %1246
        %v1248 = vrcp.pop %v1241
        %v1249 = vrcp.pop %v1244
        %v1250 = vrcp.pop %v1247
        %v1251 = vmul.f32 %v1234, %v1248
        %v1252 = vmul.f32 %v1236, %v1249
        %v1253 = vmul.f32 %v1238, %v1250
        %v1255 = vsel %vm1219, %v1251, 0
        %v1258 = vsel %vm1219, %v1252, 0
        %v1261 = vsel %vm1219, %v1253, 0
        %vm1263 = vcmask 1043456
        %v1265 = vsel %vm1263, %v943, 0
        %1267 = vmatprep.subr.mxu0 0.0
        %1268 = vmatpush1.msra.mxu0 0.0
        %1269 = vmatprep.subr.mxu0 0.0
        %1270 = vmatpush1.msra.mxu0 0.0
        %1271 = vmatprep.subr.mxu0 0.0
        %1272 = vmatpush1.msra.mxu0 0.0
        %1273 = vmatprep.subr.mxu0 0.0
        %1274 = vmatpush1.msra.mxu0 0.0
        %1275 = vmatprep.subr.mxu0 0.0
        %1276 = vmatpush1.msra.mxu0 0.0
        %1277 = vmatprep.subr.mxu0 0.0
        %1278 = vmatpush1.msra.mxu0 0.0
        %1279 = vmatprep.subr.mxu0 0.0
        %1280 = vmatpush1.msra.mxu0 0.0
        %1281 = vmatprep.subr.mxu0 0.0
        %1282 = vmatpush1.msra.mxu0 0.0
        %1283 = vmatprep.subr.mxu0 0.0
        %1284 = vmatpush1.msra.mxu0 0.0
        %1285 = vmatprep.subr.mxu0 0.0
        %1286 = vmatpush1.msra.mxu0 0.0
        %1287 = vmatprep.subr.mxu0 0.0
        %1288 = vmatpush1.msra.mxu0 0.0
        %1289 = vmatprep.subr.mxu0 0.0
        %1290 = vmatpush1.msra.mxu0 0.0
        %1291 = vmatprep.subr.mxu0 0.0
        %1292 = vmatpush1.msra.mxu0 0.0
        %1293 = vmatprep.subr.mxu0 0.0
        %1294 = vmatpush1.msra.mxu0 %v1265
        %1295 = vmatprep.subr.mxu0 0.0
        %1296 = vmatpush1.msra.mxu0 %v937
        %1297 = vmatprep.subr.mxu0 0.0
        %1298 = vmatpush1.msra.mxu0 %v931
        %1299 = vmatprep.subr.mxu0 0.0
        %1300 = vmatpush2.msra.mxu0 0.0
        %1301 = vmatprep.subr.mxu0 0.0
        %1302 = vmatpush2.msra.mxu0 0.0
        %1303 = vmatprep.subr.mxu0 0.0
        %1304 = vmatpush2.msra.mxu0 0.0
        %1305 = vmatprep.subr.mxu0 0.0
        %1306 = vmatpush2.msra.mxu0 0.0
        %1307 = vmatprep.subr.mxu0 0.0
        %1308 = vmatpush2.msra.mxu0 0.0
        %1309 = vmatprep.subr.mxu0 0.0
        %1310 = vmatpush2.msra.mxu0 0.0
        %1311 = vmatprep.subr.mxu0 0.0
        %1312 = vmatpush2.msra.mxu0 0.0
        %1313 = vmatprep.subr.mxu0 0.0
        %1314 = vmatpush2.msra.mxu0 0.0
        %1315 = vmatprep.subr.mxu0 0.0
        %1316 = vmatpush2.msra.mxu0 0.0
        %1317 = vmatprep.subr.mxu0 0.0
        %1318 = vmatpush2.msra.mxu0 0.0
        %1319 = vmatprep.subr.mxu0 0.0
        %1320 = vmatpush2.msra.mxu0 0.0
        %1321 = vmatprep.subr.mxu0 0.0
        %1322 = vmatpush2.msra.mxu0 0.0
        %1323 = vmatprep.subr.mxu0 0.0
        %1324 = vmatpush2.msra.mxu0 0.0
        %1325 = vmatprep.subr.mxu0 0.0
        %1326 = vmatpush2.msra.mxu0 0.0
        %1327 = vmatprep.subr.mxu0 0.0
        %1328 = vmatpush2.msra.mxu0 0.0
        %1329 = vmatprep.subr.mxu0 0.0
        %1330 = vmatpush2.msra.mxu0 0.0
        %1331 = vmatprep.mubr.f32.mxu0 0.0
        %1332 = vmatmul.mubr.f32.gmra.mxu0 %v1255
        %v1333 = vpop.f32.mrf.mxu0
        %v1334 = vadd.f32 0.0, %v1333
        %v1335 = vpop.f32.mrf.mxu0
        %1336 = vmatprep.mubr.f32.mxu0 0.0
        %1337 = vmatmul.mubr.f32.gmra.mxu0 %v1258
        %v1338 = vpop.f32.mrf.mxu0
        %v1339 = vadd.f32 0.0, %v1338
        %v1340 = vpop.f32.mrf.mxu0
        %1341 = vmatprep.mubr.f32.mxu0 0.0
        %1342 = vmatmul.mubr.f32.gmra.mxu0 %v1261
        %v1343 = vpop.f32.mrf.mxu0
        %v1344 = vadd.f32 0.0, %v1343
        %v1345 = vpop.f32.mrf.mxu0
        %1346 = vdwg.mxu0
        %1347 = vrot.lane.b32.xlu0 %v945, 112
        %v1348 = vpop.permute.xlu0 %1347
        %1349 = vrot.lane.b32.xlu0 %v946, 112
        %v1350 = vpop.permute.xlu0 %1349
        %1351 = vrot.lane.b32.xlu0 %v947, 112
        %v1352 = vpop.permute.xlu0 %1351
        %v1356 = vsel %vm948, %v1348, 0.0
        %1357 = vadd.xlane.f32.xlu0 %v1356
        %v1358 = vpop.xlane.xlu0 %1357
        %v1359 = vsel %vm948, %v1350, 0.0
        %1360 = vadd.xlane.f32.xlu0 %v1359
        %v1361 = vpop.xlane.xlu0 %1360
        %v1362 = vsel %vm955, %v1352, 0.0
        %1363 = vadd.xlane.f32.xlu0 %v1362
        %v1364 = vpop.xlane.xlu0 %1363
        %v1365 = vmax.f32 %v1358, 1e-24
        %v1366 = vmax.f32 %v1361, 1e-24
        %v1367 = vmax.f32 %v1364, 1e-24
        %v1368 = vrsqrt.pop %v1365
        %v1369 = vrsqrt.pop %v1366
        %v1370 = vrsqrt.pop %v1367
        %v1371 = vmul.f32 %v929, %v1368
        %v1372 = vmul.f32 %v935, %v1369
        %v1373 = vmul.f32 %v941, %v1370
        %s1374 = scalar_lea.vmem %s6, 1
        %v1375 = vld [vmem:[%s1374] sm:$0x1]
        %v1377 = vlaneseq
        %v1378 = vshrl.u32 %v1377, 7
        %v1379 = vsub.s32 0, %v1378
        %v1380 = vrot.slane %v1375, %v1379
        %1381 = vrot.lane.b32.xlu0 %v1380, 16
        %v1382 = vpop.permute.xlu0 %1381
        %v1384 = vmul.f32 %v1371, %v1382
        %v1385 = vmul.f32 %v1372, %v1382
        %v1386 = vmul.f32 %v1373, %v1382
        %1390 = vrot.lane.b32.xlu0 %v1384, 104
        %v1391 = vpop.permute.xlu0 %1390
        %1392 = vrot.lane.b32.xlu0 %v1385, 104
        %v1393 = vpop.permute.xlu0 %1392
        %1394 = vrot.lane.b32.xlu0 %v1386, 104
        %v1395 = vpop.permute.xlu0 %1394
        %1399 = vrot.lane.b32.xlu0 %v1384, 120
        %v1400 = vpop.permute.xlu0 %1399
        %1401 = vrot.lane.b32.xlu0 %v1385, 120
        %v1402 = vpop.permute.xlu0 %1401
        %1403 = vrot.lane.b32.xlu0 %v1386, 120
        %v1404 = vpop.permute.xlu0 %1403
        %v1408 = vsel %vm999, %v1391, %v1400
        %v1409 = vsel %vm999, %v1393, %v1402
        %v1410 = vsel %vm999, %v1395, %v1404
        %1411 = vrot.lane.b32.xlu0 %v794, 16
        %v1412 = vpop.permute.xlu0 %1411
        %1413 = vrot.lane.b32.xlu0 %v795, 16
        %v1414 = vpop.permute.xlu0 %1413
        %1415 = vrot.lane.b32.xlu0 %v796, 16
        %v1416 = vpop.permute.xlu0 %1415
        %v1420 = vmul.f32 %v1384, %v1412
        %v1421 = vmul.f32 %v1385, %v1414
        %v1422 = vmul.f32 %v1386, %v1416
        %v1423 = vmul.f32 %v1408, %v798
        %v1424 = vmul.f32 %v1409, %v799
        %v1425 = vmul.f32 %v1410, %v800
        %1429 = vrot.lane.b32.xlu0 %v1423, 16
        %v1430 = vpop.permute.xlu0 %1429
        %1431 = vrot.lane.b32.xlu0 %v1424, 16
        %v1432 = vpop.permute.xlu0 %1431
        %1433 = vrot.lane.b32.xlu0 %v1425, 16
        %v1434 = vpop.permute.xlu0 %1433
        %v1438 = vadd.f32 %v1420, %v1430
        %v1439 = vadd.f32 %v1421, %v1432
        %v1440 = vadd.f32 %v1422, %v1434
        %1441 = vrot.lane.b32.xlu0 %v945, 48
        %v1442 = vpop.permute.xlu0 %1441
        %1443 = vrot.lane.b32.xlu0 %v946, 48
        %v1444 = vpop.permute.xlu0 %1443
        %1445 = vrot.lane.b32.xlu0 %v947, 48
        %v1446 = vpop.permute.xlu0 %1445
        %v1450 = vsel %vm948, %v1442, 0.0
        %1451 = vadd.xlane.f32.xlu0 %v1450
        %v1452 = vpop.xlane.xlu0 %1451
        %v1453 = vsel %vm948, %v1444, 0.0
        %1454 = vadd.xlane.f32.xlu0 %v1453
        %v1455 = vpop.xlane.xlu0 %1454
        %v1456 = vsel %vm955, %v1446, 0.0
        %1457 = vadd.xlane.f32.xlu0 %v1456
        %v1458 = vpop.xlane.xlu0 %1457
        %v1459 = vmax.f32 %v1452, 1e-24
        %v1460 = vmax.f32 %v1455, 1e-24
        %v1461 = vmax.f32 %v1458, 1e-24
        %v1462 = vrsqrt.pop %v1459
        %v1463 = vrsqrt.pop %v1460
        %v1464 = vrsqrt.pop %v1461
        %v1465 = vmul.f32 %v929, %v1462
        %v1466 = vmul.f32 %v935, %v1463
        %v1467 = vmul.f32 %v941, %v1464
        %s1468 = scalar_lea.vmem %s6, 5
        %v1469 = vld [vmem:[%s1468] sm:$0x1]
        %v1471 = vlaneseq
        %v1472 = vshrl.u32 %v1471, 7
        %v1473 = vsub.s32 0, %v1472
        %v1474 = vrot.slane %v1469, %v1473
        %1475 = vrot.lane.b32.xlu0 %v1474, 80
        %v1476 = vpop.permute.xlu0 %1475
        %v1478 = vmul.f32 %v1465, %v1476
        %v1479 = vmul.f32 %v1466, %v1476
        %v1480 = vmul.f32 %v1467, %v1476
        %1484 = vrot.lane.b32.xlu0 %v1478, 40
        %v1485 = vpop.permute.xlu0 %1484
        %1486 = vrot.lane.b32.xlu0 %v1479, 40
        %v1487 = vpop.permute.xlu0 %1486
        %1488 = vrot.lane.b32.xlu0 %v1480, 40
        %v1489 = vpop.permute.xlu0 %1488
        %1493 = vrot.lane.b32.xlu0 %v1478, 56
        %v1494 = vpop.permute.xlu0 %1493
        %1495 = vrot.lane.b32.xlu0 %v1479, 56
        %v1496 = vpop.permute.xlu0 %1495
        %1497 = vrot.lane.b32.xlu0 %v1480, 56
        %v1498 = vpop.permute.xlu0 %1497
        %v1502 = vsel %vm999, %v1485, %v1494
        %v1503 = vsel %vm999, %v1487, %v1496
        %v1504 = vsel %vm999, %v1489, %v1498
        %1505 = vrot.lane.b32.xlu0 %v794, 80
        %v1506 = vpop.permute.xlu0 %1505
        %1507 = vrot.lane.b32.xlu0 %v795, 80
        %v1508 = vpop.permute.xlu0 %1507
        %1509 = vrot.lane.b32.xlu0 %v796, 80
        %v1510 = vpop.permute.xlu0 %1509
        %v1514 = vmul.f32 %v1478, %v1506
        %v1515 = vmul.f32 %v1479, %v1508
        %v1516 = vmul.f32 %v1480, %v1510
        %v1517 = vmul.f32 %v1502, %v798
        %v1518 = vmul.f32 %v1503, %v799
        %v1519 = vmul.f32 %v1504, %v800
        %1523 = vrot.lane.b32.xlu0 %v1517, 80
        %v1524 = vpop.permute.xlu0 %1523
        %1525 = vrot.lane.b32.xlu0 %v1518, 80
        %v1526 = vpop.permute.xlu0 %1525
        %1527 = vrot.lane.b32.xlu0 %v1519, 80
        %v1528 = vpop.permute.xlu0 %1527
        %v1532 = vadd.f32 %v1514, %v1524
        %v1533 = vadd.f32 %v1515, %v1526
        %v1534 = vadd.f32 %v1516, %v1528
        %1538 = vrot.lane.b32.xlu0 %v1438, 112
        %v1539 = vpop.permute.xlu0 %1538
        %1540 = vrot.lane.b32.xlu0 %v1439, 112
        %v1541 = vpop.permute.xlu0 %1540
        %1542 = vrot.lane.b32.xlu0 %v1440, 112
        %v1543 = vpop.permute.xlu0 %1542
        %1547 = vrot.lane.b32.xlu0 %v1532, 48
        %v1548 = vpop.permute.xlu0 %1547
        %1549 = vrot.lane.b32.xlu0 %v1533, 48
        %v1550 = vpop.permute.xlu0 %1549
        %1551 = vrot.lane.b32.xlu0 %v1534, 48
        %v1552 = vpop.permute.xlu0 %1551
        %v1553 = vsel %vm948, %v1539, 0
        %v1555 = vsel %vm948, %v1541, 0
        %v1557 = vsel %vm948, %v1543, 0
        %v1559 = vsel %vm948, %v1548, 0
        %v1561 = vsel %vm948, %v1550, 0
        %v1563 = vsel %vm948, %v1552, 0
        %1565 = vmatprep.subr.mxu0 0.0
        %1566 = vmatpush1.xpose.msra.mxu0 0.0
        %1567 = vmatprep.subr.mxu0 0.0
        %1568 = vmatpush1.xpose.msra.mxu0 0.0
        %1569 = vmatprep.subr.mxu0 0.0
        %1570 = vmatpush1.xpose.msra.mxu0 0.0
        %1571 = vmatprep.subr.mxu0 0.0
        %1572 = vmatpush1.xpose.msra.mxu0 0.0
        %1573 = vmatprep.subr.mxu0 0.0
        %1574 = vmatpush1.xpose.msra.mxu0 0.0
        %1575 = vmatprep.subr.mxu0 0.0
        %1576 = vmatpush1.xpose.msra.mxu0 0.0
        %1577 = vmatprep.subr.mxu0 0.0
        %1578 = vmatpush1.xpose.msra.mxu0 0.0
        %1579 = vmatprep.subr.mxu0 0.0
        %1580 = vmatpush1.xpose.msra.mxu0 0.0
        %1581 = vmatprep.subr.mxu0 0.0
        %1582 = vmatpush1.xpose.msra.mxu0 0.0
        %1583 = vmatprep.subr.mxu0 0.0
        %1584 = vmatpush1.xpose.msra.mxu0 0.0
        %1585 = vmatprep.subr.mxu0 0.0
        %1586 = vmatpush1.xpose.msra.mxu0 0.0
        %1587 = vmatprep.subr.mxu0 0.0
        %1588 = vmatpush1.xpose.msra.mxu0 0.0
        %1589 = vmatprep.subr.mxu0 0.0
        %1590 = vmatpush1.xpose.msra.mxu0 0.0
        %1591 = vmatprep.subr.mxu0 0.0
        %1592 = vmatpush1.xpose.msra.mxu0 %v1563
        %1593 = vmatprep.subr.mxu0 0.0
        %1594 = vmatpush1.xpose.msra.mxu0 %v1561
        %1595 = vmatprep.subr.mxu0 0.0
        %1596 = vmatpush1.xpose.msra.mxu0 %v1559
        %1597 = vmatprep.subr.mxu0 0.0
        %1598 = vmatpush2.xpose.msra.mxu0 0.0
        %1599 = vmatprep.subr.mxu0 0.0
        %1600 = vmatpush2.xpose.msra.mxu0 0.0
        %1601 = vmatprep.subr.mxu0 0.0
        %1602 = vmatpush2.xpose.msra.mxu0 0.0
        %1603 = vmatprep.subr.mxu0 0.0
        %1604 = vmatpush2.xpose.msra.mxu0 0.0
        %1605 = vmatprep.subr.mxu0 0.0
        %1606 = vmatpush2.xpose.msra.mxu0 0.0
        %1607 = vmatprep.subr.mxu0 0.0
        %1608 = vmatpush2.xpose.msra.mxu0 0.0
        %1609 = vmatprep.subr.mxu0 0.0
        %1610 = vmatpush2.xpose.msra.mxu0 0.0
        %1611 = vmatprep.subr.mxu0 0.0
        %1612 = vmatpush2.xpose.msra.mxu0 0.0
        %1613 = vmatprep.subr.mxu0 0.0
        %1614 = vmatpush2.xpose.msra.mxu0 0.0
        %1615 = vmatprep.subr.mxu0 0.0
        %1616 = vmatpush2.xpose.msra.mxu0 0.0
        %1617 = vmatprep.subr.mxu0 0.0
        %1618 = vmatpush2.xpose.msra.mxu0 0.0
        %1619 = vmatprep.subr.mxu0 0.0
        %1620 = vmatpush2.xpose.msra.mxu0 0.0
        %1621 = vmatprep.subr.mxu0 0.0
        %1622 = vmatpush2.xpose.msra.mxu0 0.0
        %1623 = vmatprep.subr.mxu0 0.0
        %1624 = vmatpush2.xpose.msra.mxu0 0.0
        %1625 = vmatprep.subr.mxu0 0.0
        %1626 = vmatpush2.xpose.msra.mxu0 0.0
        %1627 = vmatprep.subr.mxu0 0.0
        %1628 = vmatpush2.xpose.msra.mxu0 0.0
        %1629 = vmatprep.mubr.f32.mxu0 0.0
        %1630 = vmatmul.mubr.f32.gmra.mxu0 %v1553
        %v1631 = vpop.f32.mrf.mxu0
        %v1632 = vadd.f32 0.0, %v1631
        %v1633 = vpop.f32.mrf.mxu0
        %1634 = vmatprep.mubr.f32.mxu0 0.0
        %1635 = vmatmul.mubr.f32.gmra.mxu0 %v1555
        %v1636 = vpop.f32.mrf.mxu0
        %v1637 = vadd.f32 0.0, %v1636
        %v1638 = vpop.f32.mrf.mxu0
        %1639 = vmatprep.mubr.f32.mxu0 0.0
        %1640 = vmatmul.mubr.f32.gmra.mxu0 %v1557
        %v1641 = vpop.f32.mrf.mxu0
        %v1642 = vadd.f32 0.0, %v1641
        %v1643 = vpop.f32.mrf.mxu0
        %1644 = vdwg.mxu0
        %v1645 = vmul.f32 %v1632, 10.0
        %v1646 = vmul.f32 %v1637, 10.0
        %v1647 = vmul.f32 %v1642, 10.0
        %v1648 = vsel %vm1219, %v1645, -inf
        %1649 = vmax.xlane.f32.xlu0 %v1648
        %v1650 = vpop.xlane.xlu0 %1649
        %v1651 = vsel %vm1219, %v1646, -inf
        %1652 = vmax.xlane.f32.xlu0 %v1651
        %v1653 = vpop.xlane.xlu0 %1652
        %v1654 = vsel %vm1226, %v1647, -inf
        %1655 = vmax.xlane.f32.xlu0 %v1654
        %v1656 = vpop.xlane.xlu0 %1655
        %v1657 = vsub.f32 %v1645, %v1650
        %v1658 = vsub.f32 %v1646, %v1653
        %v1659 = vsub.f32 %v1647, %v1656
        %v1660 = vmul.f32 %v1657, 1.442695
        %v1661 = vpow.pop %v1660
        %v1662 = vmul.f32 %v1658, 1.442695
        %v1663 = vpow.pop %v1662
        %v1664 = vmul.f32 %v1659, 1.442695
        %v1665 = vpow.pop %v1664
        %v1666 = vsel %vm1219, %v1661, 0.0
        %1667 = vadd.xlane.f32.xlu0 %v1666
        %v1668 = vpop.xlane.xlu0 %1667
        %v1669 = vsel %vm1219, %v1663, 0.0
        %1670 = vadd.xlane.f32.xlu0 %v1669
        %v1671 = vpop.xlane.xlu0 %1670
        %v1672 = vsel %vm1226, %v1665, 0.0
        %1673 = vadd.xlane.f32.xlu0 %v1672
        %v1674 = vpop.xlane.xlu0 %1673
        %v1675 = vrcp.pop %v1668
        %v1676 = vrcp.pop %v1671
        %v1677 = vrcp.pop %v1674
        %v1678 = vmul.f32 %v1661, %v1675
        %v1679 = vmul.f32 %v1663, %v1676
        %v1680 = vmul.f32 %v1665, %v1677
        %1683 = vrot.lane.b32.xlu0 %v931, 112
        %v1684 = vpop.permute.xlu0 %1683
        %1685 = vrot.lane.b32.xlu0 %v937, 112
        %v1686 = vpop.permute.xlu0 %1685
        %1687 = vrot.lane.b32.xlu0 %v943, 112
        %v1688 = vpop.permute.xlu0 %1687
        %v1692 = vsel %vm1219, %v1678, 0
        %v1695 = vsel %vm1219, %v1679, 0
        %v1698 = vsel %vm1219, %v1680, 0
        %v1700 = vsel %vm1263, %v1688, 0
        %1702 = vmatprep.subr.mxu0 0.0
        %1703 = vmatpush1.msra.mxu0 0.0
        %1704 = vmatprep.subr.mxu0 0.0
        %1705 = vmatpush1.msra.mxu0 0.0
        %1706 = vmatprep.subr.mxu0 0.0
        %1707 = vmatpush1.msra.mxu0 0.0
        %1708 = vmatprep.subr.mxu0 0.0
        %1709 = vmatpush1.msra.mxu0 0.0
        %1710 = vmatprep.subr.mxu0 0.0
        %1711 = vmatpush1.msra.mxu0 0.0
        %1712 = vmatprep.subr.mxu0 0.0
        %1713 = vmatpush1.msra.mxu0 0.0
        %1714 = vmatprep.subr.mxu0 0.0
        %1715 = vmatpush1.msra.mxu0 0.0
        %1716 = vmatprep.subr.mxu0 0.0
        %1717 = vmatpush1.msra.mxu0 0.0
        %1718 = vmatprep.subr.mxu0 0.0
        %1719 = vmatpush1.msra.mxu0 0.0
        %1720 = vmatprep.subr.mxu0 0.0
        %1721 = vmatpush1.msra.mxu0 0.0
        %1722 = vmatprep.subr.mxu0 0.0
        %1723 = vmatpush1.msra.mxu0 0.0
        %1724 = vmatprep.subr.mxu0 0.0
        %1725 = vmatpush1.msra.mxu0 0.0
        %1726 = vmatprep.subr.mxu0 0.0
        %1727 = vmatpush1.msra.mxu0 0.0
        %1728 = vmatprep.subr.mxu0 0.0
        %1729 = vmatpush1.msra.mxu0 %v1700
        %1730 = vmatprep.subr.mxu0 0.0
        %1731 = vmatpush1.msra.mxu0 %v1686
        %1732 = vmatprep.subr.mxu0 0.0
        %1733 = vmatpush1.msra.mxu0 %v1684
        %1734 = vmatprep.subr.mxu0 0.0
        %1735 = vmatpush2.msra.mxu0 0.0
        %1736 = vmatprep.subr.mxu0 0.0
        %1737 = vmatpush2.msra.mxu0 0.0
        %1738 = vmatprep.subr.mxu0 0.0
        %1739 = vmatpush2.msra.mxu0 0.0
        %1740 = vmatprep.subr.mxu0 0.0
        %1741 = vmatpush2.msra.mxu0 0.0
        %1742 = vmatprep.subr.mxu0 0.0
        %1743 = vmatpush2.msra.mxu0 0.0
        %1744 = vmatprep.subr.mxu0 0.0
        %1745 = vmatpush2.msra.mxu0 0.0
        %1746 = vmatprep.subr.mxu0 0.0
        %1747 = vmatpush2.msra.mxu0 0.0
        %1748 = vmatprep.subr.mxu0 0.0
        %1749 = vmatpush2.msra.mxu0 0.0
        %1750 = vmatprep.subr.mxu0 0.0
        %1751 = vmatpush2.msra.mxu0 0.0
        %1752 = vmatprep.subr.mxu0 0.0
        %1753 = vmatpush2.msra.mxu0 0.0
        %1754 = vmatprep.subr.mxu0 0.0
        %1755 = vmatpush2.msra.mxu0 0.0
        %1756 = vmatprep.subr.mxu0 0.0
        %1757 = vmatpush2.msra.mxu0 0.0
        %1758 = vmatprep.subr.mxu0 0.0
        %1759 = vmatpush2.msra.mxu0 0.0
        %1760 = vmatprep.subr.mxu0 0.0
        %1761 = vmatpush2.msra.mxu0 0.0
        %1762 = vmatprep.subr.mxu0 0.0
        %1763 = vmatpush2.msra.mxu0 0.0
        %1764 = vmatprep.subr.mxu0 0.0
        %1765 = vmatpush2.msra.mxu0 0.0
        %1766 = vmatprep.mubr.f32.mxu0 0.0
        %1767 = vmatmul.mubr.f32.gmra.mxu0 %v1692
        %v1768 = vpop.f32.mrf.mxu0
        %v1769 = vadd.f32 0.0, %v1768
        %v1770 = vpop.f32.mrf.mxu0
        %1771 = vmatprep.mubr.f32.mxu0 0.0
        %1772 = vmatmul.mubr.f32.gmra.mxu0 %v1695
        %v1773 = vpop.f32.mrf.mxu0
        %v1774 = vadd.f32 0.0, %v1773
        %v1775 = vpop.f32.mrf.mxu0
        %1776 = vmatprep.mubr.f32.mxu0 0.0
        %1777 = vmatmul.mubr.f32.gmra.mxu0 %v1698
        %v1778 = vpop.f32.mrf.mxu0
        %v1779 = vadd.f32 0.0, %v1778
        %v1780 = vpop.f32.mrf.mxu0
        %1781 = vdwg.mxu0
        %1782 = vrot.lane.b32.xlu0 %v945, 96
        %v1783 = vpop.permute.xlu0 %1782
        %1784 = vrot.lane.b32.xlu0 %v946, 96
        %v1785 = vpop.permute.xlu0 %1784
        %1786 = vrot.lane.b32.xlu0 %v947, 96
        %v1787 = vpop.permute.xlu0 %1786
        %v1791 = vsel %vm948, %v1783, 0.0
        %1792 = vadd.xlane.f32.xlu0 %v1791
        %v1793 = vpop.xlane.xlu0 %1792
        %v1794 = vsel %vm948, %v1785, 0.0
        %1795 = vadd.xlane.f32.xlu0 %v1794
        %v1796 = vpop.xlane.xlu0 %1795
        %v1797 = vsel %vm955, %v1787, 0.0
        %1798 = vadd.xlane.f32.xlu0 %v1797
        %v1799 = vpop.xlane.xlu0 %1798
        %v1800 = vmax.f32 %v1793, 1e-24
        %v1801 = vmax.f32 %v1796, 1e-24
        %v1802 = vmax.f32 %v1799, 1e-24
        %v1803 = vrsqrt.pop %v1800
        %v1804 = vrsqrt.pop %v1801
        %v1805 = vrsqrt.pop %v1802
        %v1806 = vmul.f32 %v929, %v1803
        %v1807 = vmul.f32 %v935, %v1804
        %v1808 = vmul.f32 %v941, %v1805
        %s1809 = scalar_lea.vmem %s6, 2
        %v1810 = vld [vmem:[%s1809] sm:$0x1]
        %v1812 = vlaneseq
        %v1813 = vshrl.u32 %v1812, 7
        %v1814 = vsub.s32 0, %v1813
        %v1815 = vrot.slane %v1810, %v1814
        %1816 = vrot.lane.b32.xlu0 %v1815, 32
        %v1817 = vpop.permute.xlu0 %1816
        %v1819 = vmul.f32 %v1806, %v1817
        %v1820 = vmul.f32 %v1807, %v1817
        %v1821 = vmul.f32 %v1808, %v1817
        %1825 = vrot.lane.b32.xlu0 %v1819, 88
        %v1826 = vpop.permute.xlu0 %1825
        %1827 = vrot.lane.b32.xlu0 %v1820, 88
        %v1828 = vpop.permute.xlu0 %1827
        %1829 = vrot.lane.b32.xlu0 %v1821, 88
        %v1830 = vpop.permute.xlu0 %1829
        %1834 = vrot.lane.b32.xlu0 %v1819, 104
        %v1835 = vpop.permute.xlu0 %1834
        %1836 = vrot.lane.b32.xlu0 %v1820, 104
        %v1837 = vpop.permute.xlu0 %1836
        %1838 = vrot.lane.b32.xlu0 %v1821, 104
        %v1839 = vpop.permute.xlu0 %1838
        %v1843 = vsel %vm999, %v1826, %v1835
        %v1844 = vsel %vm999, %v1828, %v1837
        %v1845 = vsel %vm999, %v1830, %v1839
        %1846 = vrot.lane.b32.xlu0 %v794, 32
        %v1847 = vpop.permute.xlu0 %1846
        %1848 = vrot.lane.b32.xlu0 %v795, 32
        %v1849 = vpop.permute.xlu0 %1848
        %1850 = vrot.lane.b32.xlu0 %v796, 32
        %v1851 = vpop.permute.xlu0 %1850
        %v1855 = vmul.f32 %v1819, %v1847
        %v1856 = vmul.f32 %v1820, %v1849
        %v1857 = vmul.f32 %v1821, %v1851
        %v1858 = vmul.f32 %v1843, %v798
        %v1859 = vmul.f32 %v1844, %v799
        %v1860 = vmul.f32 %v1845, %v800
        %1864 = vrot.lane.b32.xlu0 %v1858, 32
        %v1865 = vpop.permute.xlu0 %1864
        %1866 = vrot.lane.b32.xlu0 %v1859, 32
        %v1867 = vpop.permute.xlu0 %1866
        %1868 = vrot.lane.b32.xlu0 %v1860, 32
        %v1869 = vpop.permute.xlu0 %1868
        %v1873 = vadd.f32 %v1855, %v1865
        %v1874 = vadd.f32 %v1856, %v1867
        %v1875 = vadd.f32 %v1857, %v1869
        %1876 = vrot.lane.b32.xlu0 %v945, 32
        %v1877 = vpop.permute.xlu0 %1876
        %1878 = vrot.lane.b32.xlu0 %v946, 32
        %v1879 = vpop.permute.xlu0 %1878
        %1880 = vrot.lane.b32.xlu0 %v947, 32
        %v1881 = vpop.permute.xlu0 %1880
        %v1885 = vsel %vm948, %v1877, 0.0
        %1886 = vadd.xlane.f32.xlu0 %v1885
        %v1887 = vpop.xlane.xlu0 %1886
        %v1888 = vsel %vm948, %v1879, 0.0
        %1889 = vadd.xlane.f32.xlu0 %v1888
        %v1890 = vpop.xlane.xlu0 %1889
        %v1891 = vsel %vm955, %v1881, 0.0
        %1892 = vadd.xlane.f32.xlu0 %v1891
        %v1893 = vpop.xlane.xlu0 %1892
        %v1894 = vmax.f32 %v1887, 1e-24
        %v1895 = vmax.f32 %v1890, 1e-24
        %v1896 = vmax.f32 %v1893, 1e-24
        %v1897 = vrsqrt.pop %v1894
        %v1898 = vrsqrt.pop %v1895
        %v1899 = vrsqrt.pop %v1896
        %v1900 = vmul.f32 %v929, %v1897
        %v1901 = vmul.f32 %v935, %v1898
        %v1902 = vmul.f32 %v941, %v1899
        %s1903 = scalar_lea.vmem %s6, 6
        %v1904 = vld [vmem:[%s1903] sm:$0x1]
        %v1906 = vlaneseq
        %v1907 = vshrl.u32 %v1906, 7
        %v1908 = vsub.s32 0, %v1907
        %v1909 = vrot.slane %v1904, %v1908
        %1910 = vrot.lane.b32.xlu0 %v1909, 96
        %v1911 = vpop.permute.xlu0 %1910
        %v1913 = vmul.f32 %v1900, %v1911
        %v1914 = vmul.f32 %v1901, %v1911
        %v1915 = vmul.f32 %v1902, %v1911
        %1919 = vrot.lane.b32.xlu0 %v1913, 24
        %v1920 = vpop.permute.xlu0 %1919
        %1921 = vrot.lane.b32.xlu0 %v1914, 24
        %v1922 = vpop.permute.xlu0 %1921
        %1923 = vrot.lane.b32.xlu0 %v1915, 24
        %v1924 = vpop.permute.xlu0 %1923
        %1928 = vrot.lane.b32.xlu0 %v1913, 40
        %v1929 = vpop.permute.xlu0 %1928
        %1930 = vrot.lane.b32.xlu0 %v1914, 40
        %v1931 = vpop.permute.xlu0 %1930
        %1932 = vrot.lane.b32.xlu0 %v1915, 40
        %v1933 = vpop.permute.xlu0 %1932
        %v1937 = vsel %vm999, %v1920, %v1929
        %v1938 = vsel %vm999, %v1922, %v1931
        %v1939 = vsel %vm999, %v1924, %v1933
        %1940 = vrot.lane.b32.xlu0 %v794, 96
        %v1941 = vpop.permute.xlu0 %1940
        %1942 = vrot.lane.b32.xlu0 %v795, 96
        %v1943 = vpop.permute.xlu0 %1942
        %1944 = vrot.lane.b32.xlu0 %v796, 96
        %v1945 = vpop.permute.xlu0 %1944
        %v1949 = vmul.f32 %v1913, %v1941
        %v1950 = vmul.f32 %v1914, %v1943
        %v1951 = vmul.f32 %v1915, %v1945
        %v1952 = vmul.f32 %v1937, %v798
        %v1953 = vmul.f32 %v1938, %v799
        %v1954 = vmul.f32 %v1939, %v800
        %1958 = vrot.lane.b32.xlu0 %v1952, 96
        %v1959 = vpop.permute.xlu0 %1958
        %1960 = vrot.lane.b32.xlu0 %v1953, 96
        %v1961 = vpop.permute.xlu0 %1960
        %1962 = vrot.lane.b32.xlu0 %v1954, 96
        %v1963 = vpop.permute.xlu0 %1962
        %v1967 = vadd.f32 %v1949, %v1959
        %v1968 = vadd.f32 %v1950, %v1961
        %v1969 = vadd.f32 %v1951, %v1963
        %1973 = vrot.lane.b32.xlu0 %v1873, 96
        %v1974 = vpop.permute.xlu0 %1973
        %1975 = vrot.lane.b32.xlu0 %v1874, 96
        %v1976 = vpop.permute.xlu0 %1975
        %1977 = vrot.lane.b32.xlu0 %v1875, 96
        %v1978 = vpop.permute.xlu0 %1977
        %1982 = vrot.lane.b32.xlu0 %v1967, 32
        %v1983 = vpop.permute.xlu0 %1982
        %1984 = vrot.lane.b32.xlu0 %v1968, 32
        %v1985 = vpop.permute.xlu0 %1984
        %1986 = vrot.lane.b32.xlu0 %v1969, 32
        %v1987 = vpop.permute.xlu0 %1986
        %v1988 = vsel %vm948, %v1974, 0
        %v1990 = vsel %vm948, %v1976, 0
        %v1992 = vsel %vm948, %v1978, 0
        %v1994 = vsel %vm948, %v1983, 0
        %v1996 = vsel %vm948, %v1985, 0
        %v1998 = vsel %vm948, %v1987, 0
        %2000 = vmatprep.subr.mxu0 0.0
        %2001 = vmatpush1.xpose.msra.mxu0 0.0
        %2002 = vmatprep.subr.mxu0 0.0
        %2003 = vmatpush1.xpose.msra.mxu0 0.0
        %2004 = vmatprep.subr.mxu0 0.0
        %2005 = vmatpush1.xpose.msra.mxu0 0.0
        %2006 = vmatprep.subr.mxu0 0.0
        %2007 = vmatpush1.xpose.msra.mxu0 0.0
        %2008 = vmatprep.subr.mxu0 0.0
        %2009 = vmatpush1.xpose.msra.mxu0 0.0
        %2010 = vmatprep.subr.mxu0 0.0
        %2011 = vmatpush1.xpose.msra.mxu0 0.0
        %2012 = vmatprep.subr.mxu0 0.0
        %2013 = vmatpush1.xpose.msra.mxu0 0.0
        %2014 = vmatprep.subr.mxu0 0.0
        %2015 = vmatpush1.xpose.msra.mxu0 0.0
        %2016 = vmatprep.subr.mxu0 0.0
        %2017 = vmatpush1.xpose.msra.mxu0 0.0
        %2018 = vmatprep.subr.mxu0 0.0
        %2019 = vmatpush1.xpose.msra.mxu0 0.0
        %2020 = vmatprep.subr.mxu0 0.0
        %2021 = vmatpush1.xpose.msra.mxu0 0.0
        %2022 = vmatprep.subr.mxu0 0.0
        %2023 = vmatpush1.xpose.msra.mxu0 0.0
        %2024 = vmatprep.subr.mxu0 0.0
        %2025 = vmatpush1.xpose.msra.mxu0 0.0
        %2026 = vmatprep.subr.mxu0 0.0
        %2027 = vmatpush1.xpose.msra.mxu0 %v1998
        %2028 = vmatprep.subr.mxu0 0.0
        %2029 = vmatpush1.xpose.msra.mxu0 %v1996
        %2030 = vmatprep.subr.mxu0 0.0
        %2031 = vmatpush1.xpose.msra.mxu0 %v1994
        %2032 = vmatprep.subr.mxu0 0.0
        %2033 = vmatpush2.xpose.msra.mxu0 0.0
        %2034 = vmatprep.subr.mxu0 0.0
        %2035 = vmatpush2.xpose.msra.mxu0 0.0
        %2036 = vmatprep.subr.mxu0 0.0
        %2037 = vmatpush2.xpose.msra.mxu0 0.0
        %2038 = vmatprep.subr.mxu0 0.0
        %2039 = vmatpush2.xpose.msra.mxu0 0.0
        %2040 = vmatprep.subr.mxu0 0.0
        %2041 = vmatpush2.xpose.msra.mxu0 0.0
        %2042 = vmatprep.subr.mxu0 0.0
        %2043 = vmatpush2.xpose.msra.mxu0 0.0
        %2044 = vmatprep.subr.mxu0 0.0
        %2045 = vmatpush2.xpose.msra.mxu0 0.0
        %2046 = vmatprep.subr.mxu0 0.0
        %2047 = vmatpush2.xpose.msra.mxu0 0.0
        %2048 = vmatprep.subr.mxu0 0.0
        %2049 = vmatpush2.xpose.msra.mxu0 0.0
        %2050 = vmatprep.subr.mxu0 0.0
        %2051 = vmatpush2.xpose.msra.mxu0 0.0
        %2052 = vmatprep.subr.mxu0 0.0
        %2053 = vmatpush2.xpose.msra.mxu0 0.0
        %2054 = vmatprep.subr.mxu0 0.0
        %2055 = vmatpush2.xpose.msra.mxu0 0.0
        %2056 = vmatprep.subr.mxu0 0.0
        %2057 = vmatpush2.xpose.msra.mxu0 0.0
        %2058 = vmatprep.subr.mxu0 0.0
        %2059 = vmatpush2.xpose.msra.mxu0 0.0
        %2060 = vmatprep.subr.mxu0 0.0
        %2061 = vmatpush2.xpose.msra.mxu0 0.0
        %2062 = vmatprep.subr.mxu0 0.0
        %2063 = vmatpush2.xpose.msra.mxu0 0.0
        %2064 = vmatprep.mubr.f32.mxu0 0.0
        %2065 = vmatmul.mubr.f32.gmra.mxu0 %v1988
        %v2066 = vpop.f32.mrf.mxu0
        %v2067 = vadd.f32 0.0, %v2066
        %v2068 = vpop.f32.mrf.mxu0
        %2069 = vmatprep.mubr.f32.mxu0 0.0
        %2070 = vmatmul.mubr.f32.gmra.mxu0 %v1990
        %v2071 = vpop.f32.mrf.mxu0
        %v2072 = vadd.f32 0.0, %v2071
        %v2073 = vpop.f32.mrf.mxu0
        %2074 = vmatprep.mubr.f32.mxu0 0.0
        %2075 = vmatmul.mubr.f32.gmra.mxu0 %v1992
        %v2076 = vpop.f32.mrf.mxu0
        %v2077 = vadd.f32 0.0, %v2076
        %v2078 = vpop.f32.mrf.mxu0
        %2079 = vdwg.mxu0
        %v2080 = vmul.f32 %v2067, 10.0
        %v2081 = vmul.f32 %v2072, 10.0
        %v2082 = vmul.f32 %v2077, 10.0
        %v2083 = vsel %vm1219, %v2080, -inf
        %2084 = vmax.xlane.f32.xlu0 %v2083
        %v2085 = vpop.xlane.xlu0 %2084
        %v2086 = vsel %vm1219, %v2081, -inf
        %2087 = vmax.xlane.f32.xlu0 %v2086
        %v2088 = vpop.xlane.xlu0 %2087
        %v2089 = vsel %vm1226, %v2082, -inf
        %2090 = vmax.xlane.f32.xlu0 %v2089
        %v2091 = vpop.xlane.xlu0 %2090
        %v2092 = vsub.f32 %v2080, %v2085
        %v2093 = vsub.f32 %v2081, %v2088
        %v2094 = vsub.f32 %v2082, %v2091
        %v2095 = vmul.f32 %v2092, 1.442695
        %v2096 = vpow.pop %v2095
        %v2097 = vmul.f32 %v2093, 1.442695
        %v2098 = vpow.pop %v2097
        %v2099 = vmul.f32 %v2094, 1.442695
        %v2100 = vpow.pop %v2099
        %v2101 = vsel %vm1219, %v2096, 0.0
        %2102 = vadd.xlane.f32.xlu0 %v2101
        %v2103 = vpop.xlane.xlu0 %2102
        %v2104 = vsel %vm1219, %v2098, 0.0
        %2105 = vadd.xlane.f32.xlu0 %v2104
        %v2106 = vpop.xlane.xlu0 %2105
        %v2107 = vsel %vm1226, %v2100, 0.0
        %2108 = vadd.xlane.f32.xlu0 %v2107
        %v2109 = vpop.xlane.xlu0 %2108
        %v2110 = vrcp.pop %v2103
        %v2111 = vrcp.pop %v2106
        %v2112 = vrcp.pop %v2109
        %v2113 = vmul.f32 %v2096, %v2110
        %v2114 = vmul.f32 %v2098, %v2111
        %v2115 = vmul.f32 %v2100, %v2112
        %2116 = vrot.lane.b32.xlu0 %v931, 96
        %v2117 = vpop.permute.xlu0 %2116
        %2118 = vrot.lane.b32.xlu0 %v937, 96
        %v2119 = vpop.permute.xlu0 %2118
        %2120 = vrot.lane.b32.xlu0 %v943, 96
        %v2121 = vpop.permute.xlu0 %2120
        %v2125 = vsel %vm1219, %v2113, 0
        %v2128 = vsel %vm1219, %v2114, 0
        %v2131 = vsel %vm1219, %v2115, 0
        %v2133 = vsel %vm1263, %v2121, 0
        %2135 = vmatprep.subr.mxu0 0.0
        %2136 = vmatpush1.msra.mxu0 0.0
        %2137 = vmatprep.subr.mxu0 0.0
        %2138 = vmatpush1.msra.mxu0 0.0
        %2139 = vmatprep.subr.mxu0 0.0
        %2140 = vmatpush1.msra.mxu0 0.0
        %2141 = vmatprep.subr.mxu0 0.0
        %2142 = vmatpush1.msra.mxu0 0.0
        %2143 = vmatprep.subr.mxu0 0.0
        %2144 = vmatpush1.msra.mxu0 0.0
        %2145 = vmatprep.subr.mxu0 0.0
        %2146 = vmatpush1.msra.mxu0 0.0
        %2147 = vmatprep.subr.mxu0 0.0
        %2148 = vmatpush1.msra.mxu0 0.0
        %2149 = vmatprep.subr.mxu0 0.0
        %2150 = vmatpush1.msra.mxu0 0.0
        %2151 = vmatprep.subr.mxu0 0.0
        %2152 = vmatpush1.msra.mxu0 0.0
        %2153 = vmatprep.subr.mxu0 0.0
        %2154 = vmatpush1.msra.mxu0 0.0
        %2155 = vmatprep.subr.mxu0 0.0
        %2156 = vmatpush1.msra.mxu0 0.0
        %2157 = vmatprep.subr.mxu0 0.0
        %2158 = vmatpush1.msra.mxu0 0.0
        %2159 = vmatprep.subr.mxu0 0.0
        %2160 = vmatpush1.msra.mxu0 0.0
        %2161 = vmatprep.subr.mxu0 0.0
        %2162 = vmatpush1.msra.mxu0 %v2133
        %2163 = vmatprep.subr.mxu0 0.0
        %2164 = vmatpush1.msra.mxu0 %v2119
        %2165 = vmatprep.subr.mxu0 0.0
        %2166 = vmatpush1.msra.mxu0 %v2117
        %2167 = vmatprep.subr.mxu0 0.0
        %2168 = vmatpush2.msra.mxu0 0.0
        %2169 = vmatprep.subr.mxu0 0.0
        %2170 = vmatpush2.msra.mxu0 0.0
        %2171 = vmatprep.subr.mxu0 0.0
        %2172 = vmatpush2.msra.mxu0 0.0
        %2173 = vmatprep.subr.mxu0 0.0
        %2174 = vmatpush2.msra.mxu0 0.0
        %2175 = vmatprep.subr.mxu0 0.0
        %2176 = vmatpush2.msra.mxu0 0.0
        %2177 = vmatprep.subr.mxu0 0.0
        %2178 = vmatpush2.msra.mxu0 0.0
        %2179 = vmatprep.subr.mxu0 0.0
        %2180 = vmatpush2.msra.mxu0 0.0
        %2181 = vmatprep.subr.mxu0 0.0
        %2182 = vmatpush2.msra.mxu0 0.0
        %2183 = vmatprep.subr.mxu0 0.0
        %2184 = vmatpush2.msra.mxu0 0.0
        %2185 = vmatprep.subr.mxu0 0.0
        %2186 = vmatpush2.msra.mxu0 0.0
        %2187 = vmatprep.subr.mxu0 0.0
        %2188 = vmatpush2.msra.mxu0 0.0
        %2189 = vmatprep.subr.mxu0 0.0
        %2190 = vmatpush2.msra.mxu0 0.0
        %2191 = vmatprep.subr.mxu0 0.0
        %2192 = vmatpush2.msra.mxu0 0.0
        %2193 = vmatprep.subr.mxu0 0.0
        %2194 = vmatpush2.msra.mxu0 0.0
        %2195 = vmatprep.subr.mxu0 0.0
        %2196 = vmatpush2.msra.mxu0 0.0
        %2197 = vmatprep.subr.mxu0 0.0
        %2198 = vmatpush2.msra.mxu0 0.0
        %2199 = vmatprep.mubr.f32.mxu0 0.0
        %2200 = vmatmul.mubr.f32.gmra.mxu0 %v2125
        %v2201 = vpop.f32.mrf.mxu0
        %v2202 = vadd.f32 0.0, %v2201
        %v2203 = vpop.f32.mrf.mxu0
        %2204 = vmatprep.mubr.f32.mxu0 0.0
        %2205 = vmatmul.mubr.f32.gmra.mxu0 %v2128
        %v2206 = vpop.f32.mrf.mxu0
        %v2207 = vadd.f32 0.0, %v2206
        %v2208 = vpop.f32.mrf.mxu0
        %2209 = vmatprep.mubr.f32.mxu0 0.0
        %2210 = vmatmul.mubr.f32.gmra.mxu0 %v2131
        %v2211 = vpop.f32.mrf.mxu0
        %v2212 = vadd.f32 0.0, %v2211
        %v2213 = vpop.f32.mrf.mxu0
        %2214 = vdwg.mxu0
        %2215 = vrot.lane.b32.xlu0 %v945, 80
        %v2216 = vpop.permute.xlu0 %2215
        %2217 = vrot.lane.b32.xlu0 %v946, 80
        %v2218 = vpop.permute.xlu0 %2217
        %2219 = vrot.lane.b32.xlu0 %v947, 80
        %v2220 = vpop.permute.xlu0 %2219
        %v2224 = vsel %vm948, %v2216, 0.0
        %2225 = vadd.xlane.f32.xlu0 %v2224
        %v2226 = vpop.xlane.xlu0 %2225
        %v2227 = vsel %vm948, %v2218, 0.0
        %2228 = vadd.xlane.f32.xlu0 %v2227
        %v2229 = vpop.xlane.xlu0 %2228
        %v2230 = vsel %vm955, %v2220, 0.0
        %2231 = vadd.xlane.f32.xlu0 %v2230
        %v2232 = vpop.xlane.xlu0 %2231
        %v2233 = vmax.f32 %v2226, 1e-24
        %v2234 = vmax.f32 %v2229, 1e-24
        %v2235 = vmax.f32 %v2232, 1e-24
        %v2236 = vrsqrt.pop %v2233
        %v2237 = vrsqrt.pop %v2234
        %v2238 = vrsqrt.pop %v2235
        %v2239 = vmul.f32 %v929, %v2236
        %v2240 = vmul.f32 %v935, %v2237
        %v2241 = vmul.f32 %v941, %v2238
        %s2242 = scalar_lea.vmem %s6, 3
        %v2243 = vld [vmem:[%s2242] sm:$0x1]
        %v2245 = vlaneseq
        %v2246 = vshrl.u32 %v2245, 7
        %v2247 = vsub.s32 0, %v2246
        %v2248 = vrot.slane %v2243, %v2247
        %2249 = vrot.lane.b32.xlu0 %v2248, 48
        %v2250 = vpop.permute.xlu0 %2249
        %v2252 = vmul.f32 %v2239, %v2250
        %v2253 = vmul.f32 %v2240, %v2250
        %v2254 = vmul.f32 %v2241, %v2250
        %2258 = vrot.lane.b32.xlu0 %v2252, 72
        %v2259 = vpop.permute.xlu0 %2258
        %2260 = vrot.lane.b32.xlu0 %v2253, 72
        %v2261 = vpop.permute.xlu0 %2260
        %2262 = vrot.lane.b32.xlu0 %v2254, 72
        %v2263 = vpop.permute.xlu0 %2262
        %2267 = vrot.lane.b32.xlu0 %v2252, 88
        %v2268 = vpop.permute.xlu0 %2267
        %2269 = vrot.lane.b32.xlu0 %v2253, 88
        %v2270 = vpop.permute.xlu0 %2269
        %2271 = vrot.lane.b32.xlu0 %v2254, 88
        %v2272 = vpop.permute.xlu0 %2271
        %v2276 = vsel %vm999, %v2259, %v2268
        %v2277 = vsel %vm999, %v2261, %v2270
        %v2278 = vsel %vm999, %v2263, %v2272
        %2279 = vrot.lane.b32.xlu0 %v794, 48
        %v2280 = vpop.permute.xlu0 %2279
        %2281 = vrot.lane.b32.xlu0 %v795, 48
        %v2282 = vpop.permute.xlu0 %2281
        %2283 = vrot.lane.b32.xlu0 %v796, 48
        %v2284 = vpop.permute.xlu0 %2283
        %v2288 = vmul.f32 %v2252, %v2280
        %v2289 = vmul.f32 %v2253, %v2282
        %v2290 = vmul.f32 %v2254, %v2284
        %v2291 = vmul.f32 %v2276, %v798
        %v2292 = vmul.f32 %v2277, %v799
        %v2293 = vmul.f32 %v2278, %v800
        %2297 = vrot.lane.b32.xlu0 %v2291, 48
        %v2298 = vpop.permute.xlu0 %2297
        %2299 = vrot.lane.b32.xlu0 %v2292, 48
        %v2300 = vpop.permute.xlu0 %2299
        %2301 = vrot.lane.b32.xlu0 %v2293, 48
        %v2302 = vpop.permute.xlu0 %2301
        %v2306 = vadd.f32 %v2288, %v2298
        %v2307 = vadd.f32 %v2289, %v2300
        %v2308 = vadd.f32 %v2290, %v2302
        %2309 = vrot.lane.b32.xlu0 %v945, 16
        %v2310 = vpop.permute.xlu0 %2309
        %2311 = vrot.lane.b32.xlu0 %v946, 16
        %v2312 = vpop.permute.xlu0 %2311
        %2313 = vrot.lane.b32.xlu0 %v947, 16
        %v2314 = vpop.permute.xlu0 %2313
        %v2318 = vsel %vm948, %v2310, 0.0
        %2319 = vadd.xlane.f32.xlu0 %v2318
        %v2320 = vpop.xlane.xlu0 %2319
        %v2321 = vsel %vm948, %v2312, 0.0
        %2322 = vadd.xlane.f32.xlu0 %v2321
        %v2323 = vpop.xlane.xlu0 %2322
        %v2324 = vsel %vm955, %v2314, 0.0
        %2325 = vadd.xlane.f32.xlu0 %v2324
        %v2326 = vpop.xlane.xlu0 %2325
        %v2327 = vmax.f32 %v2320, 1e-24
        %v2328 = vmax.f32 %v2323, 1e-24
        %v2329 = vmax.f32 %v2326, 1e-24
        %v2330 = vrsqrt.pop %v2327
        %v2331 = vrsqrt.pop %v2328
        %v2332 = vrsqrt.pop %v2329
        %v2333 = vmul.f32 %v929, %v2330
        %v2334 = vmul.f32 %v935, %v2331
        %v2335 = vmul.f32 %v941, %v2332
        %s2336 = scalar_lea.vmem %s6, 7
        %v2337 = vld [vmem:[%s2336] sm:$0x1]
        %v2339 = vlaneseq
        %v2340 = vshrl.u32 %v2339, 7
        %v2341 = vsub.s32 0, %v2340
        %v2342 = vrot.slane %v2337, %v2341
        %2343 = vrot.lane.b32.xlu0 %v2342, 112
        %v2344 = vpop.permute.xlu0 %2343
        %v2346 = vmul.f32 %v2333, %v2344
        %v2347 = vmul.f32 %v2334, %v2344
        %v2348 = vmul.f32 %v2335, %v2344
        %2352 = vrot.lane.b32.xlu0 %v2346, 8
        %v2353 = vpop.permute.xlu0 %2352
        %2354 = vrot.lane.b32.xlu0 %v2347, 8
        %v2355 = vpop.permute.xlu0 %2354
        %2356 = vrot.lane.b32.xlu0 %v2348, 8
        %v2357 = vpop.permute.xlu0 %2356
        %2361 = vrot.lane.b32.xlu0 %v2346, 24
        %v2362 = vpop.permute.xlu0 %2361
        %2363 = vrot.lane.b32.xlu0 %v2347, 24
        %v2364 = vpop.permute.xlu0 %2363
        %2365 = vrot.lane.b32.xlu0 %v2348, 24
        %v2366 = vpop.permute.xlu0 %2365
        %v2370 = vsel %vm999, %v2353, %v2362
        %v2371 = vsel %vm999, %v2355, %v2364
        %v2372 = vsel %vm999, %v2357, %v2366
        %2373 = vrot.lane.b32.xlu0 %v794, 112
        %v2374 = vpop.permute.xlu0 %2373
        %2375 = vrot.lane.b32.xlu0 %v795, 112
        %v2376 = vpop.permute.xlu0 %2375
        %2377 = vrot.lane.b32.xlu0 %v796, 112
        %v2378 = vpop.permute.xlu0 %2377
        %v2382 = vmul.f32 %v2346, %v2374
        %v2383 = vmul.f32 %v2347, %v2376
        %v2384 = vmul.f32 %v2348, %v2378
        %v2385 = vmul.f32 %v2370, %v798
        %v2386 = vmul.f32 %v2371, %v799
        %v2387 = vmul.f32 %v2372, %v800
        %2391 = vrot.lane.b32.xlu0 %v2385, 112
        %v2392 = vpop.permute.xlu0 %2391
        %2393 = vrot.lane.b32.xlu0 %v2386, 112
        %v2394 = vpop.permute.xlu0 %2393
        %2395 = vrot.lane.b32.xlu0 %v2387, 112
        %v2396 = vpop.permute.xlu0 %2395
        %v2400 = vadd.f32 %v2382, %v2392
        %v2401 = vadd.f32 %v2383, %v2394
        %v2402 = vadd.f32 %v2384, %v2396
        %2406 = vrot.lane.b32.xlu0 %v2306, 80
        %v2407 = vpop.permute.xlu0 %2406
        %2408 = vrot.lane.b32.xlu0 %v2307, 80
        %v2409 = vpop.permute.xlu0 %2408
        %2410 = vrot.lane.b32.xlu0 %v2308, 80
        %v2411 = vpop.permute.xlu0 %2410
        %2415 = vrot.lane.b32.xlu0 %v2400, 16
        %v2416 = vpop.permute.xlu0 %2415
        %2417 = vrot.lane.b32.xlu0 %v2401, 16
        %v2418 = vpop.permute.xlu0 %2417
        %2419 = vrot.lane.b32.xlu0 %v2402, 16
        %v2420 = vpop.permute.xlu0 %2419
        %v2421 = vsel %vm948, %v2407, 0
        %v2423 = vsel %vm948, %v2409, 0
        %v2425 = vsel %vm948, %v2411, 0
        %v2427 = vsel %vm948, %v2416, 0
        %v2429 = vsel %vm948, %v2418, 0
        %v2431 = vsel %vm948, %v2420, 0
        %2433 = vmatprep.subr.mxu0 0.0
        %2434 = vmatpush1.xpose.msra.mxu0 0.0
        %2435 = vmatprep.subr.mxu0 0.0
        %2436 = vmatpush1.xpose.msra.mxu0 0.0
        %2437 = vmatprep.subr.mxu0 0.0
        %2438 = vmatpush1.xpose.msra.mxu0 0.0
        %2439 = vmatprep.subr.mxu0 0.0
        %2440 = vmatpush1.xpose.msra.mxu0 0.0
        %2441 = vmatprep.subr.mxu0 0.0
        %2442 = vmatpush1.xpose.msra.mxu0 0.0
        %2443 = vmatprep.subr.mxu0 0.0
        %2444 = vmatpush1.xpose.msra.mxu0 0.0
        %2445 = vmatprep.subr.mxu0 0.0
        %2446 = vmatpush1.xpose.msra.mxu0 0.0
        %2447 = vmatprep.subr.mxu0 0.0
        %2448 = vmatpush1.xpose.msra.mxu0 0.0
        %2449 = vmatprep.subr.mxu0 0.0
        %2450 = vmatpush1.xpose.msra.mxu0 0.0
        %2451 = vmatprep.subr.mxu0 0.0
        %2452 = vmatpush1.xpose.msra.mxu0 0.0
        %2453 = vmatprep.subr.mxu0 0.0
        %2454 = vmatpush1.xpose.msra.mxu0 0.0
        %2455 = vmatprep.subr.mxu0 0.0
        %2456 = vmatpush1.xpose.msra.mxu0 0.0
        %2457 = vmatprep.subr.mxu0 0.0
        %2458 = vmatpush1.xpose.msra.mxu0 0.0
        %2459 = vmatprep.subr.mxu0 0.0
        %2460 = vmatpush1.xpose.msra.mxu0 %v2431
        %2461 = vmatprep.subr.mxu0 0.0
        %2462 = vmatpush1.xpose.msra.mxu0 %v2429
        %2463 = vmatprep.subr.mxu0 0.0
        %2464 = vmatpush1.xpose.msra.mxu0 %v2427
        %2465 = vmatprep.subr.mxu0 0.0
        %2466 = vmatpush2.xpose.msra.mxu0 0.0
        %2467 = vmatprep.subr.mxu0 0.0
        %2468 = vmatpush2.xpose.msra.mxu0 0.0
        %2469 = vmatprep.subr.mxu0 0.0
        %2470 = vmatpush2.xpose.msra.mxu0 0.0
        %2471 = vmatprep.subr.mxu0 0.0
        %2472 = vmatpush2.xpose.msra.mxu0 0.0
        %2473 = vmatprep.subr.mxu0 0.0
        %2474 = vmatpush2.xpose.msra.mxu0 0.0
        %2475 = vmatprep.subr.mxu0 0.0
        %2476 = vmatpush2.xpose.msra.mxu0 0.0
        %2477 = vmatprep.subr.mxu0 0.0
        %2478 = vmatpush2.xpose.msra.mxu0 0.0
        %2479 = vmatprep.subr.mxu0 0.0
        %2480 = vmatpush2.xpose.msra.mxu0 0.0
        %2481 = vmatprep.subr.mxu0 0.0
        %2482 = vmatpush2.xpose.msra.mxu0 0.0
        %2483 = vmatprep.subr.mxu0 0.0
        %2484 = vmatpush2.xpose.msra.mxu0 0.0
        %2485 = vmatprep.subr.mxu0 0.0
        %2486 = vmatpush2.xpose.msra.mxu0 0.0
        %2487 = vmatprep.subr.mxu0 0.0
        %2488 = vmatpush2.xpose.msra.mxu0 0.0
        %2489 = vmatprep.subr.mxu0 0.0
        %2490 = vmatpush2.xpose.msra.mxu0 0.0
        %2491 = vmatprep.subr.mxu0 0.0
        %2492 = vmatpush2.xpose.msra.mxu0 0.0
        %2493 = vmatprep.subr.mxu0 0.0
        %2494 = vmatpush2.xpose.msra.mxu0 0.0
        %2495 = vmatprep.subr.mxu0 0.0
        %2496 = vmatpush2.xpose.msra.mxu0 0.0
        %2497 = vmatprep.mubr.f32.mxu0 0.0
        %2498 = vmatmul.mubr.f32.gmra.mxu0 %v2421
        %v2499 = vpop.f32.mrf.mxu0
        %v2500 = vadd.f32 0.0, %v2499
        %v2501 = vpop.f32.mrf.mxu0
        %2502 = vmatprep.mubr.f32.mxu0 0.0
        %2503 = vmatmul.mubr.f32.gmra.mxu0 %v2423
        %v2504 = vpop.f32.mrf.mxu0
        %v2505 = vadd.f32 0.0, %v2504
        %v2506 = vpop.f32.mrf.mxu0
        %2507 = vmatprep.mubr.f32.mxu0 0.0
        %2508 = vmatmul.mubr.f32.gmra.mxu0 %v2425
        %v2509 = vpop.f32.mrf.mxu0
        %v2510 = vadd.f32 0.0, %v2509
        %v2511 = vpop.f32.mrf.mxu0
        %2512 = vdwg.mxu0
        %v2513 = vmul.f32 %v2500, 10.0
        %v2514 = vmul.f32 %v2505, 10.0
        %v2515 = vmul.f32 %v2510, 10.0
        %v2516 = vsel %vm1219, %v2513, -inf
        %2517 = vmax.xlane.f32.xlu0 %v2516
        %v2518 = vpop.xlane.xlu0 %2517
        %v2519 = vsel %vm1219, %v2514, -inf
        %2520 = vmax.xlane.f32.xlu0 %v2519
        %v2521 = vpop.xlane.xlu0 %2520
        %v2522 = vsel %vm1226, %v2515, -inf
        %2523 = vmax.xlane.f32.xlu0 %v2522
        %v2524 = vpop.xlane.xlu0 %2523
        %v2525 = vsub.f32 %v2513, %v2518
        %v2526 = vsub.f32 %v2514, %v2521
        %v2527 = vsub.f32 %v2515, %v2524
        %v2528 = vmul.f32 %v2525, 1.442695
        %v2529 = vpow.pop %v2528
        %v2530 = vmul.f32 %v2526, 1.442695
        %v2531 = vpow.pop %v2530
        %v2532 = vmul.f32 %v2527, 1.442695
        %v2533 = vpow.pop %v2532
        %v2534 = vsel %vm1219, %v2529, 0.0
        %2535 = vadd.xlane.f32.xlu0 %v2534
        %v2536 = vpop.xlane.xlu0 %2535
        %v2537 = vsel %vm1219, %v2531, 0.0
        %2538 = vadd.xlane.f32.xlu0 %v2537
        %v2539 = vpop.xlane.xlu0 %2538
        %v2540 = vsel %vm1226, %v2533, 0.0
        %2541 = vadd.xlane.f32.xlu0 %v2540
        %v2542 = vpop.xlane.xlu0 %2541
        %v2543 = vrcp.pop %v2536
        %v2544 = vrcp.pop %v2539
        %v2545 = vrcp.pop %v2542
        %v2546 = vmul.f32 %v2529, %v2543
        %v2547 = vmul.f32 %v2531, %v2544
        %v2548 = vmul.f32 %v2533, %v2545
        %2549 = vrot.lane.b32.xlu0 %v931, 80
        %v2550 = vpop.permute.xlu0 %2549
        %2551 = vrot.lane.b32.xlu0 %v937, 80
        %v2552 = vpop.permute.xlu0 %2551
        %2553 = vrot.lane.b32.xlu0 %v943, 80
        %v2554 = vpop.permute.xlu0 %2553
        %v2558 = vsel %vm1219, %v2546, 0
        %v2561 = vsel %vm1219, %v2547, 0
        %v2564 = vsel %vm1219, %v2548, 0
        %v2566 = vsel %vm1263, %v2554, 0
        %2568 = vmatprep.subr.mxu0 0.0
        %2569 = vmatpush1.msra.mxu0 0.0
        %2570 = vmatprep.subr.mxu0 0.0
        %2571 = vmatpush1.msra.mxu0 0.0
        %2572 = vmatprep.subr.mxu0 0.0
        %2573 = vmatpush1.msra.mxu0 0.0
        %2574 = vmatprep.subr.mxu0 0.0
        %2575 = vmatpush1.msra.mxu0 0.0
        %2576 = vmatprep.subr.mxu0 0.0
        %2577 = vmatpush1.msra.mxu0 0.0
        %2578 = vmatprep.subr.mxu0 0.0
        %2579 = vmatpush1.msra.mxu0 0.0
        %2580 = vmatprep.subr.mxu0 0.0
        %2581 = vmatpush1.msra.mxu0 0.0
        %2582 = vmatprep.subr.mxu0 0.0
        %2583 = vmatpush1.msra.mxu0 0.0
        %2584 = vmatprep.subr.mxu0 0.0
        %2585 = vmatpush1.msra.mxu0 0.0
        %2586 = vmatprep.subr.mxu0 0.0
        %2587 = vmatpush1.msra.mxu0 0.0
        %2588 = vmatprep.subr.mxu0 0.0
        %2589 = vmatpush1.msra.mxu0 0.0
        %2590 = vmatprep.subr.mxu0 0.0
        %2591 = vmatpush1.msra.mxu0 0.0
        %2592 = vmatprep.subr.mxu0 0.0
        %2593 = vmatpush1.msra.mxu0 0.0
        %2594 = vmatprep.subr.mxu0 0.0
        %2595 = vmatpush1.msra.mxu0 %v2566
        %2596 = vmatprep.subr.mxu0 0.0
        %2597 = vmatpush1.msra.mxu0 %v2552
        %2598 = vmatprep.subr.mxu0 0.0
        %2599 = vmatpush1.msra.mxu0 %v2550
        %2600 = vmatprep.subr.mxu0 0.0
        %2601 = vmatpush2.msra.mxu0 0.0
        %2602 = vmatprep.subr.mxu0 0.0
        %2603 = vmatpush2.msra.mxu0 0.0
        %2604 = vmatprep.subr.mxu0 0.0
        %2605 = vmatpush2.msra.mxu0 0.0
        %2606 = vmatprep.subr.mxu0 0.0
        %2607 = vmatpush2.msra.mxu0 0.0
        %2608 = vmatprep.subr.mxu0 0.0
        %2609 = vmatpush2.msra.mxu0 0.0
        %2610 = vmatprep.subr.mxu0 0.0
        %2611 = vmatpush2.msra.mxu0 0.0
        %2612 = vmatprep.subr.mxu0 0.0
        %2613 = vmatpush2.msra.mxu0 0.0
        %2614 = vmatprep.subr.mxu0 0.0
        %2615 = vmatpush2.msra.mxu0 0.0
        %2616 = vmatprep.subr.mxu0 0.0
        %2617 = vmatpush2.msra.mxu0 0.0
        %2618 = vmatprep.subr.mxu0 0.0
        %2619 = vmatpush2.msra.mxu0 0.0
        %2620 = vmatprep.subr.mxu0 0.0
        %2621 = vmatpush2.msra.mxu0 0.0
        %2622 = vmatprep.subr.mxu0 0.0
        %2623 = vmatpush2.msra.mxu0 0.0
        %2624 = vmatprep.subr.mxu0 0.0
        %2625 = vmatpush2.msra.mxu0 0.0
        %2626 = vmatprep.subr.mxu0 0.0
        %2627 = vmatpush2.msra.mxu0 0.0
        %2628 = vmatprep.subr.mxu0 0.0
        %2629 = vmatpush2.msra.mxu0 0.0
        %2630 = vmatprep.subr.mxu0 0.0
        %2631 = vmatpush2.msra.mxu0 0.0
        %2632 = vmatprep.mubr.f32.mxu0 0.0
        %2633 = vmatmul.mubr.f32.gmra.mxu0 %v2558
        %v2634 = vpop.f32.mrf.mxu0
        %v2635 = vadd.f32 0.0, %v2634
        %v2636 = vpop.f32.mrf.mxu0
        %2637 = vmatprep.mubr.f32.mxu0 0.0
        %2638 = vmatmul.mubr.f32.gmra.mxu0 %v2561
        %v2639 = vpop.f32.mrf.mxu0
        %v2640 = vadd.f32 0.0, %v2639
        %v2641 = vpop.f32.mrf.mxu0
        %2642 = vmatprep.mubr.f32.mxu0 0.0
        %2643 = vmatmul.mubr.f32.gmra.mxu0 %v2564
        %v2644 = vpop.f32.mrf.mxu0
        %v2645 = vadd.f32 0.0, %v2644
        %v2646 = vpop.f32.mrf.mxu0
        %2647 = vdwg.mxu0
        %2651 = vrot.lane.b32.xlu0 %v1769, 16
        %v2652 = vpop.permute.xlu0 %2651
        %2653 = vrot.lane.b32.xlu0 %v1774, 16
        %v2654 = vpop.permute.xlu0 %2653
        %2655 = vrot.lane.b32.xlu0 %v1779, 16
        %v2656 = vpop.permute.xlu0 %2655
        %2663 = vrot.lane.b32.xlu0 %v2202, 32
        %v2664 = vpop.permute.xlu0 %2663
        %2665 = vrot.lane.b32.xlu0 %v2207, 32
        %v2666 = vpop.permute.xlu0 %2665
        %2667 = vrot.lane.b32.xlu0 %v2212, 32
        %v2668 = vpop.permute.xlu0 %2667
        %2675 = vrot.lane.b32.xlu0 %v2635, 48
        %v2676 = vpop.permute.xlu0 %2675
        %2677 = vrot.lane.b32.xlu0 %v2640, 48
        %v2678 = vpop.permute.xlu0 %2677
        %2679 = vrot.lane.b32.xlu0 %v2645, 48
        %v2680 = vpop.permute.xlu0 %2679
        %v2684 = vsel %vm948, %v1334, %v2652
        %v2685 = vsel %vm948, %v1339, %v2654
        %v2686 = vsel %vm948, %v1344, %v2656
        %vm2687 = vcmask 261120
        %v2688 = vsel %vm2687, %v2684, %v2664
        %v2689 = vsel %vm2687, %v2685, %v2666
        %v2690 = vsel %vm2687, %v2686, %v2668
        %vm2691 = vcmask 392192
        %v2692 = vsel %vm2691, %v2688, %v2676
        %v2693 = vsel %vm2691, %v2689, %v2678
        %v2694 = vsel %vm2691, %v2690, %v2680
        %v2695 = vld [vmem:[#allocation8] sm:$0xff]
        %v2696 = vld [vmem:[#allocation8 + $0x8] sm:$0xff]
        %v2697 = vld [vmem:[#allocation8 + $0x10] sm:$0xff]
        %v2698 = vld [vmem:[#allocation8 + $0x18] sm:$0xff]
        %v2699 = vld [vmem:[#allocation8 + $0x20] sm:$0xff]
        %v2700 = vld [vmem:[#allocation8 + $0x28] sm:$0xff]
        %v2701 = vld [vmem:[#allocation8 + $0x30] sm:$0xff]
        %v2702 = vld [vmem:[#allocation8 + $0x38] sm:$0xff]
        %v2704 = vsel %vm786, %v2692, 0
        %v2707 = vsel %vm786, %v2693, 0
        %v2710 = vsel %vm786, %v2694, 0
        %2712 = vmatprep.subr.mxu0 0.0
        %2713 = vmatpush1.msra.mxu0 0.0
        %2714 = vmatprep.subr.mxu0 0.0
        %2715 = vmatpush1.msra.mxu0 0.0
        %2716 = vmatprep.subr.mxu0 0.0
        %2717 = vmatpush1.msra.mxu0 0.0
        %2718 = vmatprep.subr.mxu0 0.0
        %2719 = vmatpush1.msra.mxu0 0.0
        %2720 = vmatprep.subr.mxu0 0.0
        %2721 = vmatpush1.msra.mxu0 0.0
        %2722 = vmatprep.subr.mxu0 0.0
        %2723 = vmatpush1.msra.mxu0 0.0
        %2724 = vmatprep.subr.mxu0 0.0
        %2725 = vmatpush1.msra.mxu0 0.0
        %2726 = vmatprep.subr.mxu0 0.0
        %2727 = vmatpush1.msra.mxu0 0.0
        %2728 = vmatprep.subr.mxu0 0.0
        %2729 = vmatpush1.msra.mxu0 %v2702
        %2730 = vmatprep.subr.mxu0 0.0
        %2731 = vmatpush1.msra.mxu0 %v2701
        %2732 = vmatprep.subr.mxu0 0.0
        %2733 = vmatpush1.msra.mxu0 %v2700
        %2734 = vmatprep.subr.mxu0 0.0
        %2735 = vmatpush1.msra.mxu0 %v2699
        %2736 = vmatprep.subr.mxu0 0.0
        %2737 = vmatpush1.msra.mxu0 %v2698
        %2738 = vmatprep.subr.mxu0 0.0
        %2739 = vmatpush1.msra.mxu0 %v2697
        %2740 = vmatprep.subr.mxu0 0.0
        %2741 = vmatpush1.msra.mxu0 %v2696
        %2742 = vmatprep.subr.mxu0 0.0
        %2743 = vmatpush1.msra.mxu0 %v2695
        %2744 = vmatprep.subr.mxu0 0.0
        %2745 = vmatpush2.msra.mxu0 0.0
        %2746 = vmatprep.subr.mxu0 0.0
        %2747 = vmatpush2.msra.mxu0 0.0
        %2748 = vmatprep.subr.mxu0 0.0
        %2749 = vmatpush2.msra.mxu0 0.0
        %2750 = vmatprep.subr.mxu0 0.0
        %2751 = vmatpush2.msra.mxu0 0.0
        %2752 = vmatprep.subr.mxu0 0.0
        %2753 = vmatpush2.msra.mxu0 0.0
        %2754 = vmatprep.subr.mxu0 0.0
        %2755 = vmatpush2.msra.mxu0 0.0
        %2756 = vmatprep.subr.mxu0 0.0
        %2757 = vmatpush2.msra.mxu0 0.0
        %2758 = vmatprep.subr.mxu0 0.0
        %2759 = vmatpush2.msra.mxu0 0.0
        %2760 = vmatprep.subr.mxu0 0.0
        %2761 = vmatpush2.msra.mxu0 0.0
        %2762 = vmatprep.subr.mxu0 0.0
        %2763 = vmatpush2.msra.mxu0 0.0
        %2764 = vmatprep.subr.mxu0 0.0
        %2765 = vmatpush2.msra.mxu0 0.0
        %2766 = vmatprep.subr.mxu0 0.0
        %2767 = vmatpush2.msra.mxu0 0.0
        %2768 = vmatprep.subr.mxu0 0.0
        %2769 = vmatpush2.msra.mxu0 0.0
        %2770 = vmatprep.subr.mxu0 0.0
        %2771 = vmatpush2.msra.mxu0 0.0
        %2772 = vmatprep.subr.mxu0 0.0
        %2773 = vmatpush2.msra.mxu0 0.0
        %2774 = vmatprep.subr.mxu0 0.0
        %2775 = vmatpush2.msra.mxu0 0.0
        %2776 = vmatprep.mubr.f32.mxu0 0.0
        %2777 = vmatmul.mubr.f32.gmra.mxu0 %v2704
        %v2778 = vpop.f32.mrf.mxu0
        %v2779 = vadd.f32 %v791, %v2778
        %v2780 = vpop.f32.mrf.mxu0
        %2781 = vmatprep.mubr.f32.mxu0 0.0
        %2782 = vmatmul.mubr.f32.gmra.mxu0 %v2707
        %v2783 = vpop.f32.mrf.mxu0
        %v2784 = vadd.f32 %v792, %v2783
        %v2785 = vpop.f32.mrf.mxu0
        %2786 = vmatprep.mubr.f32.mxu0 0.0
        %2787 = vmatmul.mubr.f32.gmra.mxu0 %v2710
        %v2788 = vpop.f32.mrf.mxu0
        %v2789 = vadd.f32 %v793, %v2788
        %v2790 = vpop.f32.mrf.mxu0
        %2791 = vdwg.mxu0
        %v2792 = vmul.f32 %v2779, %v2779
        %v2793 = vmul.f32 %v2784, %v2784
        %v2794 = vmul.f32 %v2789, %v2789
        %v2795 = vsel %vm786, %v2792, 0.0
        %2796 = vadd.xlane.f32.xlu0 %v2795
        %v2797 = vpop.xlane.xlu0 %2796
        %v2798 = vsel %vm786, %v2793, 0.0
        %2799 = vadd.xlane.f32.xlu0 %v2798
        %v2800 = vpop.xlane.xlu0 %2799
        %v2801 = vsel %vm810, %v2794, 0.0
        %2802 = vadd.xlane.f32.xlu0 %v2801
        %v2803 = vpop.xlane.xlu0 %2802
        %v2804 = vmax.f32 %v2797, 1e-24
        %v2805 = vmax.f32 %v2800, 1e-24
        %v2806 = vmax.f32 %v2803, 1e-24
        %v2807 = vrsqrt.pop %v2804
        %v2808 = vrsqrt.pop %v2805
        %v2809 = vrsqrt.pop %v2806
        %v2810 = vmul.f32 %v2779, %v2807
        %v2811 = vmul.f32 %v2784, %v2808
        %v2812 = vmul.f32 %v2789, %v2809
        %v2813 = vlaneseq
        %v2814 = vshrl.u32 %v2813, 7
        %v2815 = vsub.s32 2, %v2814
        %v2816 = vrot.slane %v547, %v2815
        %v2817 = vmul.f32 %v2810, %v2816
        %v2818 = vmul.f32 %v2811, %v2816
        %v2819 = vmul.f32 %v2812, %v2816
        %v2820 = vlaneseq
        %v2821 = vshrl.u32 %v2820, 7
        %v2822 = vsub.s32 3, %v2821
        %v2823 = vrot.slane %v547, %v2822
        %v2824 = vadd.f32 %v2817, %v2823
        %v2825 = vadd.f32 %v2818, %v2823
        %v2826 = vadd.f32 %v2819, %v2823
        %v2827 = vld [vmem:[#allocation10] sm:$0xff]
        %v2828 = vld [vmem:[#allocation10 + $0x8] sm:$0xff]
        %v2829 = vld [vmem:[#allocation10 + $0x10] sm:$0xff]
        %v2830 = vld [vmem:[#allocation10 + $0x18] sm:$0xff]
        %v2831 = vld [vmem:[#allocation10 + $0x20] sm:$0xff]
        %v2832 = vld [vmem:[#allocation10 + $0x28] sm:$0xff]
        %v2833 = vld [vmem:[#allocation10 + $0x30] sm:$0xff]
        %v2834 = vld [vmem:[#allocation10 + $0x38] sm:$0xff]
        %v2835 = vld [vmem:[#allocation10 + $0x40] sm:$0xff]
        %v2836 = vld [vmem:[#allocation10 + $0x48] sm:$0xff]
        %v2837 = vld [vmem:[#allocation10 + $0x50] sm:$0xff]
        %v2838 = vld [vmem:[#allocation10 + $0x58] sm:$0xff]
        %v2839 = vld [vmem:[#allocation10 + $0x60] sm:$0xff]
        %v2840 = vld [vmem:[#allocation10 + $0x68] sm:$0xff]
        %v2841 = vld [vmem:[#allocation10 + $0x70] sm:$0xff]
        %v2842 = vld [vmem:[#allocation10 + $0x78] sm:$0xff]
        %v2843 = vld [vmem:[#allocation10 + $0x80] sm:$0xff]
        %v2844 = vld [vmem:[#allocation10 + $0x88] sm:$0xff]
        %v2845 = vld [vmem:[#allocation10 + $0x90] sm:$0xff]
        %v2846 = vld [vmem:[#allocation10 + $0x98] sm:$0xff]
        %v2847 = vld [vmem:[#allocation10 + $0xa0] sm:$0xff]
        %v2848 = vld [vmem:[#allocation10 + $0xa8] sm:$0xff]
        %v2849 = vld [vmem:[#allocation10 + $0xb0] sm:$0xff]
        %v2850 = vld [vmem:[#allocation10 + $0xb8] sm:$0xff]
        %v2851 = vld [vmem:[#allocation10 + $0xc0] sm:$0xff]
        %v2852 = vld [vmem:[#allocation10 + $0xc8] sm:$0xff]
        %v2853 = vld [vmem:[#allocation10 + $0xd0] sm:$0xff]
        %v2854 = vld [vmem:[#allocation10 + $0xd8] sm:$0xff]
        %v2855 = vld [vmem:[#allocation10 + $0xe0] sm:$0xff]
        %v2856 = vld [vmem:[#allocation10 + $0xe8] sm:$0xff]
        %v2857 = vld [vmem:[#allocation10 + $0xf0] sm:$0xff]
        %v2858 = vld [vmem:[#allocation10 + $0xf8] sm:$0xff]
        %v2859 = vld [vmem:[%s10] sm:$0xf]
        %v2861 = vlaneseq
        %v2862 = vshrl.u32 %v2861, 7
        %v2863 = vsub.s32 0, %v2862
        %v2864 = vrot.slane %v2859, %v2863
        %v2865 = vlaneseq
        %v2866 = vshrl.u32 %v2865, 7
        %v2867 = vsub.s32 1, %v2866
        %v2868 = vrot.slane %v2859, %v2867
        %v2869 = vlaneseq
        %v2870 = vshrl.u32 %v2869, 7
        %v2871 = vsub.s32 2, %v2870
        %v2872 = vrot.slane %v2859, %v2871
        %v2873 = vlaneseq
        %v2874 = vshrl.u32 %v2873, 7
        %v2875 = vsub.s32 3, %v2874
        %v2876 = vrot.slane %v2859, %v2875
        %v2882 = vsel %vm786, %v2824, 0
        %v2885 = vsel %vm786, %v2825, 0
        %v2888 = vsel %vm786, %v2826, 0
        %2890 = vmatprep.subr.mxu0 0.0
        %2891 = vmatpush1.msra.mxu0 0.0
        %2892 = vmatprep.subr.mxu0 0.0
        %2893 = vmatpush1.msra.mxu0 0.0
        %2894 = vmatprep.subr.mxu0 0.0
        %2895 = vmatpush1.msra.mxu0 0.0
        %2896 = vmatprep.subr.mxu0 0.0
        %2897 = vmatpush1.msra.mxu0 0.0
        %2898 = vmatprep.subr.mxu0 0.0
        %2899 = vmatpush1.msra.mxu0 0.0
        %2900 = vmatprep.subr.mxu0 0.0
        %2901 = vmatpush1.msra.mxu0 0.0
        %2902 = vmatprep.subr.mxu0 0.0
        %2903 = vmatpush1.msra.mxu0 0.0
        %2904 = vmatprep.subr.mxu0 0.0
        %2905 = vmatpush1.msra.mxu0 0.0
        %2906 = vmatprep.subr.mxu0 %v2856
        %2907 = vmatpush1.msra.mxu0 %v2855
        %2908 = vmatprep.subr.mxu0 %v2852
        %2909 = vmatpush1.msra.mxu0 %v2851
        %2910 = vmatprep.subr.mxu0 %v2848
        %2911 = vmatpush1.msra.mxu0 %v2847
        %2912 = vmatprep.subr.mxu0 %v2844
        %2913 = vmatpush1.msra.mxu0 %v2843
        %2914 = vmatprep.subr.mxu0 %v2840
        %2915 = vmatpush1.msra.mxu0 %v2839
        %2916 = vmatprep.subr.mxu0 %v2836
        %2917 = vmatpush1.msra.mxu0 %v2835
        %2918 = vmatprep.subr.mxu0 %v2832
        %2919 = vmatpush1.msra.mxu0 %v2831
        %2920 = vmatprep.subr.mxu0 %v2828
        %2921 = vmatpush1.msra.mxu0 %v2827
        %2922 = vmatprep.subr.mxu0 0.0
        %2923 = vmatpush2.msra.mxu0 0.0
        %2924 = vmatprep.subr.mxu0 0.0
        %2925 = vmatpush2.msra.mxu0 0.0
        %2926 = vmatprep.subr.mxu0 0.0
        %2927 = vmatpush2.msra.mxu0 0.0
        %2928 = vmatprep.subr.mxu0 0.0
        %2929 = vmatpush2.msra.mxu0 0.0
        %2930 = vmatprep.subr.mxu0 0.0
        %2931 = vmatpush2.msra.mxu0 0.0
        %2932 = vmatprep.subr.mxu0 0.0
        %2933 = vmatpush2.msra.mxu0 0.0
        %2934 = vmatprep.subr.mxu0 0.0
        %2935 = vmatpush2.msra.mxu0 0.0
        %2936 = vmatprep.subr.mxu0 0.0
        %2937 = vmatpush2.msra.mxu0 0.0
        %2938 = vmatprep.subr.mxu0 0.0
        %2939 = vmatpush2.msra.mxu0 0.0
        %2940 = vmatprep.subr.mxu0 0.0
        %2941 = vmatpush2.msra.mxu0 0.0
        %2942 = vmatprep.subr.mxu0 0.0
        %2943 = vmatpush2.msra.mxu0 0.0
        %2944 = vmatprep.subr.mxu0 0.0
        %2945 = vmatpush2.msra.mxu0 0.0
        %2946 = vmatprep.subr.mxu0 0.0
        %2947 = vmatpush2.msra.mxu0 0.0
        %2948 = vmatprep.subr.mxu0 0.0
        %2949 = vmatpush2.msra.mxu0 0.0
        %2950 = vmatprep.subr.mxu0 0.0
        %2951 = vmatpush2.msra.mxu0 0.0
        %2952 = vmatprep.subr.mxu0 0.0
        %2953 = vmatpush2.msra.mxu0 0.0
        %2954 = vmatprep.mubr.f32.mxu0 0.0
        %2955 = vmatmul.mubr.f32.gmra.mxu0 %v2882
        %v2956 = vpop.f32.mrf.mxu0
        %v2957 = vadd.f32 %v2864, %v2956
        %v2958 = vpop.f32.mrf.mxu0
        %v2959 = vadd.f32 %v2868, %v2958
        %2960 = vmatprep.mubr.f32.mxu0 0.0
        %2961 = vmatmul.mubr.f32.gmra.mxu0 %v2885
        %v2962 = vpop.f32.mrf.mxu0
        %v2963 = vadd.f32 %v2864, %v2962
        %v2964 = vpop.f32.mrf.mxu0
        %v2965 = vadd.f32 %v2868, %v2964
        %2966 = vmatprep.mubr.f32.mxu0 0.0
        %2967 = vmatmul.mubr.f32.gmra.mxu0 %v2888
        %v2968 = vpop.f32.mrf.mxu0
        %v2969 = vadd.f32 %v2864, %v2968
        %v2970 = vpop.f32.mrf.mxu0
        %v2971 = vadd.f32 %v2868, %v2970
        %2972 = vdwg.mxu0
        %2973 = vmatprep.subr.mxu0 0.0
        %2974 = vmatpush1.msra.mxu0 0.0
        %2975 = vmatprep.subr.mxu0 0.0
        %2976 = vmatpush1.msra.mxu0 0.0
        %2977 = vmatprep.subr.mxu0 0.0
        %2978 = vmatpush1.msra.mxu0 0.0
        %2979 = vmatprep.subr.mxu0 0.0
        %2980 = vmatpush1.msra.mxu0 0.0
        %2981 = vmatprep.subr.mxu0 0.0
        %2982 = vmatpush1.msra.mxu0 0.0
        %2983 = vmatprep.subr.mxu0 0.0
        %2984 = vmatpush1.msra.mxu0 0.0
        %2985 = vmatprep.subr.mxu0 0.0
        %2986 = vmatpush1.msra.mxu0 0.0
        %2987 = vmatprep.subr.mxu0 0.0
        %2988 = vmatpush1.msra.mxu0 0.0
        %2989 = vmatprep.subr.mxu0 %v2858
        %2990 = vmatpush1.msra.mxu0 %v2857
        %2991 = vmatprep.subr.mxu0 %v2854
        %2992 = vmatpush1.msra.mxu0 %v2853
        %2993 = vmatprep.subr.mxu0 %v2850
        %2994 = vmatpush1.msra.mxu0 %v2849
        %2995 = vmatprep.subr.mxu0 %v2846
        %2996 = vmatpush1.msra.mxu0 %v2845
        %2997 = vmatprep.subr.mxu0 %v2842
        %2998 = vmatpush1.msra.mxu0 %v2841
        %2999 = vmatprep.subr.mxu0 %v2838
        %3000 = vmatpush1.msra.mxu0 %v2837
        %3001 = vmatprep.subr.mxu0 %v2834
        %3002 = vmatpush1.msra.mxu0 %v2833
        %3003 = vmatprep.subr.mxu0 %v2830
        %3004 = vmatpush1.msra.mxu0 %v2829
        %3005 = vmatprep.subr.mxu0 0.0
        %3006 = vmatpush2.msra.mxu0 0.0
        %3007 = vmatprep.subr.mxu0 0.0
        %3008 = vmatpush2.msra.mxu0 0.0
        %3009 = vmatprep.subr.mxu0 0.0
        %3010 = vmatpush2.msra.mxu0 0.0
        %3011 = vmatprep.subr.mxu0 0.0
        %3012 = vmatpush2.msra.mxu0 0.0
        %3013 = vmatprep.subr.mxu0 0.0
        %3014 = vmatpush2.msra.mxu0 0.0
        %3015 = vmatprep.subr.mxu0 0.0
        %3016 = vmatpush2.msra.mxu0 0.0
        %3017 = vmatprep.subr.mxu0 0.0
        %3018 = vmatpush2.msra.mxu0 0.0
        %3019 = vmatprep.subr.mxu0 0.0
        %3020 = vmatpush2.msra.mxu0 0.0
        %3021 = vmatprep.subr.mxu0 0.0
        %3022 = vmatpush2.msra.mxu0 0.0
        %3023 = vmatprep.subr.mxu0 0.0
        %3024 = vmatpush2.msra.mxu0 0.0
        %3025 = vmatprep.subr.mxu0 0.0
        %3026 = vmatpush2.msra.mxu0 0.0
        %3027 = vmatprep.subr.mxu0 0.0
        %3028 = vmatpush2.msra.mxu0 0.0
        %3029 = vmatprep.subr.mxu0 0.0
        %3030 = vmatpush2.msra.mxu0 0.0
        %3031 = vmatprep.subr.mxu0 0.0
        %3032 = vmatpush2.msra.mxu0 0.0
        %3033 = vmatprep.subr.mxu0 0.0
        %3034 = vmatpush2.msra.mxu0 0.0
        %3035 = vmatprep.subr.mxu0 0.0
        %3036 = vmatpush2.msra.mxu0 0.0
        %3037 = vmatprep.mubr.f32.mxu0 0.0
        %3038 = vmatmul.mubr.f32.gmra.mxu0 %v2882
        %v3039 = vpop.f32.mrf.mxu0
        %v3040 = vadd.f32 %v2872, %v3039
        %v3041 = vpop.f32.mrf.mxu0
        %v3042 = vadd.f32 %v2876, %v3041
        %3043 = vmatprep.mubr.f32.mxu0 0.0
        %3044 = vmatmul.mubr.f32.gmra.mxu0 %v2885
        %v3045 = vpop.f32.mrf.mxu0
        %v3046 = vadd.f32 %v2872, %v3045
        %v3047 = vpop.f32.mrf.mxu0
        %v3048 = vadd.f32 %v2876, %v3047
        %3049 = vmatprep.mubr.f32.mxu0 0.0
        %3050 = vmatmul.mubr.f32.gmra.mxu0 %v2888
        %v3051 = vpop.f32.mrf.mxu0
        %v3052 = vadd.f32 %v2872, %v3051
        %v3053 = vpop.f32.mrf.mxu0
        %v3054 = vadd.f32 %v2876, %v3053
        %3055 = vdwg.mxu0
        %v3056 = vmul.f32 %v3040, 0.5
        %v3057 = vmul.f32 %v3042, 0.5
        %v3058 = vmul.f32 %v3046, 0.5
        %v3059 = vmul.f32 %v3048, 0.5
        %v3060 = vmul.f32 %v3052, 0.5
        %v3061 = vmul.f32 %v3054, 0.5
        %v3062 = vmul.f32 %v3040, 0.70710677
        %v3063 = vmul.f32 %v3042, 0.70710677
        %v3064 = vmul.f32 %v3046, 0.70710677
        %v3065 = vmul.f32 %v3048, 0.70710677
        %v3066 = vmul.f32 %v3052, 0.70710677
        %v3067 = vmul.f32 %v3054, 0.70710677
        %v3068 = vand.u32 2147483647, %v3062
        %v3069 = vand.u32 2147483647, %v3063
        %v3070 = vand.u32 2147483647, %v3064
        %v3071 = vand.u32 2147483647, %v3065
        %v3072 = vand.u32 2147483647, %v3066
        %v3073 = vand.u32 2147483647, %v3067
        %v3074 = vmul.f32 %v3068, 0.3275911
        %v3075 = vmul.f32 %v3069, 0.3275911
        %v3076 = vmul.f32 %v3070, 0.3275911
        %v3077 = vmul.f32 %v3071, 0.3275911
        %v3078 = vmul.f32 %v3072, 0.3275911
        %v3079 = vmul.f32 %v3073, 0.3275911
        %v3080 = vadd.f32 %v3074, 1.0
        %v3081 = vadd.f32 %v3075, 1.0
        %v3082 = vadd.f32 %v3076, 1.0
        %v3083 = vadd.f32 %v3077, 1.0
        %v3084 = vadd.f32 %v3078, 1.0
        %v3085 = vadd.f32 %v3079, 1.0
        %v3086 = vrcp.pop %v3080
        %v3087 = vmul.f32 1.0, %v3086
        %v3088 = vrcp.pop %v3081
        %v3089 = vmul.f32 1.0, %v3088
        %v3090 = vrcp.pop %v3082
        %v3091 = vmul.f32 1.0, %v3090
        %v3092 = vrcp.pop %v3083
        %v3093 = vmul.f32 1.0, %v3092
        %v3094 = vrcp.pop %v3084
        %v3095 = vmul.f32 1.0, %v3094
        %v3096 = vrcp.pop %v3085
        %v3097 = vmul.f32 1.0, %v3096
        %v3098 = vmul.f32 %v3087, 1.0614054
        %v3099 = vmul.f32 %v3089, 1.0614054
        %v3100 = vmul.f32 %v3091, 1.0614054
        %v3101 = vmul.f32 %v3093, 1.0614054
        %v3102 = vmul.f32 %v3095, 1.0614054
        %v3103 = vmul.f32 %v3097, 1.0614054
        %v3104 = vsub.f32 %v3098, 1.4531521
        %v3105 = vsub.f32 %v3099, 1.4531521
        %v3106 = vsub.f32 %v3100, 1.4531521
        %v3107 = vsub.f32 %v3101, 1.4531521
        %v3108 = vsub.f32 %v3102, 1.4531521
        %v3109 = vsub.f32 %v3103, 1.4531521
        %v3110 = vmul.f32 %v3104, %v3087
        %v3111 = vmul.f32 %v3105, %v3089
        %v3112 = vmul.f32 %v3106, %v3091
        %v3113 = vmul.f32 %v3107, %v3093
        %v3114 = vmul.f32 %v3108, %v3095
        %v3115 = vmul.f32 %v3109, %v3097
        %v3116 = vadd.f32 %v3110, 1.4214138
        %v3117 = vadd.f32 %v3111, 1.4214138
        %v3118 = vadd.f32 %v3112, 1.4214138
        %v3119 = vadd.f32 %v3113, 1.4214138
        %v3120 = vadd.f32 %v3114, 1.4214138
        %v3121 = vadd.f32 %v3115, 1.4214138
        %v3122 = vmul.f32 %v3116, %v3087
        %v3123 = vmul.f32 %v3117, %v3089
        %v3124 = vmul.f32 %v3118, %v3091
        %v3125 = vmul.f32 %v3119, %v3093
        %v3126 = vmul.f32 %v3120, %v3095
        %v3127 = vmul.f32 %v3121, %v3097
        %v3128 = vsub.f32 %v3122, 0.28449672
        %v3129 = vsub.f32 %v3123, 0.28449672
        %v3130 = vsub.f32 %v3124, 0.28449672
        %v3131 = vsub.f32 %v3125, 0.28449672
        %v3132 = vsub.f32 %v3126, 0.28449672
        %v3133 = vsub.f32 %v3127, 0.28449672
        %v3134 = vmul.f32 %v3128, %v3087
        %v3135 = vmul.f32 %v3129, %v3089
        %v3136 = vmul.f32 %v3130, %v3091
        %v3137 = vmul.f32 %v3131, %v3093
        %v3138 = vmul.f32 %v3132, %v3095
        %v3139 = vmul.f32 %v3133, %v3097
        %v3140 = vadd.f32 %v3134, 0.2548296
        %v3141 = vadd.f32 %v3135, 0.2548296
        %v3142 = vadd.f32 %v3136, 0.2548296
        %v3143 = vadd.f32 %v3137, 0.2548296
        %v3144 = vadd.f32 %v3138, 0.2548296
        %v3145 = vadd.f32 %v3139, 0.2548296
        %v3146 = vmul.f32 %v3140, %v3087
        %v3147 = vmul.f32 %v3141, %v3089
        %v3148 = vmul.f32 %v3142, %v3091
        %v3149 = vmul.f32 %v3143, %v3093
        %v3150 = vmul.f32 %v3144, %v3095
        %v3151 = vmul.f32 %v3145, %v3097
        %v3152 = vsub.f32 0.0, %v3068
        %v3153 = vsub.f32 0.0, %v3069
        %v3154 = vsub.f32 0.0, %v3070
        %v3155 = vsub.f32 0.0, %v3071
        %v3156 = vsub.f32 0.0, %v3072
        %v3157 = vsub.f32 0.0, %v3073
        %v3158 = vmul.f32 %v3152, %v3068
        %v3159 = vmul.f32 %v3153, %v3069
        %v3160 = vmul.f32 %v3154, %v3070
        %v3161 = vmul.f32 %v3155, %v3071
        %v3162 = vmul.f32 %v3156, %v3072
        %v3163 = vmul.f32 %v3157, %v3073
        %v3164 = vmul.f32 %v3158, 1.442695
        %v3165 = vpow.pop %v3164
        %v3166 = vmul.f32 %v3159, 1.442695
        %v3167 = vpow.pop %v3166
        %v3168 = vmul.f32 %v3160, 1.442695
        %v3169 = vpow.pop %v3168
        %v3170 = vmul.f32 %v3161, 1.442695
        %v3171 = vpow.pop %v3170
        %v3172 = vmul.f32 %v3162, 1.442695
        %v3173 = vpow.pop %v3172
        %v3174 = vmul.f32 %v3163, 1.442695
        %v3175 = vpow.pop %v3174
        %v3176 = vmul.f32 %v3146, %v3165
        %v3177 = vmul.f32 %v3147, %v3167
        %v3178 = vmul.f32 %v3148, %v3169
        %v3179 = vmul.f32 %v3149, %v3171
        %v3180 = vmul.f32 %v3150, %v3173
        %v3181 = vmul.f32 %v3151, %v3175
        %v3182 = vsub.f32 1.0, %v3176
        %v3183 = vsub.f32 1.0, %v3177
        %v3184 = vsub.f32 1.0, %v3178
        %v3185 = vsub.f32 1.0, %v3179
        %v3186 = vsub.f32 1.0, %v3180
        %v3187 = vsub.f32 1.0, %v3181
        %vm3188 = vcmp.ge.f32.partialorder %v3062, 0.0
        %vm3189 = vcmp.ge.f32.partialorder %v3063, 0.0
        %vm3190 = vcmp.ge.f32.partialorder %v3064, 0.0
        %vm3191 = vcmp.ge.f32.partialorder %v3065, 0.0
        %vm3192 = vcmp.ge.f32.partialorder %v3066, 0.0
        %vm3193 = vcmp.ge.f32.partialorder %v3067, 0.0
        %v3194 = vsub.f32 0.0, %v3182
        %v3195 = vsub.f32 0.0, %v3183
        %v3196 = vsub.f32 0.0, %v3184
        %v3197 = vsub.f32 0.0, %v3185
        %v3198 = vsub.f32 0.0, %v3186
        %v3199 = vsub.f32 0.0, %v3187
        %v3200 = vsel %vm3188, %v3182, %v3194
        %v3201 = vsel %vm3189, %v3183, %v3195
        %v3202 = vsel %vm3190, %v3184, %v3196
        %v3203 = vsel %vm3191, %v3185, %v3197
        %v3204 = vsel %vm3192, %v3186, %v3198
        %v3205 = vsel %vm3193, %v3187, %v3199
        %v3206 = vadd.f32 %v3200, 1.0
        %v3207 = vadd.f32 %v3201, 1.0
        %v3208 = vadd.f32 %v3202, 1.0
        %v3209 = vadd.f32 %v3203, 1.0
        %v3210 = vadd.f32 %v3204, 1.0
        %v3211 = vadd.f32 %v3205, 1.0
        %v3212 = vmul.f32 %v3056, %v3206
        %v3213 = vmul.f32 %v3057, %v3207
        %v3214 = vmul.f32 %v3058, %v3208
        %v3215 = vmul.f32 %v3059, %v3209
        %v3216 = vmul.f32 %v3060, %v3210
        %v3217 = vmul.f32 %v3061, %v3211
        %v3218 = vmul.f32 %v3212, %v2957
        %v3219 = vmul.f32 %v3213, %v2959
        %v3220 = vmul.f32 %v3214, %v2963
        %v3221 = vmul.f32 %v3215, %v2965
        %v3222 = vmul.f32 %v3216, %v2969
        %v3223 = vmul.f32 %v3217, %v2971
        %v3224 = vld [vmem:[#allocation11] sm:$0xff]
        %v3225 = vld [vmem:[#allocation11 + $0x8] sm:$0xff]
        %v3226 = vld [vmem:[#allocation11 + $0x10] sm:$0xff]
        %v3227 = vld [vmem:[#allocation11 + $0x18] sm:$0xff]
        %v3228 = vld [vmem:[#allocation11 + $0x20] sm:$0xff]
        %v3229 = vld [vmem:[#allocation11 + $0x28] sm:$0xff]
        %v3230 = vld [vmem:[#allocation11 + $0x30] sm:$0xff]
        %v3231 = vld [vmem:[#allocation11 + $0x38] sm:$0xff]
        %v3232 = vld [vmem:[#allocation11 + $0x40] sm:$0xff]
        %v3233 = vld [vmem:[#allocation11 + $0x48] sm:$0xff]
        %v3234 = vld [vmem:[#allocation11 + $0x50] sm:$0xff]
        %v3235 = vld [vmem:[#allocation11 + $0x58] sm:$0xff]
        %v3236 = vld [vmem:[#allocation11 + $0x60] sm:$0xff]
        %v3237 = vld [vmem:[#allocation11 + $0x68] sm:$0xff]
        %v3238 = vld [vmem:[#allocation11 + $0x70] sm:$0xff]
        %v3239 = vld [vmem:[#allocation11 + $0x78] sm:$0xff]
        %v3240 = vld [vmem:[#allocation11 + $0x80] sm:$0xff]
        %v3241 = vld [vmem:[#allocation11 + $0x88] sm:$0xff]
        %v3242 = vld [vmem:[#allocation11 + $0x90] sm:$0xff]
        %v3243 = vld [vmem:[#allocation11 + $0x98] sm:$0xff]
        %v3244 = vld [vmem:[#allocation11 + $0xa0] sm:$0xff]
        %v3245 = vld [vmem:[#allocation11 + $0xa8] sm:$0xff]
        %v3246 = vld [vmem:[#allocation11 + $0xb0] sm:$0xff]
        %v3247 = vld [vmem:[#allocation11 + $0xb8] sm:$0xff]
        %v3248 = vld [vmem:[#allocation11 + $0xc0] sm:$0xff]
        %v3249 = vld [vmem:[#allocation11 + $0xc8] sm:$0xff]
        %v3250 = vld [vmem:[#allocation11 + $0xd0] sm:$0xff]
        %v3251 = vld [vmem:[#allocation11 + $0xd8] sm:$0xff]
        %v3252 = vld [vmem:[#allocation11 + $0xe0] sm:$0xff]
        %v3253 = vld [vmem:[#allocation11 + $0xe8] sm:$0xff]
        %v3254 = vld [vmem:[#allocation11 + $0xf0] sm:$0xff]
        %v3255 = vld [vmem:[#allocation11 + $0xf8] sm:$0xff]
        %v3256 = vlaneseq
        %v3257 = vshrl.u32 %v3256, 7
        %v3258 = vsub.s32 2, %v3257
        %v3259 = vrot.slane %v546, %v3258
        %3260 = vmatprep.subr.mxu0 0.0
        %3261 = vmatpush1.msra.mxu0 %v3239
        %3262 = vmatprep.subr.mxu0 0.0
        %3263 = vmatpush1.msra.mxu0 %v3238
        %3264 = vmatprep.subr.mxu0 0.0
        %3265 = vmatpush1.msra.mxu0 %v3237
        %3266 = vmatprep.subr.mxu0 0.0
        %3267 = vmatpush1.msra.mxu0 %v3236
        %3268 = vmatprep.subr.mxu0 0.0
        %3269 = vmatpush1.msra.mxu0 %v3235
        %3270 = vmatprep.subr.mxu0 0.0
        %3271 = vmatpush1.msra.mxu0 %v3234
        %3272 = vmatprep.subr.mxu0 0.0
        %3273 = vmatpush1.msra.mxu0 %v3233
        %3274 = vmatprep.subr.mxu0 0.0
        %3275 = vmatpush1.msra.mxu0 %v3232
        %3276 = vmatprep.subr.mxu0 0.0
        %3277 = vmatpush1.msra.mxu0 %v3231
        %3278 = vmatprep.subr.mxu0 0.0
        %3279 = vmatpush1.msra.mxu0 %v3230
        %3280 = vmatprep.subr.mxu0 0.0
        %3281 = vmatpush1.msra.mxu0 %v3229
        %3282 = vmatprep.subr.mxu0 0.0
        %3283 = vmatpush1.msra.mxu0 %v3228
        %3284 = vmatprep.subr.mxu0 0.0
        %3285 = vmatpush1.msra.mxu0 %v3227
        %3286 = vmatprep.subr.mxu0 0.0
        %3287 = vmatpush1.msra.mxu0 %v3226
        %3288 = vmatprep.subr.mxu0 0.0
        %3289 = vmatpush1.msra.mxu0 %v3225
        %3290 = vmatprep.subr.mxu0 0.0
        %3291 = vmatpush1.msra.mxu0 %v3224
        %3292 = vmatprep.subr.mxu0 0.0
        %3293 = vmatpush2.msra.mxu0 %v3255
        %3294 = vmatprep.subr.mxu0 0.0
        %3295 = vmatpush2.msra.mxu0 %v3254
        %3296 = vmatprep.subr.mxu0 0.0
        %3297 = vmatpush2.msra.mxu0 %v3253
        %3298 = vmatprep.subr.mxu0 0.0
        %3299 = vmatpush2.msra.mxu0 %v3252
        %3300 = vmatprep.subr.mxu0 0.0
        %3301 = vmatpush2.msra.mxu0 %v3251
        %3302 = vmatprep.subr.mxu0 0.0
        %3303 = vmatpush2.msra.mxu0 %v3250
        %3304 = vmatprep.subr.mxu0 0.0
        %3305 = vmatpush2.msra.mxu0 %v3249
        %3306 = vmatprep.subr.mxu0 0.0
        %3307 = vmatpush2.msra.mxu0 %v3248
        %3308 = vmatprep.subr.mxu0 0.0
        %3309 = vmatpush2.msra.mxu0 %v3247
        %3310 = vmatprep.subr.mxu0 0.0
        %3311 = vmatpush2.msra.mxu0 %v3246
        %3312 = vmatprep.subr.mxu0 0.0
        %3313 = vmatpush2.msra.mxu0 %v3245
        %3314 = vmatprep.subr.mxu0 0.0
        %3315 = vmatpush2.msra.mxu0 %v3244
        %3316 = vmatprep.subr.mxu0 0.0
        %3317 = vmatpush2.msra.mxu0 %v3243
        %3318 = vmatprep.subr.mxu0 0.0
        %3319 = vmatpush2.msra.mxu0 %v3242
        %3320 = vmatprep.subr.mxu0 0.0
        %3321 = vmatpush2.msra.mxu0 %v3241
        %3322 = vmatprep.subr.mxu0 0.0
        %3323 = vmatpush2.msra.mxu0 %v3240
        %3324 = vmatprep.mubr.f32.mxu0 %v3219
        %3325 = vmatmul.mubr.f32.gmra.mxu0 %v3218
        %v3326 = vpop.f32.mrf.mxu0
        %v3327 = vadd.f32 %v3259, %v3326
        %v3328 = vpop.f32.mrf.mxu0
        %3329 = vmatprep.mubr.f32.mxu0 %v3221
        %3330 = vmatmul.mubr.f32.gmra.mxu0 %v3220
        %v3331 = vpop.f32.mrf.mxu0
        %v3332 = vadd.f32 %v3259, %v3331
        %v3333 = vpop.f32.mrf.mxu0
        %3334 = vmatprep.mubr.f32.mxu0 %v3223
        %3335 = vmatmul.mubr.f32.gmra.mxu0 %v3222
        %v3336 = vpop.f32.mrf.mxu0
        %v3337 = vadd.f32 %v3259, %v3336
        %v3338 = vpop.f32.mrf.mxu0
        %3339 = vdwg.mxu0
        %v3340 = vadd.f32 %v3327, %v2779
        %v3341 = vadd.f32 %v3332, %v2784
        %v3342 = vadd.f32 %v3337, %v2789
        %v3343 = vmul.f32 %v3340, %v3340
        %v3344 = vmul.f32 %v3341, %v3341
        %v3345 = vmul.f32 %v3342, %v3342
        %v3346 = vsel %vm786, %v3343, 0.0
        %3347 = vadd.xlane.f32.xlu0 %v3346
        %v3348 = vpop.xlane.xlu0 %3347
        %v3349 = vsel %vm786, %v3344, 0.0
        %3350 = vadd.xlane.f32.xlu0 %v3349
        %v3351 = vpop.xlane.xlu0 %3350
        %v3352 = vsel %vm810, %v3345, 0.0
        %3353 = vadd.xlane.f32.xlu0 %v3352
        %v3354 = vpop.xlane.xlu0 %3353
        %v3355 = vmax.f32 %v3348, 1e-24
        %v3356 = vmax.f32 %v3351, 1e-24
        %v3357 = vmax.f32 %v3354, 1e-24
        %v3358 = vrsqrt.pop %v3355
        %v3359 = vrsqrt.pop %v3356
        %v3360 = vrsqrt.pop %v3357
        %v3361 = vmul.f32 %v3340, %v3358
        %v3362 = vmul.f32 %v3341, %v3359
        %v3363 = vmul.f32 %v3342, %v3360
        %v3364 = vlaneseq
        %v3365 = vshrl.u32 %v3364, 7
        %v3366 = vsub.s32 4, %v3365
        %v3367 = vrot.slane %v547, %v3366
        %v3368 = vmul.f32 %v3361, %v3367
        %v3369 = vmul.f32 %v3362, %v3367
        %v3370 = vmul.f32 %v3363, %v3367
        %v3371 = vlaneseq
        %v3372 = vshrl.u32 %v3371, 7
        %v3373 = vsub.s32 5, %v3372
        %v3374 = vrot.slane %v547, %v3373
        %v3375 = vadd.f32 %v3368, %v3374
        %v3376 = vadd.f32 %v3369, %v3374
        %v3377 = vadd.f32 %v3370, %v3374
        %s3378 = scalar_lea.vmem %s7, 128
        %v3379 = vld [vmem:[%s3378] sm:$0xff]
        %v3380 = vld [vmem:[%s3378 + $0x8] sm:$0xff]
        %v3381 = vld [vmem:[%s3378 + $0x10] sm:$0xff]
        %v3382 = vld [vmem:[%s3378 + $0x18] sm:$0xff]
        %v3383 = vld [vmem:[%s3378 + $0x20] sm:$0xff]
        %v3384 = vld [vmem:[%s3378 + $0x28] sm:$0xff]
        %v3385 = vld [vmem:[%s3378 + $0x30] sm:$0xff]
        %v3386 = vld [vmem:[%s3378 + $0x38] sm:$0xff]
        %v3387 = vld [vmem:[%s3378 + $0x40] sm:$0xff]
        %v3388 = vld [vmem:[%s3378 + $0x48] sm:$0xff]
        %v3389 = vld [vmem:[%s3378 + $0x50] sm:$0xff]
        %v3390 = vld [vmem:[%s3378 + $0x58] sm:$0xff]
        %v3391 = vld [vmem:[%s3378 + $0x60] sm:$0xff]
        %v3392 = vld [vmem:[%s3378 + $0x68] sm:$0xff]
        %v3393 = vld [vmem:[%s3378 + $0x70] sm:$0xff]
        %v3394 = vld [vmem:[%s3378 + $0x78] sm:$0xff]
        %v3396 = vsel %vm786, %v3375, 0
        %v3399 = vsel %vm786, %v3376, 0
        %v3402 = vsel %vm786, %v3377, 0
        %3404 = vmatprep.subr.mxu0 0.0
        %3405 = vmatpush1.msra.mxu0 0.0
        %3406 = vmatprep.subr.mxu0 0.0
        %3407 = vmatpush1.msra.mxu0 0.0
        %3408 = vmatprep.subr.mxu0 0.0
        %3409 = vmatpush1.msra.mxu0 0.0
        %3410 = vmatprep.subr.mxu0 0.0
        %3411 = vmatpush1.msra.mxu0 0.0
        %3412 = vmatprep.subr.mxu0 0.0
        %3413 = vmatpush1.msra.mxu0 0.0
        %3414 = vmatprep.subr.mxu0 0.0
        %3415 = vmatpush1.msra.mxu0 0.0
        %3416 = vmatprep.subr.mxu0 0.0
        %3417 = vmatpush1.msra.mxu0 0.0
        %3418 = vmatprep.subr.mxu0 0.0
        %3419 = vmatpush1.msra.mxu0 0.0
        %3420 = vmatprep.subr.mxu0 %v3394
        %3421 = vmatpush1.msra.mxu0 %v3393
        %3422 = vmatprep.subr.mxu0 %v3392
        %3423 = vmatpush1.msra.mxu0 %v3391
        %3424 = vmatprep.subr.mxu0 %v3390
        %3425 = vmatpush1.msra.mxu0 %v3389
        %3426 = vmatprep.subr.mxu0 %v3388
        %3427 = vmatpush1.msra.mxu0 %v3387
        %3428 = vmatprep.subr.mxu0 %v3386
        %3429 = vmatpush1.msra.mxu0 %v3385
        %3430 = vmatprep.subr.mxu0 %v3384
        %3431 = vmatpush1.msra.mxu0 %v3383
        %3432 = vmatprep.subr.mxu0 %v3382
        %3433 = vmatpush1.msra.mxu0 %v3381
        %3434 = vmatprep.subr.mxu0 %v3380
        %3435 = vmatpush1.msra.mxu0 %v3379
        %3436 = vmatprep.subr.mxu0 0.0
        %3437 = vmatpush2.msra.mxu0 0.0
        %3438 = vmatprep.subr.mxu0 0.0
        %3439 = vmatpush2.msra.mxu0 0.0
        %3440 = vmatprep.subr.mxu0 0.0
        %3441 = vmatpush2.msra.mxu0 0.0
        %3442 = vmatprep.subr.mxu0 0.0
        %3443 = vmatpush2.msra.mxu0 0.0
        %3444 = vmatprep.subr.mxu0 0.0
        %3445 = vmatpush2.msra.mxu0 0.0
        %3446 = vmatprep.subr.mxu0 0.0
        %3447 = vmatpush2.msra.mxu0 0.0
        %3448 = vmatprep.subr.mxu0 0.0
        %3449 = vmatpush2.msra.mxu0 0.0
        %3450 = vmatprep.subr.mxu0 0.0
        %3451 = vmatpush2.msra.mxu0 0.0
        %3452 = vmatprep.subr.mxu0 0.0
        %3453 = vmatpush2.msra.mxu0 0.0
        %3454 = vmatprep.subr.mxu0 0.0
        %3455 = vmatpush2.msra.mxu0 0.0
        %3456 = vmatprep.subr.mxu0 0.0
        %3457 = vmatpush2.msra.mxu0 0.0
        %3458 = vmatprep.subr.mxu0 0.0
        %3459 = vmatpush2.msra.mxu0 0.0
        %3460 = vmatprep.subr.mxu0 0.0
        %3461 = vmatpush2.msra.mxu0 0.0
        %3462 = vmatprep.subr.mxu0 0.0
        %3463 = vmatpush2.msra.mxu0 0.0
        %3464 = vmatprep.subr.mxu0 0.0
        %3465 = vmatpush2.msra.mxu0 0.0
        %3466 = vmatprep.subr.mxu0 0.0
        %3467 = vmatpush2.msra.mxu0 0.0
        %3468 = vmatprep.mubr.f32.mxu0 0.0
        %3469 = vmatmul.mubr.f32.gmra.mxu0 %v3396
        %v3470 = vpop.f32.mrf.mxu0
        %v3471 = vadd.f32 0.0, %v3470
        %v3472 = vpop.f32.mrf.mxu0
        %v3473 = vadd.f32 0.0, %v3472
        %3474 = vmatprep.mubr.f32.mxu0 0.0
        %3475 = vmatmul.mubr.f32.gmra.mxu0 %v3399
        %v3476 = vpop.f32.mrf.mxu0
        %v3477 = vadd.f32 0.0, %v3476
        %v3478 = vpop.f32.mrf.mxu0
        %v3479 = vadd.f32 0.0, %v3478
        %3480 = vmatprep.mubr.f32.mxu0 0.0
        %3481 = vmatmul.mubr.f32.gmra.mxu0 %v3402
        %v3482 = vpop.f32.mrf.mxu0
        %v3483 = vadd.f32 0.0, %v3482
        %v3484 = vpop.f32.mrf.mxu0
        %v3485 = vadd.f32 0.0, %v3484
        %3486 = vdwg.mxu0
        %v3487 = vmul.f32 %v3471, %v3471
        %v3488 = vmul.f32 %v3477, %v3477
        %v3489 = vmul.f32 %v3483, %v3483
        %v3490 = vsel %vm948, %v3487, 0.0
        %3491 = vadd.xlane.f32.xlu0 %v3490
        %v3492 = vpop.xlane.xlu0 %3491
        %v3493 = vsel %vm948, %v3488, 0.0
        %3494 = vadd.xlane.f32.xlu0 %v3493
        %v3495 = vpop.xlane.xlu0 %3494
        %v3496 = vsel %vm955, %v3489, 0.0
        %3497 = vadd.xlane.f32.xlu0 %v3496
        %v3498 = vpop.xlane.xlu0 %3497
        %v3499 = vmax.f32 %v3492, 1e-24
        %v3500 = vmax.f32 %v3495, 1e-24
        %v3501 = vmax.f32 %v3498, 1e-24
        %v3502 = vrsqrt.pop %v3499
        %v3503 = vrsqrt.pop %v3500
        %v3504 = vrsqrt.pop %v3501
        %v3505 = vmul.f32 %v3471, %v3502
        %v3506 = vmul.f32 %v3477, %v3503
        %v3507 = vmul.f32 %v3483, %v3504
        %s3508 = scalar_lea.vmem %s6, 8
        %v3509 = vld [vmem:[%s3508] sm:$0x1]
        %v3511 = vlaneseq
        %v3512 = vshrl.u32 %v3511, 7
        %v3513 = vsub.s32 0, %v3512
        %v3514 = vrot.slane %v3509, %v3513
        %v3516 = vmul.f32 %v3505, %v3514
        %v3517 = vmul.f32 %v3506, %v3514
        %v3518 = vmul.f32 %v3507, %v3514
        %3522 = vrot.lane.b32.xlu0 %v3516, 120
        %v3523 = vpop.permute.xlu0 %3522
        %3524 = vrot.lane.b32.xlu0 %v3517, 120
        %v3525 = vpop.permute.xlu0 %3524
        %3526 = vrot.lane.b32.xlu0 %v3518, 120
        %v3527 = vpop.permute.xlu0 %3526
        %3531 = vrot.lane.b32.xlu0 %v3516, 8
        %v3532 = vpop.permute.xlu0 %3531
        %3533 = vrot.lane.b32.xlu0 %v3517, 8
        %v3534 = vpop.permute.xlu0 %3533
        %3535 = vrot.lane.b32.xlu0 %v3518, 8
        %v3536 = vpop.permute.xlu0 %3535
        %v3540 = vsel %vm999, %v3523, %v3532
        %v3541 = vsel %vm999, %v3525, %v3534
        %v3542 = vsel %vm999, %v3527, %v3536
        %v3543 = vmul.f32 %v3516, %v794
        %v3544 = vmul.f32 %v3517, %v795
        %v3545 = vmul.f32 %v3518, %v796
        %v3546 = vmul.f32 %v3540, %v798
        %v3547 = vmul.f32 %v3541, %v799
        %v3548 = vmul.f32 %v3542, %v800
        %v3549 = vadd.f32 %v3543, %v3546
        %v3550 = vadd.f32 %v3544, %v3547
        %v3551 = vadd.f32 %v3545, %v3548
        %3555 = vrot.lane.b32.xlu0 %v3487, 64
        %v3556 = vpop.permute.xlu0 %3555
        %3557 = vrot.lane.b32.xlu0 %v3488, 64
        %v3558 = vpop.permute.xlu0 %3557
        %3559 = vrot.lane.b32.xlu0 %v3489, 64
        %v3560 = vpop.permute.xlu0 %3559
        %v3564 = vsel %vm948, %v3556, 0.0
        %3565 = vadd.xlane.f32.xlu0 %v3564
        %v3566 = vpop.xlane.xlu0 %3565
        %v3567 = vsel %vm948, %v3558, 0.0
        %3568 = vadd.xlane.f32.xlu0 %v3567
        %v3569 = vpop.xlane.xlu0 %3568
        %v3570 = vsel %vm955, %v3560, 0.0
        %3571 = vadd.xlane.f32.xlu0 %v3570
        %v3572 = vpop.xlane.xlu0 %3571
        %v3573 = vmax.f32 %v3566, 1e-24
        %v3574 = vmax.f32 %v3569, 1e-24
        %v3575 = vmax.f32 %v3572, 1e-24
        %v3576 = vrsqrt.pop %v3573
        %v3577 = vrsqrt.pop %v3574
        %v3578 = vrsqrt.pop %v3575
        %v3579 = vmul.f32 %v3471, %v3576
        %v3580 = vmul.f32 %v3477, %v3577
        %v3581 = vmul.f32 %v3483, %v3578
        %s3582 = scalar_lea.vmem %s6, 12
        %v3583 = vld [vmem:[%s3582] sm:$0x1]
        %v3585 = vlaneseq
        %v3586 = vshrl.u32 %v3585, 7
        %v3587 = vsub.s32 0, %v3586
        %v3588 = vrot.slane %v3583, %v3587
        %3589 = vrot.lane.b32.xlu0 %v3588, 64
        %v3590 = vpop.permute.xlu0 %3589
        %v3592 = vmul.f32 %v3579, %v3590
        %v3593 = vmul.f32 %v3580, %v3590
        %v3594 = vmul.f32 %v3581, %v3590
        %3598 = vrot.lane.b32.xlu0 %v3592, 56
        %v3599 = vpop.permute.xlu0 %3598
        %3600 = vrot.lane.b32.xlu0 %v3593, 56
        %v3601 = vpop.permute.xlu0 %3600
        %3602 = vrot.lane.b32.xlu0 %v3594, 56
        %v3603 = vpop.permute.xlu0 %3602
        %3607 = vrot.lane.b32.xlu0 %v3592, 72
        %v3608 = vpop.permute.xlu0 %3607
        %3609 = vrot.lane.b32.xlu0 %v3593, 72
        %v3610 = vpop.permute.xlu0 %3609
        %3611 = vrot.lane.b32.xlu0 %v3594, 72
        %v3612 = vpop.permute.xlu0 %3611
        %v3616 = vsel %vm999, %v3599, %v3608
        %v3617 = vsel %vm999, %v3601, %v3610
        %v3618 = vsel %vm999, %v3603, %v3612
        %v3619 = vmul.f32 %v3592, %v1083
        %v3620 = vmul.f32 %v3593, %v1085
        %v3621 = vmul.f32 %v3594, %v1087
        %v3622 = vmul.f32 %v3616, %v798
        %v3623 = vmul.f32 %v3617, %v799
        %v3624 = vmul.f32 %v3618, %v800
        %3628 = vrot.lane.b32.xlu0 %v3622, 64
        %v3629 = vpop.permute.xlu0 %3628
        %3630 = vrot.lane.b32.xlu0 %v3623, 64
        %v3631 = vpop.permute.xlu0 %3630
        %3632 = vrot.lane.b32.xlu0 %v3624, 64
        %v3633 = vpop.permute.xlu0 %3632
        %v3637 = vadd.f32 %v3619, %v3629
        %v3638 = vadd.f32 %v3620, %v3631
        %v3639 = vadd.f32 %v3621, %v3633
        %3643 = vrot.lane.b32.xlu0 %v3637, 64
        %v3644 = vpop.permute.xlu0 %3643
        %3645 = vrot.lane.b32.xlu0 %v3638, 64
        %v3646 = vpop.permute.xlu0 %3645
        %3647 = vrot.lane.b32.xlu0 %v3639, 64
        %v3648 = vpop.permute.xlu0 %3647
        %v3650 = vsel %vm948, %v3549, 0
        %v3653 = vsel %vm948, %v3550, 0
        %v3656 = vsel %vm948, %v3551, 0
        %v3658 = vsel %vm948, %v3644, 0
        %v3660 = vsel %vm948, %v3646, 0
        %v3662 = vsel %vm948, %v3648, 0
        %3664 = vmatprep.subr.mxu0 0.0
        %3665 = vmatpush1.xpose.msra.mxu0 0.0
        %3666 = vmatprep.subr.mxu0 0.0
        %3667 = vmatpush1.xpose.msra.mxu0 0.0
        %3668 = vmatprep.subr.mxu0 0.0
        %3669 = vmatpush1.xpose.msra.mxu0 0.0
        %3670 = vmatprep.subr.mxu0 0.0
        %3671 = vmatpush1.xpose.msra.mxu0 0.0
        %3672 = vmatprep.subr.mxu0 0.0
        %3673 = vmatpush1.xpose.msra.mxu0 0.0
        %3674 = vmatprep.subr.mxu0 0.0
        %3675 = vmatpush1.xpose.msra.mxu0 0.0
        %3676 = vmatprep.subr.mxu0 0.0
        %3677 = vmatpush1.xpose.msra.mxu0 0.0
        %3678 = vmatprep.subr.mxu0 0.0
        %3679 = vmatpush1.xpose.msra.mxu0 0.0
        %3680 = vmatprep.subr.mxu0 0.0
        %3681 = vmatpush1.xpose.msra.mxu0 0.0
        %3682 = vmatprep.subr.mxu0 0.0
        %3683 = vmatpush1.xpose.msra.mxu0 0.0
        %3684 = vmatprep.subr.mxu0 0.0
        %3685 = vmatpush1.xpose.msra.mxu0 0.0
        %3686 = vmatprep.subr.mxu0 0.0
        %3687 = vmatpush1.xpose.msra.mxu0 0.0
        %3688 = vmatprep.subr.mxu0 0.0
        %3689 = vmatpush1.xpose.msra.mxu0 0.0
        %3690 = vmatprep.subr.mxu0 0.0
        %3691 = vmatpush1.xpose.msra.mxu0 %v3662
        %3692 = vmatprep.subr.mxu0 0.0
        %3693 = vmatpush1.xpose.msra.mxu0 %v3660
        %3694 = vmatprep.subr.mxu0 0.0
        %3695 = vmatpush1.xpose.msra.mxu0 %v3658
        %3696 = vmatprep.subr.mxu0 0.0
        %3697 = vmatpush2.xpose.msra.mxu0 0.0
        %3698 = vmatprep.subr.mxu0 0.0
        %3699 = vmatpush2.xpose.msra.mxu0 0.0
        %3700 = vmatprep.subr.mxu0 0.0
        %3701 = vmatpush2.xpose.msra.mxu0 0.0
        %3702 = vmatprep.subr.mxu0 0.0
        %3703 = vmatpush2.xpose.msra.mxu0 0.0
        %3704 = vmatprep.subr.mxu0 0.0
        %3705 = vmatpush2.xpose.msra.mxu0 0.0
        %3706 = vmatprep.subr.mxu0 0.0
        %3707 = vmatpush2.xpose.msra.mxu0 0.0
        %3708 = vmatprep.subr.mxu0 0.0
        %3709 = vmatpush2.xpose.msra.mxu0 0.0
        %3710 = vmatprep.subr.mxu0 0.0
        %3711 = vmatpush2.xpose.msra.mxu0 0.0
        %3712 = vmatprep.subr.mxu0 0.0
        %3713 = vmatpush2.xpose.msra.mxu0 0.0
        %3714 = vmatprep.subr.mxu0 0.0
        %3715 = vmatpush2.xpose.msra.mxu0 0.0
        %3716 = vmatprep.subr.mxu0 0.0
        %3717 = vmatpush2.xpose.msra.mxu0 0.0
        %3718 = vmatprep.subr.mxu0 0.0
        %3719 = vmatpush2.xpose.msra.mxu0 0.0
        %3720 = vmatprep.subr.mxu0 0.0
        %3721 = vmatpush2.xpose.msra.mxu0 0.0
        %3722 = vmatprep.subr.mxu0 0.0
        %3723 = vmatpush2.xpose.msra.mxu0 0.0
        %3724 = vmatprep.subr.mxu0 0.0
        %3725 = vmatpush2.xpose.msra.mxu0 0.0
        %3726 = vmatprep.subr.mxu0 0.0
        %3727 = vmatpush2.xpose.msra.mxu0 0.0
        %3728 = vmatprep.mubr.f32.mxu0 0.0
        %3729 = vmatmul.mubr.f32.gmra.mxu0 %v3650
        %v3730 = vpop.f32.mrf.mxu0
        %v3731 = vadd.f32 0.0, %v3730
        %v3732 = vpop.f32.mrf.mxu0
        %3733 = vmatprep.mubr.f32.mxu0 0.0
        %3734 = vmatmul.mubr.f32.gmra.mxu0 %v3653
        %v3735 = vpop.f32.mrf.mxu0
        %v3736 = vadd.f32 0.0, %v3735
        %v3737 = vpop.f32.mrf.mxu0
        %3738 = vmatprep.mubr.f32.mxu0 0.0
        %3739 = vmatmul.mubr.f32.gmra.mxu0 %v3656
        %v3740 = vpop.f32.mrf.mxu0
        %v3741 = vadd.f32 0.0, %v3740
        %v3742 = vpop.f32.mrf.mxu0
        %3743 = vdwg.mxu0
        %v3744 = vmul.f32 %v3731, 10.0
        %v3745 = vmul.f32 %v3736, 10.0
        %v3746 = vmul.f32 %v3741, 10.0
        %v3747 = vsel %vm1219, %v3744, -inf
        %3748 = vmax.xlane.f32.xlu0 %v3747
        %v3749 = vpop.xlane.xlu0 %3748
        %v3750 = vsel %vm1219, %v3745, -inf
        %3751 = vmax.xlane.f32.xlu0 %v3750
        %v3752 = vpop.xlane.xlu0 %3751
        %v3753 = vsel %vm1226, %v3746, -inf
        %3754 = vmax.xlane.f32.xlu0 %v3753
        %v3755 = vpop.xlane.xlu0 %3754
        %v3756 = vsub.f32 %v3744, %v3749
        %v3757 = vsub.f32 %v3745, %v3752
        %v3758 = vsub.f32 %v3746, %v3755
        %v3759 = vmul.f32 %v3756, 1.442695
        %v3760 = vpow.pop %v3759
        %v3761 = vmul.f32 %v3757, 1.442695
        %v3762 = vpow.pop %v3761
        %v3763 = vmul.f32 %v3758, 1.442695
        %v3764 = vpow.pop %v3763
        %v3765 = vsel %vm1219, %v3760, 0.0
        %3766 = vadd.xlane.f32.xlu0 %v3765
        %v3767 = vpop.xlane.xlu0 %3766
        %v3768 = vsel %vm1219, %v3762, 0.0
        %3769 = vadd.xlane.f32.xlu0 %v3768
        %v3770 = vpop.xlane.xlu0 %3769
        %v3771 = vsel %vm1226, %v3764, 0.0
        %3772 = vadd.xlane.f32.xlu0 %v3771
        %v3773 = vpop.xlane.xlu0 %3772
        %v3774 = vrcp.pop %v3767
        %v3775 = vrcp.pop %v3770
        %v3776 = vrcp.pop %v3773
        %v3777 = vmul.f32 %v3760, %v3774
        %v3778 = vmul.f32 %v3762, %v3775
        %v3779 = vmul.f32 %v3764, %v3776
        %v3781 = vsel %vm1219, %v3777, 0
        %v3784 = vsel %vm1219, %v3778, 0
        %v3787 = vsel %vm1219, %v3779, 0
        %v3790 = vsel %vm1263, %v3485, 0
        %3792 = vmatprep.subr.mxu0 0.0
        %3793 = vmatpush1.msra.mxu0 0.0
        %3794 = vmatprep.subr.mxu0 0.0
        %3795 = vmatpush1.msra.mxu0 0.0
        %3796 = vmatprep.subr.mxu0 0.0
        %3797 = vmatpush1.msra.mxu0 0.0
        %3798 = vmatprep.subr.mxu0 0.0
        %3799 = vmatpush1.msra.mxu0 0.0
        %3800 = vmatprep.subr.mxu0 0.0
        %3801 = vmatpush1.msra.mxu0 0.0
        %3802 = vmatprep.subr.mxu0 0.0
        %3803 = vmatpush1.msra.mxu0 0.0
        %3804 = vmatprep.subr.mxu0 0.0
        %3805 = vmatpush1.msra.mxu0 0.0
        %3806 = vmatprep.subr.mxu0 0.0
        %3807 = vmatpush1.msra.mxu0 0.0
        %3808 = vmatprep.subr.mxu0 0.0
        %3809 = vmatpush1.msra.mxu0 0.0
        %3810 = vmatprep.subr.mxu0 0.0
        %3811 = vmatpush1.msra.mxu0 0.0
        %3812 = vmatprep.subr.mxu0 0.0
        %3813 = vmatpush1.msra.mxu0 0.0
        %3814 = vmatprep.subr.mxu0 0.0
        %3815 = vmatpush1.msra.mxu0 0.0
        %3816 = vmatprep.subr.mxu0 0.0
        %3817 = vmatpush1.msra.mxu0 0.0
        %3818 = vmatprep.subr.mxu0 0.0
        %3819 = vmatpush1.msra.mxu0 %v3790
        %3820 = vmatprep.subr.mxu0 0.0
        %3821 = vmatpush1.msra.mxu0 %v3479
        %3822 = vmatprep.subr.mxu0 0.0
        %3823 = vmatpush1.msra.mxu0 %v3473
        %3824 = vmatprep.subr.mxu0 0.0
        %3825 = vmatpush2.msra.mxu0 0.0
        %3826 = vmatprep.subr.mxu0 0.0
        %3827 = vmatpush2.msra.mxu0 0.0
        %3828 = vmatprep.subr.mxu0 0.0
        %3829 = vmatpush2.msra.mxu0 0.0
        %3830 = vmatprep.subr.mxu0 0.0
        %3831 = vmatpush2.msra.mxu0 0.0
        %3832 = vmatprep.subr.mxu0 0.0
        %3833 = vmatpush2.msra.mxu0 0.0
        %3834 = vmatprep.subr.mxu0 0.0
        %3835 = vmatpush2.msra.mxu0 0.0
        %3836 = vmatprep.subr.mxu0 0.0
        %3837 = vmatpush2.msra.mxu0 0.0
        %3838 = vmatprep.subr.mxu0 0.0
        %3839 = vmatpush2.msra.mxu0 0.0
        %3840 = vmatprep.subr.mxu0 0.0
        %3841 = vmatpush2.msra.mxu0 0.0
        %3842 = vmatprep.subr.mxu0 0.0
        %3843 = vmatpush2.msra.mxu0 0.0
        %3844 = vmatprep.subr.mxu0 0.0
        %3845 = vmatpush2.msra.mxu0 0.0
        %3846 = vmatprep.subr.mxu0 0.0
        %3847 = vmatpush2.msra.mxu0 0.0
        %3848 = vmatprep.subr.mxu0 0.0
        %3849 = vmatpush2.msra.mxu0 0.0
        %3850 = vmatprep.subr.mxu0 0.0
        %3851 = vmatpush2.msra.mxu0 0.0
        %3852 = vmatprep.subr.mxu0 0.0
        %3853 = vmatpush2.msra.mxu0 0.0
        %3854 = vmatprep.subr.mxu0 0.0
        %3855 = vmatpush2.msra.mxu0 0.0
        %3856 = vmatprep.mubr.f32.mxu0 0.0
        %3857 = vmatmul.mubr.f32.gmra.mxu0 %v3781
        %v3858 = vpop.f32.mrf.mxu0
        %v3859 = vadd.f32 0.0, %v3858
        %v3860 = vpop.f32.mrf.mxu0
        %3861 = vmatprep.mubr.f32.mxu0 0.0
        %3862 = vmatmul.mubr.f32.gmra.mxu0 %v3784
        %v3863 = vpop.f32.mrf.mxu0
        %v3864 = vadd.f32 0.0, %v3863
        %v3865 = vpop.f32.mrf.mxu0
        %3866 = vmatprep.mubr.f32.mxu0 0.0
        %3867 = vmatmul.mubr.f32.gmra.mxu0 %v3787
        %v3868 = vpop.f32.mrf.mxu0
        %v3869 = vadd.f32 0.0, %v3868
        %v3870 = vpop.f32.mrf.mxu0
        %3871 = vdwg.mxu0
        %3872 = vrot.lane.b32.xlu0 %v3487, 112
        %v3873 = vpop.permute.xlu0 %3872
        %3874 = vrot.lane.b32.xlu0 %v3488, 112
        %v3875 = vpop.permute.xlu0 %3874
        %3876 = vrot.lane.b32.xlu0 %v3489, 112
        %v3877 = vpop.permute.xlu0 %3876
        %v3881 = vsel %vm948, %v3873, 0.0
        %3882 = vadd.xlane.f32.xlu0 %v3881
        %v3883 = vpop.xlane.xlu0 %3882
        %v3884 = vsel %vm948, %v3875, 0.0
        %3885 = vadd.xlane.f32.xlu0 %v3884
        %v3886 = vpop.xlane.xlu0 %3885
        %v3887 = vsel %vm955, %v3877, 0.0
        %3888 = vadd.xlane.f32.xlu0 %v3887
        %v3889 = vpop.xlane.xlu0 %3888
        %v3890 = vmax.f32 %v3883, 1e-24
        %v3891 = vmax.f32 %v3886, 1e-24
        %v3892 = vmax.f32 %v3889, 1e-24
        %v3893 = vrsqrt.pop %v3890
        %v3894 = vrsqrt.pop %v3891
        %v3895 = vrsqrt.pop %v3892
        %v3896 = vmul.f32 %v3471, %v3893
        %v3897 = vmul.f32 %v3477, %v3894
        %v3898 = vmul.f32 %v3483, %v3895
        %s3899 = scalar_lea.vmem %s6, 9
        %v3900 = vld [vmem:[%s3899] sm:$0x1]
        %v3902 = vlaneseq
        %v3903 = vshrl.u32 %v3902, 7
        %v3904 = vsub.s32 0, %v3903
        %v3905 = vrot.slane %v3900, %v3904
        %3906 = vrot.lane.b32.xlu0 %v3905, 16
        %v3907 = vpop.permute.xlu0 %3906
        %v3909 = vmul.f32 %v3896, %v3907
        %v3910 = vmul.f32 %v3897, %v3907
        %v3911 = vmul.f32 %v3898, %v3907
        %3915 = vrot.lane.b32.xlu0 %v3909, 104
        %v3916 = vpop.permute.xlu0 %3915
        %3917 = vrot.lane.b32.xlu0 %v3910, 104
        %v3918 = vpop.permute.xlu0 %3917
        %3919 = vrot.lane.b32.xlu0 %v3911, 104
        %v3920 = vpop.permute.xlu0 %3919
        %3924 = vrot.lane.b32.xlu0 %v3909, 120
        %v3925 = vpop.permute.xlu0 %3924
        %3926 = vrot.lane.b32.xlu0 %v3910, 120
        %v3927 = vpop.permute.xlu0 %3926
        %3928 = vrot.lane.b32.xlu0 %v3911, 120
        %v3929 = vpop.permute.xlu0 %3928
        %v3933 = vsel %vm999, %v3916, %v3925
        %v3934 = vsel %vm999, %v3918, %v3927
        %v3935 = vsel %vm999, %v3920, %v3929
        %v3936 = vmul.f32 %v3909, %v1412
        %v3937 = vmul.f32 %v3910, %v1414
        %v3938 = vmul.f32 %v3911, %v1416
        %v3939 = vmul.f32 %v3933, %v798
        %v3940 = vmul.f32 %v3934, %v799
        %v3941 = vmul.f32 %v3935, %v800
        %3945 = vrot.lane.b32.xlu0 %v3939, 16
        %v3946 = vpop.permute.xlu0 %3945
        %3947 = vrot.lane.b32.xlu0 %v3940, 16
        %v3948 = vpop.permute.xlu0 %3947
        %3949 = vrot.lane.b32.xlu0 %v3941, 16
        %v3950 = vpop.permute.xlu0 %3949
        %v3954 = vadd.f32 %v3936, %v3946
        %v3955 = vadd.f32 %v3937, %v3948
        %v3956 = vadd.f32 %v3938, %v3950
        %3957 = vrot.lane.b32.xlu0 %v3487, 48
        %v3958 = vpop.permute.xlu0 %3957
        %3959 = vrot.lane.b32.xlu0 %v3488, 48
        %v3960 = vpop.permute.xlu0 %3959
        %3961 = vrot.lane.b32.xlu0 %v3489, 48
        %v3962 = vpop.permute.xlu0 %3961
        %v3966 = vsel %vm948, %v3958, 0.0
        %3967 = vadd.xlane.f32.xlu0 %v3966
        %v3968 = vpop.xlane.xlu0 %3967
        %v3969 = vsel %vm948, %v3960, 0.0
        %3970 = vadd.xlane.f32.xlu0 %v3969
        %v3971 = vpop.xlane.xlu0 %3970
        %v3972 = vsel %vm955, %v3962, 0.0
        %3973 = vadd.xlane.f32.xlu0 %v3972
        %v3974 = vpop.xlane.xlu0 %3973
        %v3975 = vmax.f32 %v3968, 1e-24
        %v3976 = vmax.f32 %v3971, 1e-24
        %v3977 = vmax.f32 %v3974, 1e-24
        %v3978 = vrsqrt.pop %v3975
        %v3979 = vrsqrt.pop %v3976
        %v3980 = vrsqrt.pop %v3977
        %v3981 = vmul.f32 %v3471, %v3978
        %v3982 = vmul.f32 %v3477, %v3979
        %v3983 = vmul.f32 %v3483, %v3980
        %s3984 = scalar_lea.vmem %s6, 13
        %v3985 = vld [vmem:[%s3984] sm:$0x1]
        %v3987 = vlaneseq
        %v3988 = vshrl.u32 %v3987, 7
        %v3989 = vsub.s32 0, %v3988
        %v3990 = vrot.slane %v3985, %v3989
        %3991 = vrot.lane.b32.xlu0 %v3990, 80
        %v3992 = vpop.permute.xlu0 %3991
        %v3994 = vmul.f32 %v3981, %v3992
        %v3995 = vmul.f32 %v3982, %v3992
        %v3996 = vmul.f32 %v3983, %v3992
        %4000 = vrot.lane.b32.xlu0 %v3994, 40
        %v4001 = vpop.permute.xlu0 %4000
        %4002 = vrot.lane.b32.xlu0 %v3995, 40
        %v4003 = vpop.permute.xlu0 %4002
        %4004 = vrot.lane.b32.xlu0 %v3996, 40
        %v4005 = vpop.permute.xlu0 %4004
        %4009 = vrot.lane.b32.xlu0 %v3994, 56
        %v4010 = vpop.permute.xlu0 %4009
        %4011 = vrot.lane.b32.xlu0 %v3995, 56
        %v4012 = vpop.permute.xlu0 %4011
        %4013 = vrot.lane.b32.xlu0 %v3996, 56
        %v4014 = vpop.permute.xlu0 %4013
        %v4018 = vsel %vm999, %v4001, %v4010
        %v4019 = vsel %vm999, %v4003, %v4012
        %v4020 = vsel %vm999, %v4005, %v4014
        %v4021 = vmul.f32 %v3994, %v1506
        %v4022 = vmul.f32 %v3995, %v1508
        %v4023 = vmul.f32 %v3996, %v1510
        %v4024 = vmul.f32 %v4018, %v798
        %v4025 = vmul.f32 %v4019, %v799
        %v4026 = vmul.f32 %v4020, %v800
        %4030 = vrot.lane.b32.xlu0 %v4024, 80
        %v4031 = vpop.permute.xlu0 %4030
        %4032 = vrot.lane.b32.xlu0 %v4025, 80
        %v4033 = vpop.permute.xlu0 %4032
        %4034 = vrot.lane.b32.xlu0 %v4026, 80
        %v4035 = vpop.permute.xlu0 %4034
        %v4039 = vadd.f32 %v4021, %v4031
        %v4040 = vadd.f32 %v4022, %v4033
        %v4041 = vadd.f32 %v4023, %v4035
        %4045 = vrot.lane.b32.xlu0 %v3954, 112
        %v4046 = vpop.permute.xlu0 %4045
        %4047 = vrot.lane.b32.xlu0 %v3955, 112
        %v4048 = vpop.permute.xlu0 %4047
        %4049 = vrot.lane.b32.xlu0 %v3956, 112
        %v4050 = vpop.permute.xlu0 %4049
        %4054 = vrot.lane.b32.xlu0 %v4039, 48
        %v4055 = vpop.permute.xlu0 %4054
        %4056 = vrot.lane.b32.xlu0 %v4040, 48
        %v4057 = vpop.permute.xlu0 %4056
        %4058 = vrot.lane.b32.xlu0 %v4041, 48
        %v4059 = vpop.permute.xlu0 %4058
        %v4060 = vsel %vm948, %v4046, 0
        %v4062 = vsel %vm948, %v4048, 0
        %v4064 = vsel %vm948, %v4050, 0
        %v4066 = vsel %vm948, %v4055, 0
        %v4068 = vsel %vm948, %v4057, 0
        %v4070 = vsel %vm948, %v4059, 0
        %4072 = vmatprep.subr.mxu0 0.0
        %4073 = vmatpush1.xpose.msra.mxu0 0.0
        %4074 = vmatprep.subr.mxu0 0.0
        %4075 = vmatpush1.xpose.msra.mxu0 0.0
        %4076 = vmatprep.subr.mxu0 0.0
        %4077 = vmatpush1.xpose.msra.mxu0 0.0
        %4078 = vmatprep.subr.mxu0 0.0
        %4079 = vmatpush1.xpose.msra.mxu0 0.0
        %4080 = vmatprep.subr.mxu0 0.0
        %4081 = vmatpush1.xpose.msra.mxu0 0.0
        %4082 = vmatprep.subr.mxu0 0.0
        %4083 = vmatpush1.xpose.msra.mxu0 0.0
        %4084 = vmatprep.subr.mxu0 0.0
        %4085 = vmatpush1.xpose.msra.mxu0 0.0
        %4086 = vmatprep.subr.mxu0 0.0
        %4087 = vmatpush1.xpose.msra.mxu0 0.0
        %4088 = vmatprep.subr.mxu0 0.0
        %4089 = vmatpush1.xpose.msra.mxu0 0.0
        %4090 = vmatprep.subr.mxu0 0.0
        %4091 = vmatpush1.xpose.msra.mxu0 0.0
        %4092 = vmatprep.subr.mxu0 0.0
        %4093 = vmatpush1.xpose.msra.mxu0 0.0
        %4094 = vmatprep.subr.mxu0 0.0
        %4095 = vmatpush1.xpose.msra.mxu0 0.0
        %4096 = vmatprep.subr.mxu0 0.0
        %4097 = vmatpush1.xpose.msra.mxu0 0.0
        %4098 = vmatprep.subr.mxu0 0.0
        %4099 = vmatpush1.xpose.msra.mxu0 %v4070
        %4100 = vmatprep.subr.mxu0 0.0
        %4101 = vmatpush1.xpose.msra.mxu0 %v4068
        %4102 = vmatprep.subr.mxu0 0.0
        %4103 = vmatpush1.xpose.msra.mxu0 %v4066
        %4104 = vmatprep.subr.mxu0 0.0
        %4105 = vmatpush2.xpose.msra.mxu0 0.0
        %4106 = vmatprep.subr.mxu0 0.0
        %4107 = vmatpush2.xpose.msra.mxu0 0.0
        %4108 = vmatprep.subr.mxu0 0.0
        %4109 = vmatpush2.xpose.msra.mxu0 0.0
        %4110 = vmatprep.subr.mxu0 0.0
        %4111 = vmatpush2.xpose.msra.mxu0 0.0
        %4112 = vmatprep.subr.mxu0 0.0
        %4113 = vmatpush2.xpose.msra.mxu0 0.0
        %4114 = vmatprep.subr.mxu0 0.0
        %4115 = vmatpush2.xpose.msra.mxu0 0.0
        %4116 = vmatprep.subr.mxu0 0.0
        %4117 = vmatpush2.xpose.msra.mxu0 0.0
        %4118 = vmatprep.subr.mxu0 0.0
        %4119 = vmatpush2.xpose.msra.mxu0 0.0
        %4120 = vmatprep.subr.mxu0 0.0
        %4121 = vmatpush2.xpose.msra.mxu0 0.0
        %4122 = vmatprep.subr.mxu0 0.0
        %4123 = vmatpush2.xpose.msra.mxu0 0.0
        %4124 = vmatprep.subr.mxu0 0.0
        %4125 = vmatpush2.xpose.msra.mxu0 0.0
        %4126 = vmatprep.subr.mxu0 0.0
        %4127 = vmatpush2.xpose.msra.mxu0 0.0
        %4128 = vmatprep.subr.mxu0 0.0
        %4129 = vmatpush2.xpose.msra.mxu0 0.0
        %4130 = vmatprep.subr.mxu0 0.0
        %4131 = vmatpush2.xpose.msra.mxu0 0.0
        %4132 = vmatprep.subr.mxu0 0.0
        %4133 = vmatpush2.xpose.msra.mxu0 0.0
        %4134 = vmatprep.subr.mxu0 0.0
        %4135 = vmatpush2.xpose.msra.mxu0 0.0
        %4136 = vmatprep.mubr.f32.mxu0 0.0
        %4137 = vmatmul.mubr.f32.gmra.mxu0 %v4060
        %v4138 = vpop.f32.mrf.mxu0
        %v4139 = vadd.f32 0.0, %v4138
        %v4140 = vpop.f32.mrf.mxu0
        %4141 = vmatprep.mubr.f32.mxu0 0.0
        %4142 = vmatmul.mubr.f32.gmra.mxu0 %v4062
        %v4143 = vpop.f32.mrf.mxu0
        %v4144 = vadd.f32 0.0, %v4143
        %v4145 = vpop.f32.mrf.mxu0
        %4146 = vmatprep.mubr.f32.mxu0 0.0
        %4147 = vmatmul.mubr.f32.gmra.mxu0 %v4064
        %v4148 = vpop.f32.mrf.mxu0
        %v4149 = vadd.f32 0.0, %v4148
        %v4150 = vpop.f32.mrf.mxu0
        %4151 = vdwg.mxu0
        %v4152 = vmul.f32 %v4139, 10.0
        %v4153 = vmul.f32 %v4144, 10.0
        %v4154 = vmul.f32 %v4149, 10.0
        %v4155 = vsel %vm1219, %v4152, -inf
        %4156 = vmax.xlane.f32.xlu0 %v4155
        %v4157 = vpop.xlane.xlu0 %4156
        %v4158 = vsel %vm1219, %v4153, -inf
        %4159 = vmax.xlane.f32.xlu0 %v4158
        %v4160 = vpop.xlane.xlu0 %4159
        %v4161 = vsel %vm1226, %v4154, -inf
        %4162 = vmax.xlane.f32.xlu0 %v4161
        %v4163 = vpop.xlane.xlu0 %4162
        %v4164 = vsub.f32 %v4152, %v4157
        %v4165 = vsub.f32 %v4153, %v4160
        %v4166 = vsub.f32 %v4154, %v4163
        %v4167 = vmul.f32 %v4164, 1.442695
        %v4168 = vpow.pop %v4167
        %v4169 = vmul.f32 %v4165, 1.442695
        %v4170 = vpow.pop %v4169
        %v4171 = vmul.f32 %v4166, 1.442695
        %v4172 = vpow.pop %v4171
        %v4173 = vsel %vm1219, %v4168, 0.0
        %4174 = vadd.xlane.f32.xlu0 %v4173
        %v4175 = vpop.xlane.xlu0 %4174
        %v4176 = vsel %vm1219, %v4170, 0.0
        %4177 = vadd.xlane.f32.xlu0 %v4176
        %v4178 = vpop.xlane.xlu0 %4177
        %v4179 = vsel %vm1226, %v4172, 0.0
        %4180 = vadd.xlane.f32.xlu0 %v4179
        %v4181 = vpop.xlane.xlu0 %4180
        %v4182 = vrcp.pop %v4175
        %v4183 = vrcp.pop %v4178
        %v4184 = vrcp.pop %v4181
        %v4185 = vmul.f32 %v4168, %v4182
        %v4186 = vmul.f32 %v4170, %v4183
        %v4187 = vmul.f32 %v4172, %v4184
        %4190 = vrot.lane.b32.xlu0 %v3473, 112
        %v4191 = vpop.permute.xlu0 %4190
        %4192 = vrot.lane.b32.xlu0 %v3479, 112
        %v4193 = vpop.permute.xlu0 %4192
        %4194 = vrot.lane.b32.xlu0 %v3485, 112
        %v4195 = vpop.permute.xlu0 %4194
        %v4199 = vsel %vm1219, %v4185, 0
        %v4202 = vsel %vm1219, %v4186, 0
        %v4205 = vsel %vm1219, %v4187, 0
        %v4207 = vsel %vm1263, %v4195, 0
        %4209 = vmatprep.subr.mxu0 0.0
        %4210 = vmatpush1.msra.mxu0 0.0
        %4211 = vmatprep.subr.mxu0 0.0
        %4212 = vmatpush1.msra.mxu0 0.0
        %4213 = vmatprep.subr.mxu0 0.0
        %4214 = vmatpush1.msra.mxu0 0.0
        %4215 = vmatprep.subr.mxu0 0.0
        %4216 = vmatpush1.msra.mxu0 0.0
        %4217 = vmatprep.subr.mxu0 0.0
        %4218 = vmatpush1.msra.mxu0 0.0
        %4219 = vmatprep.subr.mxu0 0.0
        %4220 = vmatpush1.msra.mxu0 0.0
        %4221 = vmatprep.subr.mxu0 0.0
        %4222 = vmatpush1.msra.mxu0 0.0
        %4223 = vmatprep.subr.mxu0 0.0
        %4224 = vmatpush1.msra.mxu0 0.0
        %4225 = vmatprep.subr.mxu0 0.0
        %4226 = vmatpush1.msra.mxu0 0.0
        %4227 = vmatprep.subr.mxu0 0.0
        %4228 = vmatpush1.msra.mxu0 0.0
        %4229 = vmatprep.subr.mxu0 0.0
        %4230 = vmatpush1.msra.mxu0 0.0
        %4231 = vmatprep.subr.mxu0 0.0
        %4232 = vmatpush1.msra.mxu0 0.0
        %4233 = vmatprep.subr.mxu0 0.0
        %4234 = vmatpush1.msra.mxu0 0.0
        %4235 = vmatprep.subr.mxu0 0.0
        %4236 = vmatpush1.msra.mxu0 %v4207
        %4237 = vmatprep.subr.mxu0 0.0
        %4238 = vmatpush1.msra.mxu0 %v4193
        %4239 = vmatprep.subr.mxu0 0.0
        %4240 = vmatpush1.msra.mxu0 %v4191
        %4241 = vmatprep.subr.mxu0 0.0
        %4242 = vmatpush2.msra.mxu0 0.0
        %4243 = vmatprep.subr.mxu0 0.0
        %4244 = vmatpush2.msra.mxu0 0.0
        %4245 = vmatprep.subr.mxu0 0.0
        %4246 = vmatpush2.msra.mxu0 0.0
        %4247 = vmatprep.subr.mxu0 0.0
        %4248 = vmatpush2.msra.mxu0 0.0
        %4249 = vmatprep.subr.mxu0 0.0
        %4250 = vmatpush2.msra.mxu0 0.0
        %4251 = vmatprep.subr.mxu0 0.0
        %4252 = vmatpush2.msra.mxu0 0.0
        %4253 = vmatprep.subr.mxu0 0.0
        %4254 = vmatpush2.msra.mxu0 0.0
        %4255 = vmatprep.subr.mxu0 0.0
        %4256 = vmatpush2.msra.mxu0 0.0
        %4257 = vmatprep.subr.mxu0 0.0
        %4258 = vmatpush2.msra.mxu0 0.0
        %4259 = vmatprep.subr.mxu0 0.0
        %4260 = vmatpush2.msra.mxu0 0.0
        %4261 = vmatprep.subr.mxu0 0.0
        %4262 = vmatpush2.msra.mxu0 0.0
        %4263 = vmatprep.subr.mxu0 0.0
        %4264 = vmatpush2.msra.mxu0 0.0
        %4265 = vmatprep.subr.mxu0 0.0
        %4266 = vmatpush2.msra.mxu0 0.0
        %4267 = vmatprep.subr.mxu0 0.0
        %4268 = vmatpush2.msra.mxu0 0.0
        %4269 = vmatprep.subr.mxu0 0.0
        %4270 = vmatpush2.msra.mxu0 0.0
        %4271 = vmatprep.subr.mxu0 0.0
        %4272 = vmatpush2.msra.mxu0 0.0
        %4273 = vmatprep.mubr.f32.mxu0 0.0
        %4274 = vmatmul.mubr.f32.gmra.mxu0 %v4199
        %v4275 = vpop.f32.mrf.mxu0
        %v4276 = vadd.f32 0.0, %v4275
        %v4277 = vpop.f32.mrf.mxu0
        %4278 = vmatprep.mubr.f32.mxu0 0.0
        %4279 = vmatmul.mubr.f32.gmra.mxu0 %v4202
        %v4280 = vpop.f32.mrf.mxu0
        %v4281 = vadd.f32 0.0, %v4280
        %v4282 = vpop.f32.mrf.mxu0
        %4283 = vmatprep.mubr.f32.mxu0 0.0
        %4284 = vmatmul.mubr.f32.gmra.mxu0 %v4205
        %v4285 = vpop.f32.mrf.mxu0
        %v4286 = vadd.f32 0.0, %v4285
        %v4287 = vpop.f32.mrf.mxu0
        %4288 = vdwg.mxu0
        %4289 = vrot.lane.b32.xlu0 %v3487, 96
        %v4290 = vpop.permute.xlu0 %4289
        %4291 = vrot.lane.b32.xlu0 %v3488, 96
        %v4292 = vpop.permute.xlu0 %4291
        %4293 = vrot.lane.b32.xlu0 %v3489, 96
        %v4294 = vpop.permute.xlu0 %4293
        %v4298 = vsel %vm948, %v4290, 0.0
        %4299 = vadd.xlane.f32.xlu0 %v4298
        %v4300 = vpop.xlane.xlu0 %4299
        %v4301 = vsel %vm948, %v4292, 0.0
        %4302 = vadd.xlane.f32.xlu0 %v4301
        %v4303 = vpop.xlane.xlu0 %4302
        %v4304 = vsel %vm955, %v4294, 0.0
        %4305 = vadd.xlane.f32.xlu0 %v4304
        %v4306 = vpop.xlane.xlu0 %4305
        %v4307 = vmax.f32 %v4300, 1e-24
        %v4308 = vmax.f32 %v4303, 1e-24
        %v4309 = vmax.f32 %v4306, 1e-24
        %v4310 = vrsqrt.pop %v4307
        %v4311 = vrsqrt.pop %v4308
        %v4312 = vrsqrt.pop %v4309
        %v4313 = vmul.f32 %v3471, %v4310
        %v4314 = vmul.f32 %v3477, %v4311
        %v4315 = vmul.f32 %v3483, %v4312
        %s4316 = scalar_lea.vmem %s6, 10
        %v4317 = vld [vmem:[%s4316] sm:$0x1]
        %v4319 = vlaneseq
        %v4320 = vshrl.u32 %v4319, 7
        %v4321 = vsub.s32 0, %v4320
        %v4322 = vrot.slane %v4317, %v4321
        %4323 = vrot.lane.b32.xlu0 %v4322, 32
        %v4324 = vpop.permute.xlu0 %4323
        %v4326 = vmul.f32 %v4313, %v4324
        %v4327 = vmul.f32 %v4314, %v4324
        %v4328 = vmul.f32 %v4315, %v4324
        %4332 = vrot.lane.b32.xlu0 %v4326, 88
        %v4333 = vpop.permute.xlu0 %4332
        %4334 = vrot.lane.b32.xlu0 %v4327, 88
        %v4335 = vpop.permute.xlu0 %4334
        %4336 = vrot.lane.b32.xlu0 %v4328, 88
        %v4337 = vpop.permute.xlu0 %4336
        %4341 = vrot.lane.b32.xlu0 %v4326, 104
        %v4342 = vpop.permute.xlu0 %4341
        %4343 = vrot.lane.b32.xlu0 %v4327, 104
        %v4344 = vpop.permute.xlu0 %4343
        %4345 = vrot.lane.b32.xlu0 %v4328, 104
        %v4346 = vpop.permute.xlu0 %4345
        %v4350 = vsel %vm999, %v4333, %v4342
        %v4351 = vsel %vm999, %v4335, %v4344
        %v4352 = vsel %vm999, %v4337, %v4346
        %v4353 = vmul.f32 %v4326, %v1847
        %v4354 = vmul.f32 %v4327, %v1849
        %v4355 = vmul.f32 %v4328, %v1851
        %v4356 = vmul.f32 %v4350, %v798
        %v4357 = vmul.f32 %v4351, %v799
        %v4358 = vmul.f32 %v4352, %v800
        %4362 = vrot.lane.b32.xlu0 %v4356, 32
        %v4363 = vpop.permute.xlu0 %4362
        %4364 = vrot.lane.b32.xlu0 %v4357, 32
        %v4365 = vpop.permute.xlu0 %4364
        %4366 = vrot.lane.b32.xlu0 %v4358, 32
        %v4367 = vpop.permute.xlu0 %4366
        %v4371 = vadd.f32 %v4353, %v4363
        %v4372 = vadd.f32 %v4354, %v4365
        %v4373 = vadd.f32 %v4355, %v4367
        %4374 = vrot.lane.b32.xlu0 %v3487, 32
        %v4375 = vpop.permute.xlu0 %4374
        %4376 = vrot.lane.b32.xlu0 %v3488, 32
        %v4377 = vpop.permute.xlu0 %4376
        %4378 = vrot.lane.b32.xlu0 %v3489, 32
        %v4379 = vpop.permute.xlu0 %4378
        %v4383 = vsel %vm948, %v4375, 0.0
        %4384 = vadd.xlane.f32.xlu0 %v4383
        %v4385 = vpop.xlane.xlu0 %4384
        %v4386 = vsel %vm948, %v4377, 0.0
        %4387 = vadd.xlane.f32.xlu0 %v4386
        %v4388 = vpop.xlane.xlu0 %4387
        %v4389 = vsel %vm955, %v4379, 0.0
        %4390 = vadd.xlane.f32.xlu0 %v4389
        %v4391 = vpop.xlane.xlu0 %4390
        %v4392 = vmax.f32 %v4385, 1e-24
        %v4393 = vmax.f32 %v4388, 1e-24
        %v4394 = vmax.f32 %v4391, 1e-24
        %v4395 = vrsqrt.pop %v4392
        %v4396 = vrsqrt.pop %v4393
        %v4397 = vrsqrt.pop %v4394
        %v4398 = vmul.f32 %v3471, %v4395
        %v4399 = vmul.f32 %v3477, %v4396
        %v4400 = vmul.f32 %v3483, %v4397
        %s4401 = scalar_lea.vmem %s6, 14
        %v4402 = vld [vmem:[%s4401] sm:$0x1]
        %v4404 = vlaneseq
        %v4405 = vshrl.u32 %v4404, 7
        %v4406 = vsub.s32 0, %v4405
        %v4407 = vrot.slane %v4402, %v4406
        %4408 = vrot.lane.b32.xlu0 %v4407, 96
        %v4409 = vpop.permute.xlu0 %4408
        %v4411 = vmul.f32 %v4398, %v4409
        %v4412 = vmul.f32 %v4399, %v4409
        %v4413 = vmul.f32 %v4400, %v4409
        %4417 = vrot.lane.b32.xlu0 %v4411, 24
        %v4418 = vpop.permute.xlu0 %4417
        %4419 = vrot.lane.b32.xlu0 %v4412, 24
        %v4420 = vpop.permute.xlu0 %4419
        %4421 = vrot.lane.b32.xlu0 %v4413, 24
        %v4422 = vpop.permute.xlu0 %4421
        %4426 = vrot.lane.b32.xlu0 %v4411, 40
        %v4427 = vpop.permute.xlu0 %4426
        %4428 = vrot.lane.b32.xlu0 %v4412, 40
        %v4429 = vpop.permute.xlu0 %4428
        %4430 = vrot.lane.b32.xlu0 %v4413, 40
        %v4431 = vpop.permute.xlu0 %4430
        %v4435 = vsel %vm999, %v4418, %v4427
        %v4436 = vsel %vm999, %v4420, %v4429
        %v4437 = vsel %vm999, %v4422, %v4431
        %v4438 = vmul.f32 %v4411, %v1941
        %v4439 = vmul.f32 %v4412, %v1943
        %v4440 = vmul.f32 %v4413, %v1945
        %v4441 = vmul.f32 %v4435, %v798
        %v4442 = vmul.f32 %v4436, %v799
        %v4443 = vmul.f32 %v4437, %v800
        %4447 = vrot.lane.b32.xlu0 %v4441, 96
        %v4448 = vpop.permute.xlu0 %4447
        %4449 = vrot.lane.b32.xlu0 %v4442, 96
        %v4450 = vpop.permute.xlu0 %4449
        %4451 = vrot.lane.b32.xlu0 %v4443, 96
        %v4452 = vpop.permute.xlu0 %4451
        %v4456 = vadd.f32 %v4438, %v4448
        %v4457 = vadd.f32 %v4439, %v4450
        %v4458 = vadd.f32 %v4440, %v4452
        %4462 = vrot.lane.b32.xlu0 %v4371, 96
        %v4463 = vpop.permute.xlu0 %4462
        %4464 = vrot.lane.b32.xlu0 %v4372, 96
        %v4465 = vpop.permute.xlu0 %4464
        %4466 = vrot.lane.b32.xlu0 %v4373, 96
        %v4467 = vpop.permute.xlu0 %4466
        %4471 = vrot.lane.b32.xlu0 %v4456, 32
        %v4472 = vpop.permute.xlu0 %4471
        %4473 = vrot.lane.b32.xlu0 %v4457, 32
        %v4474 = vpop.permute.xlu0 %4473
        %4475 = vrot.lane.b32.xlu0 %v4458, 32
        %v4476 = vpop.permute.xlu0 %4475
        %v4477 = vsel %vm948, %v4463, 0
        %v4479 = vsel %vm948, %v4465, 0
        %v4481 = vsel %vm948, %v4467, 0
        %v4483 = vsel %vm948, %v4472, 0
        %v4485 = vsel %vm948, %v4474, 0
        %v4487 = vsel %vm948, %v4476, 0
        %4489 = vmatprep.subr.mxu0 0.0
        %4490 = vmatpush1.xpose.msra.mxu0 0.0
        %4491 = vmatprep.subr.mxu0 0.0
        %4492 = vmatpush1.xpose.msra.mxu0 0.0
        %4493 = vmatprep.subr.mxu0 0.0
        %4494 = vmatpush1.xpose.msra.mxu0 0.0
        %4495 = vmatprep.subr.mxu0 0.0
        %4496 = vmatpush1.xpose.msra.mxu0 0.0
        %4497 = vmatprep.subr.mxu0 0.0
        %4498 = vmatpush1.xpose.msra.mxu0 0.0
        %4499 = vmatprep.subr.mxu0 0.0
        %4500 = vmatpush1.xpose.msra.mxu0 0.0
        %4501 = vmatprep.subr.mxu0 0.0
        %4502 = vmatpush1.xpose.msra.mxu0 0.0
        %4503 = vmatprep.subr.mxu0 0.0
        %4504 = vmatpush1.xpose.msra.mxu0 0.0
        %4505 = vmatprep.subr.mxu0 0.0
        %4506 = vmatpush1.xpose.msra.mxu0 0.0
        %4507 = vmatprep.subr.mxu0 0.0
        %4508 = vmatpush1.xpose.msra.mxu0 0.0
        %4509 = vmatprep.subr.mxu0 0.0
        %4510 = vmatpush1.xpose.msra.mxu0 0.0
        %4511 = vmatprep.subr.mxu0 0.0
        %4512 = vmatpush1.xpose.msra.mxu0 0.0
        %4513 = vmatprep.subr.mxu0 0.0
        %4514 = vmatpush1.xpose.msra.mxu0 0.0
        %4515 = vmatprep.subr.mxu0 0.0
        %4516 = vmatpush1.xpose.msra.mxu0 %v4487
        %4517 = vmatprep.subr.mxu0 0.0
        %4518 = vmatpush1.xpose.msra.mxu0 %v4485
        %4519 = vmatprep.subr.mxu0 0.0
        %4520 = vmatpush1.xpose.msra.mxu0 %v4483
        %4521 = vmatprep.subr.mxu0 0.0
        %4522 = vmatpush2.xpose.msra.mxu0 0.0
        %4523 = vmatprep.subr.mxu0 0.0
        %4524 = vmatpush2.xpose.msra.mxu0 0.0
        %4525 = vmatprep.subr.mxu0 0.0
        %4526 = vmatpush2.xpose.msra.mxu0 0.0
        %4527 = vmatprep.subr.mxu0 0.0
        %4528 = vmatpush2.xpose.msra.mxu0 0.0
        %4529 = vmatprep.subr.mxu0 0.0
        %4530 = vmatpush2.xpose.msra.mxu0 0.0
        %4531 = vmatprep.subr.mxu0 0.0
        %4532 = vmatpush2.xpose.msra.mxu0 0.0
        %4533 = vmatprep.subr.mxu0 0.0
        %4534 = vmatpush2.xpose.msra.mxu0 0.0
        %4535 = vmatprep.subr.mxu0 0.0
        %4536 = vmatpush2.xpose.msra.mxu0 0.0
        %4537 = vmatprep.subr.mxu0 0.0
        %4538 = vmatpush2.xpose.msra.mxu0 0.0
        %4539 = vmatprep.subr.mxu0 0.0
        %4540 = vmatpush2.xpose.msra.mxu0 0.0
        %4541 = vmatprep.subr.mxu0 0.0
        %4542 = vmatpush2.xpose.msra.mxu0 0.0
        %4543 = vmatprep.subr.mxu0 0.0
        %4544 = vmatpush2.xpose.msra.mxu0 0.0
        %4545 = vmatprep.subr.mxu0 0.0
        %4546 = vmatpush2.xpose.msra.mxu0 0.0
        %4547 = vmatprep.subr.mxu0 0.0
        %4548 = vmatpush2.xpose.msra.mxu0 0.0
        %4549 = vmatprep.subr.mxu0 0.0
        %4550 = vmatpush2.xpose.msra.mxu0 0.0
        %4551 = vmatprep.subr.mxu0 0.0
        %4552 = vmatpush2.xpose.msra.mxu0 0.0
        %4553 = vmatprep.mubr.f32.mxu0 0.0
        %4554 = vmatmul.mubr.f32.gmra.mxu0 %v4477
        %v4555 = vpop.f32.mrf.mxu0
        %v4556 = vadd.f32 0.0, %v4555
        %v4557 = vpop.f32.mrf.mxu0
        %4558 = vmatprep.mubr.f32.mxu0 0.0
        %4559 = vmatmul.mubr.f32.gmra.mxu0 %v4479
        %v4560 = vpop.f32.mrf.mxu0
        %v4561 = vadd.f32 0.0, %v4560
        %v4562 = vpop.f32.mrf.mxu0
        %4563 = vmatprep.mubr.f32.mxu0 0.0
        %4564 = vmatmul.mubr.f32.gmra.mxu0 %v4481
        %v4565 = vpop.f32.mrf.mxu0
        %v4566 = vadd.f32 0.0, %v4565
        %v4567 = vpop.f32.mrf.mxu0
        %4568 = vdwg.mxu0
        %v4569 = vmul.f32 %v4556, 10.0
        %v4570 = vmul.f32 %v4561, 10.0
        %v4571 = vmul.f32 %v4566, 10.0
        %v4572 = vsel %vm1219, %v4569, -inf
        %4573 = vmax.xlane.f32.xlu0 %v4572
        %v4574 = vpop.xlane.xlu0 %4573
        %v4575 = vsel %vm1219, %v4570, -inf
        %4576 = vmax.xlane.f32.xlu0 %v4575
        %v4577 = vpop.xlane.xlu0 %4576
        %v4578 = vsel %vm1226, %v4571, -inf
        %4579 = vmax.xlane.f32.xlu0 %v4578
        %v4580 = vpop.xlane.xlu0 %4579
        %v4581 = vsub.f32 %v4569, %v4574
        %v4582 = vsub.f32 %v4570, %v4577
        %v4583 = vsub.f32 %v4571, %v4580
        %v4584 = vmul.f32 %v4581, 1.442695
        %v4585 = vpow.pop %v4584
        %v4586 = vmul.f32 %v4582, 1.442695
        %v4587 = vpow.pop %v4586
        %v4588 = vmul.f32 %v4583, 1.442695
        %v4589 = vpow.pop %v4588
        %v4590 = vsel %vm1219, %v4585, 0.0
        %4591 = vadd.xlane.f32.xlu0 %v4590
        %v4592 = vpop.xlane.xlu0 %4591
        %v4593 = vsel %vm1219, %v4587, 0.0
        %4594 = vadd.xlane.f32.xlu0 %v4593
        %v4595 = vpop.xlane.xlu0 %4594
        %v4596 = vsel %vm1226, %v4589, 0.0
        %4597 = vadd.xlane.f32.xlu0 %v4596
        %v4598 = vpop.xlane.xlu0 %4597
        %v4599 = vrcp.pop %v4592
        %v4600 = vrcp.pop %v4595
        %v4601 = vrcp.pop %v4598
        %v4602 = vmul.f32 %v4585, %v4599
        %v4603 = vmul.f32 %v4587, %v4600
        %v4604 = vmul.f32 %v4589, %v4601
        %4605 = vrot.lane.b32.xlu0 %v3473, 96
        %v4606 = vpop.permute.xlu0 %4605
        %4607 = vrot.lane.b32.xlu0 %v3479, 96
        %v4608 = vpop.permute.xlu0 %4607
        %4609 = vrot.lane.b32.xlu0 %v3485, 96
        %v4610 = vpop.permute.xlu0 %4609
        %v4614 = vsel %vm1219, %v4602, 0
        %v4617 = vsel %vm1219, %v4603, 0
        %v4620 = vsel %vm1219, %v4604, 0
        %v4622 = vsel %vm1263, %v4610, 0
        %4624 = vmatprep.subr.mxu0 0.0
        %4625 = vmatpush1.msra.mxu0 0.0
        %4626 = vmatprep.subr.mxu0 0.0
        %4627 = vmatpush1.msra.mxu0 0.0
        %4628 = vmatprep.subr.mxu0 0.0
        %4629 = vmatpush1.msra.mxu0 0.0
        %4630 = vmatprep.subr.mxu0 0.0
        %4631 = vmatpush1.msra.mxu0 0.0
        %4632 = vmatprep.subr.mxu0 0.0
        %4633 = vmatpush1.msra.mxu0 0.0
        %4634 = vmatprep.subr.mxu0 0.0
        %4635 = vmatpush1.msra.mxu0 0.0
        %4636 = vmatprep.subr.mxu0 0.0
        %4637 = vmatpush1.msra.mxu0 0.0
        %4638 = vmatprep.subr.mxu0 0.0
        %4639 = vmatpush1.msra.mxu0 0.0
        %4640 = vmatprep.subr.mxu0 0.0
        %4641 = vmatpush1.msra.mxu0 0.0
        %4642 = vmatprep.subr.mxu0 0.0
        %4643 = vmatpush1.msra.mxu0 0.0
        %4644 = vmatprep.subr.mxu0 0.0
        %4645 = vmatpush1.msra.mxu0 0.0
        %4646 = vmatprep.subr.mxu0 0.0
        %4647 = vmatpush1.msra.mxu0 0.0
        %4648 = vmatprep.subr.mxu0 0.0
        %4649 = vmatpush1.msra.mxu0 0.0
        %4650 = vmatprep.subr.mxu0 0.0
        %4651 = vmatpush1.msra.mxu0 %v4622
        %4652 = vmatprep.subr.mxu0 0.0
        %4653 = vmatpush1.msra.mxu0 %v4608
        %4654 = vmatprep.subr.mxu0 0.0
        %4655 = vmatpush1.msra.mxu0 %v4606
        %4656 = vmatprep.subr.mxu0 0.0
        %4657 = vmatpush2.msra.mxu0 0.0
        %4658 = vmatprep.subr.mxu0 0.0
        %4659 = vmatpush2.msra.mxu0 0.0
        %4660 = vmatprep.subr.mxu0 0.0
        %4661 = vmatpush2.msra.mxu0 0.0
        %4662 = vmatprep.subr.mxu0 0.0
        %4663 = vmatpush2.msra.mxu0 0.0
        %4664 = vmatprep.subr.mxu0 0.0
        %4665 = vmatpush2.msra.mxu0 0.0
        %4666 = vmatprep.subr.mxu0 0.0
        %4667 = vmatpush2.msra.mxu0 0.0
        %4668 = vmatprep.subr.mxu0 0.0
        %4669 = vmatpush2.msra.mxu0 0.0
        %4670 = vmatprep.subr.mxu0 0.0
        %4671 = vmatpush2.msra.mxu0 0.0
        %4672 = vmatprep.subr.mxu0 0.0
        %4673 = vmatpush2.msra.mxu0 0.0
        %4674 = vmatprep.subr.mxu0 0.0
        %4675 = vmatpush2.msra.mxu0 0.0
        %4676 = vmatprep.subr.mxu0 0.0
        %4677 = vmatpush2.msra.mxu0 0.0
        %4678 = vmatprep.subr.mxu0 0.0
        %4679 = vmatpush2.msra.mxu0 0.0
        %4680 = vmatprep.subr.mxu0 0.0
        %4681 = vmatpush2.msra.mxu0 0.0
        %4682 = vmatprep.subr.mxu0 0.0
        %4683 = vmatpush2.msra.mxu0 0.0
        %4684 = vmatprep.subr.mxu0 0.0
        %4685 = vmatpush2.msra.mxu0 0.0
        %4686 = vmatprep.subr.mxu0 0.0
        %4687 = vmatpush2.msra.mxu0 0.0
        %4688 = vmatprep.mubr.f32.mxu0 0.0
        %4689 = vmatmul.mubr.f32.gmra.mxu0 %v4614
        %v4690 = vpop.f32.mrf.mxu0
        %v4691 = vadd.f32 0.0, %v4690
        %v4692 = vpop.f32.mrf.mxu0
        %4693 = vmatprep.mubr.f32.mxu0 0.0
        %4694 = vmatmul.mubr.f32.gmra.mxu0 %v4617
        %v4695 = vpop.f32.mrf.mxu0
        %v4696 = vadd.f32 0.0, %v4695
        %v4697 = vpop.f32.mrf.mxu0
        %4698 = vmatprep.mubr.f32.mxu0 0.0
        %4699 = vmatmul.mubr.f32.gmra.mxu0 %v4620
        %v4700 = vpop.f32.mrf.mxu0
        %v4701 = vadd.f32 0.0, %v4700
        %v4702 = vpop.f32.mrf.mxu0
        %4703 = vdwg.mxu0
        %4704 = vrot.lane.b32.xlu0 %v3487, 80
        %v4705 = vpop.permute.xlu0 %4704
        %4706 = vrot.lane.b32.xlu0 %v3488, 80
        %v4707 = vpop.permute.xlu0 %4706
        %4708 = vrot.lane.b32.xlu0 %v3489, 80
        %v4709 = vpop.permute.xlu0 %4708
        %v4713 = vsel %vm948, %v4705, 0.0
        %4714 = vadd.xlane.f32.xlu0 %v4713
        %v4715 = vpop.xlane.xlu0 %4714
        %v4716 = vsel %vm948, %v4707, 0.0
        %4717 = vadd.xlane.f32.xlu0 %v4716
        %v4718 = vpop.xlane.xlu0 %4717
        %v4719 = vsel %vm955, %v4709, 0.0
        %4720 = vadd.xlane.f32.xlu0 %v4719
        %v4721 = vpop.xlane.xlu0 %4720
        %v4722 = vmax.f32 %v4715, 1e-24
        %v4723 = vmax.f32 %v4718, 1e-24
        %v4724 = vmax.f32 %v4721, 1e-24
        %v4725 = vrsqrt.pop %v4722
        %v4726 = vrsqrt.pop %v4723
        %v4727 = vrsqrt.pop %v4724
        %v4728 = vmul.f32 %v3471, %v4725
        %v4729 = vmul.f32 %v3477, %v4726
        %v4730 = vmul.f32 %v3483, %v4727
        %s4731 = scalar_lea.vmem %s6, 11
        %v4732 = vld [vmem:[%s4731] sm:$0x1]
        %v4734 = vlaneseq
        %v4735 = vshrl.u32 %v4734, 7
        %v4736 = vsub.s32 0, %v4735
        %v4737 = vrot.slane %v4732, %v4736
        %4738 = vrot.lane.b32.xlu0 %v4737, 48
        %v4739 = vpop.permute.xlu0 %4738
        %v4741 = vmul.f32 %v4728, %v4739
        %v4742 = vmul.f32 %v4729, %v4739
        %v4743 = vmul.f32 %v4730, %v4739
        %4747 = vrot.lane.b32.xlu0 %v4741, 72
        %v4748 = vpop.permute.xlu0 %4747
        %4749 = vrot.lane.b32.xlu0 %v4742, 72
        %v4750 = vpop.permute.xlu0 %4749
        %4751 = vrot.lane.b32.xlu0 %v4743, 72
        %v4752 = vpop.permute.xlu0 %4751
        %4756 = vrot.lane.b32.xlu0 %v4741, 88
        %v4757 = vpop.permute.xlu0 %4756
        %4758 = vrot.lane.b32.xlu0 %v4742, 88
        %v4759 = vpop.permute.xlu0 %4758
        %4760 = vrot.lane.b32.xlu0 %v4743, 88
        %v4761 = vpop.permute.xlu0 %4760
        %v4765 = vsel %vm999, %v4748, %v4757
        %v4766 = vsel %vm999, %v4750, %v4759
        %v4767 = vsel %vm999, %v4752, %v4761
        %v4768 = vmul.f32 %v4741, %v2280
        %v4769 = vmul.f32 %v4742, %v2282
        %v4770 = vmul.f32 %v4743, %v2284
        %v4771 = vmul.f32 %v4765, %v798
        %v4772 = vmul.f32 %v4766, %v799
        %v4773 = vmul.f32 %v4767, %v800
        %4777 = vrot.lane.b32.xlu0 %v4771, 48
        %v4778 = vpop.permute.xlu0 %4777
        %4779 = vrot.lane.b32.xlu0 %v4772, 48
        %v4780 = vpop.permute.xlu0 %4779
        %4781 = vrot.lane.b32.xlu0 %v4773, 48
        %v4782 = vpop.permute.xlu0 %4781
        %v4786 = vadd.f32 %v4768, %v4778
        %v4787 = vadd.f32 %v4769, %v4780
        %v4788 = vadd.f32 %v4770, %v4782
        %4789 = vrot.lane.b32.xlu0 %v3487, 16
        %v4790 = vpop.permute.xlu0 %4789
        %4791 = vrot.lane.b32.xlu0 %v3488, 16
        %v4792 = vpop.permute.xlu0 %4791
        %4793 = vrot.lane.b32.xlu0 %v3489, 16
        %v4794 = vpop.permute.xlu0 %4793
        %v4798 = vsel %vm948, %v4790, 0.0
        %4799 = vadd.xlane.f32.xlu0 %v4798
        %v4800 = vpop.xlane.xlu0 %4799
        %v4801 = vsel %vm948, %v4792, 0.0
        %4802 = vadd.xlane.f32.xlu0 %v4801
        %v4803 = vpop.xlane.xlu0 %4802
        %v4804 = vsel %vm955, %v4794, 0.0
        %4805 = vadd.xlane.f32.xlu0 %v4804
        %v4806 = vpop.xlane.xlu0 %4805
        %v4807 = vmax.f32 %v4800, 1e-24
        %v4808 = vmax.f32 %v4803, 1e-24
        %v4809 = vmax.f32 %v4806, 1e-24
        %v4810 = vrsqrt.pop %v4807
        %v4811 = vrsqrt.pop %v4808
        %v4812 = vrsqrt.pop %v4809
        %v4813 = vmul.f32 %v3471, %v4810
        %v4814 = vmul.f32 %v3477, %v4811
        %v4815 = vmul.f32 %v3483, %v4812
        %s4816 = scalar_lea.vmem %s6, 15
        %v4817 = vld [vmem:[%s4816] sm:$0x1]
        %v4819 = vlaneseq
        %v4820 = vshrl.u32 %v4819, 7
        %v4821 = vsub.s32 0, %v4820
        %v4822 = vrot.slane %v4817, %v4821
        %4823 = vrot.lane.b32.xlu0 %v4822, 112
        %v4824 = vpop.permute.xlu0 %4823
        %v4826 = vmul.f32 %v4813, %v4824
        %v4827 = vmul.f32 %v4814, %v4824
        %v4828 = vmul.f32 %v4815, %v4824
        %4832 = vrot.lane.b32.xlu0 %v4826, 8
        %v4833 = vpop.permute.xlu0 %4832
        %4834 = vrot.lane.b32.xlu0 %v4827, 8
        %v4835 = vpop.permute.xlu0 %4834
        %4836 = vrot.lane.b32.xlu0 %v4828, 8
        %v4837 = vpop.permute.xlu0 %4836
        %4841 = vrot.lane.b32.xlu0 %v4826, 24
        %v4842 = vpop.permute.xlu0 %4841
        %4843 = vrot.lane.b32.xlu0 %v4827, 24
        %v4844 = vpop.permute.xlu0 %4843
        %4845 = vrot.lane.b32.xlu0 %v4828, 24
        %v4846 = vpop.permute.xlu0 %4845
        %v4850 = vsel %vm999, %v4833, %v4842
        %v4851 = vsel %vm999, %v4835, %v4844
        %v4852 = vsel %vm999, %v4837, %v4846
        %v4853 = vmul.f32 %v4826, %v2374
        %v4854 = vmul.f32 %v4827, %v2376
        %v4855 = vmul.f32 %v4828, %v2378
        %v4856 = vmul.f32 %v4850, %v798
        %v4857 = vmul.f32 %v4851, %v799
        %v4858 = vmul.f32 %v4852, %v800
        %4862 = vrot.lane.b32.xlu0 %v4856, 112
        %v4863 = vpop.permute.xlu0 %4862
        %4864 = vrot.lane.b32.xlu0 %v4857, 112
        %v4865 = vpop.permute.xlu0 %4864
        %4866 = vrot.lane.b32.xlu0 %v4858, 112
        %v4867 = vpop.permute.xlu0 %4866
        %v4871 = vadd.f32 %v4853, %v4863
        %v4872 = vadd.f32 %v4854, %v4865
        %v4873 = vadd.f32 %v4855, %v4867
        %4877 = vrot.lane.b32.xlu0 %v4786, 80
        %v4878 = vpop.permute.xlu0 %4877
        %4879 = vrot.lane.b32.xlu0 %v4787, 80
        %v4880 = vpop.permute.xlu0 %4879
        %4881 = vrot.lane.b32.xlu0 %v4788, 80
        %v4882 = vpop.permute.xlu0 %4881
        %4886 = vrot.lane.b32.xlu0 %v4871, 16
        %v4887 = vpop.permute.xlu0 %4886
        %4888 = vrot.lane.b32.xlu0 %v4872, 16
        %v4889 = vpop.permute.xlu0 %4888
        %4890 = vrot.lane.b32.xlu0 %v4873, 16
        %v4891 = vpop.permute.xlu0 %4890
        %v4892 = vsel %vm948, %v4878, 0
        %v4894 = vsel %vm948, %v4880, 0
        %v4896 = vsel %vm948, %v4882, 0
        %v4898 = vsel %vm948, %v4887, 0
        %v4900 = vsel %vm948, %v4889, 0
        %v4902 = vsel %vm948, %v4891, 0
        %4904 = vmatprep.subr.mxu0 0.0
        %4905 = vmatpush1.xpose.msra.mxu0 0.0
        %4906 = vmatprep.subr.mxu0 0.0
        %4907 = vmatpush1.xpose.msra.mxu0 0.0
        %4908 = vmatprep.subr.mxu0 0.0
        %4909 = vmatpush1.xpose.msra.mxu0 0.0
        %4910 = vmatprep.subr.mxu0 0.0
        %4911 = vmatpush1.xpose.msra.mxu0 0.0
        %4912 = vmatprep.subr.mxu0 0.0
        %4913 = vmatpush1.xpose.msra.mxu0 0.0
        %4914 = vmatprep.subr.mxu0 0.0
        %4915 = vmatpush1.xpose.msra.mxu0 0.0
        %4916 = vmatprep.subr.mxu0 0.0
        %4917 = vmatpush1.xpose.msra.mxu0 0.0
        %4918 = vmatprep.subr.mxu0 0.0
        %4919 = vmatpush1.xpose.msra.mxu0 0.0
        %4920 = vmatprep.subr.mxu0 0.0
        %4921 = vmatpush1.xpose.msra.mxu0 0.0
        %4922 = vmatprep.subr.mxu0 0.0
        %4923 = vmatpush1.xpose.msra.mxu0 0.0
        %4924 = vmatprep.subr.mxu0 0.0
        %4925 = vmatpush1.xpose.msra.mxu0 0.0
        %4926 = vmatprep.subr.mxu0 0.0
        %4927 = vmatpush1.xpose.msra.mxu0 0.0
        %4928 = vmatprep.subr.mxu0 0.0
        %4929 = vmatpush1.xpose.msra.mxu0 0.0
        %4930 = vmatprep.subr.mxu0 0.0
        %4931 = vmatpush1.xpose.msra.mxu0 %v4902
        %4932 = vmatprep.subr.mxu0 0.0
        %4933 = vmatpush1.xpose.msra.mxu0 %v4900
        %4934 = vmatprep.subr.mxu0 0.0
        %4935 = vmatpush1.xpose.msra.mxu0 %v4898
        %4936 = vmatprep.subr.mxu0 0.0
        %4937 = vmatpush2.xpose.msra.mxu0 0.0
        %4938 = vmatprep.subr.mxu0 0.0
        %4939 = vmatpush2.xpose.msra.mxu0 0.0
        %4940 = vmatprep.subr.mxu0 0.0
        %4941 = vmatpush2.xpose.msra.mxu0 0.0
        %4942 = vmatprep.subr.mxu0 0.0
        %4943 = vmatpush2.xpose.msra.mxu0 0.0
        %4944 = vmatprep.subr.mxu0 0.0
        %4945 = vmatpush2.xpose.msra.mxu0 0.0
        %4946 = vmatprep.subr.mxu0 0.0
        %4947 = vmatpush2.xpose.msra.mxu0 0.0
        %4948 = vmatprep.subr.mxu0 0.0
        %4949 = vmatpush2.xpose.msra.mxu0 0.0
        %4950 = vmatprep.subr.mxu0 0.0
        %4951 = vmatpush2.xpose.msra.mxu0 0.0
        %4952 = vmatprep.subr.mxu0 0.0
        %4953 = vmatpush2.xpose.msra.mxu0 0.0
        %4954 = vmatprep.subr.mxu0 0.0
        %4955 = vmatpush2.xpose.msra.mxu0 0.0
        %4956 = vmatprep.subr.mxu0 0.0
        %4957 = vmatpush2.xpose.msra.mxu0 0.0
        %4958 = vmatprep.subr.mxu0 0.0
        %4959 = vmatpush2.xpose.msra.mxu0 0.0
        %4960 = vmatprep.subr.mxu0 0.0
        %4961 = vmatpush2.xpose.msra.mxu0 0.0
        %4962 = vmatprep.subr.mxu0 0.0
        %4963 = vmatpush2.xpose.msra.mxu0 0.0
        %4964 = vmatprep.subr.mxu0 0.0
        %4965 = vmatpush2.xpose.msra.mxu0 0.0
        %4966 = vmatprep.subr.mxu0 0.0
        %4967 = vmatpush2.xpose.msra.mxu0 0.0
        %4968 = vmatprep.mubr.f32.mxu0 0.0
        %4969 = vmatmul.mubr.f32.gmra.mxu0 %v4892
        %v4970 = vpop.f32.mrf.mxu0
        %v4971 = vadd.f32 0.0, %v4970
        %v4972 = vpop.f32.mrf.mxu0
        %4973 = vmatprep.mubr.f32.mxu0 0.0
        %4974 = vmatmul.mubr.f32.gmra.mxu0 %v4894
        %v4975 = vpop.f32.mrf.mxu0
        %v4976 = vadd.f32 0.0, %v4975
        %v4977 = vpop.f32.mrf.mxu0
        %4978 = vmatprep.mubr.f32.mxu0 0.0
        %4979 = vmatmul.mubr.f32.gmra.mxu0 %v4896
        %v4980 = vpop.f32.mrf.mxu0
        %v4981 = vadd.f32 0.0, %v4980
        %v4982 = vpop.f32.mrf.mxu0
        %4983 = vdwg.mxu0
        %v4984 = vmul.f32 %v4971, 10.0
        %v4985 = vmul.f32 %v4976, 10.0
        %v4986 = vmul.f32 %v4981, 10.0
        %v4987 = vsel %vm1219, %v4984, -inf
        %4988 = vmax.xlane.f32.xlu0 %v4987
        %v4989 = vpop.xlane.xlu0 %4988
        %v4990 = vsel %vm1219, %v4985, -inf
        %4991 = vmax.xlane.f32.xlu0 %v4990
        %v4992 = vpop.xlane.xlu0 %4991
        %v4993 = vsel %vm1226, %v4986, -inf
        %4994 = vmax.xlane.f32.xlu0 %v4993
        %v4995 = vpop.xlane.xlu0 %4994
        %v4996 = vsub.f32 %v4984, %v4989
        %v4997 = vsub.f32 %v4985, %v4992
        %v4998 = vsub.f32 %v4986, %v4995
        %v4999 = vmul.f32 %v4996, 1.442695
        %v5000 = vpow.pop %v4999
        %v5001 = vmul.f32 %v4997, 1.442695
        %v5002 = vpow.pop %v5001
        %v5003 = vmul.f32 %v4998, 1.442695
        %v5004 = vpow.pop %v5003
        %v5005 = vsel %vm1219, %v5000, 0.0
        %5006 = vadd.xlane.f32.xlu0 %v5005
        %v5007 = vpop.xlane.xlu0 %5006
        %v5008 = vsel %vm1219, %v5002, 0.0
        %5009 = vadd.xlane.f32.xlu0 %v5008
        %v5010 = vpop.xlane.xlu0 %5009
        %v5011 = vsel %vm1226, %v5004, 0.0
        %5012 = vadd.xlane.f32.xlu0 %v5011
        %v5013 = vpop.xlane.xlu0 %5012
        %v5014 = vrcp.pop %v5007
        %v5015 = vrcp.pop %v5010
        %v5016 = vrcp.pop %v5013
        %v5017 = vmul.f32 %v5000, %v5014
        %v5018 = vmul.f32 %v5002, %v5015
        %v5019 = vmul.f32 %v5004, %v5016
        %5020 = vrot.lane.b32.xlu0 %v3473, 80
        %v5021 = vpop.permute.xlu0 %5020
        %5022 = vrot.lane.b32.xlu0 %v3479, 80
        %v5023 = vpop.permute.xlu0 %5022
        %5024 = vrot.lane.b32.xlu0 %v3485, 80
        %v5025 = vpop.permute.xlu0 %5024
        %v5029 = vsel %vm1219, %v5017, 0
        %v5032 = vsel %vm1219, %v5018, 0
        %v5035 = vsel %vm1219, %v5019, 0
        %v5037 = vsel %vm1263, %v5025, 0
        %5039 = vmatprep.subr.mxu0 0.0
        %5040 = vmatpush1.msra.mxu0 0.0
        %5041 = vmatprep.subr.mxu0 0.0
        %5042 = vmatpush1.msra.mxu0 0.0
        %5043 = vmatprep.subr.mxu0 0.0
        %5044 = vmatpush1.msra.mxu0 0.0
        %5045 = vmatprep.subr.mxu0 0.0
        %5046 = vmatpush1.msra.mxu0 0.0
        %5047 = vmatprep.subr.mxu0 0.0
        %5048 = vmatpush1.msra.mxu0 0.0
        %5049 = vmatprep.subr.mxu0 0.0
        %5050 = vmatpush1.msra.mxu0 0.0
        %5051 = vmatprep.subr.mxu0 0.0
        %5052 = vmatpush1.msra.mxu0 0.0
        %5053 = vmatprep.subr.mxu0 0.0
        %5054 = vmatpush1.msra.mxu0 0.0
        %5055 = vmatprep.subr.mxu0 0.0
        %5056 = vmatpush1.msra.mxu0 0.0
        %5057 = vmatprep.subr.mxu0 0.0
        %5058 = vmatpush1.msra.mxu0 0.0
        %5059 = vmatprep.subr.mxu0 0.0
        %5060 = vmatpush1.msra.mxu0 0.0
        %5061 = vmatprep.subr.mxu0 0.0
        %5062 = vmatpush1.msra.mxu0 0.0
        %5063 = vmatprep.subr.mxu0 0.0
        %5064 = vmatpush1.msra.mxu0 0.0
        %5065 = vmatprep.subr.mxu0 0.0
        %5066 = vmatpush1.msra.mxu0 %v5037
        %5067 = vmatprep.subr.mxu0 0.0
        %5068 = vmatpush1.msra.mxu0 %v5023
        %5069 = vmatprep.subr.mxu0 0.0
        %5070 = vmatpush1.msra.mxu0 %v5021
        %5071 = vmatprep.subr.mxu0 0.0
        %5072 = vmatpush2.msra.mxu0 0.0
        %5073 = vmatprep.subr.mxu0 0.0
        %5074 = vmatpush2.msra.mxu0 0.0
        %5075 = vmatprep.subr.mxu0 0.0
        %5076 = vmatpush2.msra.mxu0 0.0
        %5077 = vmatprep.subr.mxu0 0.0
        %5078 = vmatpush2.msra.mxu0 0.0
        %5079 = vmatprep.subr.mxu0 0.0
        %5080 = vmatpush2.msra.mxu0 0.0
        %5081 = vmatprep.subr.mxu0 0.0
        %5082 = vmatpush2.msra.mxu0 0.0
        %5083 = vmatprep.subr.mxu0 0.0
        %5084 = vmatpush2.msra.mxu0 0.0
        %5085 = vmatprep.subr.mxu0 0.0
        %5086 = vmatpush2.msra.mxu0 0.0
        %5087 = vmatprep.subr.mxu0 0.0
        %5088 = vmatpush2.msra.mxu0 0.0
        %5089 = vmatprep.subr.mxu0 0.0
        %5090 = vmatpush2.msra.mxu0 0.0
        %5091 = vmatprep.subr.mxu0 0.0
        %5092 = vmatpush2.msra.mxu0 0.0
        %5093 = vmatprep.subr.mxu0 0.0
        %5094 = vmatpush2.msra.mxu0 0.0
        %5095 = vmatprep.subr.mxu0 0.0
        %5096 = vmatpush2.msra.mxu0 0.0
        %5097 = vmatprep.subr.mxu0 0.0
        %5098 = vmatpush2.msra.mxu0 0.0
        %5099 = vmatprep.subr.mxu0 0.0
        %5100 = vmatpush2.msra.mxu0 0.0
        %5101 = vmatprep.subr.mxu0 0.0
        %5102 = vmatpush2.msra.mxu0 0.0
        %5103 = vmatprep.mubr.f32.mxu0 0.0
        %5104 = vmatmul.mubr.f32.gmra.mxu0 %v5029
        %v5105 = vpop.f32.mrf.mxu0
        %v5106 = vadd.f32 0.0, %v5105
        %v5107 = vpop.f32.mrf.mxu0
        %5108 = vmatprep.mubr.f32.mxu0 0.0
        %5109 = vmatmul.mubr.f32.gmra.mxu0 %v5032
        %v5110 = vpop.f32.mrf.mxu0
        %v5111 = vadd.f32 0.0, %v5110
        %v5112 = vpop.f32.mrf.mxu0
        %5113 = vmatprep.mubr.f32.mxu0 0.0
        %5114 = vmatmul.mubr.f32.gmra.mxu0 %v5035
        %v5115 = vpop.f32.mrf.mxu0
        %v5116 = vadd.f32 0.0, %v5115
        %v5117 = vpop.f32.mrf.mxu0
        %5118 = vdwg.mxu0
        %5122 = vrot.lane.b32.xlu0 %v4276, 16
        %v5123 = vpop.permute.xlu0 %5122
        %5124 = vrot.lane.b32.xlu0 %v4281, 16
        %v5125 = vpop.permute.xlu0 %5124
        %5126 = vrot.lane.b32.xlu0 %v4286, 16
        %v5127 = vpop.permute.xlu0 %5126
        %5134 = vrot.lane.b32.xlu0 %v4691, 32
        %v5135 = vpop.permute.xlu0 %5134
        %5136 = vrot.lane.b32.xlu0 %v4696, 32
        %v5137 = vpop.permute.xlu0 %5136
        %5138 = vrot.lane.b32.xlu0 %v4701, 32
        %v5139 = vpop.permute.xlu0 %5138
        %5146 = vrot.lane.b32.xlu0 %v5106, 48
        %v5147 = vpop.permute.xlu0 %5146
        %5148 = vrot.lane.b32.xlu0 %v5111, 48
        %v5149 = vpop.permute.xlu0 %5148
        %5150 = vrot.lane.b32.xlu0 %v5116, 48
        %v5151 = vpop.permute.xlu0 %5150
        %v5155 = vsel %vm948, %v3859, %v5123
        %v5156 = vsel %vm948, %v3864, %v5125
        %v5157 = vsel %vm948, %v3869, %v5127
        %v5158 = vsel %vm2687, %v5155, %v5135
        %v5159 = vsel %vm2687, %v5156, %v5137
        %v5160 = vsel %vm2687, %v5157, %v5139
        %v5161 = vsel %vm2691, %v5158, %v5147
        %v5162 = vsel %vm2691, %v5159, %v5149
        %v5163 = vsel %vm2691, %v5160, %v5151
        %s5164 = scalar_lea.vmem [#allocation8], 64
        %v5165 = vld [vmem:[%s5164] sm:$0xff]
        %v5166 = vld [vmem:[%s5164 + $0x8] sm:$0xff]
        %v5167 = vld [vmem:[%s5164 + $0x10] sm:$0xff]
        %v5168 = vld [vmem:[%s5164 + $0x18] sm:$0xff]
        %v5169 = vld [vmem:[%s5164 + $0x20] sm:$0xff]
        %v5170 = vld [vmem:[%s5164 + $0x28] sm:$0xff]
        %v5171 = vld [vmem:[%s5164 + $0x30] sm:$0xff]
        %v5172 = vld [vmem:[%s5164 + $0x38] sm:$0xff]
        %v5174 = vsel %vm786, %v5161, 0
        %v5177 = vsel %vm786, %v5162, 0
        %v5180 = vsel %vm786, %v5163, 0
        %5182 = vmatprep.subr.mxu0 0.0
        %5183 = vmatpush1.msra.mxu0 0.0
        %5184 = vmatprep.subr.mxu0 0.0
        %5185 = vmatpush1.msra.mxu0 0.0
        %5186 = vmatprep.subr.mxu0 0.0
        %5187 = vmatpush1.msra.mxu0 0.0
        %5188 = vmatprep.subr.mxu0 0.0
        %5189 = vmatpush1.msra.mxu0 0.0
        %5190 = vmatprep.subr.mxu0 0.0
        %5191 = vmatpush1.msra.mxu0 0.0
        %5192 = vmatprep.subr.mxu0 0.0
        %5193 = vmatpush1.msra.mxu0 0.0
        %5194 = vmatprep.subr.mxu0 0.0
        %5195 = vmatpush1.msra.mxu0 0.0
        %5196 = vmatprep.subr.mxu0 0.0
        %5197 = vmatpush1.msra.mxu0 0.0
        %5198 = vmatprep.subr.mxu0 0.0
        %5199 = vmatpush1.msra.mxu0 %v5172
        %5200 = vmatprep.subr.mxu0 0.0
        %5201 = vmatpush1.msra.mxu0 %v5171
        %5202 = vmatprep.subr.mxu0 0.0
        %5203 = vmatpush1.msra.mxu0 %v5170
        %5204 = vmatprep.subr.mxu0 0.0
        %5205 = vmatpush1.msra.mxu0 %v5169
        %5206 = vmatprep.subr.mxu0 0.0
        %5207 = vmatpush1.msra.mxu0 %v5168
        %5208 = vmatprep.subr.mxu0 0.0
        %5209 = vmatpush1.msra.mxu0 %v5167
        %5210 = vmatprep.subr.mxu0 0.0
        %5211 = vmatpush1.msra.mxu0 %v5166
        %5212 = vmatprep.subr.mxu0 0.0
        %5213 = vmatpush1.msra.mxu0 %v5165
        %5214 = vmatprep.subr.mxu0 0.0
        %5215 = vmatpush2.msra.mxu0 0.0
        %5216 = vmatprep.subr.mxu0 0.0
        %5217 = vmatpush2.msra.mxu0 0.0
        %5218 = vmatprep.subr.mxu0 0.0
        %5219 = vmatpush2.msra.mxu0 0.0
        %5220 = vmatprep.subr.mxu0 0.0
        %5221 = vmatpush2.msra.mxu0 0.0
        %5222 = vmatprep.subr.mxu0 0.0
        %5223 = vmatpush2.msra.mxu0 0.0
        %5224 = vmatprep.subr.mxu0 0.0
        %5225 = vmatpush2.msra.mxu0 0.0
        %5226 = vmatprep.subr.mxu0 0.0
        %5227 = vmatpush2.msra.mxu0 0.0
        %5228 = vmatprep.subr.mxu0 0.0
        %5229 = vmatpush2.msra.mxu0 0.0
        %5230 = vmatprep.subr.mxu0 0.0
        %5231 = vmatpush2.msra.mxu0 0.0
        %5232 = vmatprep.subr.mxu0 0.0
        %5233 = vmatpush2.msra.mxu0 0.0
        %5234 = vmatprep.subr.mxu0 0.0
        %5235 = vmatpush2.msra.mxu0 0.0
        %5236 = vmatprep.subr.mxu0 0.0
        %5237 = vmatpush2.msra.mxu0 0.0
        %5238 = vmatprep.subr.mxu0 0.0
        %5239 = vmatpush2.msra.mxu0 0.0
        %5240 = vmatprep.subr.mxu0 0.0
        %5241 = vmatpush2.msra.mxu0 0.0
        %5242 = vmatprep.subr.mxu0 0.0
        %5243 = vmatpush2.msra.mxu0 0.0
        %5244 = vmatprep.subr.mxu0 0.0
        %5245 = vmatpush2.msra.mxu0 0.0
        %5246 = vmatprep.mubr.f32.mxu0 0.0
        %5247 = vmatmul.mubr.f32.gmra.mxu0 %v5174
        %v5248 = vpop.f32.mrf.mxu0
        %v5249 = vadd.f32 %v3340, %v5248
        %v5250 = vpop.f32.mrf.mxu0
        %5251 = vmatprep.mubr.f32.mxu0 0.0
        %5252 = vmatmul.mubr.f32.gmra.mxu0 %v5177
        %v5253 = vpop.f32.mrf.mxu0
        %v5254 = vadd.f32 %v3341, %v5253
        %v5255 = vpop.f32.mrf.mxu0
        %5256 = vmatprep.mubr.f32.mxu0 0.0
        %5257 = vmatmul.mubr.f32.gmra.mxu0 %v5180
        %v5258 = vpop.f32.mrf.mxu0
        %v5259 = vadd.f32 %v3342, %v5258
        %v5260 = vpop.f32.mrf.mxu0
        %5261 = vdwg.mxu0
        %v5262 = vmul.f32 %v5249, %v5249
        %v5263 = vmul.f32 %v5254, %v5254
        %v5264 = vmul.f32 %v5259, %v5259
        %v5265 = vsel %vm786, %v5262, 0.0
        %5266 = vadd.xlane.f32.xlu0 %v5265
        %v5267 = vpop.xlane.xlu0 %5266
        %v5268 = vsel %vm786, %v5263, 0.0
        %5269 = vadd.xlane.f32.xlu0 %v5268
        %v5270 = vpop.xlane.xlu0 %5269
        %v5271 = vsel %vm810, %v5264, 0.0
        %5272 = vadd.xlane.f32.xlu0 %v5271
        %v5273 = vpop.xlane.xlu0 %5272
        %v5274 = vmax.f32 %v5267, 1e-24
        %v5275 = vmax.f32 %v5270, 1e-24
        %v5276 = vmax.f32 %v5273, 1e-24
        %v5277 = vrsqrt.pop %v5274
        %v5278 = vrsqrt.pop %v5275
        %v5279 = vrsqrt.pop %v5276
        %v5280 = vmul.f32 %v5249, %v5277
        %v5281 = vmul.f32 %v5254, %v5278
        %v5282 = vmul.f32 %v5259, %v5279
        %v5283 = vlaneseq
        %v5284 = vshrl.u32 %v5283, 7
        %v5285 = vsub.s32 6, %v5284
        %v5286 = vrot.slane %v547, %v5285
        %v5287 = vmul.f32 %v5280, %v5286
        %v5288 = vmul.f32 %v5281, %v5286
        %v5289 = vmul.f32 %v5282, %v5286
        %v5290 = vlaneseq
        %v5291 = vshrl.u32 %v5290, 7
        %v5292 = vsub.s32 7, %v5291
        %v5293 = vrot.slane %v547, %v5292
        %v5294 = vadd.f32 %v5287, %v5293
        %v5295 = vadd.f32 %v5288, %v5293
        %v5296 = vadd.f32 %v5289, %v5293
        %s5297 = scalar_lea.vmem [#allocation10], 256
        %v5298 = vld [vmem:[%s5297] sm:$0xff]
        %v5299 = vld [vmem:[%s5297 + $0x8] sm:$0xff]
        %v5300 = vld [vmem:[%s5297 + $0x10] sm:$0xff]
        %v5301 = vld [vmem:[%s5297 + $0x18] sm:$0xff]
        %v5302 = vld [vmem:[%s5297 + $0x20] sm:$0xff]
        %v5303 = vld [vmem:[%s5297 + $0x28] sm:$0xff]
        %v5304 = vld [vmem:[%s5297 + $0x30] sm:$0xff]
        %v5305 = vld [vmem:[%s5297 + $0x38] sm:$0xff]
        %v5306 = vld [vmem:[%s5297 + $0x40] sm:$0xff]
        %v5307 = vld [vmem:[%s5297 + $0x48] sm:$0xff]
        %v5308 = vld [vmem:[%s5297 + $0x50] sm:$0xff]
        %v5309 = vld [vmem:[%s5297 + $0x58] sm:$0xff]
        %v5310 = vld [vmem:[%s5297 + $0x60] sm:$0xff]
        %v5311 = vld [vmem:[%s5297 + $0x68] sm:$0xff]
        %v5312 = vld [vmem:[%s5297 + $0x70] sm:$0xff]
        %v5313 = vld [vmem:[%s5297 + $0x78] sm:$0xff]
        %v5314 = vld [vmem:[%s5297 + $0x80] sm:$0xff]
        %v5315 = vld [vmem:[%s5297 + $0x88] sm:$0xff]
        %v5316 = vld [vmem:[%s5297 + $0x90] sm:$0xff]
        %v5317 = vld [vmem:[%s5297 + $0x98] sm:$0xff]
        %v5318 = vld [vmem:[%s5297 + $0xa0] sm:$0xff]
        %v5319 = vld [vmem:[%s5297 + $0xa8] sm:$0xff]
        %v5320 = vld [vmem:[%s5297 + $0xb0] sm:$0xff]
        %v5321 = vld [vmem:[%s5297 + $0xb8] sm:$0xff]
        %v5322 = vld [vmem:[%s5297 + $0xc0] sm:$0xff]
        %v5323 = vld [vmem:[%s5297 + $0xc8] sm:$0xff]
        %v5324 = vld [vmem:[%s5297 + $0xd0] sm:$0xff]
        %v5325 = vld [vmem:[%s5297 + $0xd8] sm:$0xff]
        %v5326 = vld [vmem:[%s5297 + $0xe0] sm:$0xff]
        %v5327 = vld [vmem:[%s5297 + $0xe8] sm:$0xff]
        %v5328 = vld [vmem:[%s5297 + $0xf0] sm:$0xff]
        %v5329 = vld [vmem:[%s5297 + $0xf8] sm:$0xff]
        %s5330 = scalar_lea.vmem %s10, 4
        %v5331 = vld [vmem:[%s5330] sm:$0xf]
        %v5333 = vlaneseq
        %v5334 = vshrl.u32 %v5333, 7
        %v5335 = vsub.s32 0, %v5334
        %v5336 = vrot.slane %v5331, %v5335
        %v5337 = vlaneseq
        %v5338 = vshrl.u32 %v5337, 7
        %v5339 = vsub.s32 1, %v5338
        %v5340 = vrot.slane %v5331, %v5339
        %v5341 = vlaneseq
        %v5342 = vshrl.u32 %v5341, 7
        %v5343 = vsub.s32 2, %v5342
        %v5344 = vrot.slane %v5331, %v5343
        %v5345 = vlaneseq
        %v5346 = vshrl.u32 %v5345, 7
        %v5347 = vsub.s32 3, %v5346
        %v5348 = vrot.slane %v5331, %v5347
        %v5354 = vsel %vm786, %v5294, 0
        %v5357 = vsel %vm786, %v5295, 0
        %v5360 = vsel %vm786, %v5296, 0
        %5362 = vmatprep.subr.mxu0 0.0
        %5363 = vmatpush1.msra.mxu0 0.0
        %5364 = vmatprep.subr.mxu0 0.0
        %5365 = vmatpush1.msra.mxu0 0.0
        %5366 = vmatprep.subr.mxu0 0.0
        %5367 = vmatpush1.msra.mxu0 0.0
        %5368 = vmatprep.subr.mxu0 0.0
        %5369 = vmatpush1.msra.mxu0 0.0
        %5370 = vmatprep.subr.mxu0 0.0
        %5371 = vmatpush1.msra.mxu0 0.0
        %5372 = vmatprep.subr.mxu0 0.0
        %5373 = vmatpush1.msra.mxu0 0.0
        %5374 = vmatprep.subr.mxu0 0.0
        %5375 = vmatpush1.msra.mxu0 0.0
        %5376 = vmatprep.subr.mxu0 0.0
        %5377 = vmatpush1.msra.mxu0 0.0
        %5378 = vmatprep.subr.mxu0 %v5327
        %5379 = vmatpush1.msra.mxu0 %v5326
        %5380 = vmatprep.subr.mxu0 %v5323
        %5381 = vmatpush1.msra.mxu0 %v5322
        %5382 = vmatprep.subr.mxu0 %v5319
        %5383 = vmatpush1.msra.mxu0 %v5318
        %5384 = vmatprep.subr.mxu0 %v5315
        %5385 = vmatpush1.msra.mxu0 %v5314
        %5386 = vmatprep.subr.mxu0 %v5311
        %5387 = vmatpush1.msra.mxu0 %v5310
        %5388 = vmatprep.subr.mxu0 %v5307
        %5389 = vmatpush1.msra.mxu0 %v5306
        %5390 = vmatprep.subr.mxu0 %v5303
        %5391 = vmatpush1.msra.mxu0 %v5302
        %5392 = vmatprep.subr.mxu0 %v5299
        %5393 = vmatpush1.msra.mxu0 %v5298
        %5394 = vmatprep.subr.mxu0 0.0
        %5395 = vmatpush2.msra.mxu0 0.0
        %5396 = vmatprep.subr.mxu0 0.0
        %5397 = vmatpush2.msra.mxu0 0.0
        %5398 = vmatprep.subr.mxu0 0.0
        %5399 = vmatpush2.msra.mxu0 0.0
        %5400 = vmatprep.subr.mxu0 0.0
        %5401 = vmatpush2.msra.mxu0 0.0
        %5402 = vmatprep.subr.mxu0 0.0
        %5403 = vmatpush2.msra.mxu0 0.0
        %5404 = vmatprep.subr.mxu0 0.0
        %5405 = vmatpush2.msra.mxu0 0.0
        %5406 = vmatprep.subr.mxu0 0.0
        %5407 = vmatpush2.msra.mxu0 0.0
        %5408 = vmatprep.subr.mxu0 0.0
        %5409 = vmatpush2.msra.mxu0 0.0
        %5410 = vmatprep.subr.mxu0 0.0
        %5411 = vmatpush2.msra.mxu0 0.0
        %5412 = vmatprep.subr.mxu0 0.0
        %5413 = vmatpush2.msra.mxu0 0.0
        %5414 = vmatprep.subr.mxu0 0.0
        %5415 = vmatpush2.msra.mxu0 0.0
        %5416 = vmatprep.subr.mxu0 0.0
        %5417 = vmatpush2.msra.mxu0 0.0
        %5418 = vmatprep.subr.mxu0 0.0
        %5419 = vmatpush2.msra.mxu0 0.0
        %5420 = vmatprep.subr.mxu0 0.0
        %5421 = vmatpush2.msra.mxu0 0.0
        %5422 = vmatprep.subr.mxu0 0.0
        %5423 = vmatpush2.msra.mxu0 0.0
        %5424 = vmatprep.subr.mxu0 0.0
        %5425 = vmatpush2.msra.mxu0 0.0
        %5426 = vmatprep.mubr.f32.mxu0 0.0
        %5427 = vmatmul.mubr.f32.gmra.mxu0 %v5354
        %v5428 = vpop.f32.mrf.mxu0
        %v5429 = vadd.f32 %v5336, %v5428
        %v5430 = vpop.f32.mrf.mxu0
        %v5431 = vadd.f32 %v5340, %v5430
        %5432 = vmatprep.mubr.f32.mxu0 0.0
        %5433 = vmatmul.mubr.f32.gmra.mxu0 %v5357
        %v5434 = vpop.f32.mrf.mxu0
        %v5435 = vadd.f32 %v5336, %v5434
        %v5436 = vpop.f32.mrf.mxu0
        %v5437 = vadd.f32 %v5340, %v5436
        %5438 = vmatprep.mubr.f32.mxu0 0.0
        %5439 = vmatmul.mubr.f32.gmra.mxu0 %v5360
        %v5440 = vpop.f32.mrf.mxu0
        %v5441 = vadd.f32 %v5336, %v5440
        %v5442 = vpop.f32.mrf.mxu0
        %v5443 = vadd.f32 %v5340, %v5442
        %5444 = vdwg.mxu0
        %5445 = vmatprep.subr.mxu0 0.0
        %5446 = vmatpush1.msra.mxu0 0.0
        %5447 = vmatprep.subr.mxu0 0.0
        %5448 = vmatpush1.msra.mxu0 0.0
        %5449 = vmatprep.subr.mxu0 0.0
        %5450 = vmatpush1.msra.mxu0 0.0
        %5451 = vmatprep.subr.mxu0 0.0
        %5452 = vmatpush1.msra.mxu0 0.0
        %5453 = vmatprep.subr.mxu0 0.0
        %5454 = vmatpush1.msra.mxu0 0.0
        %5455 = vmatprep.subr.mxu0 0.0
        %5456 = vmatpush1.msra.mxu0 0.0
        %5457 = vmatprep.subr.mxu0 0.0
        %5458 = vmatpush1.msra.mxu0 0.0
        %5459 = vmatprep.subr.mxu0 0.0
        %5460 = vmatpush1.msra.mxu0 0.0
        %5461 = vmatprep.subr.mxu0 %v5329
        %5462 = vmatpush1.msra.mxu0 %v5328
        %5463 = vmatprep.subr.mxu0 %v5325
        %5464 = vmatpush1.msra.mxu0 %v5324
        %5465 = vmatprep.subr.mxu0 %v5321
        %5466 = vmatpush1.msra.mxu0 %v5320
        %5467 = vmatprep.subr.mxu0 %v5317
        %5468 = vmatpush1.msra.mxu0 %v5316
        %5469 = vmatprep.subr.mxu0 %v5313
        %5470 = vmatpush1.msra.mxu0 %v5312
        %5471 = vmatprep.subr.mxu0 %v5309
        %5472 = vmatpush1.msra.mxu0 %v5308
        %5473 = vmatprep.subr.mxu0 %v5305
        %5474 = vmatpush1.msra.mxu0 %v5304
        %5475 = vmatprep.subr.mxu0 %v5301
        %5476 = vmatpush1.msra.mxu0 %v5300
        %5477 = vmatprep.subr.mxu0 0.0
        %5478 = vmatpush2.msra.mxu0 0.0
        %5479 = vmatprep.subr.mxu0 0.0
        %5480 = vmatpush2.msra.mxu0 0.0
        %5481 = vmatprep.subr.mxu0 0.0
        %5482 = vmatpush2.msra.mxu0 0.0
        %5483 = vmatprep.subr.mxu0 0.0
        %5484 = vmatpush2.msra.mxu0 0.0
        %5485 = vmatprep.subr.mxu0 0.0
        %5486 = vmatpush2.msra.mxu0 0.0
        %5487 = vmatprep.subr.mxu0 0.0
        %5488 = vmatpush2.msra.mxu0 0.0
        %5489 = vmatprep.subr.mxu0 0.0
        %5490 = vmatpush2.msra.mxu0 0.0
        %5491 = vmatprep.subr.mxu0 0.0
        %5492 = vmatpush2.msra.mxu0 0.0
        %5493 = vmatprep.subr.mxu0 0.0
        %5494 = vmatpush2.msra.mxu0 0.0
        %5495 = vmatprep.subr.mxu0 0.0
        %5496 = vmatpush2.msra.mxu0 0.0
        %5497 = vmatprep.subr.mxu0 0.0
        %5498 = vmatpush2.msra.mxu0 0.0
        %5499 = vmatprep.subr.mxu0 0.0
        %5500 = vmatpush2.msra.mxu0 0.0
        %5501 = vmatprep.subr.mxu0 0.0
        %5502 = vmatpush2.msra.mxu0 0.0
        %5503 = vmatprep.subr.mxu0 0.0
        %5504 = vmatpush2.msra.mxu0 0.0
        %5505 = vmatprep.subr.mxu0 0.0
        %5506 = vmatpush2.msra.mxu0 0.0
        %5507 = vmatprep.subr.mxu0 0.0
        %5508 = vmatpush2.msra.mxu0 0.0
        %5509 = vmatprep.mubr.f32.mxu0 0.0
        %5510 = vmatmul.mubr.f32.gmra.mxu0 %v5354
        %v5511 = vpop.f32.mrf.mxu0
        %v5512 = vadd.f32 %v5344, %v5511
        %v5513 = vpop.f32.mrf.mxu0
        %v5514 = vadd.f32 %v5348, %v5513
        %5515 = vmatprep.mubr.f32.mxu0 0.0
        %5516 = vmatmul.mubr.f32.gmra.mxu0 %v5357
        %v5517 = vpop.f32.mrf.mxu0
        %v5518 = vadd.f32 %v5344, %v5517
        %v5519 = vpop.f32.mrf.mxu0
        %v5520 = vadd.f32 %v5348, %v5519
        %5521 = vmatprep.mubr.f32.mxu0 0.0
        %5522 = vmatmul.mubr.f32.gmra.mxu0 %v5360
        %v5523 = vpop.f32.mrf.mxu0
        %v5524 = vadd.f32 %v5344, %v5523
        %v5525 = vpop.f32.mrf.mxu0
        %v5526 = vadd.f32 %v5348, %v5525
        %5527 = vdwg.mxu0
        %v5528 = vmul.f32 %v5512, 0.5
        %v5529 = vmul.f32 %v5514, 0.5
        %v5530 = vmul.f32 %v5518, 0.5
        %v5531 = vmul.f32 %v5520, 0.5
        %v5532 = vmul.f32 %v5524, 0.5
        %v5533 = vmul.f32 %v5526, 0.5
        %v5534 = vmul.f32 %v5512, 0.70710677
        %v5535 = vmul.f32 %v5514, 0.70710677
        %v5536 = vmul.f32 %v5518, 0.70710677
        %v5537 = vmul.f32 %v5520, 0.70710677
        %v5538 = vmul.f32 %v5524, 0.70710677
        %v5539 = vmul.f32 %v5526, 0.70710677
        %v5540 = vand.u32 2147483647, %v5534
        %v5541 = vand.u32 2147483647, %v5535
        %v5542 = vand.u32 2147483647, %v5536
        %v5543 = vand.u32 2147483647, %v5537
        %v5544 = vand.u32 2147483647, %v5538
        %v5545 = vand.u32 2147483647, %v5539
        %v5546 = vmul.f32 %v5540, 0.3275911
        %v5547 = vmul.f32 %v5541, 0.3275911
        %v5548 = vmul.f32 %v5542, 0.3275911
        %v5549 = vmul.f32 %v5543, 0.3275911
        %v5550 = vmul.f32 %v5544, 0.3275911
        %v5551 = vmul.f32 %v5545, 0.3275911
        %v5552 = vadd.f32 %v5546, 1.0
        %v5553 = vadd.f32 %v5547, 1.0
        %v5554 = vadd.f32 %v5548, 1.0
        %v5555 = vadd.f32 %v5549, 1.0
        %v5556 = vadd.f32 %v5550, 1.0
        %v5557 = vadd.f32 %v5551, 1.0
        %v5558 = vrcp.pop %v5552
        %v5559 = vmul.f32 1.0, %v5558
        %v5560 = vrcp.pop %v5553
        %v5561 = vmul.f32 1.0, %v5560
        %v5562 = vrcp.pop %v5554
        %v5563 = vmul.f32 1.0, %v5562
        %v5564 = vrcp.pop %v5555
        %v5565 = vmul.f32 1.0, %v5564
        %v5566 = vrcp.pop %v5556
        %v5567 = vmul.f32 1.0, %v5566
        %v5568 = vrcp.pop %v5557
        %v5569 = vmul.f32 1.0, %v5568
        %v5570 = vmul.f32 %v5559, 1.0614054
        %v5571 = vmul.f32 %v5561, 1.0614054
        %v5572 = vmul.f32 %v5563, 1.0614054
        %v5573 = vmul.f32 %v5565, 1.0614054
        %v5574 = vmul.f32 %v5567, 1.0614054
        %v5575 = vmul.f32 %v5569, 1.0614054
        %v5576 = vsub.f32 %v5570, 1.4531521
        %v5577 = vsub.f32 %v5571, 1.4531521
        %v5578 = vsub.f32 %v5572, 1.4531521
        %v5579 = vsub.f32 %v5573, 1.4531521
        %v5580 = vsub.f32 %v5574, 1.4531521
        %v5581 = vsub.f32 %v5575, 1.4531521
        %v5582 = vmul.f32 %v5576, %v5559
        %v5583 = vmul.f32 %v5577, %v5561
        %v5584 = vmul.f32 %v5578, %v5563
        %v5585 = vmul.f32 %v5579, %v5565
        %v5586 = vmul.f32 %v5580, %v5567
        %v5587 = vmul.f32 %v5581, %v5569
        %v5588 = vadd.f32 %v5582, 1.4214138
        %v5589 = vadd.f32 %v5583, 1.4214138
        %v5590 = vadd.f32 %v5584, 1.4214138
        %v5591 = vadd.f32 %v5585, 1.4214138
        %v5592 = vadd.f32 %v5586, 1.4214138
        %v5593 = vadd.f32 %v5587, 1.4214138
        %v5594 = vmul.f32 %v5588, %v5559
        %v5595 = vmul.f32 %v5589, %v5561
        %v5596 = vmul.f32 %v5590, %v5563
        %v5597 = vmul.f32 %v5591, %v5565
        %v5598 = vmul.f32 %v5592, %v5567
        %v5599 = vmul.f32 %v5593, %v5569
        %v5600 = vsub.f32 %v5594, 0.28449672
        %v5601 = vsub.f32 %v5595, 0.28449672
        %v5602 = vsub.f32 %v5596, 0.28449672
        %v5603 = vsub.f32 %v5597, 0.28449672
        %v5604 = vsub.f32 %v5598, 0.28449672
        %v5605 = vsub.f32 %v5599, 0.28449672
        %v5606 = vmul.f32 %v5600, %v5559
        %v5607 = vmul.f32 %v5601, %v5561
        %v5608 = vmul.f32 %v5602, %v5563
        %v5609 = vmul.f32 %v5603, %v5565
        %v5610 = vmul.f32 %v5604, %v5567
        %v5611 = vmul.f32 %v5605, %v5569
        %v5612 = vadd.f32 %v5606, 0.2548296
        %v5613 = vadd.f32 %v5607, 0.2548296
        %v5614 = vadd.f32 %v5608, 0.2548296
        %v5615 = vadd.f32 %v5609, 0.2548296
        %v5616 = vadd.f32 %v5610, 0.2548296
        %v5617 = vadd.f32 %v5611, 0.2548296
        %v5618 = vmul.f32 %v5612, %v5559
        %v5619 = vmul.f32 %v5613, %v5561
        %v5620 = vmul.f32 %v5614, %v5563
        %v5621 = vmul.f32 %v5615, %v5565
        %v5622 = vmul.f32 %v5616, %v5567
        %v5623 = vmul.f32 %v5617, %v5569
        %v5624 = vsub.f32 0.0, %v5540
        %v5625 = vsub.f32 0.0, %v5541
        %v5626 = vsub.f32 0.0, %v5542
        %v5627 = vsub.f32 0.0, %v5543
        %v5628 = vsub.f32 0.0, %v5544
        %v5629 = vsub.f32 0.0, %v5545
        %v5630 = vmul.f32 %v5624, %v5540
        %v5631 = vmul.f32 %v5625, %v5541
        %v5632 = vmul.f32 %v5626, %v5542
        %v5633 = vmul.f32 %v5627, %v5543
        %v5634 = vmul.f32 %v5628, %v5544
        %v5635 = vmul.f32 %v5629, %v5545
        %v5636 = vmul.f32 %v5630, 1.442695
        %v5637 = vpow.pop %v5636
        %v5638 = vmul.f32 %v5631, 1.442695
        %v5639 = vpow.pop %v5638
        %v5640 = vmul.f32 %v5632, 1.442695
        %v5641 = vpow.pop %v5640
        %v5642 = vmul.f32 %v5633, 1.442695
        %v5643 = vpow.pop %v5642
        %v5644 = vmul.f32 %v5634, 1.442695
        %v5645 = vpow.pop %v5644
        %v5646 = vmul.f32 %v5635, 1.442695
        %v5647 = vpow.pop %v5646
        %v5648 = vmul.f32 %v5618, %v5637
        %v5649 = vmul.f32 %v5619, %v5639
        %v5650 = vmul.f32 %v5620, %v5641
        %v5651 = vmul.f32 %v5621, %v5643
        %v5652 = vmul.f32 %v5622, %v5645
        %v5653 = vmul.f32 %v5623, %v5647
        %v5654 = vsub.f32 1.0, %v5648
        %v5655 = vsub.f32 1.0, %v5649
        %v5656 = vsub.f32 1.0, %v5650
        %v5657 = vsub.f32 1.0, %v5651
        %v5658 = vsub.f32 1.0, %v5652
        %v5659 = vsub.f32 1.0, %v5653
        %vm5660 = vcmp.ge.f32.partialorder %v5534, 0.0
        %vm5661 = vcmp.ge.f32.partialorder %v5535, 0.0
        %vm5662 = vcmp.ge.f32.partialorder %v5536, 0.0
        %vm5663 = vcmp.ge.f32.partialorder %v5537, 0.0
        %vm5664 = vcmp.ge.f32.partialorder %v5538, 0.0
        %vm5665 = vcmp.ge.f32.partialorder %v5539, 0.0
        %v5666 = vsub.f32 0.0, %v5654
        %v5667 = vsub.f32 0.0, %v5655
        %v5668 = vsub.f32 0.0, %v5656
        %v5669 = vsub.f32 0.0, %v5657
        %v5670 = vsub.f32 0.0, %v5658
        %v5671 = vsub.f32 0.0, %v5659
        %v5672 = vsel %vm5660, %v5654, %v5666
        %v5673 = vsel %vm5661, %v5655, %v5667
        %v5674 = vsel %vm5662, %v5656, %v5668
        %v5675 = vsel %vm5663, %v5657, %v5669
        %v5676 = vsel %vm5664, %v5658, %v5670
        %v5677 = vsel %vm5665, %v5659, %v5671
        %v5678 = vadd.f32 %v5672, 1.0
        %v5679 = vadd.f32 %v5673, 1.0
        %v5680 = vadd.f32 %v5674, 1.0
        %v5681 = vadd.f32 %v5675, 1.0
        %v5682 = vadd.f32 %v5676, 1.0
        %v5683 = vadd.f32 %v5677, 1.0
        %v5684 = vmul.f32 %v5528, %v5678
        %v5685 = vmul.f32 %v5529, %v5679
        %v5686 = vmul.f32 %v5530, %v5680
        %v5687 = vmul.f32 %v5531, %v5681
        %v5688 = vmul.f32 %v5532, %v5682
        %v5689 = vmul.f32 %v5533, %v5683
        %v5690 = vmul.f32 %v5684, %v5429
        %v5691 = vmul.f32 %v5685, %v5431
        %v5692 = vmul.f32 %v5686, %v5435
        %v5693 = vmul.f32 %v5687, %v5437
        %v5694 = vmul.f32 %v5688, %v5441
        %v5695 = vmul.f32 %v5689, %v5443
        %s5696 = scalar_lea.vmem [#allocation11], 256
        %v5697 = vld [vmem:[%s5696] sm:$0xff]
        %v5698 = vld [vmem:[%s5696 + $0x8] sm:$0xff]
        %v5699 = vld [vmem:[%s5696 + $0x10] sm:$0xff]
        %v5700 = vld [vmem:[%s5696 + $0x18] sm:$0xff]
        %v5701 = vld [vmem:[%s5696 + $0x20] sm:$0xff]
        %v5702 = vld [vmem:[%s5696 + $0x28] sm:$0xff]
        %v5703 = vld [vmem:[%s5696 + $0x30] sm:$0xff]
        %v5704 = vld [vmem:[%s5696 + $0x38] sm:$0xff]
        %v5705 = vld [vmem:[%s5696 + $0x40] sm:$0xff]
        %v5706 = vld [vmem:[%s5696 + $0x48] sm:$0xff]
        %v5707 = vld [vmem:[%s5696 + $0x50] sm:$0xff]
        %v5708 = vld [vmem:[%s5696 + $0x58] sm:$0xff]
        %v5709 = vld [vmem:[%s5696 + $0x60] sm:$0xff]
        %v5710 = vld [vmem:[%s5696 + $0x68] sm:$0xff]
        %v5711 = vld [vmem:[%s5696 + $0x70] sm:$0xff]
        %v5712 = vld [vmem:[%s5696 + $0x78] sm:$0xff]
        %v5713 = vld [vmem:[%s5696 + $0x80] sm:$0xff]
        %v5714 = vld [vmem:[%s5696 + $0x88] sm:$0xff]
        %v5715 = vld [vmem:[%s5696 + $0x90] sm:$0xff]
        %v5716 = vld [vmem:[%s5696 + $0x98] sm:$0xff]
        %v5717 = vld [vmem:[%s5696 + $0xa0] sm:$0xff]
        %v5718 = vld [vmem:[%s5696 + $0xa8] sm:$0xff]
        %v5719 = vld [vmem:[%s5696 + $0xb0] sm:$0xff]
        %v5720 = vld [vmem:[%s5696 + $0xb8] sm:$0xff]
        %v5721 = vld [vmem:[%s5696 + $0xc0] sm:$0xff]
        %v5722 = vld [vmem:[%s5696 + $0xc8] sm:$0xff]
        %v5723 = vld [vmem:[%s5696 + $0xd0] sm:$0xff]
        %v5724 = vld [vmem:[%s5696 + $0xd8] sm:$0xff]
        %v5725 = vld [vmem:[%s5696 + $0xe0] sm:$0xff]
        %v5726 = vld [vmem:[%s5696 + $0xe8] sm:$0xff]
        %v5727 = vld [vmem:[%s5696 + $0xf0] sm:$0xff]
        %v5728 = vld [vmem:[%s5696 + $0xf8] sm:$0xff]
        %v5729 = vlaneseq
        %v5730 = vshrl.u32 %v5729, 7
        %v5731 = vsub.s32 3, %v5730
        %v5732 = vrot.slane %v546, %v5731
        %5733 = vmatprep.subr.mxu0 0.0
        %5734 = vmatpush1.msra.mxu0 %v5712
        %5735 = vmatprep.subr.mxu0 0.0
        %5736 = vmatpush1.msra.mxu0 %v5711
        %5737 = vmatprep.subr.mxu0 0.0
        %5738 = vmatpush1.msra.mxu0 %v5710
        %5739 = vmatprep.subr.mxu0 0.0
        %5740 = vmatpush1.msra.mxu0 %v5709
        %5741 = vmatprep.subr.mxu0 0.0
        %5742 = vmatpush1.msra.mxu0 %v5708
        %5743 = vmatprep.subr.mxu0 0.0
        %5744 = vmatpush1.msra.mxu0 %v5707
        %5745 = vmatprep.subr.mxu0 0.0
        %5746 = vmatpush1.msra.mxu0 %v5706
        %5747 = vmatprep.subr.mxu0 0.0
        %5748 = vmatpush1.msra.mxu0 %v5705
        %5749 = vmatprep.subr.mxu0 0.0
        %5750 = vmatpush1.msra.mxu0 %v5704
        %5751 = vmatprep.subr.mxu0 0.0
        %5752 = vmatpush1.msra.mxu0 %v5703
        %5753 = vmatprep.subr.mxu0 0.0
        %5754 = vmatpush1.msra.mxu0 %v5702
        %5755 = vmatprep.subr.mxu0 0.0
        %5756 = vmatpush1.msra.mxu0 %v5701
        %5757 = vmatprep.subr.mxu0 0.0
        %5758 = vmatpush1.msra.mxu0 %v5700
        %5759 = vmatprep.subr.mxu0 0.0
        %5760 = vmatpush1.msra.mxu0 %v5699
        %5761 = vmatprep.subr.mxu0 0.0
        %5762 = vmatpush1.msra.mxu0 %v5698
        %5763 = vmatprep.subr.mxu0 0.0
        %5764 = vmatpush1.msra.mxu0 %v5697
        %5765 = vmatprep.subr.mxu0 0.0
        %5766 = vmatpush2.msra.mxu0 %v5728
        %5767 = vmatprep.subr.mxu0 0.0
        %5768 = vmatpush2.msra.mxu0 %v5727
        %5769 = vmatprep.subr.mxu0 0.0
        %5770 = vmatpush2.msra.mxu0 %v5726
        %5771 = vmatprep.subr.mxu0 0.0
        %5772 = vmatpush2.msra.mxu0 %v5725
        %5773 = vmatprep.subr.mxu0 0.0
        %5774 = vmatpush2.msra.mxu0 %v5724
        %5775 = vmatprep.subr.mxu0 0.0
        %5776 = vmatpush2.msra.mxu0 %v5723
        %5777 = vmatprep.subr.mxu0 0.0
        %5778 = vmatpush2.msra.mxu0 %v5722
        %5779 = vmatprep.subr.mxu0 0.0
        %5780 = vmatpush2.msra.mxu0 %v5721
        %5781 = vmatprep.subr.mxu0 0.0
        %5782 = vmatpush2.msra.mxu0 %v5720
        %5783 = vmatprep.subr.mxu0 0.0
        %5784 = vmatpush2.msra.mxu0 %v5719
        %5785 = vmatprep.subr.mxu0 0.0
        %5786 = vmatpush2.msra.mxu0 %v5718
        %5787 = vmatprep.subr.mxu0 0.0
        %5788 = vmatpush2.msra.mxu0 %v5717
        %5789 = vmatprep.subr.mxu0 0.0
        %5790 = vmatpush2.msra.mxu0 %v5716
        %5791 = vmatprep.subr.mxu0 0.0
        %5792 = vmatpush2.msra.mxu0 %v5715
        %5793 = vmatprep.subr.mxu0 0.0
        %5794 = vmatpush2.msra.mxu0 %v5714
        %5795 = vmatprep.subr.mxu0 0.0
        %5796 = vmatpush2.msra.mxu0 %v5713
        %5797 = vmatprep.mubr.f32.mxu0 %v5691
        %5798 = vmatmul.mubr.f32.gmra.mxu0 %v5690
        %v5799 = vpop.f32.mrf.mxu0
        %v5800 = vadd.f32 %v5732, %v5799
        %v5801 = vpop.f32.mrf.mxu0
        %5802 = vmatprep.mubr.f32.mxu0 %v5693
        %5803 = vmatmul.mubr.f32.gmra.mxu0 %v5692
        %v5804 = vpop.f32.mrf.mxu0
        %v5805 = vadd.f32 %v5732, %v5804
        %v5806 = vpop.f32.mrf.mxu0
        %5807 = vmatprep.mubr.f32.mxu0 %v5695
        %5808 = vmatmul.mubr.f32.gmra.mxu0 %v5694
        %v5809 = vpop.f32.mrf.mxu0
        %v5810 = vpop.f32.mrf.mxu0
        %5811 = vdwg.mxu0
        %v5812 = vadd.f32 %v5800, %v5249
        %v5813 = vadd.f32 %v5805, %v5254
        %v5814 = vmul.f32 %v5812, %v5812
        %v5815 = vmul.f32 %v5813, %v5813
        %v5816 = vsel %vm786, %v5814, 0.0
        %5817 = vadd.xlane.f32.xlu0 %v5816
        %v5818 = vpop.xlane.xlu0 %5817
        %v5819 = vsel %vm786, %v5815, 0.0
        %5820 = vadd.xlane.f32.xlu0 %v5819
        %v5821 = vpop.xlane.xlu0 %5820
        %v5822 = vmax.f32 %v5818, 1e-24
        %v5823 = vmax.f32 %v5821, 1e-24
        %v5824 = vrsqrt.pop %v5822
        %v5825 = vrsqrt.pop %v5823
        %v5826 = vmul.f32 %v5812, %v5824
        %v5827 = vmul.f32 %v5813, %v5825
        %v5828 = vld [vmem:[%s12] sm:$0xff]
        %v5829 = vld [vmem:[%s12 + $0x8] sm:$0xff]
        %v5830 = vld [vmem:[%s12 + $0x10] sm:$0xff]
        %v5831 = vld [vmem:[%s12 + $0x18] sm:$0xff]
        %v5832 = vld [vmem:[%s12 + $0x20] sm:$0xff]
        %v5833 = vld [vmem:[%s12 + $0x28] sm:$0xff]
        %v5834 = vld [vmem:[%s12 + $0x30] sm:$0xff]
        %v5835 = vld [vmem:[%s12 + $0x38] sm:$0xff]
        %v5837 = vsel %vm786, %v5826, 0
        %v5840 = vsel %vm786, %v5827, 0
        %5842 = vmatprep.subr.mxu0 0.0
        %5843 = vmatpush1.msra.mxu0 0.0
        %5844 = vmatprep.subr.mxu0 0.0
        %5845 = vmatpush1.msra.mxu0 0.0
        %5846 = vmatprep.subr.mxu0 0.0
        %5847 = vmatpush1.msra.mxu0 0.0
        %5848 = vmatprep.subr.mxu0 0.0
        %5849 = vmatpush1.msra.mxu0 0.0
        %5850 = vmatprep.subr.mxu0 0.0
        %5851 = vmatpush1.msra.mxu0 0.0
        %5852 = vmatprep.subr.mxu0 0.0
        %5853 = vmatpush1.msra.mxu0 0.0
        %5854 = vmatprep.subr.mxu0 0.0
        %5855 = vmatpush1.msra.mxu0 0.0
        %5856 = vmatprep.subr.mxu0 0.0
        %5857 = vmatpush1.msra.mxu0 0.0
        %5858 = vmatprep.subr.mxu0 0.0
        %5859 = vmatpush1.msra.mxu0 %v5835
        %5860 = vmatprep.subr.mxu0 0.0
        %5861 = vmatpush1.msra.mxu0 %v5834
        %5862 = vmatprep.subr.mxu0 0.0
        %5863 = vmatpush1.msra.mxu0 %v5833
        %5864 = vmatprep.subr.mxu0 0.0
        %5865 = vmatpush1.msra.mxu0 %v5832
        %5866 = vmatprep.subr.mxu0 0.0
        %5867 = vmatpush1.msra.mxu0 %v5831
        %5868 = vmatprep.subr.mxu0 0.0
        %5869 = vmatpush1.msra.mxu0 %v5830
        %5870 = vmatprep.subr.mxu0 0.0
        %5871 = vmatpush1.msra.mxu0 %v5829
        %5872 = vmatprep.subr.mxu0 0.0
        %5873 = vmatpush1.msra.mxu0 %v5828
        %5874 = vmatprep.subr.mxu0 0.0
        %5875 = vmatpush2.msra.mxu0 0.0
        %5876 = vmatprep.subr.mxu0 0.0
        %5877 = vmatpush2.msra.mxu0 0.0
        %5878 = vmatprep.subr.mxu0 0.0
        %5879 = vmatpush2.msra.mxu0 0.0
        %5880 = vmatprep.subr.mxu0 0.0
        %5881 = vmatpush2.msra.mxu0 0.0
        %5882 = vmatprep.subr.mxu0 0.0
        %5883 = vmatpush2.msra.mxu0 0.0
        %5884 = vmatprep.subr.mxu0 0.0
        %5885 = vmatpush2.msra.mxu0 0.0
        %5886 = vmatprep.subr.mxu0 0.0
        %5887 = vmatpush2.msra.mxu0 0.0
        %5888 = vmatprep.subr.mxu0 0.0
        %5889 = vmatpush2.msra.mxu0 0.0
        %5890 = vmatprep.subr.mxu0 0.0
        %5891 = vmatpush2.msra.mxu0 0.0
        %5892 = vmatprep.subr.mxu0 0.0
        %5893 = vmatpush2.msra.mxu0 0.0
        %5894 = vmatprep.subr.mxu0 0.0
        %5895 = vmatpush2.msra.mxu0 0.0
        %5896 = vmatprep.subr.mxu0 0.0
        %5897 = vmatpush2.msra.mxu0 0.0
        %5898 = vmatprep.subr.mxu0 0.0
        %5899 = vmatpush2.msra.mxu0 0.0
        %5900 = vmatprep.subr.mxu0 0.0
        %5901 = vmatpush2.msra.mxu0 0.0
        %5902 = vmatprep.subr.mxu0 0.0
        %5903 = vmatpush2.msra.mxu0 0.0
        %5904 = vmatprep.subr.mxu0 0.0
        %5905 = vmatpush2.msra.mxu0 0.0
        %5906 = vmatprep.mubr.f32.mxu0 0.0
        %5907 = vmatmul.mubr.f32.gmra.mxu0 %v5837
        %v5908 = vpop.f32.mrf.mxu0
        %v5909 = vadd.f32 0.0, %v5908
        %v5910 = vpop.f32.mrf.mxu0
        %5911 = vmatprep.mubr.f32.mxu0 0.0
        %5912 = vmatmul.mubr.f32.gmra.mxu0 %v5840
        %v5913 = vpop.f32.mrf.mxu0
        %v5914 = vadd.f32 0.0, %v5913
        %v5915 = vpop.f32.mrf.mxu0
        %5916 = vdwg.mxu0
        %5917 = vst [vmem:[%s545] sm:$0xff] %v5909
        %5918 = vst [vmem:[%s545 + $0x8] sm:$0xff] %v5914
        %p5919 = scmp.lt.s32.totalorder %s28, 1
        %s5920 = scalar_select %p5919, %s28, 1
        %s5921 = smul.addr %s5920, 2
        %s5922 = smul.addr %s5921, 8
        %s5923 = scalar_lea.vmem %s13, %s5922
        // Predicated region
        $region97: #{regressor_forward.1} parent=71 // pred_check
          %p5924 = pneg %p329
        $region98: #{regressor_forward.1} parent=71 // pred_check_branch
          %5926 = sbr.rel (%p5924) target = $region100
        $region99: #{regressor_forward.1} parent=71 // pred_region
          _
        $region100: #{regressor_forward.1} parent=71 // pred_fallthru
          _
      $region72: #{regressor_forward.1} parent=5 // pred_fallthru
        _
      %p5927 = scmp.le.s32.totalorder 2, %s23
      // Predicated region
      $region101: #{regressor_forward.1} parent=5 // pred_check
        %p5928 = pneg %p5927
      $region102: #{regressor_forward.1} parent=5 // pred_check_branch
        %5930 = sbr.rel (%p5928) target = $region104
      $region103: #{regressor_forward.1} parent=5 // pred_region
        %s5931 = ssub.s32 %s23, 2
        // Predicated region
        $region105: #{regressor_forward.1} parent=103 // pred_check
          %p5932 = pneg %p335
        $region106: #{regressor_forward.1} parent=103 // pred_check_branch
          %5934 = sbr.rel (%p5932) target = $region108
        $region107: #{regressor_forward.1} parent=103 // pred_region
          %p5935 = scmp.lt.s32.totalorder %s29, 1
          %s5936 = scalar_select %p5935, %s29, 1
          %s5937 = smul.addr %s5936, 2
          %s5938 = smul.addr %s5937, 8
          %s5939 = scalar_lea.vmem %s13, %s5938
        $region108: #{regressor_forward.1} parent=103 // pred_fallthru
          _
      $region104: #{regressor_forward.1} parent=5 // pred_fallthru
        _
    $region6: #{regressor_forward.1} parent=1 // loop_footer
      %s27 = sadd.s32 1, %s23
    $region7: #{regressor_forward.1} parent=1 // loop_footer_branch
      %22 = sbr.rel target = $region3
    $region8: #{regressor_forward.1} parent=1 // loop_exit
      _
    %5940 = vsyncpa [#allocation4], 1
    %s5941 = scalar_lea.sflag [#allocation4], 1
    %5942 = vsyncpa %s5941, 1
    %5943 = vsyncpa [#allocation6], 1
    %5944 = vsyncpa [#allocation9], 1
    %5945 = vsyncpa [#allocation12], 1

</llo_original>
